<compile_context>
chip_gen: v7x
topology: tpu7x:2x2x1
jax: 0.10.0
libtpu: 0.0.40
codegen_flags: <defaults>
</compile_context>

<pallas_src>
import functools
import math

import jax
import jax.numpy as jnp
from jax.experimental import pallas as pl
from jax.experimental.pallas import tpu as pltpu

# Make the pure-JAX reference matmuls full f32 so the correctness check is
# meaningful on TPU.
jax.config.update("jax_default_matmul_precision", "highest")


def _round_up(x, m):
    return (x + m - 1) // m * m


# ---------------------------------------------------------------------------
# Kernel 1: tiled matmul  (out = a @ b, f32 accumulation, optional fused ELU)
# ---------------------------------------------------------------------------
def _matmul_kernel(a_ref, b_ref, o_ref, acc_ref, *, activation):
    # grid = (M//tm, N//tn, K//tk); K is the reduction axis ("arbitrary").
    @pl.when(pl.program_id(2) == 0)
    def _():
        acc_ref[...] = jnp.zeros_like(acc_ref)

    acc_ref[...] += jnp.dot(a_ref[...], b_ref[...],
                            preferred_element_type=jnp.float32)

    @pl.when(pl.program_id(2) == pl.num_programs(2) - 1)
    def _():
        r = acc_ref[...]
        if activation == "elu":              # static flag, resolved at trace time
            r = jnp.where(r > 0, r, jnp.exp(r) - 1.0)
        o_ref[...] = r.astype(o_ref.dtype)


def pallas_matmul(a, b, *, activation=None, tm=512, tn=512, tk=512):
    """a @ b via a tiled Pallas TPU kernel.

    * inputs are zero-padded up to tile multiples (no divisibility asserts),
    * reduction tile capped at 512 so VMEM stays bounded for large K,
    * optional fused ELU applied on the final write (used for the context gate).
    """
    M, K = a.shape
    K2, N = b.shape
    assert K == K2, (a.shape, b.shape)

    tm = min(tm, _round_up(M, 8))      # sublane granularity (f32)
    tn = min(tn, _round_up(N, 128))    # lane granularity
    tk = min(tk, _round_up(K, 128))
    Mp, Kp, Np = _round_up(M, tm), _round_up(K, tk), _round_up(N, tn)

    if (Mp, Kp) != (M, K):
        a = jnp.pad(a, ((0, Mp - M), (0, Kp - K)))
    if (Kp, Np) != (K, N):
        b = jnp.pad(b, ((0, Kp - K), (0, Np - N)))

    grid = (Mp // tm, Np // tn, Kp // tk)
    cost = pl.CostEstimate(
        flops=2 * Mp * Np * Kp,
        transcendentals=Mp * Np if activation == "elu" else 0,
        bytes_accessed=4 * (Mp * Kp + Kp * Np + Mp * Np),
    )

    out = pl.pallas_call(
        functools.partial(_matmul_kernel, activation=activation),
        out_shape=jax.ShapeDtypeStruct((Mp, Np), jnp.float32),
        grid_spec=pltpu.PrefetchScalarGridSpec(
            num_scalar_prefetch=0,
            grid=grid,
            in_specs=[
                pl.BlockSpec((tm, tk), lambda i, j, k: (i, k)),
                pl.BlockSpec((tk, tn), lambda i, j, k: (k, j)),
            ],
            out_specs=pl.BlockSpec((tm, tn), lambda i, j, k: (i, j)),
            scratch_shapes=[pltpu.VMEM((tm, tn), jnp.float32)],
        ),
        compiler_params=pltpu.CompilerParams(
            dimension_semantics=("parallel", "parallel", "arbitrary"),
            vmem_limit_bytes=48 * 1024 * 1024,
        ),
        cost_estimate=cost,
    )(a, b)

    if (Mp, Np) != (M, N):
        out = out[:M, :N]
    return out


# ---------------------------------------------------------------------------
# Kernel 2: fused per-batch attention
#   gating -> relation scores -> mask -> softmax -> aggregate -> out projection
# ---------------------------------------------------------------------------
def _attention_kernel(pq_ref, pk_ref, mq_ref, mk_ref, waq_ref, wak_ref,
                      adj_ref, x_ref, wux_ref, wun_ref, out_ref, *, alpha):
    # One batch element per grid step; everything below stays in VMEM/vregs.
    xq = pq_ref[0] * mq_ref[0]                                 # [N, F] * [1, F]
    xk = pk_ref[0] * mk_ref[0]
    sq = jnp.dot(xq, waq_ref[...], preferred_element_type=jnp.float32)  # [N, R]
    sk = jnp.dot(xk, wak_ref[...], preferred_element_type=jnp.float32)  # [N, R]

    adj = adj_ref[0]                                           # [N, N, R]
    e = sq[:, None, :] + sk[None, :, :]                        # [N, N, R]
    e = jnp.where(e > 0, e, alpha * e)                         # LeakyReLU(alpha)
    scores = jnp.sum(e * adj, axis=-1)                         # [N, N]
    adj_sum = jnp.sum(adj, axis=-1)                            # [N, N]
    masked = jnp.where(adj_sum > 0, scores,
                       jnp.full_like(scores, -9.0e15))

    # Row-wise (over neighbours j) numerically-stable softmax.
    row_max = jnp.max(masked, axis=-1, keepdims=True)
    p = jnp.exp(masked - row_max)
    attn = p / jnp.sum(p, axis=-1, keepdims=True)
    # TODO(synk): nn.Dropout(attention) is identity in eval mode; training-mode
    # dropout (RNG masking of the attention matrix) is not implemented.

    xb = x_ref[0]                                              # [N, F]
    new_x = jnp.dot(attn, xb, preferred_element_type=jnp.float32)       # [N, F]
    out = (jnp.dot(xb, wux_ref[...], preferred_element_type=jnp.float32) +
           jnp.dot(new_x, wun_ref[...], preferred_element_type=jnp.float32))
    out_ref[0] = out.astype(out_ref.dtype)


def qdrgat_attention(pq, pk, mq, mk, waq, wak, adj, x, wu_x, wu_n, *, alpha):
    bs, N, F = pq.shape
    R = waq.shape[1]
    out_features = wu_x.shape[1]

    cost = pl.CostEstimate(
        flops=bs * (4 * N * F * R + 6 * N * N * R + 10 * N * N
                    + 2 * N * N * F + 4 * N * F * out_features),
        transcendentals=bs * N * N,
        bytes_accessed=4 * (3 * bs * N * F + 2 * bs * F + 2 * F * R
                            + bs * N * N * R + 2 * F * out_features
                            + bs * N * out_features),
    )

    return pl.pallas_call(
        functools.partial(_attention_kernel, alpha=alpha),
        out_shape=jax.ShapeDtypeStruct((bs, N, out_features), jnp.float32),
        grid_spec=pltpu.PrefetchScalarGridSpec(
            num_scalar_prefetch=0,
            grid=(bs,),
            in_specs=[
                pl.BlockSpec((1, N, F), lambda b: (b, 0, 0)),        # pq
                pl.BlockSpec((1, N, F), lambda b: (b, 0, 0)),        # pk
                pl.BlockSpec((1, 1, F), lambda b: (b, 0, 0)),        # mq gate
                pl.BlockSpec((1, 1, F), lambda b: (b, 0, 0)),        # mk gate
                pl.BlockSpec((F, R), lambda b: (0, 0)),              # Wa[:F]
                pl.BlockSpec((F, R), lambda b: (0, 0)),              # Wa[F:]
                pl.BlockSpec((1, N, N, R), lambda b: (b, 0, 0, 0)),  # adj
                pl.BlockSpec((1, N, F), lambda b: (b, 0, 0)),        # x
                pl.BlockSpec((F, out_features), lambda b: (0, 0)),   # Wu[:F]
                pl.BlockSpec((F, out_features), lambda b: (0, 0)),   # Wu[F:]
            ],
            out_specs=pl.BlockSpec((1, N, out_features), lambda b: (b, 0, 0)),
        ),
        compiler_params=pltpu.CompilerParams(
            dimension_semantics=("parallel",),   # batches independent
        ),
        cost_estimate=cost,
    )(pq, pk, mq, mk, waq, wak, adj, x, wu_x, wu_n)


# ---------------------------------------------------------------------------
# Forward pass
# ---------------------------------------------------------------------------
def qdrgat_forward(params, x_ori, x, adj, c, *, alpha):
    bs, N, F = x.shape

    # Context gate: m = ELU(c @ Wfc) @ Wdc  (ELU fused into the matmul kernel).
    h = pallas_matmul(c, params["Wfc"], activation="elu")
    m = pallas_matmul(h, params["Wdc"])
    mq = pallas_matmul(m, params["Wqc"]).reshape(bs, 1, F)
    mk = pallas_matmul(m, params["Wkc"]).reshape(bs, 1, F)
    # NOTE: Wvv / Wvc (xv, mvc) are computed in the PyTorch forward but never
    # consumed, so they are skipped here; the output is identical.

    nodes = jnp.concatenate([x, x_ori], axis=2).reshape(bs * N, 2 * F)
    pq = pallas_matmul(nodes, params["Wqv"]).reshape(bs, N, F)
    pk = pallas_matmul(nodes, params["Wkv"]).reshape(bs, N, F)

    waq, wak = params["Wa"][:F], params["Wa"][F:]
    wu_x, wu_n = params["Wu"][:F], params["Wu"][F:]
    return qdrgat_attention(pq, pk, mq, mk, waq, wak, adj, x, wu_x, wu_n,
                            alpha=alpha)


# ---------------------------------------------------------------------------
# Pure-JAX reference (direct transcription of the PyTorch forward, eval mode)
# ---------------------------------------------------------------------------
def qdrgat_reference(params, x_ori, x, adj, c, *, alpha):
    bs, N, F = x.shape
    h = c @ params["Wfc"]
    m = jnp.where(h > 0, h, jnp.exp(h) - 1.0) @ params["Wdc"]
    nodes = jnp.concatenate([x, x_ori], axis=2)
    xq = (nodes @ params["Wqv"]) * (m @ params["Wqc"])[:, None, :]
    xk = (nodes @ params["Wkv"]) * (m @ params["Wkc"])[:, None, :]
    xq_rep = jnp.repeat(xq, N, axis=1)            # repeat_interleave(N, dim=1)
    xk_rep = jnp.tile(xk, (1, N, 1))              # repeat(1, N, 1)
    xqk = jnp.concatenate([xq_rep, xk_rep], axis=2).reshape(bs, N, N, 2 * F)
    scores = xqk @ params["Wa"]
    scores = jnp.where(scores > 0, scores, alpha * scores)
    scores = jnp.sum(scores * adj, axis=3)
    adj_sum = jnp.sum(adj, axis=3)
    attention = jnp.where(adj_sum > 0, scores, -9.0e15)
    attention = jax.nn.softmax(attention, axis=2)
    new_x = attention @ x
    return jnp.concatenate([x, new_x], axis=2) @ params["Wu"]


# ---------------------------------------------------------------------------
# Parameter init mirroring nn.init.xavier_uniform_(..., gain=1.414)
# ---------------------------------------------------------------------------
def _xavier_uniform(key, shape, gain=1.414):
    fan_in, fan_out = shape
    limit = gain * math.sqrt(6.0 / (fan_in + fan_out))
    return jax.random.uniform(key, shape, minval=-limit, maxval=limit,
                              dtype=jnp.float32)


def init_qdrgat_params(key, in_features, out_features, num_relations):
    names_shapes = [
        ("Wfc", (in_features, in_features)),
        ("Wdc", (in_features, in_features)),
        ("Wqv", (2 * in_features, in_features)),
        ("Wkv", (2 * in_features, in_features)),
        ("Wvv", (2 * in_features, in_features)),   # dead in forward
        ("Wqc", (in_features, in_features)),
        ("Wkc", (in_features, in_features)),
        ("Wvc", (in_features, in_features)),       # dead in forward
        ("Wa", (2 * in_features, num_relations)),
        ("Wu", (2 * in_features, out_features)),
    ]
    keys = jax.random.split(key, len(names_shapes))
    return {name: _xavier_uniform(k, shape)
            for k, (name, shape) in zip(keys, names_shapes)}


if __name__ == "__main__":
    BS, N, F_IN, F_OUT, R = 2, 16, 32, 32, 4
    ALPHA = 0.2          # LeakyReLU negative slope; dropout=0 (eval mode)

    key = jax.random.PRNGKey(0)
    k_params, k_x, k_xo, k_adj, k_c = jax.random.split(key, 5)

    params = init_qdrgat_params(k_params, F_IN, F_OUT, R)
    x = 0.5 * jax.random.normal(k_x, (BS, N, F_IN), dtype=jnp.float32)
    x_ori = 0.5 * jax.random.normal(k_xo, (BS, N, F_IN), dtype=jnp.float32)
    adj = (jax.random.uniform(k_adj, (BS, N, N, R)) < 0.5).astype(jnp.float32)
    c = 0.5 * jax.random.normal(k_c, (BS, F_IN), dtype=jnp.float32)

    fwd = jax.jit(functools.partial(qdrgat_forward, alpha=ALPHA))
    out = jax.block_until_ready(fwd(params, x_ori, x, adj, c))

    ref = qdrgat_reference(params, x_ori, x, adj, c, alpha=ALPHA)
    assert out.shape == (BS, N, F_OUT), out.shape
    max_err = float(jnp.max(jnp.abs(out - ref)))
    assert jnp.allclose(out, ref, atol=5e-3, rtol=5e-3), max_err

    print("KERNEL_OK")
</pallas_src>

<mosaic_0001>
module attributes {stable_mosaic.version = 11 : i64} {
  func.func @_matmul_kernel(%arg0: i32, %arg1: i32, %arg2: i32, %arg3: memref<8x128xf32, #tpu.memory_space<vmem>>, %arg4: memref<128x128xf32, #tpu.memory_space<vmem>>, %arg5: memref<8x128xf32, #tpu.memory_space<vmem>>, %arg6: memref<8x128xf32, #tpu.memory_space<vmem>>) attributes {dimension_semantics = [#tpu.dimension_semantics<parallel>, #tpu.dimension_semantics<parallel>, #tpu.dimension_semantics<arbitrary>], iteration_bounds = array<i64: 1, 1, 1>, scalar_prefetch = 0 : i64, scratch_operands = 1 : i64, tpu.core_type = #tpu.core_type<tc>, window_params = [{transform_indices = @transform_0, window_bounds = array<i64: 8, 128>}, {transform_indices = @transform_1, window_bounds = array<i64: 128, 128>}, {transform_indices = @transform_2, window_bounds = array<i64: 8, 128>}]} {
    %c0_i32 = arith.constant 0 : i32
    %0 = arith.cmpi eq, %arg2, %c0_i32 : i32
    %1 = arith.extui %0 : i1 to i32
    %c0_i32_0 = arith.constant 0 : i32
    %2 = arith.cmpi ne, %1, %c0_i32_0 : i32
    scf.if %2 {
      %cst_10 = arith.constant 0.000000e+00 : f32
      %12 = vector.broadcast %cst_10 : f32 to vector<8x128xf32>
      %c0_11 = arith.constant 0 : index
      %c0_12 = arith.constant 0 : index
      %13 = vector.load %arg6[%c0_11, %c0_12] : memref<8x128xf32, #tpu.memory_space<vmem>>, vector<8x128xf32>
      tpu.vector_store %arg6[%c0_11, %c0_12], %12 {strides = array<i32>} : memref<8x128xf32, #tpu.memory_space<vmem>>, vector<8x128xf32>,
    } else {
    }
    %c0 = arith.constant 0 : index
    %c0_1 = arith.constant 0 : index
    %3 = vector.load %arg6[%c0, %c0_1] : memref<8x128xf32, #tpu.memory_space<vmem>>, vector<8x128xf32>
    %c0_2 = arith.constant 0 : index
    %c0_3 = arith.constant 0 : index
    %4 = vector.load %arg3[%c0_2, %c0_3] : memref<8x128xf32, #tpu.memory_space<vmem>>, vector<8x128xf32>
    %c0_4 = arith.constant 0 : index
    %c0_5 = arith.constant 0 : index
    %5 = vector.load %arg4[%c0_4, %c0_5] : memref<128x128xf32, #tpu.memory_space<vmem>>, vector<128x128xf32>
    %cst = arith.constant dense<0.000000e+00> : vector<8x128xf32>
    %6 = tpu.matmul %4, %5, %cst {dimension_numbers = #tpu.dot_dimension_numbers<[1], [0], [0], [1], [0, 0, 1, 1], [], []>, precision = #tpu.contract_precision<fp32>} : vector<8x128xf32>, vector<128x128xf32>, vector<8x128xf32> -> vector<8x128xf32>
    %7 = arith.addf %3, %6 : vector<8x128xf32>
    %c0_6 = arith.constant 0 : index
    %c0_7 = arith.constant 0 : index
    %8 = vector.load %arg6[%c0_6, %c0_7] : memref<8x128xf32, #tpu.memory_space<vmem>>, vector<8x128xf32>
    tpu.vector_store %arg6[%c0_6, %c0_7], %7 {strides = array<i32>} : memref<8x128xf32, #tpu.memory_space<vmem>>, vector<8x128xf32>,
    %c0_i32_8 = arith.constant 0 : i32
    %9 = arith.cmpi eq, %arg2, %c0_i32_8 : i32
    %10 = arith.extui %9 : i1 to i32
    %c0_i32_9 = arith.constant 0 : i32
    %11 = arith.cmpi ne, %10, %c0_i32_9 : i32
    scf.if %11 {
      %c0_10 = arith.constant 0 : index
      %c0_11 = arith.constant 0 : index
      %12 = vector.load %arg6[%c0_10, %c0_11] : memref<8x128xf32, #tpu.memory_space<vmem>>, vector<8x128xf32>
      %cst_12 = arith.constant 0.000000e+00 : f32
      %13 = vector.broadcast %cst_12 : f32 to vector<8x128xf32>
      %14 = arith.cmpf ogt, %12, %13 : vector<8x128xf32>
      %15 = math.exp %12 : vector<8x128xf32>
      %cst_13 = arith.constant 1.000000e+00 : f32
      %16 = vector.broadcast %cst_13 : f32 to vector<8x128xf32>
      %17 = arith.subf %15, %16 : vector<8x128xf32>
      %18 = arith.select %14, %12, %17 : vector<8x128xi1>, vector<8x128xf32>
      %c0_14 = arith.constant 0 : index
      %c0_15 = arith.constant 0 : index
      %19 = vector.load %arg5[%c0_14, %c0_15] : memref<8x128xf32, #tpu.memory_space<vmem>>, vector<8x128xf32>
      tpu.vector_store %arg5[%c0_14, %c0_15], %18 {strides = array<i32>} : memref<8x128xf32, #tpu.memory_space<vmem>>, vector<8x128xf32>,
    } else {
    }
    return
  }
  func.func @transform_0(%arg0: i32, %arg1: i32, %arg2: i32) -> (i32, i32) {
    %c0_i32 = arith.constant 0 : i32
    return %arg0, %arg2 : i32, i32
  }
  func.func @transform_1(%arg0: i32, %arg1: i32, %arg2: i32) -> (i32, i32) {
    %c0_i32 = arith.constant 0 : i32
    return %arg2, %arg1 : i32, i32
  }
  func.func @transform_2(%arg0: i32, %arg1: i32, %arg2: i32) -> (i32, i32) {
    %c0_i32 = arith.constant 0 : i32
    return %arg0, %arg1 : i32, i32
  }
}

module attributes {stable_mosaic.version = 11 : i64} {
  func.func @_matmul_kernel(%arg0: i32, %arg1: i32, %arg2: i32, %arg3: memref<8x128xf32, #tpu.memory_space<vmem>>, %arg4: memref<128x128xf32, #tpu.memory_space<vmem>>, %arg5: memref<8x128xf32, #tpu.memory_space<vmem>>, %arg6: memref<8x128xf32, #tpu.memory_space<vmem>>) attributes {dimension_semantics = [#tpu.dimension_semantics<parallel>, #tpu.dimension_semantics<parallel>, #tpu.dimension_semantics<arbitrary>], iteration_bounds = array<i64: 1, 1, 1>, scalar_prefetch = 0 : i64, scratch_operands = 1 : i64, tpu.core_type = #tpu.core_type<tc>, window_params = [{transform_indices = @transform_0, window_bounds = array<i64: 8, 128>}, {transform_indices = @transform_1, window_bounds = array<i64: 128, 128>}, {transform_indices = @transform_2, window_bounds = array<i64: 8, 128>}]} {
    %c0_i32 = arith.constant 0 : i32
    %0 = arith.cmpi eq, %arg2, %c0_i32 : i32
    %1 = arith.extui %0 : i1 to i32
    %c0_i32_0 = arith.constant 0 : i32
    %2 = arith.cmpi ne, %1, %c0_i32_0 : i32
    scf.if %2 {
      %cst_10 = arith.constant 0.000000e+00 : f32
      %12 = vector.broadcast %cst_10 : f32 to vector<8x128xf32>
      %c0_11 = arith.constant 0 : index
      %c0_12 = arith.constant 0 : index
      %13 = vector.load %arg6[%c0_11, %c0_12] : memref<8x128xf32, #tpu.memory_space<vmem>>, vector<8x128xf32>
      tpu.vector_store %arg6[%c0_11, %c0_12], %12 {strides = array<i32>} : memref<8x128xf32, #tpu.memory_space<vmem>>, vector<8x128xf32>,
    } else {
    }
    %c0 = arith.constant 0 : index
    %c0_1 = arith.constant 0 : index
    %3 = vector.load %arg6[%c0, %c0_1] : memref<8x128xf32, #tpu.memory_space<vmem>>, vector<8x128xf32>
    %c0_2 = arith.constant 0 : index
    %c0_3 = arith.constant 0 : index
    %4 = vector.load %arg3[%c0_2, %c0_3] : memref<8x128xf32, #tpu.memory_space<vmem>>, vector<8x128xf32>
    %c0_4 = arith.constant 0 : index
    %c0_5 = arith.constant 0 : index
    %5 = vector.load %arg4[%c0_4, %c0_5] : memref<128x128xf32, #tpu.memory_space<vmem>>, vector<128x128xf32>
    %cst = arith.constant dense<0.000000e+00> : vector<8x128xf32>
    %6 = tpu.matmul %4, %5, %cst {dimension_numbers = #tpu.dot_dimension_numbers<[1], [0], [0], [1], [0, 0, 1, 1], [], []>, precision = #tpu.contract_precision<fp32>} : vector<8x128xf32>, vector<128x128xf32>, vector<8x128xf32> -> vector<8x128xf32>
    %7 = arith.addf %3, %6 : vector<8x128xf32>
    %c0_6 = arith.constant 0 : index
    %c0_7 = arith.constant 0 : index
    %8 = vector.load %arg6[%c0_6, %c0_7] : memref<8x128xf32, #tpu.memory_space<vmem>>, vector<8x128xf32>
    tpu.vector_store %arg6[%c0_6, %c0_7], %7 {strides = array<i32>} : memref<8x128xf32, #tpu.memory_space<vmem>>, vector<8x128xf32>,
    %c0_i32_8 = arith.constant 0 : i32
    %9 = arith.cmpi eq, %arg2, %c0_i32_8 : i32
    %10 = arith.extui %9 : i1 to i32
    %c0_i32_9 = arith.constant 0 : i32
    %11 = arith.cmpi ne, %10, %c0_i32_9 : i32
    scf.if %11 {
      %c0_10 = arith.constant 0 : index
      %c0_11 = arith.constant 0 : index
      %12 = vector.load %arg6[%c0_10, %c0_11] : memref<8x128xf32, #tpu.memory_space<vmem>>, vector<8x128xf32>
      %c0_12 = arith.constant 0 : index
      %c0_13 = arith.constant 0 : index
      %13 = vector.load %arg5[%c0_12, %c0_13] : memref<8x128xf32, #tpu.memory_space<vmem>>, vector<8x128xf32>
      tpu.vector_store %arg5[%c0_12, %c0_13], %12 {strides = array<i32>} : memref<8x128xf32, #tpu.memory_space<vmem>>, vector<8x128xf32>,
    } else {
    }
    return
  }
  func.func @transform_0(%arg0: i32, %arg1: i32, %arg2: i32) -> (i32, i32) {
    %c0_i32 = arith.constant 0 : i32
    return %arg0, %arg2 : i32, i32
  }
  func.func @transform_1(%arg0: i32, %arg1: i32, %arg2: i32) -> (i32, i32) {
    %c0_i32 = arith.constant 0 : i32
    return %arg2, %arg1 : i32, i32
  }
  func.func @transform_2(%arg0: i32, %arg1: i32, %arg2: i32) -> (i32, i32) {
    %c0_i32 = arith.constant 0 : i32
    return %arg0, %arg1 : i32, i32
  }
}

module attributes {stable_mosaic.version = 11 : i64} {
  func.func @_matmul_kernel(%arg0: i32, %arg1: i32, %arg2: i32, %arg3: memref<32x128xf32, #tpu.memory_space<vmem>>, %arg4: memref<128x128xf32, #tpu.memory_space<vmem>>, %arg5: memref<32x128xf32, #tpu.memory_space<vmem>>, %arg6: memref<32x128xf32, #tpu.memory_space<vmem>>) attributes {dimension_semantics = [#tpu.dimension_semantics<parallel>, #tpu.dimension_semantics<parallel>, #tpu.dimension_semantics<arbitrary>], iteration_bounds = array<i64: 1, 1, 1>, scalar_prefetch = 0 : i64, scratch_operands = 1 : i64, tpu.core_type = #tpu.core_type<tc>, window_params = [{transform_indices = @transform_0, window_bounds = array<i64: 32, 128>}, {transform_indices = @transform_1, window_bounds = array<i64: 128, 128>}, {transform_indices = @transform_2, window_bounds = array<i64: 32, 128>}]} {
    %c0_i32 = arith.constant 0 : i32
    %0 = arith.cmpi eq, %arg2, %c0_i32 : i32
    %1 = arith.extui %0 : i1 to i32
    %c0_i32_0 = arith.constant 0 : i32
    %2 = arith.cmpi ne, %1, %c0_i32_0 : i32
    scf.if %2 {
      %cst_10 = arith.constant 0.000000e+00 : f32
      %12 = vector.broadcast %cst_10 : f32 to vector<32x128xf32>
      %c0_11 = arith.constant 0 : index
      %c0_12 = arith.constant 0 : index
      %13 = vector.load %arg6[%c0_11, %c0_12] : memref<32x128xf32, #tpu.memory_space<vmem>>, vector<32x128xf32>
      tpu.vector_store %arg6[%c0_11, %c0_12], %12 {strides = array<i32>} : memref<32x128xf32, #tpu.memory_space<vmem>>, vector<32x128xf32>,
    } else {
    }
    %c0 = arith.constant 0 : index
    %c0_1 = arith.constant 0 : index
    %3 = vector.load %arg6[%c0, %c0_1] : memref<32x128xf32, #tpu.memory_space<vmem>>, vector<32x128xf32>
    %c0_2 = arith.constant 0 : index
    %c0_3 = arith.constant 0 : index
    %4 = vector.load %arg3[%c0_2, %c0_3] : memref<32x128xf32, #tpu.memory_space<vmem>>, vector<32x128xf32>
    %c0_4 = arith.constant 0 : index
    %c0_5 = arith.constant 0 : index
    %5 = vector.load %arg4[%c0_4, %c0_5] : memref<128x128xf32, #tpu.memory_space<vmem>>, vector<128x128xf32>
    %cst = arith.constant dense<0.000000e+00> : vector<32x128xf32>
    %6 = tpu.matmul %4, %5, %cst {dimension_numbers = #tpu.dot_dimension_numbers<[1], [0], [0], [1], [0, 0, 1, 1], [], []>, precision = #tpu.contract_precision<fp32>} : vector<32x128xf32>, vector<128x128xf32>, vector<32x128xf32> -> vector<32x128xf32>
    %7 = arith.addf %3, %6 : vector<32x128xf32>
    %c0_6 = arith.constant 0 : index
    %c0_7 = arith.constant 0 : index
    %8 = vector.load %arg6[%c0_6, %c0_7] : memref<32x128xf32, #tpu.memory_space<vmem>>, vector<32x128xf32>
    tpu.vector_store %arg6[%c0_6, %c0_7], %7 {strides = array<i32>} : memref<32x128xf32, #tpu.memory_space<vmem>>, vector<32x128xf32>,
    %c0_i32_8 = arith.constant 0 : i32
    %9 = arith.cmpi eq, %arg2, %c0_i32_8 : i32
    %10 = arith.extui %9 : i1 to i32
    %c0_i32_9 = arith.constant 0 : i32
    %11 = arith.cmpi ne, %10, %c0_i32_9 : i32
    scf.if %11 {
      %c0_10 = arith.constant 0 : index
      %c0_11 = arith.constant 0 : index
      %12 = vector.load %arg6[%c0_10, %c0_11] : memref<32x128xf32, #tpu.memory_space<vmem>>, vector<32x128xf32>
      %c0_12 = arith.constant 0 : index
      %c0_13 = arith.constant 0 : index
      %13 = vector.load %arg5[%c0_12, %c0_13] : memref<32x128xf32, #tpu.memory_space<vmem>>, vector<32x128xf32>
      tpu.vector_store %arg5[%c0_12, %c0_13], %12 {strides = array<i32>} : memref<32x128xf32, #tpu.memory_space<vmem>>, vector<32x128xf32>,
    } else {
    }
    return
  }
  func.func @transform_0(%arg0: i32, %arg1: i32, %arg2: i32) -> (i32, i32) {
    %c0_i32 = arith.constant 0 : i32
    return %arg0, %arg2 : i32, i32
  }
  func.func @transform_1(%arg0: i32, %arg1: i32, %arg2: i32) -> (i32, i32) {
    %c0_i32 = arith.constant 0 : i32
    return %arg2, %arg1 : i32, i32
  }
  func.func @transform_2(%arg0: i32, %arg1: i32, %arg2: i32) -> (i32, i32) {
    %c0_i32 = arith.constant 0 : i32
    return %arg0, %arg1 : i32, i32
  }
}

module attributes {stable_mosaic.version = 11 : i64} {
  func.func @_attention_kernel(%arg0: i32, %arg1: memref<1x16x32xf32, #tpu.memory_space<vmem>>, %arg2: memref<1x16x32xf32, #tpu.memory_space<vmem>>, %arg3: memref<1x1x32xf32, #tpu.memory_space<vmem>>, %arg4: memref<1x1x32xf32, #tpu.memory_space<vmem>>, %arg5: memref<32x4xf32, #tpu.memory_space<vmem>>, %arg6: memref<32x4xf32, #tpu.memory_space<vmem>>, %arg7: memref<1x16x16x4xf32, #tpu.memory_space<vmem>>, %arg8: memref<1x16x32xf32, #tpu.memory_space<vmem>>, %arg9: memref<32x32xf32, #tpu.memory_space<vmem>>, %arg10: memref<32x32xf32, #tpu.memory_space<vmem>>, %arg11: memref<1x16x32xf32, #tpu.memory_space<vmem>>) attributes {dimension_semantics = [#tpu.dimension_semantics<parallel>], iteration_bounds = array<i64: 2>, scalar_prefetch = 0 : i64, scratch_operands = 0 : i64, tpu.core_type = #tpu.core_type<tc>, window_params = [{transform_indices = @transform_0, window_bounds = array<i64: 1, 16, 32>}, {transform_indices = @transform_1, window_bounds = array<i64: 1, 16, 32>}, {transform_indices = @transform_2, window_bounds = array<i64: 1, 1, 32>}, {transform_indices = @transform_3, window_bounds = array<i64: 1, 1, 32>}, {pipeline_mode = #tpu.pipeline_mode<synchronous>, transform_indices = @transform_4, window_bounds = array<i64: 32, 4>}, {pipeline_mode = #tpu.pipeline_mode<synchronous>, transform_indices = @transform_5, window_bounds = array<i64: 32, 4>}, {transform_indices = @transform_6, window_bounds = array<i64: 1, 16, 16, 4>}, {transform_indices = @transform_7, window_bounds = array<i64: 1, 16, 32>}, {pipeline_mode = #tpu.pipeline_mode<synchronous>, transform_indices = @transform_8, window_bounds = array<i64: 32, 32>}, {pipeline_mode = #tpu.pipeline_mode<synchronous>, transform_indices = @transform_9, window_bounds = array<i64: 32, 32>}, {transform_indices = @transform_10, window_bounds = array<i64: 1, 16, 32>}]} {
    %c0 = arith.constant 0 : index
    %c0_0 = arith.constant 0 : index
    %c0_1 = arith.constant 0 : index
    %0 = vector.load %arg1[%c0, %c0_0, %c0_1] : memref<1x16x32xf32, #tpu.memory_space<vmem>>, vector<1x16x32xf32>
    %1 = vector.shape_cast %0 : vector<1x16x32xf32> to vector<16x32xf32>
    %c0_2 = arith.constant 0 : index
    %c0_3 = arith.constant 0 : index
    %c0_4 = arith.constant 0 : index
    %2 = vector.load %arg3[%c0_2, %c0_3, %c0_4] : memref<1x1x32xf32, #tpu.memory_space<vmem>>, vector<1x1x32xf32>
    %3 = vector.shape_cast %2 : vector<1x1x32xf32> to vector<1x32xf32>
    %4 = vector.broadcast %3 : vector<1x32xf32> to vector<16x32xf32>
    %5 = arith.mulf %1, %4 : vector<16x32xf32>
    %c0_5 = arith.constant 0 : index
    %c0_6 = arith.constant 0 : index
    %c0_7 = arith.constant 0 : index
    %6 = vector.load %arg2[%c0_5, %c0_6, %c0_7] : memref<1x16x32xf32, #tpu.memory_space<vmem>>, vector<1x16x32xf32>
    %7 = vector.shape_cast %6 : vector<1x16x32xf32> to vector<16x32xf32>
    %c0_8 = arith.constant 0 : index
    %c0_9 = arith.constant 0 : index
    %c0_10 = arith.constant 0 : index
    %8 = vector.load %arg4[%c0_8, %c0_9, %c0_10] : memref<1x1x32xf32, #tpu.memory_space<vmem>>, vector<1x1x32xf32>
    %9 = vector.shape_cast %8 : vector<1x1x32xf32> to vector<1x32xf32>
    %10 = vector.broadcast %9 : vector<1x32xf32> to vector<16x32xf32>
    %11 = arith.mulf %7, %10 : vector<16x32xf32>
    %c0_11 = arith.constant 0 : index
    %c0_12 = arith.constant 0 : index
    %12 = vector.load %arg5[%c0_11, %c0_12] : memref<32x4xf32, #tpu.memory_space<vmem>>, vector<32x4xf32>
    %cst = arith.constant dense<0.000000e+00> : vector<16x4xf32>
    %13 = tpu.matmul %5, %12, %cst {dimension_numbers = #tpu.dot_dimension_numbers<[1], [0], [0], [1], [0, 0, 1, 1], [], []>, precision = #tpu.contract_precision<fp32>} : vector<16x32xf32>, vector<32x4xf32>, vector<16x4xf32> -> vector<16x4xf32>
    %c0_13 = arith.constant 0 : index
    %c0_14 = arith.constant 0 : index
    %14 = vector.load %arg6[%c0_13, %c0_14] : memref<32x4xf32, #tpu.memory_space<vmem>>, vector<32x4xf32>
    %cst_15 = arith.constant dense<0.000000e+00> : vector<16x4xf32>
    %15 = tpu.matmul %11, %14, %cst_15 {dimension_numbers = #tpu.dot_dimension_numbers<[1], [0], [0], [1], [0, 0, 1, 1], [], []>, precision = #tpu.contract_precision<fp32>} : vector<16x32xf32>, vector<32x4xf32>, vector<16x4xf32> -> vector<16x4xf32>
    %c0_16 = arith.constant 0 : index
    %c0_17 = arith.constant 0 : index
    %c0_18 = arith.constant 0 : index
    %c0_19 = arith.constant 0 : index
    %16 = vector.load %arg7[%c0_16, %c0_17, %c0_18, %c0_19] : memref<1x16x16x4xf32, #tpu.memory_space<vmem>>, vector<1x16x16x4xf32>
    %17 = vector.shape_cast %16 : vector<1x16x16x4xf32> to vector<16x16x4xf32>
    %18 = vector.shape_cast %13 : vector<16x4xf32> to vector<16x1x4xf32>
    %19 = vector.shape_cast %15 : vector<16x4xf32> to vector<1x16x4xf32>
    %20 = vector.broadcast %18 : vector<16x1x4xf32> to vector<16x16x4xf32>
    %21 = vector.broadcast %19 : vector<1x16x4xf32> to vector<16x16x4xf32>
    %22 = arith.addf %20, %21 : vector<16x16x4xf32>
    %cst_20 = arith.constant 0.000000e+00 : f32
    %23 = vector.broadcast %cst_20 : f32 to vector<16x16x4xf32>
    %24 = arith.cmpf ogt, %22, %23 : vector<16x16x4xf32>
    %cst_21 = arith.constant 2.000000e-01 : f32
    %25 = vector.broadcast %cst_21 : f32 to vector<16x16x4xf32>
    %26 = arith.mulf %25, %22 : vector<16x16x4xf32>
    %27 = arith.select %24, %22, %26 : vector<16x16x4xi1>, vector<16x16x4xf32>
    %28 = arith.mulf %27, %17 : vector<16x16x4xf32>
    %cst_22 = arith.constant dense<0.000000e+00> : vector<16x16xf32>
    %29 = vector.multi_reduction <add>, %28, %cst_22 [2] : vector<16x16x4xf32> to vector<16x16xf32>
    %cst_23 = arith.constant dense<0.000000e+00> : vector<16x16xf32>
    %30 = vector.multi_reduction <add>, %17, %cst_23 [2] : vector<16x16x4xf32> to vector<16x16xf32>
    %cst_24 = arith.constant 0.000000e+00 : f32
    %31 = vector.broadcast %cst_24 : f32 to vector<16x16xf32>
    %32 = arith.cmpf ogt, %30, %31 : vector<16x16xf32>
    %cst_25 = arith.constant -9.000000e+15 : f32
    %33 = vector.broadcast %cst_25 : f32 to vector<16x16xf32>
    %34 = arith.select %32, %29, %33 : vector<16x16xi1>, vector<16x16xf32>
    %cst_26 = arith.constant dense<0xFF800000> : vector<16xf32>
    %35 = vector.multi_reduction <maximumf>, %34, %cst_26 [1] : vector<16x16xf32> to vector<16xf32>
    %36 = vector.shape_cast %35 : vector<16xf32> to vector<16x1xf32>
    %37 = vector.broadcast %36 : vector<16x1xf32> to vector<16x16xf32>
    %38 = arith.subf %34, %37 : vector<16x16xf32>
    %39 = math.exp %38 : vector<16x16xf32>
    %cst_27 = arith.constant dense<0.000000e+00> : vector<16xf32>
    %40 = vector.multi_reduction <add>, %39, %cst_27 [1] : vector<16x16xf32> to vector<16xf32>
    %41 = vector.shape_cast %40 : vector<16xf32> to vector<16x1xf32>
    %42 = vector.broadcast %41 : vector<16x1xf32> to vector<16x16xf32>
    %43 = arith.divf %39, %42 : vector<16x16xf32>
    %c0_28 = arith.constant 0 : index
    %c0_29 = arith.constant 0 : index
    %c0_30 = arith.constant 0 : index
    %44 = vector.load %arg8[%c0_28, %c0_29, %c0_30] : memref<1x16x32xf32, #tpu.memory_space<vmem>>, vector<1x16x32xf32>
    %45 = vector.shape_cast %44 : vector<1x16x32xf32> to vector<16x32xf32>
    %cst_31 = arith.constant dense<0.000000e+00> : vector<16x32xf32>
    %46 = tpu.matmul %43, %45, %cst_31 {dimension_numbers = #tpu.dot_dimension_numbers<[1], [0], [0], [1], [0, 0, 1, 1], [], []>, precision = #tpu.contract_precision<fp32>} : vector<16x16xf32>, vector<16x32xf32>, vector<16x32xf32> -> vector<16x32xf32>
    %c0_32 = arith.constant 0 : index
    %c0_33 = arith.constant 0 : index
    %47 = vector.load %arg9[%c0_32, %c0_33] : memref<32x32xf32, #tpu.memory_space<vmem>>, vector<32x32xf32>
    %cst_34 = arith.constant dense<0.000000e+00> : vector<16x32xf32>
    %48 = tpu.matmul %45, %47, %cst_34 {dimension_numbers = #tpu.dot_dimension_numbers<[1], [0], [0], [1], [0, 0, 1, 1], [], []>, precision = #tpu.contract_precision<fp32>} : vector<16x32xf32>, vector<32x32xf32>, vector<16x32xf32> -> vector<16x32xf32>
    %c0_35 = arith.constant 0 : index
    %c0_36 = arith.constant 0 : index
    %49 = vector.load %arg10[%c0_35, %c0_36] : memref<32x32xf32, #tpu.memory_space<vmem>>, vector<32x32xf32>
    %cst_37 = arith.constant dense<0.000000e+00> : vector<16x32xf32>
    %50 = tpu.matmul %46, %49, %cst_37 {dimension_numbers = #tpu.dot_dimension_numbers<[1], [0], [0], [1], [0, 0, 1, 1], [], []>, precision = #tpu.contract_precision<fp32>} : vector<16x32xf32>, vector<32x32xf32>, vector<16x32xf32> -> vector<16x32xf32>
    %51 = arith.addf %48, %50 : vector<16x32xf32>
    %c0_38 = arith.constant 0 : index
    %c0_39 = arith.constant 0 : index
    %c0_40 = arith.constant 0 : index
    %52 = vector.load %arg11[%c0_38, %c0_39, %c0_40] : memref<1x16x32xf32, #tpu.memory_space<vmem>>, vector<1x16x32xf32>
    %53 = vector.shape_cast %52 : vector<1x16x32xf32> to vector<16x32xf32>
    %54 = vector.shape_cast %51 : vector<16x32xf32> to vector<1x16x32xf32>
    tpu.vector_store %arg11[%c0_38, %c0_39, %c0_40], %54 {strides = array<i32>} : memref<1x16x32xf32, #tpu.memory_space<vmem>>, vector<1x16x32xf32>,
    return
  }
  func.func @transform_0(%arg0: i32) -> (i32, i32, i32) {
    %c0_i32 = arith.constant 0 : i32
    %c0_i32_0 = arith.constant 0 : i32
    %c0_i32_1 = arith.constant 0 : i32
    return %arg0, %c0_i32, %c0_i32_0 : i32, i32, i32
  }
  func.func @transform_1(%arg0: i32) -> (i32, i32, i32) {
    %c0_i32 = arith.constant 0 : i32
    %c0_i32_0 = arith.constant 0 : i32
    %c0_i32_1 = arith.constant 0 : i32
    return %arg0, %c0_i32, %c0_i32_0 : i32, i32, i32
  }
  func.func @transform_2(%arg0: i32) -> (i32, i32, i32) {
    %c0_i32 = arith.constant 0 : i32
    %c0_i32_0 = arith.constant 0 : i32
    %c0_i32_1 = arith.constant 0 : i32
    return %arg0, %c0_i32, %c0_i32_0 : i32, i32, i32
  }
  func.func @transform_3(%arg0: i32) -> (i32, i32, i32) {
    %c0_i32 = arith.constant 0 : i32
    %c0_i32_0 = arith.constant 0 : i32
    %c0_i32_1 = arith.constant 0 : i32
    return %arg0, %c0_i32, %c0_i32_0 : i32, i32, i32
  }
  func.func @transform_4(%arg0: i32) -> (i32, i32) {
    %c0_i32 = arith.constant 0 : i32
    %c0_i32_0 = arith.constant 0 : i32
    %c0_i32_1 = arith.constant 0 : i32
    return %c0_i32, %c0_i32_0 : i32, i32
  }
  func.func @transform_5(%arg0: i32) -> (i32, i32) {
    %c0_i32 = arith.constant 0 : i32
    %c0_i32_0 = arith.constant 0 : i32
    %c0_i32_1 = arith.constant 0 : i32
    return %c0_i32, %c0_i32_0 : i32, i32
  }
  func.func @transform_6(%arg0: i32) -> (i32, i32, i32, i32) {
    %c0_i32 = arith.constant 0 : i32
    %c0_i32_0 = arith.constant 0 : i32
    %c0_i32_1 = arith.constant 0 : i32
    %c0_i32_2 = arith.constant 0 : i32
    return %arg0, %c0_i32, %c0_i32_0, %c0_i32_1 : i32, i32, i32, i32
  }
  func.func @transform_7(%arg0: i32) -> (i32, i32, i32) {
    %c0_i32 = arith.constant 0 : i32
    %c0_i32_0 = arith.constant 0 : i32
    %c0_i32_1 = arith.constant 0 : i32
    return %arg0, %c0_i32, %c0_i32_0 : i32, i32, i32
  }
  func.func @transform_8(%arg0: i32) -> (i32, i32) {
    %c0_i32 = arith.constant 0 : i32
    %c0_i32_0 = arith.constant 0 : i32
    %c0_i32_1 = arith.constant 0 : i32
    return %c0_i32, %c0_i32_0 : i32, i32
  }
  func.func @transform_9(%arg0: i32) -> (i32, i32) {
    %c0_i32 = arith.constant 0 : i32
    %c0_i32_0 = arith.constant 0 : i32
    %c0_i32_1 = arith.constant 0 : i32
    return %c0_i32, %c0_i32_0 : i32, i32
  }
  func.func @transform_10(%arg0: i32) -> (i32, i32, i32) {
    %c0_i32 = arith.constant 0 : i32
    %c0_i32_0 = arith.constant 0 : i32
    %c0_i32_1 = arith.constant 0 : i32
    return %arg0, %c0_i32, %c0_i32_0 : i32, i32, i32
  }
}

</mosaic_0001>

<llo_original>
// kernel: qdrgat_forward.8
$region0: #{qdrgat_forward.8}
  #allocation0 [shape = 'u32[]', space=smem, size = 0x4, offset = 0x4, fixed_abs, tag = 'smem constant byte address 0x4 - core index']
  #allocation1 [shape = 'u32[144,128]{1,0:T(1,128)}', space=vmem, size = 0x12000, scoped, tag = 'internal scratch']
  #allocation2 [shape = 'f32[8,128]{1,0:T(8,128)}', space=vmem, size = 0x1000, scoped, tag = 'scratch operand']
  %s0 = inlined_call_operand.vmem [shape: f32[8,128], index: 0, kind: input, shape index: {}]
  %s1 = inlined_call_operand.vmem [shape: f32[128,128], index: 1, kind: input, shape index: {}]
  %s2 = inlined_call_operand.vmem [shape: f32[8,128], index: 2, kind: output, shape index: {}]
  %s3 = sld [smem:[#allocation0]]
  $region26: #{qdrgat_forward.8} parent=0
    _
  %s5 = ssub.s32 1, %s3
  %s6 = scalar_select 0, %s5, %s3
  // Predicated region
  $region2: #{qdrgat_forward.8} parent=0 // pred_check
    _
  $region3: #{qdrgat_forward.8} parent=0 // pred_check_branch
    %8 = sbr.rel (0) target = $region5
  $region4: #{qdrgat_forward.8} parent=0 // pred_region
    _
  $region5: #{qdrgat_forward.8} parent=0 // pred_fallthru
    _
  // Predicated region
  $region6: #{qdrgat_forward.8} parent=0 // pred_check
    _
  $region7: #{qdrgat_forward.8} parent=0 // pred_check_branch
    %10 = sbr.rel (0) target = $region9
  $region8: #{qdrgat_forward.8} parent=0 // pred_region
    _
  $region9: #{qdrgat_forward.8} parent=0 // pred_fallthru
    _
  %p11 = scmp.eq.s32.totalorder 0, 0
  // Predicated region
  $region10: #{qdrgat_forward.8} parent=0 // pred_check
    %p12 = pneg %p11
  $region11: #{qdrgat_forward.8} parent=0 // pred_check_branch
    %14 = sbr.rel (%p12) target = $region13
  $region12: #{qdrgat_forward.8} parent=0 // pred_region
    %15 = vst [vmem:[#allocation2] sm:$0xff] 0.0
  $region13: #{qdrgat_forward.8} parent=0 // pred_fallthru
    _
  %v16 = vld [vmem:[#allocation2] sm:$0xff]
  %v17 = vld [vmem:[%s0] sm:$0xff]
  %v18 = vld [vmem:[%s1] sm:$0xff]
  %v19 = vld [vmem:[%s1 + $0x8] sm:$0xff]
  %v20 = vld [vmem:[%s1 + $0x10] sm:$0xff]
  %v21 = vld [vmem:[%s1 + $0x18] sm:$0xff]
  %v22 = vld [vmem:[%s1 + $0x20] sm:$0xff]
  %v23 = vld [vmem:[%s1 + $0x28] sm:$0xff]
  %v24 = vld [vmem:[%s1 + $0x30] sm:$0xff]
  %v25 = vld [vmem:[%s1 + $0x38] sm:$0xff]
  %v26 = vld [vmem:[%s1 + $0x40] sm:$0xff]
  %v27 = vld [vmem:[%s1 + $0x48] sm:$0xff]
  %v28 = vld [vmem:[%s1 + $0x50] sm:$0xff]
  %v29 = vld [vmem:[%s1 + $0x58] sm:$0xff]
  %v30 = vld [vmem:[%s1 + $0x60] sm:$0xff]
  %v31 = vld [vmem:[%s1 + $0x68] sm:$0xff]
  %v32 = vld [vmem:[%s1 + $0x70] sm:$0xff]
  %v33 = vld [vmem:[%s1 + $0x78] sm:$0xff]
  %34 = vmatprep.subr.mxu0 0.0
  %v35 = vand.u32 %v18, 4294901760
  %36 = vmatpush1.msra.mxu0 %v35
  %37 = vmatprep.subr.mxu0 0.0
  %v38 = vand.u32 %v19, 4294901760
  %39 = vmatpush1.msra.mxu0 %v38
  %40 = vmatprep.subr.mxu0 0.0
  %v41 = vand.u32 %v20, 4294901760
  %42 = vmatpush1.msra.mxu0 %v41
  %43 = vmatprep.subr.mxu0 0.0
  %v44 = vand.u32 %v21, 4294901760
  %45 = vmatpush1.msra.mxu0 %v44
  %46 = vmatprep.subr.mxu0 0.0
  %v47 = vand.u32 %v22, 4294901760
  %48 = vmatpush1.msra.mxu0 %v47
  %49 = vmatprep.subr.mxu0 0.0
  %v50 = vand.u32 %v23, 4294901760
  %51 = vmatpush1.msra.mxu0 %v50
  %52 = vmatprep.subr.mxu0 0.0
  %v53 = vand.u32 %v24, 4294901760
  %54 = vmatpush1.msra.mxu0 %v53
  %55 = vmatprep.subr.mxu0 0.0
  %v56 = vand.u32 %v25, 4294901760
  %57 = vmatpush1.msra.mxu0 %v56
  %58 = vmatprep.subr.mxu0 0.0
  %v59 = vand.u32 %v26, 4294901760
  %60 = vmatpush1.msra.mxu0 %v59
  %61 = vmatprep.subr.mxu0 0.0
  %v62 = vand.u32 %v27, 4294901760
  %63 = vmatpush1.msra.mxu0 %v62
  %64 = vmatprep.subr.mxu0 0.0
  %v65 = vand.u32 %v28, 4294901760
  %66 = vmatpush1.msra.mxu0 %v65
  %67 = vmatprep.subr.mxu0 0.0
  %v68 = vand.u32 %v29, 4294901760
  %69 = vmatpush1.msra.mxu0 %v68
  %70 = vmatprep.subr.mxu0 0.0
  %v71 = vand.u32 %v30, 4294901760
  %72 = vmatpush1.msra.mxu0 %v71
  %73 = vmatprep.subr.mxu0 0.0
  %v74 = vand.u32 %v31, 4294901760
  %75 = vmatpush1.msra.mxu0 %v74
  %76 = vmatprep.subr.mxu0 0.0
  %v77 = vand.u32 %v32, 4294901760
  %78 = vmatpush1.msra.mxu0 %v77
  %79 = vmatprep.subr.mxu0 0.0
  %v80 = vand.u32 %v33, 4294901760
  %81 = vmatpush1.msra.mxu0 %v80
  %82 = vmatprep.subr.mxu0 0.0
  %83 = vmatpush1.msra.mxu0 0.0
  %84 = vmatprep.subr.mxu0 0.0
  %85 = vmatpush1.msra.mxu0 0.0
  %86 = vmatprep.subr.mxu0 0.0
  %87 = vmatpush1.msra.mxu0 0.0
  %88 = vmatprep.subr.mxu0 0.0
  %89 = vmatpush1.msra.mxu0 0.0
  %90 = vmatprep.subr.mxu0 0.0
  %91 = vmatpush1.msra.mxu0 0.0
  %92 = vmatprep.subr.mxu0 0.0
  %93 = vmatpush1.msra.mxu0 0.0
  %94 = vmatprep.subr.mxu0 0.0
  %95 = vmatpush1.msra.mxu0 0.0
  %96 = vmatprep.subr.mxu0 0.0
  %97 = vmatpush1.msra.mxu0 0.0
  %98 = vmatprep.subr.mxu0 0.0
  %99 = vmatpush1.msra.mxu0 0.0
  %100 = vmatprep.subr.mxu0 0.0
  %101 = vmatpush1.msra.mxu0 0.0
  %102 = vmatprep.subr.mxu0 0.0
  %103 = vmatpush1.msra.mxu0 0.0
  %104 = vmatprep.subr.mxu0 0.0
  %105 = vmatpush1.msra.mxu0 0.0
  %106 = vmatprep.subr.mxu0 0.0
  %107 = vmatpush1.msra.mxu0 0.0
  %108 = vmatprep.subr.mxu0 0.0
  %109 = vmatpush1.msra.mxu0 0.0
  %110 = vmatprep.subr.mxu0 0.0
  %111 = vmatpush1.msra.mxu0 0.0
  %112 = vmatprep.subr.mxu0 0.0
  %113 = vmatpush1.msra.mxu0 0.0
  %114 = vmatprep.mubr.f32.mxu0 0.0
  %v115 = vand.u32 %v17, 4294901760
  %v116 = vsub.f32 %v17, %v115
  %v117 = vand.u32 %v116, 4294901760
  %v118 = vsub.f32 %v116, %v117
  %v119 = vand.u32 %v118, 4294901760
  %120 = vmatmul.mubr.f32.gmra.mrb[0].mxu0 %v119
  %v121 = vpop.f32.mrb[0].mxu0
  %v122 = vadd.f32 0.0, %v121
  %v123 = vpop.f32.mrb[0].mxu0
  %124 = vdwg.mxu0
  %125 = vmatprep.subr.mxu0 0.0
  %v126 = vand.u32 %v18, 4294901760
  %v127 = vsub.f32 %v18, %v126
  %v128 = vand.u32 %v127, 4294901760
  %v129 = vsub.f32 %v127, %v128
  %v130 = vand.u32 %v129, 4294901760
  %131 = vmatpush1.msra.mxu0 %v130
  %132 = vmatprep.subr.mxu0 0.0
  %v133 = vand.u32 %v19, 4294901760
  %v134 = vsub.f32 %v19, %v133
  %v135 = vand.u32 %v134, 4294901760
  %v136 = vsub.f32 %v134, %v135
  %v137 = vand.u32 %v136, 4294901760
  %138 = vmatpush1.msra.mxu0 %v137
  %139 = vmatprep.subr.mxu0 0.0
  %v140 = vand.u32 %v20, 4294901760
  %v141 = vsub.f32 %v20, %v140
  %v142 = vand.u32 %v141, 4294901760
  %v143 = vsub.f32 %v141, %v142
  %v144 = vand.u32 %v143, 4294901760
  %145 = vmatpush1.msra.mxu0 %v144
  %146 = vmatprep.subr.mxu0 0.0
  %v147 = vand.u32 %v21, 4294901760
  %v148 = vsub.f32 %v21, %v147
  %v149 = vand.u32 %v148, 4294901760
  %v150 = vsub.f32 %v148, %v149
  %v151 = vand.u32 %v150, 4294901760
  %152 = vmatpush1.msra.mxu0 %v151
  %153 = vmatprep.subr.mxu0 0.0
  %v154 = vand.u32 %v22, 4294901760
  %v155 = vsub.f32 %v22, %v154
  %v156 = vand.u32 %v155, 4294901760
  %v157 = vsub.f32 %v155, %v156
  %v158 = vand.u32 %v157, 4294901760
  %159 = vmatpush1.msra.mxu0 %v158
  %160 = vmatprep.subr.mxu0 0.0
  %v161 = vand.u32 %v23, 4294901760
  %v162 = vsub.f32 %v23, %v161
  %v163 = vand.u32 %v162, 4294901760
  %v164 = vsub.f32 %v162, %v163
  %v165 = vand.u32 %v164, 4294901760
  %166 = vmatpush1.msra.mxu0 %v165
  %167 = vmatprep.subr.mxu0 0.0
  %v168 = vand.u32 %v24, 4294901760
  %v169 = vsub.f32 %v24, %v168
  %v170 = vand.u32 %v169, 4294901760
  %v171 = vsub.f32 %v169, %v170
  %v172 = vand.u32 %v171, 4294901760
  %173 = vmatpush1.msra.mxu0 %v172
  %174 = vmatprep.subr.mxu0 0.0
  %v175 = vand.u32 %v25, 4294901760
  %v176 = vsub.f32 %v25, %v175
  %v177 = vand.u32 %v176, 4294901760
  %v178 = vsub.f32 %v176, %v177
  %v179 = vand.u32 %v178, 4294901760
  %180 = vmatpush1.msra.mxu0 %v179
  %181 = vmatprep.subr.mxu0 0.0
  %v182 = vand.u32 %v26, 4294901760
  %v183 = vsub.f32 %v26, %v182
  %v184 = vand.u32 %v183, 4294901760
  %v185 = vsub.f32 %v183, %v184
  %v186 = vand.u32 %v185, 4294901760
  %187 = vmatpush1.msra.mxu0 %v186
  %188 = vmatprep.subr.mxu0 0.0
  %v189 = vand.u32 %v27, 4294901760
  %v190 = vsub.f32 %v27, %v189
  %v191 = vand.u32 %v190, 4294901760
  %v192 = vsub.f32 %v190, %v191
  %v193 = vand.u32 %v192, 4294901760
  %194 = vmatpush1.msra.mxu0 %v193
  %195 = vmatprep.subr.mxu0 0.0
  %v196 = vand.u32 %v28, 4294901760
  %v197 = vsub.f32 %v28, %v196
  %v198 = vand.u32 %v197, 4294901760
  %v199 = vsub.f32 %v197, %v198
  %v200 = vand.u32 %v199, 4294901760
  %201 = vmatpush1.msra.mxu0 %v200
  %202 = vmatprep.subr.mxu0 0.0
  %v203 = vand.u32 %v29, 4294901760
  %v204 = vsub.f32 %v29, %v203
  %v205 = vand.u32 %v204, 4294901760
  %v206 = vsub.f32 %v204, %v205
  %v207 = vand.u32 %v206, 4294901760
  %208 = vmatpush1.msra.mxu0 %v207
  %209 = vmatprep.subr.mxu0 0.0
  %v210 = vand.u32 %v30, 4294901760
  %v211 = vsub.f32 %v30, %v210
  %v212 = vand.u32 %v211, 4294901760
  %v213 = vsub.f32 %v211, %v212
  %v214 = vand.u32 %v213, 4294901760
  %215 = vmatpush1.msra.mxu0 %v214
  %216 = vmatprep.subr.mxu0 0.0
  %v217 = vand.u32 %v31, 4294901760
  %v218 = vsub.f32 %v31, %v217
  %v219 = vand.u32 %v218, 4294901760
  %v220 = vsub.f32 %v218, %v219
  %v221 = vand.u32 %v220, 4294901760
  %222 = vmatpush1.msra.mxu0 %v221
  %223 = vmatprep.subr.mxu0 0.0
  %v224 = vand.u32 %v32, 4294901760
  %v225 = vsub.f32 %v32, %v224
  %v226 = vand.u32 %v225, 4294901760
  %v227 = vsub.f32 %v225, %v226
  %v228 = vand.u32 %v227, 4294901760
  %229 = vmatpush1.msra.mxu0 %v228
  %230 = vmatprep.subr.mxu0 0.0
  %v231 = vand.u32 %v33, 4294901760
  %v232 = vsub.f32 %v33, %v231
  %v233 = vand.u32 %v232, 4294901760
  %v234 = vsub.f32 %v232, %v233
  %v235 = vand.u32 %v234, 4294901760
  %236 = vmatpush1.msra.mxu0 %v235
  %237 = vmatprep.subr.mxu0 0.0
  %238 = vmatpush1.msra.mxu0 0.0
  %239 = vmatprep.subr.mxu0 0.0
  %240 = vmatpush1.msra.mxu0 0.0
  %241 = vmatprep.subr.mxu0 0.0
  %242 = vmatpush1.msra.mxu0 0.0
  %243 = vmatprep.subr.mxu0 0.0
  %244 = vmatpush1.msra.mxu0 0.0
  %245 = vmatprep.subr.mxu0 0.0
  %246 = vmatpush1.msra.mxu0 0.0
  %247 = vmatprep.subr.mxu0 0.0
  %248 = vmatpush1.msra.mxu0 0.0
  %249 = vmatprep.subr.mxu0 0.0
  %250 = vmatpush1.msra.mxu0 0.0
  %251 = vmatprep.subr.mxu0 0.0
  %252 = vmatpush1.msra.mxu0 0.0
  %253 = vmatprep.subr.mxu0 0.0
  %254 = vmatpush1.msra.mxu0 0.0
  %255 = vmatprep.subr.mxu0 0.0
  %256 = vmatpush1.msra.mxu0 0.0
  %257 = vmatprep.subr.mxu0 0.0
  %258 = vmatpush1.msra.mxu0 0.0
  %259 = vmatprep.subr.mxu0 0.0
  %260 = vmatpush1.msra.mxu0 0.0
  %261 = vmatprep.subr.mxu0 0.0
  %262 = vmatpush1.msra.mxu0 0.0
  %263 = vmatprep.subr.mxu0 0.0
  %264 = vmatpush1.msra.mxu0 0.0
  %265 = vmatprep.subr.mxu0 0.0
  %266 = vmatpush1.msra.mxu0 0.0
  %267 = vmatprep.subr.mxu0 0.0
  %268 = vmatpush1.msra.mxu0 0.0
  %269 = vmatprep.mubr.f32.mxu0 0.0
  %v270 = vand.u32 %v17, 4294901760
  %271 = vmatmul.mubr.f32.gmra.mrb[0].mxu0 %v270
  %v272 = vpop.f32.mrb[0].mxu0
  %v273 = vadd.f32 %v122, %v272
  %v274 = vpop.f32.mrb[0].mxu0
  %275 = vdwg.mxu0
  %276 = vmatprep.subr.mxu0 0.0
  %v277 = vand.u32 %v18, 4294901760
  %v278 = vsub.f32 %v18, %v277
  %279 = vmatpush1.msra.mxu0 %v278
  %280 = vmatprep.subr.mxu0 0.0
  %v281 = vand.u32 %v19, 4294901760
  %v282 = vsub.f32 %v19, %v281
  %283 = vmatpush1.msra.mxu0 %v282
  %284 = vmatprep.subr.mxu0 0.0
  %v285 = vand.u32 %v20, 4294901760
  %v286 = vsub.f32 %v20, %v285
  %287 = vmatpush1.msra.mxu0 %v286
  %288 = vmatprep.subr.mxu0 0.0
  %v289 = vand.u32 %v21, 4294901760
  %v290 = vsub.f32 %v21, %v289
  %291 = vmatpush1.msra.mxu0 %v290
  %292 = vmatprep.subr.mxu0 0.0
  %v293 = vand.u32 %v22, 4294901760
  %v294 = vsub.f32 %v22, %v293
  %295 = vmatpush1.msra.mxu0 %v294
  %296 = vmatprep.subr.mxu0 0.0
  %v297 = vand.u32 %v23, 4294901760
  %v298 = vsub.f32 %v23, %v297
  %299 = vmatpush1.msra.mxu0 %v298
  %300 = vmatprep.subr.mxu0 0.0
  %v301 = vand.u32 %v24, 4294901760
  %v302 = vsub.f32 %v24, %v301
  %303 = vmatpush1.msra.mxu0 %v302
  %304 = vmatprep.subr.mxu0 0.0
  %v305 = vand.u32 %v25, 4294901760
  %v306 = vsub.f32 %v25, %v305
  %307 = vmatpush1.msra.mxu0 %v306
  %308 = vmatprep.subr.mxu0 0.0
  %v309 = vand.u32 %v26, 4294901760
  %v310 = vsub.f32 %v26, %v309
  %311 = vmatpush1.msra.mxu0 %v310
  %312 = vmatprep.subr.mxu0 0.0
  %v313 = vand.u32 %v27, 4294901760
  %v314 = vsub.f32 %v27, %v313
  %315 = vmatpush1.msra.mxu0 %v314
  %316 = vmatprep.subr.mxu0 0.0
  %v317 = vand.u32 %v28, 4294901760
  %v318 = vsub.f32 %v28, %v317
  %319 = vmatpush1.msra.mxu0 %v318
  %320 = vmatprep.subr.mxu0 0.0
  %v321 = vand.u32 %v29, 4294901760
  %v322 = vsub.f32 %v29, %v321
  %323 = vmatpush1.msra.mxu0 %v322
  %324 = vmatprep.subr.mxu0 0.0
  %v325 = vand.u32 %v30, 4294901760
  %v326 = vsub.f32 %v30, %v325
  %327 = vmatpush1.msra.mxu0 %v326
  %328 = vmatprep.subr.mxu0 0.0
  %v329 = vand.u32 %v31, 4294901760
  %v330 = vsub.f32 %v31, %v329
  %331 = vmatpush1.msra.mxu0 %v330
  %332 = vmatprep.subr.mxu0 0.0
  %v333 = vand.u32 %v32, 4294901760
  %v334 = vsub.f32 %v32, %v333
  %335 = vmatpush1.msra.mxu0 %v334
  %336 = vmatprep.subr.mxu0 0.0
  %v337 = vand.u32 %v33, 4294901760
  %v338 = vsub.f32 %v33, %v337
  %339 = vmatpush1.msra.mxu0 %v338
  %340 = vmatprep.subr.mxu0 0.0
  %341 = vmatpush1.msra.mxu0 0.0
  %342 = vmatprep.subr.mxu0 0.0
  %343 = vmatpush1.msra.mxu0 0.0
  %344 = vmatprep.subr.mxu0 0.0
  %345 = vmatpush1.msra.mxu0 0.0
  %346 = vmatprep.subr.mxu0 0.0
  %347 = vmatpush1.msra.mxu0 0.0
  %348 = vmatprep.subr.mxu0 0.0
  %349 = vmatpush1.msra.mxu0 0.0
  %350 = vmatprep.subr.mxu0 0.0
  %351 = vmatpush1.msra.mxu0 0.0
  %352 = vmatprep.subr.mxu0 0.0
  %353 = vmatpush1.msra.mxu0 0.0
  %354 = vmatprep.subr.mxu0 0.0
  %355 = vmatpush1.msra.mxu0 0.0
  %356 = vmatprep.subr.mxu0 0.0
  %357 = vmatpush1.msra.mxu0 0.0
  %358 = vmatprep.subr.mxu0 0.0
  %359 = vmatpush1.msra.mxu0 0.0
  %360 = vmatprep.subr.mxu0 0.0
  %361 = vmatpush1.msra.mxu0 0.0
  %362 = vmatprep.subr.mxu0 0.0
  %363 = vmatpush1.msra.mxu0 0.0
  %364 = vmatprep.subr.mxu0 0.0
  %365 = vmatpush1.msra.mxu0 0.0
  %366 = vmatprep.subr.mxu0 0.0
  %367 = vmatpush1.msra.mxu0 0.0
  %368 = vmatprep.subr.mxu0 0.0
  %369 = vmatpush1.msra.mxu0 0.0
  %370 = vmatprep.subr.mxu0 0.0
  %371 = vmatpush1.msra.mxu0 0.0
  %372 = vmatprep.mubr.f32.mxu0 0.0
  %v373 = vand.u32 %v17, 4294901760
  %v374 = vsub.f32 %v17, %v373
  %375 = vmatmul.mubr.f32.gmra.mrb[0].mxu0 %v374
  %v376 = vpop.f32.mrb[0].mxu0
  %v377 = vadd.f32 %v273, %v376
  %v378 = vpop.f32.mrb[0].mxu0
  %379 = vdwg.mxu0
  %380 = vmatprep.subr.mxu0 0.0
  %v381 = vand.u32 %v18, 4294901760
  %382 = vmatpush1.msra.mxu0 %v381
  %383 = vmatprep.subr.mxu0 0.0
  %v384 = vand.u32 %v19, 4294901760
  %385 = vmatpush1.msra.mxu0 %v384
  %386 = vmatprep.subr.mxu0 0.0
  %v387 = vand.u32 %v20, 4294901760
  %388 = vmatpush1.msra.mxu0 %v387
  %389 = vmatprep.subr.mxu0 0.0
  %v390 = vand.u32 %v21, 4294901760
  %391 = vmatpush1.msra.mxu0 %v390
  %392 = vmatprep.subr.mxu0 0.0
  %v393 = vand.u32 %v22, 4294901760
  %394 = vmatpush1.msra.mxu0 %v393
  %395 = vmatprep.subr.mxu0 0.0
  %v396 = vand.u32 %v23, 4294901760
  %397 = vmatpush1.msra.mxu0 %v396
  %398 = vmatprep.subr.mxu0 0.0
  %v399 = vand.u32 %v24, 4294901760
  %400 = vmatpush1.msra.mxu0 %v399
  %401 = vmatprep.subr.mxu0 0.0
  %v402 = vand.u32 %v25, 4294901760
  %403 = vmatpush1.msra.mxu0 %v402
  %404 = vmatprep.subr.mxu0 0.0
  %v405 = vand.u32 %v26, 4294901760
  %406 = vmatpush1.msra.mxu0 %v405
  %407 = vmatprep.subr.mxu0 0.0
  %v408 = vand.u32 %v27, 4294901760
  %409 = vmatpush1.msra.mxu0 %v408
  %410 = vmatprep.subr.mxu0 0.0
  %v411 = vand.u32 %v28, 4294901760
  %412 = vmatpush1.msra.mxu0 %v411
  %413 = vmatprep.subr.mxu0 0.0
  %v414 = vand.u32 %v29, 4294901760
  %415 = vmatpush1.msra.mxu0 %v414
  %416 = vmatprep.subr.mxu0 0.0
  %v417 = vand.u32 %v30, 4294901760
  %418 = vmatpush1.msra.mxu0 %v417
  %419 = vmatprep.subr.mxu0 0.0
  %v420 = vand.u32 %v31, 4294901760
  %421 = vmatpush1.msra.mxu0 %v420
  %422 = vmatprep.subr.mxu0 0.0
  %v423 = vand.u32 %v32, 4294901760
  %424 = vmatpush1.msra.mxu0 %v423
  %425 = vmatprep.subr.mxu0 0.0
  %v426 = vand.u32 %v33, 4294901760
  %427 = vmatpush1.msra.mxu0 %v426
  %428 = vmatprep.subr.mxu0 0.0
  %429 = vmatpush1.msra.mxu0 0.0
  %430 = vmatprep.subr.mxu0 0.0
  %431 = vmatpush1.msra.mxu0 0.0
  %432 = vmatprep.subr.mxu0 0.0
  %433 = vmatpush1.msra.mxu0 0.0
  %434 = vmatprep.subr.mxu0 0.0
  %435 = vmatpush1.msra.mxu0 0.0
  %436 = vmatprep.subr.mxu0 0.0
  %437 = vmatpush1.msra.mxu0 0.0
  %438 = vmatprep.subr.mxu0 0.0
  %439 = vmatpush1.msra.mxu0 0.0
  %440 = vmatprep.subr.mxu0 0.0
  %441 = vmatpush1.msra.mxu0 0.0
  %442 = vmatprep.subr.mxu0 0.0
  %443 = vmatpush1.msra.mxu0 0.0
  %444 = vmatprep.subr.mxu0 0.0
  %445 = vmatpush1.msra.mxu0 0.0
  %446 = vmatprep.subr.mxu0 0.0
  %447 = vmatpush1.msra.mxu0 0.0
  %448 = vmatprep.subr.mxu0 0.0
  %449 = vmatpush1.msra.mxu0 0.0
  %450 = vmatprep.subr.mxu0 0.0
  %451 = vmatpush1.msra.mxu0 0.0
  %452 = vmatprep.subr.mxu0 0.0
  %453 = vmatpush1.msra.mxu0 0.0
  %454 = vmatprep.subr.mxu0 0.0
  %455 = vmatpush1.msra.mxu0 0.0
  %456 = vmatprep.subr.mxu0 0.0
  %457 = vmatpush1.msra.mxu0 0.0
  %458 = vmatprep.subr.mxu0 0.0
  %459 = vmatpush1.msra.mxu0 0.0
  %460 = vmatprep.mubr.f32.mxu0 0.0
  %v461 = vand.u32 %v17, 4294901760
  %v462 = vsub.f32 %v17, %v461
  %v463 = vand.u32 %v462, 4294901760
  %464 = vmatmul.mubr.f32.gmra.mrb[0].mxu0 %v463
  %v465 = vpop.f32.mrb[0].mxu0
  %v466 = vadd.f32 %v377, %v465
  %v467 = vpop.f32.mrb[0].mxu0
  %468 = vdwg.mxu0
  %469 = vmatprep.subr.mxu0 0.0
  %v470 = vand.u32 %v18, 4294901760
  %v471 = vsub.f32 %v18, %v470
  %v472 = vand.u32 %v471, 4294901760
  %473 = vmatpush1.msra.mxu0 %v472
  %474 = vmatprep.subr.mxu0 0.0
  %v475 = vand.u32 %v19, 4294901760
  %v476 = vsub.f32 %v19, %v475
  %v477 = vand.u32 %v476, 4294901760
  %478 = vmatpush1.msra.mxu0 %v477
  %479 = vmatprep.subr.mxu0 0.0
  %v480 = vand.u32 %v20, 4294901760
  %v481 = vsub.f32 %v20, %v480
  %v482 = vand.u32 %v481, 4294901760
  %483 = vmatpush1.msra.mxu0 %v482
  %484 = vmatprep.subr.mxu0 0.0
  %v485 = vand.u32 %v21, 4294901760
  %v486 = vsub.f32 %v21, %v485
  %v487 = vand.u32 %v486, 4294901760
  %488 = vmatpush1.msra.mxu0 %v487
  %489 = vmatprep.subr.mxu0 0.0
  %v490 = vand.u32 %v22, 4294901760
  %v491 = vsub.f32 %v22, %v490
  %v492 = vand.u32 %v491, 4294901760
  %493 = vmatpush1.msra.mxu0 %v492
  %494 = vmatprep.subr.mxu0 0.0
  %v495 = vand.u32 %v23, 4294901760
  %v496 = vsub.f32 %v23, %v495
  %v497 = vand.u32 %v496, 4294901760
  %498 = vmatpush1.msra.mxu0 %v497
  %499 = vmatprep.subr.mxu0 0.0
  %v500 = vand.u32 %v24, 4294901760
  %v501 = vsub.f32 %v24, %v500
  %v502 = vand.u32 %v501, 4294901760
  %503 = vmatpush1.msra.mxu0 %v502
  %504 = vmatprep.subr.mxu0 0.0
  %v505 = vand.u32 %v25, 4294901760
  %v506 = vsub.f32 %v25, %v505
  %v507 = vand.u32 %v506, 4294901760
  %508 = vmatpush1.msra.mxu0 %v507
  %509 = vmatprep.subr.mxu0 0.0
  %v510 = vand.u32 %v26, 4294901760
  %v511 = vsub.f32 %v26, %v510
  %v512 = vand.u32 %v511, 4294901760
  %513 = vmatpush1.msra.mxu0 %v512
  %514 = vmatprep.subr.mxu0 0.0
  %v515 = vand.u32 %v27, 4294901760
  %v516 = vsub.f32 %v27, %v515
  %v517 = vand.u32 %v516, 4294901760
  %518 = vmatpush1.msra.mxu0 %v517
  %519 = vmatprep.subr.mxu0 0.0
  %v520 = vand.u32 %v28, 4294901760
  %v521 = vsub.f32 %v28, %v520
  %v522 = vand.u32 %v521, 4294901760
  %523 = vmatpush1.msra.mxu0 %v522
  %524 = vmatprep.subr.mxu0 0.0
  %v525 = vand.u32 %v29, 4294901760
  %v526 = vsub.f32 %v29, %v525
  %v527 = vand.u32 %v526, 4294901760
  %528 = vmatpush1.msra.mxu0 %v527
  %529 = vmatprep.subr.mxu0 0.0
  %v530 = vand.u32 %v30, 4294901760
  %v531 = vsub.f32 %v30, %v530
  %v532 = vand.u32 %v531, 4294901760
  %533 = vmatpush1.msra.mxu0 %v532
  %534 = vmatprep.subr.mxu0 0.0
  %v535 = vand.u32 %v31, 4294901760
  %v536 = vsub.f32 %v31, %v535
  %v537 = vand.u32 %v536, 4294901760
  %538 = vmatpush1.msra.mxu0 %v537
  %539 = vmatprep.subr.mxu0 0.0
  %v540 = vand.u32 %v32, 4294901760
  %v541 = vsub.f32 %v32, %v540
  %v542 = vand.u32 %v541, 4294901760
  %543 = vmatpush1.msra.mxu0 %v542
  %544 = vmatprep.subr.mxu0 0.0
  %v545 = vand.u32 %v33, 4294901760
  %v546 = vsub.f32 %v33, %v545
  %v547 = vand.u32 %v546, 4294901760
  %548 = vmatpush1.msra.mxu0 %v547
  %549 = vmatprep.subr.mxu0 0.0
  %550 = vmatpush1.msra.mxu0 0.0
  %551 = vmatprep.subr.mxu0 0.0
  %552 = vmatpush1.msra.mxu0 0.0
  %553 = vmatprep.subr.mxu0 0.0
  %554 = vmatpush1.msra.mxu0 0.0
  %555 = vmatprep.subr.mxu0 0.0
  %556 = vmatpush1.msra.mxu0 0.0
  %557 = vmatprep.subr.mxu0 0.0
  %558 = vmatpush1.msra.mxu0 0.0
  %559 = vmatprep.subr.mxu0 0.0
  %560 = vmatpush1.msra.mxu0 0.0
  %561 = vmatprep.subr.mxu0 0.0
  %562 = vmatpush1.msra.mxu0 0.0
  %563 = vmatprep.subr.mxu0 0.0
  %564 = vmatpush1.msra.mxu0 0.0
  %565 = vmatprep.subr.mxu0 0.0
  %566 = vmatpush1.msra.mxu0 0.0
  %567 = vmatprep.subr.mxu0 0.0
  %568 = vmatpush1.msra.mxu0 0.0
  %569 = vmatprep.subr.mxu0 0.0
  %570 = vmatpush1.msra.mxu0 0.0
  %571 = vmatprep.subr.mxu0 0.0
  %572 = vmatpush1.msra.mxu0 0.0
  %573 = vmatprep.subr.mxu0 0.0
  %574 = vmatpush1.msra.mxu0 0.0
  %575 = vmatprep.subr.mxu0 0.0
  %576 = vmatpush1.msra.mxu0 0.0
  %577 = vmatprep.subr.mxu0 0.0
  %578 = vmatpush1.msra.mxu0 0.0
  %579 = vmatprep.subr.mxu0 0.0
  %580 = vmatpush1.msra.mxu0 0.0
  %581 = vmatprep.mubr.f32.mxu0 0.0
  %v582 = vand.u32 %v17, 4294901760
  %583 = vmatmul.mubr.f32.gmra.mrb[0].mxu0 %v582
  %v584 = vpop.f32.mrb[0].mxu0
  %v585 = vadd.f32 %v466, %v584
  %v586 = vpop.f32.mrb[0].mxu0
  %587 = vdwg.mxu0
  %588 = vmatprep.subr.mxu0 0.0
  %v589 = vand.u32 %v18, 4294901760
  %590 = vmatpush1.msra.mxu0 %v589
  %591 = vmatprep.subr.mxu0 0.0
  %v592 = vand.u32 %v19, 4294901760
  %593 = vmatpush1.msra.mxu0 %v592
  %594 = vmatprep.subr.mxu0 0.0
  %v595 = vand.u32 %v20, 4294901760
  %596 = vmatpush1.msra.mxu0 %v595
  %597 = vmatprep.subr.mxu0 0.0
  %v598 = vand.u32 %v21, 4294901760
  %599 = vmatpush1.msra.mxu0 %v598
  %600 = vmatprep.subr.mxu0 0.0
  %v601 = vand.u32 %v22, 4294901760
  %602 = vmatpush1.msra.mxu0 %v601
  %603 = vmatprep.subr.mxu0 0.0
  %v604 = vand.u32 %v23, 4294901760
  %605 = vmatpush1.msra.mxu0 %v604
  %606 = vmatprep.subr.mxu0 0.0
  %v607 = vand.u32 %v24, 4294901760
  %608 = vmatpush1.msra.mxu0 %v607
  %609 = vmatprep.subr.mxu0 0.0
  %v610 = vand.u32 %v25, 4294901760
  %611 = vmatpush1.msra.mxu0 %v610
  %612 = vmatprep.subr.mxu0 0.0
  %v613 = vand.u32 %v26, 4294901760
  %614 = vmatpush1.msra.mxu0 %v613
  %615 = vmatprep.subr.mxu0 0.0
  %v616 = vand.u32 %v27, 4294901760
  %617 = vmatpush1.msra.mxu0 %v616
  %618 = vmatprep.subr.mxu0 0.0
  %v619 = vand.u32 %v28, 4294901760
  %620 = vmatpush1.msra.mxu0 %v619
  %621 = vmatprep.subr.mxu0 0.0
  %v622 = vand.u32 %v29, 4294901760
  %623 = vmatpush1.msra.mxu0 %v622
  %624 = vmatprep.subr.mxu0 0.0
  %v625 = vand.u32 %v30, 4294901760
  %626 = vmatpush1.msra.mxu0 %v625
  %627 = vmatprep.subr.mxu0 0.0
  %v628 = vand.u32 %v31, 4294901760
  %629 = vmatpush1.msra.mxu0 %v628
  %630 = vmatprep.subr.mxu0 0.0
  %v631 = vand.u32 %v32, 4294901760
  %632 = vmatpush1.msra.mxu0 %v631
  %633 = vmatprep.subr.mxu0 0.0
  %v634 = vand.u32 %v33, 4294901760
  %635 = vmatpush1.msra.mxu0 %v634
  %636 = vmatprep.subr.mxu0 0.0
  %637 = vmatpush1.msra.mxu0 0.0
  %638 = vmatprep.subr.mxu0 0.0
  %639 = vmatpush1.msra.mxu0 0.0
  %640 = vmatprep.subr.mxu0 0.0
  %641 = vmatpush1.msra.mxu0 0.0
  %642 = vmatprep.subr.mxu0 0.0
  %643 = vmatpush1.msra.mxu0 0.0
  %644 = vmatprep.subr.mxu0 0.0
  %645 = vmatpush1.msra.mxu0 0.0
  %646 = vmatprep.subr.mxu0 0.0
  %647 = vmatpush1.msra.mxu0 0.0
  %648 = vmatprep.subr.mxu0 0.0
  %649 = vmatpush1.msra.mxu0 0.0
  %650 = vmatprep.subr.mxu0 0.0
  %651 = vmatpush1.msra.mxu0 0.0
  %652 = vmatprep.subr.mxu0 0.0
  %653 = vmatpush1.msra.mxu0 0.0
  %654 = vmatprep.subr.mxu0 0.0
  %655 = vmatpush1.msra.mxu0 0.0
  %656 = vmatprep.subr.mxu0 0.0
  %657 = vmatpush1.msra.mxu0 0.0
  %658 = vmatprep.subr.mxu0 0.0
  %659 = vmatpush1.msra.mxu0 0.0
  %660 = vmatprep.subr.mxu0 0.0
  %661 = vmatpush1.msra.mxu0 0.0
  %662 = vmatprep.subr.mxu0 0.0
  %663 = vmatpush1.msra.mxu0 0.0
  %664 = vmatprep.subr.mxu0 0.0
  %665 = vmatpush1.msra.mxu0 0.0
  %666 = vmatprep.subr.mxu0 0.0
  %667 = vmatpush1.msra.mxu0 0.0
  %668 = vmatprep.mubr.f32.mxu0 0.0
  %v669 = vand.u32 %v17, 4294901760
  %670 = vmatmul.mubr.f32.gmra.mrb[0].mxu0 %v669
  %v671 = vpop.f32.mrb[0].mxu0
  %v672 = vadd.f32 %v585, %v671
  %v673 = vpop.f32.mrb[0].mxu0
  %674 = vdwg.mxu0
  %v675 = vadd.f32 %v16, %v672
  %676 = vst [vmem:[#allocation2] sm:$0xff] %v675
  // Predicated region
  $region14: #{qdrgat_forward.8} parent=0 // pred_check
    %p677 = pneg %p11
  $region15: #{qdrgat_forward.8} parent=0 // pred_check_branch
    %679 = sbr.rel (%p677) target = $region17
  $region16: #{qdrgat_forward.8} parent=0 // pred_region
    %v680 = vld [vmem:[#allocation2] sm:$0xff]
    %681 = vst [vmem:[%s2] sm:$0xff] %v680
  $region17: #{qdrgat_forward.8} parent=0 // pred_fallthru
    _
  // Predicated region
  $region18: #{qdrgat_forward.8} parent=0 // pred_check
    _
  $region19: #{qdrgat_forward.8} parent=0 // pred_check_branch
    %683 = sbr.rel (0) target = $region21
  $region20: #{qdrgat_forward.8} parent=0 // pred_region
    _
  $region21: #{qdrgat_forward.8} parent=0 // pred_fallthru
    _
  // Predicated region
  $region22: #{qdrgat_forward.8} parent=0 // pred_check
    _
  $region23: #{qdrgat_forward.8} parent=0 // pred_check_branch
    %685 = sbr.rel (0) target = $region25
  $region24: #{qdrgat_forward.8} parent=0 // pred_region
    _
  $region25: #{qdrgat_forward.8} parent=0 // pred_fallthru
    _

// kernel: qdrgat_forward.7
$region0: #{qdrgat_forward.7}
  #allocation0 [shape = 'u32[]', space=smem, size = 0x4, offset = 0x4, fixed_abs, tag = 'smem constant byte address 0x4 - core index']
  #allocation1 [shape = 'u32[144,128]{1,0:T(1,128)}', space=vmem, size = 0x12000, scoped, tag = 'internal scratch']
  #allocation2 [shape = 'f32[8,128]{1,0:T(8,128)}', space=vmem, size = 0x1000, scoped, tag = 'scratch operand']
  %s0 = inlined_call_operand.vmem [shape: f32[8,128], index: 0, kind: input, shape index: {}]
  %s1 = inlined_call_operand.vmem [shape: f32[128,128], index: 1, kind: input, shape index: {}]
  %s2 = inlined_call_operand.vmem [shape: f32[8,128], index: 2, kind: output, shape index: {}]
  %s3 = sld [smem:[#allocation0]]
  $region26: #{qdrgat_forward.7} parent=0
    _
  %s5 = ssub.s32 1, %s3
  %s6 = scalar_select 0, %s5, %s3
  // Predicated region
  $region2: #{qdrgat_forward.7} parent=0 // pred_check
    _
  $region3: #{qdrgat_forward.7} parent=0 // pred_check_branch
    %8 = sbr.rel (0) target = $region5
  $region4: #{qdrgat_forward.7} parent=0 // pred_region
    _
  $region5: #{qdrgat_forward.7} parent=0 // pred_fallthru
    _
  // Predicated region
  $region6: #{qdrgat_forward.7} parent=0 // pred_check
    _
  $region7: #{qdrgat_forward.7} parent=0 // pred_check_branch
    %10 = sbr.rel (0) target = $region9
  $region8: #{qdrgat_forward.7} parent=0 // pred_region
    _
  $region9: #{qdrgat_forward.7} parent=0 // pred_fallthru
    _
  %p11 = scmp.eq.s32.totalorder 0, 0
  // Predicated region
  $region10: #{qdrgat_forward.7} parent=0 // pred_check
    %p12 = pneg %p11
  $region11: #{qdrgat_forward.7} parent=0 // pred_check_branch
    %14 = sbr.rel (%p12) target = $region13
  $region12: #{qdrgat_forward.7} parent=0 // pred_region
    %15 = vst [vmem:[#allocation2] sm:$0xff] 0.0
  $region13: #{qdrgat_forward.7} parent=0 // pred_fallthru
    _
  %v16 = vld [vmem:[#allocation2] sm:$0xff]
  %v17 = vld [vmem:[%s0] sm:$0xff]
  %v18 = vld [vmem:[%s1] sm:$0xff]
  %v19 = vld [vmem:[%s1 + $0x8] sm:$0xff]
  %v20 = vld [vmem:[%s1 + $0x10] sm:$0xff]
  %v21 = vld [vmem:[%s1 + $0x18] sm:$0xff]
  %v22 = vld [vmem:[%s1 + $0x20] sm:$0xff]
  %v23 = vld [vmem:[%s1 + $0x28] sm:$0xff]
  %v24 = vld [vmem:[%s1 + $0x30] sm:$0xff]
  %v25 = vld [vmem:[%s1 + $0x38] sm:$0xff]
  %v26 = vld [vmem:[%s1 + $0x40] sm:$0xff]
  %v27 = vld [vmem:[%s1 + $0x48] sm:$0xff]
  %v28 = vld [vmem:[%s1 + $0x50] sm:$0xff]
  %v29 = vld [vmem:[%s1 + $0x58] sm:$0xff]
  %v30 = vld [vmem:[%s1 + $0x60] sm:$0xff]
  %v31 = vld [vmem:[%s1 + $0x68] sm:$0xff]
  %v32 = vld [vmem:[%s1 + $0x70] sm:$0xff]
  %v33 = vld [vmem:[%s1 + $0x78] sm:$0xff]
  %34 = vmatprep.subr.mxu0 0.0
  %v35 = vand.u32 %v18, 4294901760
  %36 = vmatpush1.msra.mxu0 %v35
  %37 = vmatprep.subr.mxu0 0.0
  %v38 = vand.u32 %v19, 4294901760
  %39 = vmatpush1.msra.mxu0 %v38
  %40 = vmatprep.subr.mxu0 0.0
  %v41 = vand.u32 %v20, 4294901760
  %42 = vmatpush1.msra.mxu0 %v41
  %43 = vmatprep.subr.mxu0 0.0
  %v44 = vand.u32 %v21, 4294901760
  %45 = vmatpush1.msra.mxu0 %v44
  %46 = vmatprep.subr.mxu0 0.0
  %v47 = vand.u32 %v22, 4294901760
  %48 = vmatpush1.msra.mxu0 %v47
  %49 = vmatprep.subr.mxu0 0.0
  %v50 = vand.u32 %v23, 4294901760
  %51 = vmatpush1.msra.mxu0 %v50
  %52 = vmatprep.subr.mxu0 0.0
  %v53 = vand.u32 %v24, 4294901760
  %54 = vmatpush1.msra.mxu0 %v53
  %55 = vmatprep.subr.mxu0 0.0
  %v56 = vand.u32 %v25, 4294901760
  %57 = vmatpush1.msra.mxu0 %v56
  %58 = vmatprep.subr.mxu0 0.0
  %v59 = vand.u32 %v26, 4294901760
  %60 = vmatpush1.msra.mxu0 %v59
  %61 = vmatprep.subr.mxu0 0.0
  %v62 = vand.u32 %v27, 4294901760
  %63 = vmatpush1.msra.mxu0 %v62
  %64 = vmatprep.subr.mxu0 0.0
  %v65 = vand.u32 %v28, 4294901760
  %66 = vmatpush1.msra.mxu0 %v65
  %67 = vmatprep.subr.mxu0 0.0
  %v68 = vand.u32 %v29, 4294901760
  %69 = vmatpush1.msra.mxu0 %v68
  %70 = vmatprep.subr.mxu0 0.0
  %v71 = vand.u32 %v30, 4294901760
  %72 = vmatpush1.msra.mxu0 %v71
  %73 = vmatprep.subr.mxu0 0.0
  %v74 = vand.u32 %v31, 4294901760
  %75 = vmatpush1.msra.mxu0 %v74
  %76 = vmatprep.subr.mxu0 0.0
  %v77 = vand.u32 %v32, 4294901760
  %78 = vmatpush1.msra.mxu0 %v77
  %79 = vmatprep.subr.mxu0 0.0
  %v80 = vand.u32 %v33, 4294901760
  %81 = vmatpush1.msra.mxu0 %v80
  %82 = vmatprep.subr.mxu0 0.0
  %83 = vmatpush1.msra.mxu0 0.0
  %84 = vmatprep.subr.mxu0 0.0
  %85 = vmatpush1.msra.mxu0 0.0
  %86 = vmatprep.subr.mxu0 0.0
  %87 = vmatpush1.msra.mxu0 0.0
  %88 = vmatprep.subr.mxu0 0.0
  %89 = vmatpush1.msra.mxu0 0.0
  %90 = vmatprep.subr.mxu0 0.0
  %91 = vmatpush1.msra.mxu0 0.0
  %92 = vmatprep.subr.mxu0 0.0
  %93 = vmatpush1.msra.mxu0 0.0
  %94 = vmatprep.subr.mxu0 0.0
  %95 = vmatpush1.msra.mxu0 0.0
  %96 = vmatprep.subr.mxu0 0.0
  %97 = vmatpush1.msra.mxu0 0.0
  %98 = vmatprep.subr.mxu0 0.0
  %99 = vmatpush1.msra.mxu0 0.0
  %100 = vmatprep.subr.mxu0 0.0
  %101 = vmatpush1.msra.mxu0 0.0
  %102 = vmatprep.subr.mxu0 0.0
  %103 = vmatpush1.msra.mxu0 0.0
  %104 = vmatprep.subr.mxu0 0.0
  %105 = vmatpush1.msra.mxu0 0.0
  %106 = vmatprep.subr.mxu0 0.0
  %107 = vmatpush1.msra.mxu0 0.0
  %108 = vmatprep.subr.mxu0 0.0
  %109 = vmatpush1.msra.mxu0 0.0
  %110 = vmatprep.subr.mxu0 0.0
  %111 = vmatpush1.msra.mxu0 0.0
  %112 = vmatprep.subr.mxu0 0.0
  %113 = vmatpush1.msra.mxu0 0.0
  %114 = vmatprep.mubr.f32.mxu0 0.0
  %v115 = vand.u32 %v17, 4294901760
  %v116 = vsub.f32 %v17, %v115
  %v117 = vand.u32 %v116, 4294901760
  %v118 = vsub.f32 %v116, %v117
  %v119 = vand.u32 %v118, 4294901760
  %120 = vmatmul.mubr.f32.gmra.mrb[0].mxu0 %v119
  %v121 = vpop.f32.mrb[0].mxu0
  %v122 = vadd.f32 0.0, %v121
  %v123 = vpop.f32.mrb[0].mxu0
  %124 = vdwg.mxu0
  %125 = vmatprep.subr.mxu0 0.0
  %v126 = vand.u32 %v18, 4294901760
  %v127 = vsub.f32 %v18, %v126
  %v128 = vand.u32 %v127, 4294901760
  %v129 = vsub.f32 %v127, %v128
  %v130 = vand.u32 %v129, 4294901760
  %131 = vmatpush1.msra.mxu0 %v130
  %132 = vmatprep.subr.mxu0 0.0
  %v133 = vand.u32 %v19, 4294901760
  %v134 = vsub.f32 %v19, %v133
  %v135 = vand.u32 %v134, 4294901760
  %v136 = vsub.f32 %v134, %v135
  %v137 = vand.u32 %v136, 4294901760
  %138 = vmatpush1.msra.mxu0 %v137
  %139 = vmatprep.subr.mxu0 0.0
  %v140 = vand.u32 %v20, 4294901760
  %v141 = vsub.f32 %v20, %v140
  %v142 = vand.u32 %v141, 4294901760
  %v143 = vsub.f32 %v141, %v142
  %v144 = vand.u32 %v143, 4294901760
  %145 = vmatpush1.msra.mxu0 %v144
  %146 = vmatprep.subr.mxu0 0.0
  %v147 = vand.u32 %v21, 4294901760
  %v148 = vsub.f32 %v21, %v147
  %v149 = vand.u32 %v148, 4294901760
  %v150 = vsub.f32 %v148, %v149
  %v151 = vand.u32 %v150, 4294901760
  %152 = vmatpush1.msra.mxu0 %v151
  %153 = vmatprep.subr.mxu0 0.0
  %v154 = vand.u32 %v22, 4294901760
  %v155 = vsub.f32 %v22, %v154
  %v156 = vand.u32 %v155, 4294901760
  %v157 = vsub.f32 %v155, %v156
  %v158 = vand.u32 %v157, 4294901760
  %159 = vmatpush1.msra.mxu0 %v158
  %160 = vmatprep.subr.mxu0 0.0
  %v161 = vand.u32 %v23, 4294901760
  %v162 = vsub.f32 %v23, %v161
  %v163 = vand.u32 %v162, 4294901760
  %v164 = vsub.f32 %v162, %v163
  %v165 = vand.u32 %v164, 4294901760
  %166 = vmatpush1.msra.mxu0 %v165
  %167 = vmatprep.subr.mxu0 0.0
  %v168 = vand.u32 %v24, 4294901760
  %v169 = vsub.f32 %v24, %v168
  %v170 = vand.u32 %v169, 4294901760
  %v171 = vsub.f32 %v169, %v170
  %v172 = vand.u32 %v171, 4294901760
  %173 = vmatpush1.msra.mxu0 %v172
  %174 = vmatprep.subr.mxu0 0.0
  %v175 = vand.u32 %v25, 4294901760
  %v176 = vsub.f32 %v25, %v175
  %v177 = vand.u32 %v176, 4294901760
  %v178 = vsub.f32 %v176, %v177
  %v179 = vand.u32 %v178, 4294901760
  %180 = vmatpush1.msra.mxu0 %v179
  %181 = vmatprep.subr.mxu0 0.0
  %v182 = vand.u32 %v26, 4294901760
  %v183 = vsub.f32 %v26, %v182
  %v184 = vand.u32 %v183, 4294901760
  %v185 = vsub.f32 %v183, %v184
  %v186 = vand.u32 %v185, 4294901760
  %187 = vmatpush1.msra.mxu0 %v186
  %188 = vmatprep.subr.mxu0 0.0
  %v189 = vand.u32 %v27, 4294901760
  %v190 = vsub.f32 %v27, %v189
  %v191 = vand.u32 %v190, 4294901760
  %v192 = vsub.f32 %v190, %v191
  %v193 = vand.u32 %v192, 4294901760
  %194 = vmatpush1.msra.mxu0 %v193
  %195 = vmatprep.subr.mxu0 0.0
  %v196 = vand.u32 %v28, 4294901760
  %v197 = vsub.f32 %v28, %v196
  %v198 = vand.u32 %v197, 4294901760
  %v199 = vsub.f32 %v197, %v198
  %v200 = vand.u32 %v199, 4294901760
  %201 = vmatpush1.msra.mxu0 %v200
  %202 = vmatprep.subr.mxu0 0.0
  %v203 = vand.u32 %v29, 4294901760
  %v204 = vsub.f32 %v29, %v203
  %v205 = vand.u32 %v204, 4294901760
  %v206 = vsub.f32 %v204, %v205
  %v207 = vand.u32 %v206, 4294901760
  %208 = vmatpush1.msra.mxu0 %v207
  %209 = vmatprep.subr.mxu0 0.0
  %v210 = vand.u32 %v30, 4294901760
  %v211 = vsub.f32 %v30, %v210
  %v212 = vand.u32 %v211, 4294901760
  %v213 = vsub.f32 %v211, %v212
  %v214 = vand.u32 %v213, 4294901760
  %215 = vmatpush1.msra.mxu0 %v214
  %216 = vmatprep.subr.mxu0 0.0
  %v217 = vand.u32 %v31, 4294901760
  %v218 = vsub.f32 %v31, %v217
  %v219 = vand.u32 %v218, 4294901760
  %v220 = vsub.f32 %v218, %v219
  %v221 = vand.u32 %v220, 4294901760
  %222 = vmatpush1.msra.mxu0 %v221
  %223 = vmatprep.subr.mxu0 0.0
  %v224 = vand.u32 %v32, 4294901760
  %v225 = vsub.f32 %v32, %v224
  %v226 = vand.u32 %v225, 4294901760
  %v227 = vsub.f32 %v225, %v226
  %v228 = vand.u32 %v227, 4294901760
  %229 = vmatpush1.msra.mxu0 %v228
  %230 = vmatprep.subr.mxu0 0.0
  %v231 = vand.u32 %v33, 4294901760
  %v232 = vsub.f32 %v33, %v231
  %v233 = vand.u32 %v232, 4294901760
  %v234 = vsub.f32 %v232, %v233
  %v235 = vand.u32 %v234, 4294901760
  %236 = vmatpush1.msra.mxu0 %v235
  %237 = vmatprep.subr.mxu0 0.0
  %238 = vmatpush1.msra.mxu0 0.0
  %239 = vmatprep.subr.mxu0 0.0
  %240 = vmatpush1.msra.mxu0 0.0
  %241 = vmatprep.subr.mxu0 0.0
  %242 = vmatpush1.msra.mxu0 0.0
  %243 = vmatprep.subr.mxu0 0.0
  %244 = vmatpush1.msra.mxu0 0.0
  %245 = vmatprep.subr.mxu0 0.0
  %246 = vmatpush1.msra.mxu0 0.0
  %247 = vmatprep.subr.mxu0 0.0
  %248 = vmatpush1.msra.mxu0 0.0
  %249 = vmatprep.subr.mxu0 0.0
  %250 = vmatpush1.msra.mxu0 0.0
  %251 = vmatprep.subr.mxu0 0.0
  %252 = vmatpush1.msra.mxu0 0.0
  %253 = vmatprep.subr.mxu0 0.0
  %254 = vmatpush1.msra.mxu0 0.0
  %255 = vmatprep.subr.mxu0 0.0
  %256 = vmatpush1.msra.mxu0 0.0
  %257 = vmatprep.subr.mxu0 0.0
  %258 = vmatpush1.msra.mxu0 0.0
  %259 = vmatprep.subr.mxu0 0.0
  %260 = vmatpush1.msra.mxu0 0.0
  %261 = vmatprep.subr.mxu0 0.0
  %262 = vmatpush1.msra.mxu0 0.0
  %263 = vmatprep.subr.mxu0 0.0
  %264 = vmatpush1.msra.mxu0 0.0
  %265 = vmatprep.subr.mxu0 0.0
  %266 = vmatpush1.msra.mxu0 0.0
  %267 = vmatprep.subr.mxu0 0.0
  %268 = vmatpush1.msra.mxu0 0.0
  %269 = vmatprep.mubr.f32.mxu0 0.0
  %v270 = vand.u32 %v17, 4294901760
  %271 = vmatmul.mubr.f32.gmra.mrb[0].mxu0 %v270
  %v272 = vpop.f32.mrb[0].mxu0
  %v273 = vadd.f32 %v122, %v272
  %v274 = vpop.f32.mrb[0].mxu0
  %275 = vdwg.mxu0
  %276 = vmatprep.subr.mxu0 0.0
  %v277 = vand.u32 %v18, 4294901760
  %v278 = vsub.f32 %v18, %v277
  %279 = vmatpush1.msra.mxu0 %v278
  %280 = vmatprep.subr.mxu0 0.0
  %v281 = vand.u32 %v19, 4294901760
  %v282 = vsub.f32 %v19, %v281
  %283 = vmatpush1.msra.mxu0 %v282
  %284 = vmatprep.subr.mxu0 0.0
  %v285 = vand.u32 %v20, 4294901760
  %v286 = vsub.f32 %v20, %v285
  %287 = vmatpush1.msra.mxu0 %v286
  %288 = vmatprep.subr.mxu0 0.0
  %v289 = vand.u32 %v21, 4294901760
  %v290 = vsub.f32 %v21, %v289
  %291 = vmatpush1.msra.mxu0 %v290
  %292 = vmatprep.subr.mxu0 0.0
  %v293 = vand.u32 %v22, 4294901760
  %v294 = vsub.f32 %v22, %v293
  %295 = vmatpush1.msra.mxu0 %v294
  %296 = vmatprep.subr.mxu0 0.0
  %v297 = vand.u32 %v23, 4294901760
  %v298 = vsub.f32 %v23, %v297
  %299 = vmatpush1.msra.mxu0 %v298
  %300 = vmatprep.subr.mxu0 0.0
  %v301 = vand.u32 %v24, 4294901760
  %v302 = vsub.f32 %v24, %v301
  %303 = vmatpush1.msra.mxu0 %v302
  %304 = vmatprep.subr.mxu0 0.0
  %v305 = vand.u32 %v25, 4294901760
  %v306 = vsub.f32 %v25, %v305
  %307 = vmatpush1.msra.mxu0 %v306
  %308 = vmatprep.subr.mxu0 0.0
  %v309 = vand.u32 %v26, 4294901760
  %v310 = vsub.f32 %v26, %v309
  %311 = vmatpush1.msra.mxu0 %v310
  %312 = vmatprep.subr.mxu0 0.0
  %v313 = vand.u32 %v27, 4294901760
  %v314 = vsub.f32 %v27, %v313
  %315 = vmatpush1.msra.mxu0 %v314
  %316 = vmatprep.subr.mxu0 0.0
  %v317 = vand.u32 %v28, 4294901760
  %v318 = vsub.f32 %v28, %v317
  %319 = vmatpush1.msra.mxu0 %v318
  %320 = vmatprep.subr.mxu0 0.0
  %v321 = vand.u32 %v29, 4294901760
  %v322 = vsub.f32 %v29, %v321
  %323 = vmatpush1.msra.mxu0 %v322
  %324 = vmatprep.subr.mxu0 0.0
  %v325 = vand.u32 %v30, 4294901760
  %v326 = vsub.f32 %v30, %v325
  %327 = vmatpush1.msra.mxu0 %v326
  %328 = vmatprep.subr.mxu0 0.0
  %v329 = vand.u32 %v31, 4294901760
  %v330 = vsub.f32 %v31, %v329
  %331 = vmatpush1.msra.mxu0 %v330
  %332 = vmatprep.subr.mxu0 0.0
  %v333 = vand.u32 %v32, 4294901760
  %v334 = vsub.f32 %v32, %v333
  %335 = vmatpush1.msra.mxu0 %v334
  %336 = vmatprep.subr.mxu0 0.0
  %v337 = vand.u32 %v33, 4294901760
  %v338 = vsub.f32 %v33, %v337
  %339 = vmatpush1.msra.mxu0 %v338
  %340 = vmatprep.subr.mxu0 0.0
  %341 = vmatpush1.msra.mxu0 0.0
  %342 = vmatprep.subr.mxu0 0.0
  %343 = vmatpush1.msra.mxu0 0.0
  %344 = vmatprep.subr.mxu0 0.0
  %345 = vmatpush1.msra.mxu0 0.0
  %346 = vmatprep.subr.mxu0 0.0
  %347 = vmatpush1.msra.mxu0 0.0
  %348 = vmatprep.subr.mxu0 0.0
  %349 = vmatpush1.msra.mxu0 0.0
  %350 = vmatprep.subr.mxu0 0.0
  %351 = vmatpush1.msra.mxu0 0.0
  %352 = vmatprep.subr.mxu0 0.0
  %353 = vmatpush1.msra.mxu0 0.0
  %354 = vmatprep.subr.mxu0 0.0
  %355 = vmatpush1.msra.mxu0 0.0
  %356 = vmatprep.subr.mxu0 0.0
  %357 = vmatpush1.msra.mxu0 0.0
  %358 = vmatprep.subr.mxu0 0.0
  %359 = vmatpush1.msra.mxu0 0.0
  %360 = vmatprep.subr.mxu0 0.0
  %361 = vmatpush1.msra.mxu0 0.0
  %362 = vmatprep.subr.mxu0 0.0
  %363 = vmatpush1.msra.mxu0 0.0
  %364 = vmatprep.subr.mxu0 0.0
  %365 = vmatpush1.msra.mxu0 0.0
  %366 = vmatprep.subr.mxu0 0.0
  %367 = vmatpush1.msra.mxu0 0.0
  %368 = vmatprep.subr.mxu0 0.0
  %369 = vmatpush1.msra.mxu0 0.0
  %370 = vmatprep.subr.mxu0 0.0
  %371 = vmatpush1.msra.mxu0 0.0
  %372 = vmatprep.mubr.f32.mxu0 0.0
  %v373 = vand.u32 %v17, 4294901760
  %v374 = vsub.f32 %v17, %v373
  %375 = vmatmul.mubr.f32.gmra.mrb[0].mxu0 %v374
  %v376 = vpop.f32.mrb[0].mxu0
  %v377 = vadd.f32 %v273, %v376
  %v378 = vpop.f32.mrb[0].mxu0
  %379 = vdwg.mxu0
  %380 = vmatprep.subr.mxu0 0.0
  %v381 = vand.u32 %v18, 4294901760
  %382 = vmatpush1.msra.mxu0 %v381
  %383 = vmatprep.subr.mxu0 0.0
  %v384 = vand.u32 %v19, 4294901760
  %385 = vmatpush1.msra.mxu0 %v384
  %386 = vmatprep.subr.mxu0 0.0
  %v387 = vand.u32 %v20, 4294901760
  %388 = vmatpush1.msra.mxu0 %v387
  %389 = vmatprep.subr.mxu0 0.0
  %v390 = vand.u32 %v21, 4294901760
  %391 = vmatpush1.msra.mxu0 %v390
  %392 = vmatprep.subr.mxu0 0.0
  %v393 = vand.u32 %v22, 4294901760
  %394 = vmatpush1.msra.mxu0 %v393
  %395 = vmatprep.subr.mxu0 0.0
  %v396 = vand.u32 %v23, 4294901760
  %397 = vmatpush1.msra.mxu0 %v396
  %398 = vmatprep.subr.mxu0 0.0
  %v399 = vand.u32 %v24, 4294901760
  %400 = vmatpush1.msra.mxu0 %v399
  %401 = vmatprep.subr.mxu0 0.0
  %v402 = vand.u32 %v25, 4294901760
  %403 = vmatpush1.msra.mxu0 %v402
  %404 = vmatprep.subr.mxu0 0.0
  %v405 = vand.u32 %v26, 4294901760
  %406 = vmatpush1.msra.mxu0 %v405
  %407 = vmatprep.subr.mxu0 0.0
  %v408 = vand.u32 %v27, 4294901760
  %409 = vmatpush1.msra.mxu0 %v408
  %410 = vmatprep.subr.mxu0 0.0
  %v411 = vand.u32 %v28, 4294901760
  %412 = vmatpush1.msra.mxu0 %v411
  %413 = vmatprep.subr.mxu0 0.0
  %v414 = vand.u32 %v29, 4294901760
  %415 = vmatpush1.msra.mxu0 %v414
  %416 = vmatprep.subr.mxu0 0.0
  %v417 = vand.u32 %v30, 4294901760
  %418 = vmatpush1.msra.mxu0 %v417
  %419 = vmatprep.subr.mxu0 0.0
  %v420 = vand.u32 %v31, 4294901760
  %421 = vmatpush1.msra.mxu0 %v420
  %422 = vmatprep.subr.mxu0 0.0
  %v423 = vand.u32 %v32, 4294901760
  %424 = vmatpush1.msra.mxu0 %v423
  %425 = vmatprep.subr.mxu0 0.0
  %v426 = vand.u32 %v33, 4294901760
  %427 = vmatpush1.msra.mxu0 %v426
  %428 = vmatprep.subr.mxu0 0.0
  %429 = vmatpush1.msra.mxu0 0.0
  %430 = vmatprep.subr.mxu0 0.0
  %431 = vmatpush1.msra.mxu0 0.0
  %432 = vmatprep.subr.mxu0 0.0
  %433 = vmatpush1.msra.mxu0 0.0
  %434 = vmatprep.subr.mxu0 0.0
  %435 = vmatpush1.msra.mxu0 0.0
  %436 = vmatprep.subr.mxu0 0.0
  %437 = vmatpush1.msra.mxu0 0.0
  %438 = vmatprep.subr.mxu0 0.0
  %439 = vmatpush1.msra.mxu0 0.0
  %440 = vmatprep.subr.mxu0 0.0
  %441 = vmatpush1.msra.mxu0 0.0
  %442 = vmatprep.subr.mxu0 0.0
  %443 = vmatpush1.msra.mxu0 0.0
  %444 = vmatprep.subr.mxu0 0.0
  %445 = vmatpush1.msra.mxu0 0.0
  %446 = vmatprep.subr.mxu0 0.0
  %447 = vmatpush1.msra.mxu0 0.0
  %448 = vmatprep.subr.mxu0 0.0
  %449 = vmatpush1.msra.mxu0 0.0
  %450 = vmatprep.subr.mxu0 0.0
  %451 = vmatpush1.msra.mxu0 0.0
  %452 = vmatprep.subr.mxu0 0.0
  %453 = vmatpush1.msra.mxu0 0.0
  %454 = vmatprep.subr.mxu0 0.0
  %455 = vmatpush1.msra.mxu0 0.0
  %456 = vmatprep.subr.mxu0 0.0
  %457 = vmatpush1.msra.mxu0 0.0
  %458 = vmatprep.subr.mxu0 0.0
  %459 = vmatpush1.msra.mxu0 0.0
  %460 = vmatprep.mubr.f32.mxu0 0.0
  %v461 = vand.u32 %v17, 4294901760
  %v462 = vsub.f32 %v17, %v461
  %v463 = vand.u32 %v462, 4294901760
  %464 = vmatmul.mubr.f32.gmra.mrb[0].mxu0 %v463
  %v465 = vpop.f32.mrb[0].mxu0
  %v466 = vadd.f32 %v377, %v465
  %v467 = vpop.f32.mrb[0].mxu0
  %468 = vdwg.mxu0
  %469 = vmatprep.subr.mxu0 0.0
  %v470 = vand.u32 %v18, 4294901760
  %v471 = vsub.f32 %v18, %v470
  %v472 = vand.u32 %v471, 4294901760
  %473 = vmatpush1.msra.mxu0 %v472
  %474 = vmatprep.subr.mxu0 0.0
  %v475 = vand.u32 %v19, 4294901760
  %v476 = vsub.f32 %v19, %v475
  %v477 = vand.u32 %v476, 4294901760
  %478 = vmatpush1.msra.mxu0 %v477
  %479 = vmatprep.subr.mxu0 0.0
  %v480 = vand.u32 %v20, 4294901760
  %v481 = vsub.f32 %v20, %v480
  %v482 = vand.u32 %v481, 4294901760
  %483 = vmatpush1.msra.mxu0 %v482
  %484 = vmatprep.subr.mxu0 0.0
  %v485 = vand.u32 %v21, 4294901760
  %v486 = vsub.f32 %v21, %v485
  %v487 = vand.u32 %v486, 4294901760
  %488 = vmatpush1.msra.mxu0 %v487
  %489 = vmatprep.subr.mxu0 0.0
  %v490 = vand.u32 %v22, 4294901760
  %v491 = vsub.f32 %v22, %v490
  %v492 = vand.u32 %v491, 4294901760
  %493 = vmatpush1.msra.mxu0 %v492
  %494 = vmatprep.subr.mxu0 0.0
  %v495 = vand.u32 %v23, 4294901760
  %v496 = vsub.f32 %v23, %v495
  %v497 = vand.u32 %v496, 4294901760
  %498 = vmatpush1.msra.mxu0 %v497
  %499 = vmatprep.subr.mxu0 0.0
  %v500 = vand.u32 %v24, 4294901760
  %v501 = vsub.f32 %v24, %v500
  %v502 = vand.u32 %v501, 4294901760
  %503 = vmatpush1.msra.mxu0 %v502
  %504 = vmatprep.subr.mxu0 0.0
  %v505 = vand.u32 %v25, 4294901760
  %v506 = vsub.f32 %v25, %v505
  %v507 = vand.u32 %v506, 4294901760
  %508 = vmatpush1.msra.mxu0 %v507
  %509 = vmatprep.subr.mxu0 0.0
  %v510 = vand.u32 %v26, 4294901760
  %v511 = vsub.f32 %v26, %v510
  %v512 = vand.u32 %v511, 4294901760
  %513 = vmatpush1.msra.mxu0 %v512
  %514 = vmatprep.subr.mxu0 0.0
  %v515 = vand.u32 %v27, 4294901760
  %v516 = vsub.f32 %v27, %v515
  %v517 = vand.u32 %v516, 4294901760
  %518 = vmatpush1.msra.mxu0 %v517
  %519 = vmatprep.subr.mxu0 0.0
  %v520 = vand.u32 %v28, 4294901760
  %v521 = vsub.f32 %v28, %v520
  %v522 = vand.u32 %v521, 4294901760
  %523 = vmatpush1.msra.mxu0 %v522
  %524 = vmatprep.subr.mxu0 0.0
  %v525 = vand.u32 %v29, 4294901760
  %v526 = vsub.f32 %v29, %v525
  %v527 = vand.u32 %v526, 4294901760
  %528 = vmatpush1.msra.mxu0 %v527
  %529 = vmatprep.subr.mxu0 0.0
  %v530 = vand.u32 %v30, 4294901760
  %v531 = vsub.f32 %v30, %v530
  %v532 = vand.u32 %v531, 4294901760
  %533 = vmatpush1.msra.mxu0 %v532
  %534 = vmatprep.subr.mxu0 0.0
  %v535 = vand.u32 %v31, 4294901760
  %v536 = vsub.f32 %v31, %v535
  %v537 = vand.u32 %v536, 4294901760
  %538 = vmatpush1.msra.mxu0 %v537
  %539 = vmatprep.subr.mxu0 0.0
  %v540 = vand.u32 %v32, 4294901760
  %v541 = vsub.f32 %v32, %v540
  %v542 = vand.u32 %v541, 4294901760
  %543 = vmatpush1.msra.mxu0 %v542
  %544 = vmatprep.subr.mxu0 0.0
  %v545 = vand.u32 %v33, 4294901760
  %v546 = vsub.f32 %v33, %v545
  %v547 = vand.u32 %v546, 4294901760
  %548 = vmatpush1.msra.mxu0 %v547
  %549 = vmatprep.subr.mxu0 0.0
  %550 = vmatpush1.msra.mxu0 0.0
  %551 = vmatprep.subr.mxu0 0.0
  %552 = vmatpush1.msra.mxu0 0.0
  %553 = vmatprep.subr.mxu0 0.0
  %554 = vmatpush1.msra.mxu0 0.0
  %555 = vmatprep.subr.mxu0 0.0
  %556 = vmatpush1.msra.mxu0 0.0
  %557 = vmatprep.subr.mxu0 0.0
  %558 = vmatpush1.msra.mxu0 0.0
  %559 = vmatprep.subr.mxu0 0.0
  %560 = vmatpush1.msra.mxu0 0.0
  %561 = vmatprep.subr.mxu0 0.0
  %562 = vmatpush1.msra.mxu0 0.0
  %563 = vmatprep.subr.mxu0 0.0
  %564 = vmatpush1.msra.mxu0 0.0
  %565 = vmatprep.subr.mxu0 0.0
  %566 = vmatpush1.msra.mxu0 0.0
  %567 = vmatprep.subr.mxu0 0.0
  %568 = vmatpush1.msra.mxu0 0.0
  %569 = vmatprep.subr.mxu0 0.0
  %570 = vmatpush1.msra.mxu0 0.0
  %571 = vmatprep.subr.mxu0 0.0
  %572 = vmatpush1.msra.mxu0 0.0
  %573 = vmatprep.subr.mxu0 0.0
  %574 = vmatpush1.msra.mxu0 0.0
  %575 = vmatprep.subr.mxu0 0.0
  %576 = vmatpush1.msra.mxu0 0.0
  %577 = vmatprep.subr.mxu0 0.0
  %578 = vmatpush1.msra.mxu0 0.0
  %579 = vmatprep.subr.mxu0 0.0
  %580 = vmatpush1.msra.mxu0 0.0
  %581 = vmatprep.mubr.f32.mxu0 0.0
  %v582 = vand.u32 %v17, 4294901760
  %583 = vmatmul.mubr.f32.gmra.mrb[0].mxu0 %v582
  %v584 = vpop.f32.mrb[0].mxu0
  %v585 = vadd.f32 %v466, %v584
  %v586 = vpop.f32.mrb[0].mxu0
  %587 = vdwg.mxu0
  %588 = vmatprep.subr.mxu0 0.0
  %v589 = vand.u32 %v18, 4294901760
  %590 = vmatpush1.msra.mxu0 %v589
  %591 = vmatprep.subr.mxu0 0.0
  %v592 = vand.u32 %v19, 4294901760
  %593 = vmatpush1.msra.mxu0 %v592
  %594 = vmatprep.subr.mxu0 0.0
  %v595 = vand.u32 %v20, 4294901760
  %596 = vmatpush1.msra.mxu0 %v595
  %597 = vmatprep.subr.mxu0 0.0
  %v598 = vand.u32 %v21, 4294901760
  %599 = vmatpush1.msra.mxu0 %v598
  %600 = vmatprep.subr.mxu0 0.0
  %v601 = vand.u32 %v22, 4294901760
  %602 = vmatpush1.msra.mxu0 %v601
  %603 = vmatprep.subr.mxu0 0.0
  %v604 = vand.u32 %v23, 4294901760
  %605 = vmatpush1.msra.mxu0 %v604
  %606 = vmatprep.subr.mxu0 0.0
  %v607 = vand.u32 %v24, 4294901760
  %608 = vmatpush1.msra.mxu0 %v607
  %609 = vmatprep.subr.mxu0 0.0
  %v610 = vand.u32 %v25, 4294901760
  %611 = vmatpush1.msra.mxu0 %v610
  %612 = vmatprep.subr.mxu0 0.0
  %v613 = vand.u32 %v26, 4294901760
  %614 = vmatpush1.msra.mxu0 %v613
  %615 = vmatprep.subr.mxu0 0.0
  %v616 = vand.u32 %v27, 4294901760
  %617 = vmatpush1.msra.mxu0 %v616
  %618 = vmatprep.subr.mxu0 0.0
  %v619 = vand.u32 %v28, 4294901760
  %620 = vmatpush1.msra.mxu0 %v619
  %621 = vmatprep.subr.mxu0 0.0
  %v622 = vand.u32 %v29, 4294901760
  %623 = vmatpush1.msra.mxu0 %v622
  %624 = vmatprep.subr.mxu0 0.0
  %v625 = vand.u32 %v30, 4294901760
  %626 = vmatpush1.msra.mxu0 %v625
  %627 = vmatprep.subr.mxu0 0.0
  %v628 = vand.u32 %v31, 4294901760
  %629 = vmatpush1.msra.mxu0 %v628
  %630 = vmatprep.subr.mxu0 0.0
  %v631 = vand.u32 %v32, 4294901760
  %632 = vmatpush1.msra.mxu0 %v631
  %633 = vmatprep.subr.mxu0 0.0
  %v634 = vand.u32 %v33, 4294901760
  %635 = vmatpush1.msra.mxu0 %v634
  %636 = vmatprep.subr.mxu0 0.0
  %637 = vmatpush1.msra.mxu0 0.0
  %638 = vmatprep.subr.mxu0 0.0
  %639 = vmatpush1.msra.mxu0 0.0
  %640 = vmatprep.subr.mxu0 0.0
  %641 = vmatpush1.msra.mxu0 0.0
  %642 = vmatprep.subr.mxu0 0.0
  %643 = vmatpush1.msra.mxu0 0.0
  %644 = vmatprep.subr.mxu0 0.0
  %645 = vmatpush1.msra.mxu0 0.0
  %646 = vmatprep.subr.mxu0 0.0
  %647 = vmatpush1.msra.mxu0 0.0
  %648 = vmatprep.subr.mxu0 0.0
  %649 = vmatpush1.msra.mxu0 0.0
  %650 = vmatprep.subr.mxu0 0.0
  %651 = vmatpush1.msra.mxu0 0.0
  %652 = vmatprep.subr.mxu0 0.0
  %653 = vmatpush1.msra.mxu0 0.0
  %654 = vmatprep.subr.mxu0 0.0
  %655 = vmatpush1.msra.mxu0 0.0
  %656 = vmatprep.subr.mxu0 0.0
  %657 = vmatpush1.msra.mxu0 0.0
  %658 = vmatprep.subr.mxu0 0.0
  %659 = vmatpush1.msra.mxu0 0.0
  %660 = vmatprep.subr.mxu0 0.0
  %661 = vmatpush1.msra.mxu0 0.0
  %662 = vmatprep.subr.mxu0 0.0
  %663 = vmatpush1.msra.mxu0 0.0
  %664 = vmatprep.subr.mxu0 0.0
  %665 = vmatpush1.msra.mxu0 0.0
  %666 = vmatprep.subr.mxu0 0.0
  %667 = vmatpush1.msra.mxu0 0.0
  %668 = vmatprep.mubr.f32.mxu0 0.0
  %v669 = vand.u32 %v17, 4294901760
  %670 = vmatmul.mubr.f32.gmra.mrb[0].mxu0 %v669
  %v671 = vpop.f32.mrb[0].mxu0
  %v672 = vadd.f32 %v585, %v671
  %v673 = vpop.f32.mrb[0].mxu0
  %674 = vdwg.mxu0
  %v675 = vadd.f32 %v16, %v672
  %676 = vst [vmem:[#allocation2] sm:$0xff] %v675
  // Predicated region
  $region14: #{qdrgat_forward.7} parent=0 // pred_check
    %p677 = pneg %p11
  $region15: #{qdrgat_forward.7} parent=0 // pred_check_branch
    %679 = sbr.rel (%p677) target = $region17
  $region16: #{qdrgat_forward.7} parent=0 // pred_region
    %v680 = vld [vmem:[#allocation2] sm:$0xff]
    %vm681 = vcmp.gt.f32.partialorder %v680, 0.0
    %v682 = vmul.f32 %v680, 1.442695
    %v683 = vpow.pop %v682
    %v684 = vsub.f32 %v683, 1.0
    %v685 = vsel %vm681, %v680, %v684
    %686 = vst [vmem:[%s2] sm:$0xff] %v685
  $region17: #{qdrgat_forward.7} parent=0 // pred_fallthru
    _
  // Predicated region
  $region18: #{qdrgat_forward.7} parent=0 // pred_check
    _
  $region19: #{qdrgat_forward.7} parent=0 // pred_check_branch
    %688 = sbr.rel (0) target = $region21
  $region20: #{qdrgat_forward.7} parent=0 // pred_region
    _
  $region21: #{qdrgat_forward.7} parent=0 // pred_fallthru
    _
  // Predicated region
  $region22: #{qdrgat_forward.7} parent=0 // pred_check
    _
  $region23: #{qdrgat_forward.7} parent=0 // pred_check_branch
    %690 = sbr.rel (0) target = $region25
  $region24: #{qdrgat_forward.7} parent=0 // pred_region
    _
  $region25: #{qdrgat_forward.7} parent=0 // pred_fallthru
    _

// kernel: qdrgat_forward.12
$region0: #{qdrgat_forward.12}
  #allocation0 [shape = 'u32[]', space=smem, size = 0x4, offset = 0x4, fixed_abs, tag = 'smem constant byte address 0x4 - core index']
  #allocation1 [shape = 'u32[144,128]{1,0:T(1,128)}', space=vmem, size = 0x12000, scoped, tag = 'internal scratch']
  #allocation2 [shape = 'f32[32,128]{1,0:T(8,128)}', space=vmem, size = 0x4000, scoped, tag = 'scratch operand']
  %s0 = inlined_call_operand.vmem [shape: f32[32,128], index: 0, kind: input, shape index: {}]
  %s1 = inlined_call_operand.vmem [shape: f32[128,128], index: 1, kind: input, shape index: {}]
  %s2 = inlined_call_operand.vmem [shape: f32[32,128], index: 2, kind: output, shape index: {}]
  %s3 = sld [smem:[#allocation0]]
  $region26: #{qdrgat_forward.12} parent=0
    _
  %s5 = ssub.s32 1, %s3
  %s6 = scalar_select 0, %s5, %s3
  // Predicated region
  $region2: #{qdrgat_forward.12} parent=0 // pred_check
    _
  $region3: #{qdrgat_forward.12} parent=0 // pred_check_branch
    %8 = sbr.rel (0) target = $region5
  $region4: #{qdrgat_forward.12} parent=0 // pred_region
    _
  $region5: #{qdrgat_forward.12} parent=0 // pred_fallthru
    _
  // Predicated region
  $region6: #{qdrgat_forward.12} parent=0 // pred_check
    _
  $region7: #{qdrgat_forward.12} parent=0 // pred_check_branch
    %10 = sbr.rel (0) target = $region9
  $region8: #{qdrgat_forward.12} parent=0 // pred_region
    _
  $region9: #{qdrgat_forward.12} parent=0 // pred_fallthru
    _
  %p11 = scmp.eq.s32.totalorder 0, 0
  // Predicated region
  $region10: #{qdrgat_forward.12} parent=0 // pred_check
    %p12 = pneg %p11
  $region11: #{qdrgat_forward.12} parent=0 // pred_check_branch
    %14 = sbr.rel (%p12) target = $region13
  $region12: #{qdrgat_forward.12} parent=0 // pred_region
    %15 = vst [vmem:[#allocation2] sm:$0xff] 0.0
    %16 = vst [vmem:[#allocation2 + $0x8] sm:$0xff] 0.0
    %17 = vst [vmem:[#allocation2 + $0x10] sm:$0xff] 0.0
    %18 = vst [vmem:[#allocation2 + $0x18] sm:$0xff] 0.0
  $region13: #{qdrgat_forward.12} parent=0 // pred_fallthru
    _
  %v19 = vld [vmem:[#allocation2] sm:$0xff]
  %v20 = vld [vmem:[#allocation2 + $0x8] sm:$0xff]
  %v21 = vld [vmem:[#allocation2 + $0x10] sm:$0xff]
  %v22 = vld [vmem:[#allocation2 + $0x18] sm:$0xff]
  %v23 = vld [vmem:[%s0] sm:$0xff]
  %v24 = vld [vmem:[%s0 + $0x8] sm:$0xff]
  %v25 = vld [vmem:[%s0 + $0x10] sm:$0xff]
  %v26 = vld [vmem:[%s0 + $0x18] sm:$0xff]
  %v27 = vld [vmem:[%s1] sm:$0xff]
  %v28 = vld [vmem:[%s1 + $0x8] sm:$0xff]
  %v29 = vld [vmem:[%s1 + $0x10] sm:$0xff]
  %v30 = vld [vmem:[%s1 + $0x18] sm:$0xff]
  %v31 = vld [vmem:[%s1 + $0x20] sm:$0xff]
  %v32 = vld [vmem:[%s1 + $0x28] sm:$0xff]
  %v33 = vld [vmem:[%s1 + $0x30] sm:$0xff]
  %v34 = vld [vmem:[%s1 + $0x38] sm:$0xff]
  %v35 = vld [vmem:[%s1 + $0x40] sm:$0xff]
  %v36 = vld [vmem:[%s1 + $0x48] sm:$0xff]
  %v37 = vld [vmem:[%s1 + $0x50] sm:$0xff]
  %v38 = vld [vmem:[%s1 + $0x58] sm:$0xff]
  %v39 = vld [vmem:[%s1 + $0x60] sm:$0xff]
  %v40 = vld [vmem:[%s1 + $0x68] sm:$0xff]
  %v41 = vld [vmem:[%s1 + $0x70] sm:$0xff]
  %v42 = vld [vmem:[%s1 + $0x78] sm:$0xff]
  %43 = vmatprep.subr.mxu0 0.0
  %v44 = vand.u32 %v27, 4294901760
  %45 = vmatpush1.msra.mxu0 %v44
  %46 = vmatprep.subr.mxu0 0.0
  %v47 = vand.u32 %v28, 4294901760
  %48 = vmatpush1.msra.mxu0 %v47
  %49 = vmatprep.subr.mxu0 0.0
  %v50 = vand.u32 %v29, 4294901760
  %51 = vmatpush1.msra.mxu0 %v50
  %52 = vmatprep.subr.mxu0 0.0
  %v53 = vand.u32 %v30, 4294901760
  %54 = vmatpush1.msra.mxu0 %v53
  %55 = vmatprep.subr.mxu0 0.0
  %v56 = vand.u32 %v31, 4294901760
  %57 = vmatpush1.msra.mxu0 %v56
  %58 = vmatprep.subr.mxu0 0.0
  %v59 = vand.u32 %v32, 4294901760
  %60 = vmatpush1.msra.mxu0 %v59
  %61 = vmatprep.subr.mxu0 0.0
  %v62 = vand.u32 %v33, 4294901760
  %63 = vmatpush1.msra.mxu0 %v62
  %64 = vmatprep.subr.mxu0 0.0
  %v65 = vand.u32 %v34, 4294901760
  %66 = vmatpush1.msra.mxu0 %v65
  %67 = vmatprep.subr.mxu0 0.0
  %v68 = vand.u32 %v35, 4294901760
  %69 = vmatpush1.msra.mxu0 %v68
  %70 = vmatprep.subr.mxu0 0.0
  %v71 = vand.u32 %v36, 4294901760
  %72 = vmatpush1.msra.mxu0 %v71
  %73 = vmatprep.subr.mxu0 0.0
  %v74 = vand.u32 %v37, 4294901760
  %75 = vmatpush1.msra.mxu0 %v74
  %76 = vmatprep.subr.mxu0 0.0
  %v77 = vand.u32 %v38, 4294901760
  %78 = vmatpush1.msra.mxu0 %v77
  %79 = vmatprep.subr.mxu0 0.0
  %v80 = vand.u32 %v39, 4294901760
  %81 = vmatpush1.msra.mxu0 %v80
  %82 = vmatprep.subr.mxu0 0.0
  %v83 = vand.u32 %v40, 4294901760
  %84 = vmatpush1.msra.mxu0 %v83
  %85 = vmatprep.subr.mxu0 0.0
  %v86 = vand.u32 %v41, 4294901760
  %87 = vmatpush1.msra.mxu0 %v86
  %88 = vmatprep.subr.mxu0 0.0
  %v89 = vand.u32 %v42, 4294901760
  %90 = vmatpush1.msra.mxu0 %v89
  %91 = vmatprep.subr.mxu0 0.0
  %92 = vmatpush1.msra.mxu0 0.0
  %93 = vmatprep.subr.mxu0 0.0
  %94 = vmatpush1.msra.mxu0 0.0
  %95 = vmatprep.subr.mxu0 0.0
  %96 = vmatpush1.msra.mxu0 0.0
  %97 = vmatprep.subr.mxu0 0.0
  %98 = vmatpush1.msra.mxu0 0.0
  %99 = vmatprep.subr.mxu0 0.0
  %100 = vmatpush1.msra.mxu0 0.0
  %101 = vmatprep.subr.mxu0 0.0
  %102 = vmatpush1.msra.mxu0 0.0
  %103 = vmatprep.subr.mxu0 0.0
  %104 = vmatpush1.msra.mxu0 0.0
  %105 = vmatprep.subr.mxu0 0.0
  %106 = vmatpush1.msra.mxu0 0.0
  %107 = vmatprep.subr.mxu0 0.0
  %108 = vmatpush1.msra.mxu0 0.0
  %109 = vmatprep.subr.mxu0 0.0
  %110 = vmatpush1.msra.mxu0 0.0
  %111 = vmatprep.subr.mxu0 0.0
  %112 = vmatpush1.msra.mxu0 0.0
  %113 = vmatprep.subr.mxu0 0.0
  %114 = vmatpush1.msra.mxu0 0.0
  %115 = vmatprep.subr.mxu0 0.0
  %116 = vmatpush1.msra.mxu0 0.0
  %117 = vmatprep.subr.mxu0 0.0
  %118 = vmatpush1.msra.mxu0 0.0
  %119 = vmatprep.subr.mxu0 0.0
  %120 = vmatpush1.msra.mxu0 0.0
  %121 = vmatprep.subr.mxu0 0.0
  %122 = vmatpush1.msra.mxu0 0.0
  %123 = vmatprep.mubr.f32.mxu0 0.0
  %v124 = vand.u32 %v23, 4294901760
  %v125 = vsub.f32 %v23, %v124
  %v126 = vand.u32 %v125, 4294901760
  %v127 = vsub.f32 %v125, %v126
  %v128 = vand.u32 %v127, 4294901760
  %129 = vmatmul.mubr.f32.gmra.mrb[0].mxu0 %v128
  %v130 = vpop.f32.mrb[0].mxu0
  %v131 = vadd.f32 0.0, %v130
  %v132 = vpop.f32.mrb[0].mxu0
  %133 = vmatprep.mubr.f32.mxu0 0.0
  %v134 = vand.u32 %v24, 4294901760
  %v135 = vsub.f32 %v24, %v134
  %v136 = vand.u32 %v135, 4294901760
  %v137 = vsub.f32 %v135, %v136
  %v138 = vand.u32 %v137, 4294901760
  %139 = vmatmul.mubr.f32.gmra.mrb[0].mxu0 %v138
  %v140 = vpop.f32.mrb[0].mxu0
  %v141 = vadd.f32 0.0, %v140
  %v142 = vpop.f32.mrb[0].mxu0
  %143 = vmatprep.mubr.f32.mxu0 0.0
  %v144 = vand.u32 %v25, 4294901760
  %v145 = vsub.f32 %v25, %v144
  %v146 = vand.u32 %v145, 4294901760
  %v147 = vsub.f32 %v145, %v146
  %v148 = vand.u32 %v147, 4294901760
  %149 = vmatmul.mubr.f32.gmra.mrb[0].mxu0 %v148
  %v150 = vpop.f32.mrb[0].mxu0
  %v151 = vadd.f32 0.0, %v150
  %v152 = vpop.f32.mrb[0].mxu0
  %153 = vmatprep.mubr.f32.mxu0 0.0
  %v154 = vand.u32 %v26, 4294901760
  %v155 = vsub.f32 %v26, %v154
  %v156 = vand.u32 %v155, 4294901760
  %v157 = vsub.f32 %v155, %v156
  %v158 = vand.u32 %v157, 4294901760
  %159 = vmatmul.mubr.f32.gmra.mrb[0].mxu0 %v158
  %v160 = vpop.f32.mrb[0].mxu0
  %v161 = vadd.f32 0.0, %v160
  %v162 = vpop.f32.mrb[0].mxu0
  %163 = vdwg.mxu0
  %164 = vmatprep.subr.mxu0 0.0
  %v165 = vand.u32 %v27, 4294901760
  %v166 = vsub.f32 %v27, %v165
  %v167 = vand.u32 %v166, 4294901760
  %v168 = vsub.f32 %v166, %v167
  %v169 = vand.u32 %v168, 4294901760
  %170 = vmatpush1.msra.mxu0 %v169
  %171 = vmatprep.subr.mxu0 0.0
  %v172 = vand.u32 %v28, 4294901760
  %v173 = vsub.f32 %v28, %v172
  %v174 = vand.u32 %v173, 4294901760
  %v175 = vsub.f32 %v173, %v174
  %v176 = vand.u32 %v175, 4294901760
  %177 = vmatpush1.msra.mxu0 %v176
  %178 = vmatprep.subr.mxu0 0.0
  %v179 = vand.u32 %v29, 4294901760
  %v180 = vsub.f32 %v29, %v179
  %v181 = vand.u32 %v180, 4294901760
  %v182 = vsub.f32 %v180, %v181
  %v183 = vand.u32 %v182, 4294901760
  %184 = vmatpush1.msra.mxu0 %v183
  %185 = vmatprep.subr.mxu0 0.0
  %v186 = vand.u32 %v30, 4294901760
  %v187 = vsub.f32 %v30, %v186
  %v188 = vand.u32 %v187, 4294901760
  %v189 = vsub.f32 %v187, %v188
  %v190 = vand.u32 %v189, 4294901760
  %191 = vmatpush1.msra.mxu0 %v190
  %192 = vmatprep.subr.mxu0 0.0
  %v193 = vand.u32 %v31, 4294901760
  %v194 = vsub.f32 %v31, %v193
  %v195 = vand.u32 %v194, 4294901760
  %v196 = vsub.f32 %v194, %v195
  %v197 = vand.u32 %v196, 4294901760
  %198 = vmatpush1.msra.mxu0 %v197
  %199 = vmatprep.subr.mxu0 0.0
  %v200 = vand.u32 %v32, 4294901760
  %v201 = vsub.f32 %v32, %v200
  %v202 = vand.u32 %v201, 4294901760
  %v203 = vsub.f32 %v201, %v202
  %v204 = vand.u32 %v203, 4294901760
  %205 = vmatpush1.msra.mxu0 %v204
  %206 = vmatprep.subr.mxu0 0.0
  %v207 = vand.u32 %v33, 4294901760
  %v208 = vsub.f32 %v33, %v207
  %v209 = vand.u32 %v208, 4294901760
  %v210 = vsub.f32 %v208, %v209
  %v211 = vand.u32 %v210, 4294901760
  %212 = vmatpush1.msra.mxu0 %v211
  %213 = vmatprep.subr.mxu0 0.0
  %v214 = vand.u32 %v34, 4294901760
  %v215 = vsub.f32 %v34, %v214
  %v216 = vand.u32 %v215, 4294901760
  %v217 = vsub.f32 %v215, %v216
  %v218 = vand.u32 %v217, 4294901760
  %219 = vmatpush1.msra.mxu0 %v218
  %220 = vmatprep.subr.mxu0 0.0
  %v221 = vand.u32 %v35, 4294901760
  %v222 = vsub.f32 %v35, %v221
  %v223 = vand.u32 %v222, 4294901760
  %v224 = vsub.f32 %v222, %v223
  %v225 = vand.u32 %v224, 4294901760
  %226 = vmatpush1.msra.mxu0 %v225
  %227 = vmatprep.subr.mxu0 0.0
  %v228 = vand.u32 %v36, 4294901760
  %v229 = vsub.f32 %v36, %v228
  %v230 = vand.u32 %v229, 4294901760
  %v231 = vsub.f32 %v229, %v230
  %v232 = vand.u32 %v231, 4294901760
  %233 = vmatpush1.msra.mxu0 %v232
  %234 = vmatprep.subr.mxu0 0.0
  %v235 = vand.u32 %v37, 4294901760
  %v236 = vsub.f32 %v37, %v235
  %v237 = vand.u32 %v236, 4294901760
  %v238 = vsub.f32 %v236, %v237
  %v239 = vand.u32 %v238, 4294901760
  %240 = vmatpush1.msra.mxu0 %v239
  %241 = vmatprep.subr.mxu0 0.0
  %v242 = vand.u32 %v38, 4294901760
  %v243 = vsub.f32 %v38, %v242
  %v244 = vand.u32 %v243, 4294901760
  %v245 = vsub.f32 %v243, %v244
  %v246 = vand.u32 %v245, 4294901760
  %247 = vmatpush1.msra.mxu0 %v246
  %248 = vmatprep.subr.mxu0 0.0
  %v249 = vand.u32 %v39, 4294901760
  %v250 = vsub.f32 %v39, %v249
  %v251 = vand.u32 %v250, 4294901760
  %v252 = vsub.f32 %v250, %v251
  %v253 = vand.u32 %v252, 4294901760
  %254 = vmatpush1.msra.mxu0 %v253
  %255 = vmatprep.subr.mxu0 0.0
  %v256 = vand.u32 %v40, 4294901760
  %v257 = vsub.f32 %v40, %v256
  %v258 = vand.u32 %v257, 4294901760
  %v259 = vsub.f32 %v257, %v258
  %v260 = vand.u32 %v259, 4294901760
  %261 = vmatpush1.msra.mxu0 %v260
  %262 = vmatprep.subr.mxu0 0.0
  %v263 = vand.u32 %v41, 4294901760
  %v264 = vsub.f32 %v41, %v263
  %v265 = vand.u32 %v264, 4294901760
  %v266 = vsub.f32 %v264, %v265
  %v267 = vand.u32 %v266, 4294901760
  %268 = vmatpush1.msra.mxu0 %v267
  %269 = vmatprep.subr.mxu0 0.0
  %v270 = vand.u32 %v42, 4294901760
  %v271 = vsub.f32 %v42, %v270
  %v272 = vand.u32 %v271, 4294901760
  %v273 = vsub.f32 %v271, %v272
  %v274 = vand.u32 %v273, 4294901760
  %275 = vmatpush1.msra.mxu0 %v274
  %276 = vmatprep.subr.mxu0 0.0
  %277 = vmatpush1.msra.mxu0 0.0
  %278 = vmatprep.subr.mxu0 0.0
  %279 = vmatpush1.msra.mxu0 0.0
  %280 = vmatprep.subr.mxu0 0.0
  %281 = vmatpush1.msra.mxu0 0.0
  %282 = vmatprep.subr.mxu0 0.0
  %283 = vmatpush1.msra.mxu0 0.0
  %284 = vmatprep.subr.mxu0 0.0
  %285 = vmatpush1.msra.mxu0 0.0
  %286 = vmatprep.subr.mxu0 0.0
  %287 = vmatpush1.msra.mxu0 0.0
  %288 = vmatprep.subr.mxu0 0.0
  %289 = vmatpush1.msra.mxu0 0.0
  %290 = vmatprep.subr.mxu0 0.0
  %291 = vmatpush1.msra.mxu0 0.0
  %292 = vmatprep.subr.mxu0 0.0
  %293 = vmatpush1.msra.mxu0 0.0
  %294 = vmatprep.subr.mxu0 0.0
  %295 = vmatpush1.msra.mxu0 0.0
  %296 = vmatprep.subr.mxu0 0.0
  %297 = vmatpush1.msra.mxu0 0.0
  %298 = vmatprep.subr.mxu0 0.0
  %299 = vmatpush1.msra.mxu0 0.0
  %300 = vmatprep.subr.mxu0 0.0
  %301 = vmatpush1.msra.mxu0 0.0
  %302 = vmatprep.subr.mxu0 0.0
  %303 = vmatpush1.msra.mxu0 0.0
  %304 = vmatprep.subr.mxu0 0.0
  %305 = vmatpush1.msra.mxu0 0.0
  %306 = vmatprep.subr.mxu0 0.0
  %307 = vmatpush1.msra.mxu0 0.0
  %308 = vmatprep.mubr.f32.mxu0 0.0
  %v309 = vand.u32 %v23, 4294901760
  %310 = vmatmul.mubr.f32.gmra.mrb[0].mxu0 %v309
  %v311 = vpop.f32.mrb[0].mxu0
  %v312 = vadd.f32 %v131, %v311
  %v313 = vpop.f32.mrb[0].mxu0
  %314 = vmatprep.mubr.f32.mxu0 0.0
  %v315 = vand.u32 %v24, 4294901760
  %316 = vmatmul.mubr.f32.gmra.mrb[0].mxu0 %v315
  %v317 = vpop.f32.mrb[0].mxu0
  %v318 = vadd.f32 %v141, %v317
  %v319 = vpop.f32.mrb[0].mxu0
  %320 = vmatprep.mubr.f32.mxu0 0.0
  %v321 = vand.u32 %v25, 4294901760
  %322 = vmatmul.mubr.f32.gmra.mrb[0].mxu0 %v321
  %v323 = vpop.f32.mrb[0].mxu0
  %v324 = vadd.f32 %v151, %v323
  %v325 = vpop.f32.mrb[0].mxu0
  %326 = vmatprep.mubr.f32.mxu0 0.0
  %v327 = vand.u32 %v26, 4294901760
  %328 = vmatmul.mubr.f32.gmra.mrb[0].mxu0 %v327
  %v329 = vpop.f32.mrb[0].mxu0
  %v330 = vadd.f32 %v161, %v329
  %v331 = vpop.f32.mrb[0].mxu0
  %332 = vdwg.mxu0
  %333 = vmatprep.subr.mxu0 0.0
  %v334 = vand.u32 %v27, 4294901760
  %v335 = vsub.f32 %v27, %v334
  %336 = vmatpush1.msra.mxu0 %v335
  %337 = vmatprep.subr.mxu0 0.0
  %v338 = vand.u32 %v28, 4294901760
  %v339 = vsub.f32 %v28, %v338
  %340 = vmatpush1.msra.mxu0 %v339
  %341 = vmatprep.subr.mxu0 0.0
  %v342 = vand.u32 %v29, 4294901760
  %v343 = vsub.f32 %v29, %v342
  %344 = vmatpush1.msra.mxu0 %v343
  %345 = vmatprep.subr.mxu0 0.0
  %v346 = vand.u32 %v30, 4294901760
  %v347 = vsub.f32 %v30, %v346
  %348 = vmatpush1.msra.mxu0 %v347
  %349 = vmatprep.subr.mxu0 0.0
  %v350 = vand.u32 %v31, 4294901760
  %v351 = vsub.f32 %v31, %v350
  %352 = vmatpush1.msra.mxu0 %v351
  %353 = vmatprep.subr.mxu0 0.0
  %v354 = vand.u32 %v32, 4294901760
  %v355 = vsub.f32 %v32, %v354
  %356 = vmatpush1.msra.mxu0 %v355
  %357 = vmatprep.subr.mxu0 0.0
  %v358 = vand.u32 %v33, 4294901760
  %v359 = vsub.f32 %v33, %v358
  %360 = vmatpush1.msra.mxu0 %v359
  %361 = vmatprep.subr.mxu0 0.0
  %v362 = vand.u32 %v34, 4294901760
  %v363 = vsub.f32 %v34, %v362
  %364 = vmatpush1.msra.mxu0 %v363
  %365 = vmatprep.subr.mxu0 0.0
  %v366 = vand.u32 %v35, 4294901760
  %v367 = vsub.f32 %v35, %v366
  %368 = vmatpush1.msra.mxu0 %v367
  %369 = vmatprep.subr.mxu0 0.0
  %v370 = vand.u32 %v36, 4294901760
  %v371 = vsub.f32 %v36, %v370
  %372 = vmatpush1.msra.mxu0 %v371
  %373 = vmatprep.subr.mxu0 0.0
  %v374 = vand.u32 %v37, 4294901760
  %v375 = vsub.f32 %v37, %v374
  %376 = vmatpush1.msra.mxu0 %v375
  %377 = vmatprep.subr.mxu0 0.0
  %v378 = vand.u32 %v38, 4294901760
  %v379 = vsub.f32 %v38, %v378
  %380 = vmatpush1.msra.mxu0 %v379
  %381 = vmatprep.subr.mxu0 0.0
  %v382 = vand.u32 %v39, 4294901760
  %v383 = vsub.f32 %v39, %v382
  %384 = vmatpush1.msra.mxu0 %v383
  %385 = vmatprep.subr.mxu0 0.0
  %v386 = vand.u32 %v40, 4294901760
  %v387 = vsub.f32 %v40, %v386
  %388 = vmatpush1.msra.mxu0 %v387
  %389 = vmatprep.subr.mxu0 0.0
  %v390 = vand.u32 %v41, 4294901760
  %v391 = vsub.f32 %v41, %v390
  %392 = vmatpush1.msra.mxu0 %v391
  %393 = vmatprep.subr.mxu0 0.0
  %v394 = vand.u32 %v42, 4294901760
  %v395 = vsub.f32 %v42, %v394
  %396 = vmatpush1.msra.mxu0 %v395
  %397 = vmatprep.subr.mxu0 0.0
  %398 = vmatpush1.msra.mxu0 0.0
  %399 = vmatprep.subr.mxu0 0.0
  %400 = vmatpush1.msra.mxu0 0.0
  %401 = vmatprep.subr.mxu0 0.0
  %402 = vmatpush1.msra.mxu0 0.0
  %403 = vmatprep.subr.mxu0 0.0
  %404 = vmatpush1.msra.mxu0 0.0
  %405 = vmatprep.subr.mxu0 0.0
  %406 = vmatpush1.msra.mxu0 0.0
  %407 = vmatprep.subr.mxu0 0.0
  %408 = vmatpush1.msra.mxu0 0.0
  %409 = vmatprep.subr.mxu0 0.0
  %410 = vmatpush1.msra.mxu0 0.0
  %411 = vmatprep.subr.mxu0 0.0
  %412 = vmatpush1.msra.mxu0 0.0
  %413 = vmatprep.subr.mxu0 0.0
  %414 = vmatpush1.msra.mxu0 0.0
  %415 = vmatprep.subr.mxu0 0.0
  %416 = vmatpush1.msra.mxu0 0.0
  %417 = vmatprep.subr.mxu0 0.0
  %418 = vmatpush1.msra.mxu0 0.0
  %419 = vmatprep.subr.mxu0 0.0
  %420 = vmatpush1.msra.mxu0 0.0
  %421 = vmatprep.subr.mxu0 0.0
  %422 = vmatpush1.msra.mxu0 0.0
  %423 = vmatprep.subr.mxu0 0.0
  %424 = vmatpush1.msra.mxu0 0.0
  %425 = vmatprep.subr.mxu0 0.0
  %426 = vmatpush1.msra.mxu0 0.0
  %427 = vmatprep.subr.mxu0 0.0
  %428 = vmatpush1.msra.mxu0 0.0
  %429 = vmatprep.mubr.f32.mxu0 0.0
  %v430 = vand.u32 %v23, 4294901760
  %v431 = vsub.f32 %v23, %v430
  %432 = vmatmul.mubr.f32.gmra.mrb[0].mxu0 %v431
  %v433 = vpop.f32.mrb[0].mxu0
  %v434 = vadd.f32 %v312, %v433
  %v435 = vpop.f32.mrb[0].mxu0
  %436 = vmatprep.mubr.f32.mxu0 0.0
  %v437 = vand.u32 %v24, 4294901760
  %v438 = vsub.f32 %v24, %v437
  %439 = vmatmul.mubr.f32.gmra.mrb[0].mxu0 %v438
  %v440 = vpop.f32.mrb[0].mxu0
  %v441 = vadd.f32 %v318, %v440
  %v442 = vpop.f32.mrb[0].mxu0
  %443 = vmatprep.mubr.f32.mxu0 0.0
  %v444 = vand.u32 %v25, 4294901760
  %v445 = vsub.f32 %v25, %v444
  %446 = vmatmul.mubr.f32.gmra.mrb[0].mxu0 %v445
  %v447 = vpop.f32.mrb[0].mxu0
  %v448 = vadd.f32 %v324, %v447
  %v449 = vpop.f32.mrb[0].mxu0
  %450 = vmatprep.mubr.f32.mxu0 0.0
  %v451 = vand.u32 %v26, 4294901760
  %v452 = vsub.f32 %v26, %v451
  %453 = vmatmul.mubr.f32.gmra.mrb[0].mxu0 %v452
  %v454 = vpop.f32.mrb[0].mxu0
  %v455 = vadd.f32 %v330, %v454
  %v456 = vpop.f32.mrb[0].mxu0
  %457 = vdwg.mxu0
  %458 = vmatprep.subr.mxu0 0.0
  %v459 = vand.u32 %v27, 4294901760
  %460 = vmatpush1.msra.mxu0 %v459
  %461 = vmatprep.subr.mxu0 0.0
  %v462 = vand.u32 %v28, 4294901760
  %463 = vmatpush1.msra.mxu0 %v462
  %464 = vmatprep.subr.mxu0 0.0
  %v465 = vand.u32 %v29, 4294901760
  %466 = vmatpush1.msra.mxu0 %v465
  %467 = vmatprep.subr.mxu0 0.0
  %v468 = vand.u32 %v30, 4294901760
  %469 = vmatpush1.msra.mxu0 %v468
  %470 = vmatprep.subr.mxu0 0.0
  %v471 = vand.u32 %v31, 4294901760
  %472 = vmatpush1.msra.mxu0 %v471
  %473 = vmatprep.subr.mxu0 0.0
  %v474 = vand.u32 %v32, 4294901760
  %475 = vmatpush1.msra.mxu0 %v474
  %476 = vmatprep.subr.mxu0 0.0
  %v477 = vand.u32 %v33, 4294901760
  %478 = vmatpush1.msra.mxu0 %v477
  %479 = vmatprep.subr.mxu0 0.0
  %v480 = vand.u32 %v34, 4294901760
  %481 = vmatpush1.msra.mxu0 %v480
  %482 = vmatprep.subr.mxu0 0.0
  %v483 = vand.u32 %v35, 4294901760
  %484 = vmatpush1.msra.mxu0 %v483
  %485 = vmatprep.subr.mxu0 0.0
  %v486 = vand.u32 %v36, 4294901760
  %487 = vmatpush1.msra.mxu0 %v486
  %488 = vmatprep.subr.mxu0 0.0
  %v489 = vand.u32 %v37, 4294901760
  %490 = vmatpush1.msra.mxu0 %v489
  %491 = vmatprep.subr.mxu0 0.0
  %v492 = vand.u32 %v38, 4294901760
  %493 = vmatpush1.msra.mxu0 %v492
  %494 = vmatprep.subr.mxu0 0.0
  %v495 = vand.u32 %v39, 4294901760
  %496 = vmatpush1.msra.mxu0 %v495
  %497 = vmatprep.subr.mxu0 0.0
  %v498 = vand.u32 %v40, 4294901760
  %499 = vmatpush1.msra.mxu0 %v498
  %500 = vmatprep.subr.mxu0 0.0
  %v501 = vand.u32 %v41, 4294901760
  %502 = vmatpush1.msra.mxu0 %v501
  %503 = vmatprep.subr.mxu0 0.0
  %v504 = vand.u32 %v42, 4294901760
  %505 = vmatpush1.msra.mxu0 %v504
  %506 = vmatprep.subr.mxu0 0.0
  %507 = vmatpush1.msra.mxu0 0.0
  %508 = vmatprep.subr.mxu0 0.0
  %509 = vmatpush1.msra.mxu0 0.0
  %510 = vmatprep.subr.mxu0 0.0
  %511 = vmatpush1.msra.mxu0 0.0
  %512 = vmatprep.subr.mxu0 0.0
  %513 = vmatpush1.msra.mxu0 0.0
  %514 = vmatprep.subr.mxu0 0.0
  %515 = vmatpush1.msra.mxu0 0.0
  %516 = vmatprep.subr.mxu0 0.0
  %517 = vmatpush1.msra.mxu0 0.0
  %518 = vmatprep.subr.mxu0 0.0
  %519 = vmatpush1.msra.mxu0 0.0
  %520 = vmatprep.subr.mxu0 0.0
  %521 = vmatpush1.msra.mxu0 0.0
  %522 = vmatprep.subr.mxu0 0.0
  %523 = vmatpush1.msra.mxu0 0.0
  %524 = vmatprep.subr.mxu0 0.0
  %525 = vmatpush1.msra.mxu0 0.0
  %526 = vmatprep.subr.mxu0 0.0
  %527 = vmatpush1.msra.mxu0 0.0
  %528 = vmatprep.subr.mxu0 0.0
  %529 = vmatpush1.msra.mxu0 0.0
  %530 = vmatprep.subr.mxu0 0.0
  %531 = vmatpush1.msra.mxu0 0.0
  %532 = vmatprep.subr.mxu0 0.0
  %533 = vmatpush1.msra.mxu0 0.0
  %534 = vmatprep.subr.mxu0 0.0
  %535 = vmatpush1.msra.mxu0 0.0
  %536 = vmatprep.subr.mxu0 0.0
  %537 = vmatpush1.msra.mxu0 0.0
  %538 = vmatprep.mubr.f32.mxu0 0.0
  %v539 = vand.u32 %v23, 4294901760
  %v540 = vsub.f32 %v23, %v539
  %v541 = vand.u32 %v540, 4294901760
  %542 = vmatmul.mubr.f32.gmra.mrb[0].mxu0 %v541
  %v543 = vpop.f32.mrb[0].mxu0
  %v544 = vadd.f32 %v434, %v543
  %v545 = vpop.f32.mrb[0].mxu0
  %546 = vmatprep.mubr.f32.mxu0 0.0
  %v547 = vand.u32 %v24, 4294901760
  %v548 = vsub.f32 %v24, %v547
  %v549 = vand.u32 %v548, 4294901760
  %550 = vmatmul.mubr.f32.gmra.mrb[0].mxu0 %v549
  %v551 = vpop.f32.mrb[0].mxu0
  %v552 = vadd.f32 %v441, %v551
  %v553 = vpop.f32.mrb[0].mxu0
  %554 = vmatprep.mubr.f32.mxu0 0.0
  %v555 = vand.u32 %v25, 4294901760
  %v556 = vsub.f32 %v25, %v555
  %v557 = vand.u32 %v556, 4294901760
  %558 = vmatmul.mubr.f32.gmra.mrb[0].mxu0 %v557
  %v559 = vpop.f32.mrb[0].mxu0
  %v560 = vadd.f32 %v448, %v559
  %v561 = vpop.f32.mrb[0].mxu0
  %562 = vmatprep.mubr.f32.mxu0 0.0
  %v563 = vand.u32 %v26, 4294901760
  %v564 = vsub.f32 %v26, %v563
  %v565 = vand.u32 %v564, 4294901760
  %566 = vmatmul.mubr.f32.gmra.mrb[0].mxu0 %v565
  %v567 = vpop.f32.mrb[0].mxu0
  %v568 = vadd.f32 %v455, %v567
  %v569 = vpop.f32.mrb[0].mxu0
  %570 = vdwg.mxu0
  %571 = vmatprep.subr.mxu0 0.0
  %v572 = vand.u32 %v27, 4294901760
  %v573 = vsub.f32 %v27, %v572
  %v574 = vand.u32 %v573, 4294901760
  %575 = vmatpush1.msra.mxu0 %v574
  %576 = vmatprep.subr.mxu0 0.0
  %v577 = vand.u32 %v28, 4294901760
  %v578 = vsub.f32 %v28, %v577
  %v579 = vand.u32 %v578, 4294901760
  %580 = vmatpush1.msra.mxu0 %v579
  %581 = vmatprep.subr.mxu0 0.0
  %v582 = vand.u32 %v29, 4294901760
  %v583 = vsub.f32 %v29, %v582
  %v584 = vand.u32 %v583, 4294901760
  %585 = vmatpush1.msra.mxu0 %v584
  %586 = vmatprep.subr.mxu0 0.0
  %v587 = vand.u32 %v30, 4294901760
  %v588 = vsub.f32 %v30, %v587
  %v589 = vand.u32 %v588, 4294901760
  %590 = vmatpush1.msra.mxu0 %v589
  %591 = vmatprep.subr.mxu0 0.0
  %v592 = vand.u32 %v31, 4294901760
  %v593 = vsub.f32 %v31, %v592
  %v594 = vand.u32 %v593, 4294901760
  %595 = vmatpush1.msra.mxu0 %v594
  %596 = vmatprep.subr.mxu0 0.0
  %v597 = vand.u32 %v32, 4294901760
  %v598 = vsub.f32 %v32, %v597
  %v599 = vand.u32 %v598, 4294901760
  %600 = vmatpush1.msra.mxu0 %v599
  %601 = vmatprep.subr.mxu0 0.0
  %v602 = vand.u32 %v33, 4294901760
  %v603 = vsub.f32 %v33, %v602
  %v604 = vand.u32 %v603, 4294901760
  %605 = vmatpush1.msra.mxu0 %v604
  %606 = vmatprep.subr.mxu0 0.0
  %v607 = vand.u32 %v34, 4294901760
  %v608 = vsub.f32 %v34, %v607
  %v609 = vand.u32 %v608, 4294901760
  %610 = vmatpush1.msra.mxu0 %v609
  %611 = vmatprep.subr.mxu0 0.0
  %v612 = vand.u32 %v35, 4294901760
  %v613 = vsub.f32 %v35, %v612
  %v614 = vand.u32 %v613, 4294901760
  %615 = vmatpush1.msra.mxu0 %v614
  %616 = vmatprep.subr.mxu0 0.0
  %v617 = vand.u32 %v36, 4294901760
  %v618 = vsub.f32 %v36, %v617
  %v619 = vand.u32 %v618, 4294901760
  %620 = vmatpush1.msra.mxu0 %v619
  %621 = vmatprep.subr.mxu0 0.0
  %v622 = vand.u32 %v37, 4294901760
  %v623 = vsub.f32 %v37, %v622
  %v624 = vand.u32 %v623, 4294901760
  %625 = vmatpush1.msra.mxu0 %v624
  %626 = vmatprep.subr.mxu0 0.0
  %v627 = vand.u32 %v38, 4294901760
  %v628 = vsub.f32 %v38, %v627
  %v629 = vand.u32 %v628, 4294901760
  %630 = vmatpush1.msra.mxu0 %v629
  %631 = vmatprep.subr.mxu0 0.0
  %v632 = vand.u32 %v39, 4294901760
  %v633 = vsub.f32 %v39, %v632
  %v634 = vand.u32 %v633, 4294901760
  %635 = vmatpush1.msra.mxu0 %v634
  %636 = vmatprep.subr.mxu0 0.0
  %v637 = vand.u32 %v40, 4294901760
  %v638 = vsub.f32 %v40, %v637
  %v639 = vand.u32 %v638, 4294901760
  %640 = vmatpush1.msra.mxu0 %v639
  %641 = vmatprep.subr.mxu0 0.0
  %v642 = vand.u32 %v41, 4294901760
  %v643 = vsub.f32 %v41, %v642
  %v644 = vand.u32 %v643, 4294901760
  %645 = vmatpush1.msra.mxu0 %v644
  %646 = vmatprep.subr.mxu0 0.0
  %v647 = vand.u32 %v42, 4294901760
  %v648 = vsub.f32 %v42, %v647
  %v649 = vand.u32 %v648, 4294901760
  %650 = vmatpush1.msra.mxu0 %v649
  %651 = vmatprep.subr.mxu0 0.0
  %652 = vmatpush1.msra.mxu0 0.0
  %653 = vmatprep.subr.mxu0 0.0
  %654 = vmatpush1.msra.mxu0 0.0
  %655 = vmatprep.subr.mxu0 0.0
  %656 = vmatpush1.msra.mxu0 0.0
  %657 = vmatprep.subr.mxu0 0.0
  %658 = vmatpush1.msra.mxu0 0.0
  %659 = vmatprep.subr.mxu0 0.0
  %660 = vmatpush1.msra.mxu0 0.0
  %661 = vmatprep.subr.mxu0 0.0
  %662 = vmatpush1.msra.mxu0 0.0
  %663 = vmatprep.subr.mxu0 0.0
  %664 = vmatpush1.msra.mxu0 0.0
  %665 = vmatprep.subr.mxu0 0.0
  %666 = vmatpush1.msra.mxu0 0.0
  %667 = vmatprep.subr.mxu0 0.0
  %668 = vmatpush1.msra.mxu0 0.0
  %669 = vmatprep.subr.mxu0 0.0
  %670 = vmatpush1.msra.mxu0 0.0
  %671 = vmatprep.subr.mxu0 0.0
  %672 = vmatpush1.msra.mxu0 0.0
  %673 = vmatprep.subr.mxu0 0.0
  %674 = vmatpush1.msra.mxu0 0.0
  %675 = vmatprep.subr.mxu0 0.0
  %676 = vmatpush1.msra.mxu0 0.0
  %677 = vmatprep.subr.mxu0 0.0
  %678 = vmatpush1.msra.mxu0 0.0
  %679 = vmatprep.subr.mxu0 0.0
  %680 = vmatpush1.msra.mxu0 0.0
  %681 = vmatprep.subr.mxu0 0.0
  %682 = vmatpush1.msra.mxu0 0.0
  %683 = vmatprep.mubr.f32.mxu0 0.0
  %v684 = vand.u32 %v23, 4294901760
  %685 = vmatmul.mubr.f32.gmra.mrb[0].mxu0 %v684
  %v686 = vpop.f32.mrb[0].mxu0
  %v687 = vadd.f32 %v544, %v686
  %v688 = vpop.f32.mrb[0].mxu0
  %689 = vmatprep.mubr.f32.mxu0 0.0
  %v690 = vand.u32 %v24, 4294901760
  %691 = vmatmul.mubr.f32.gmra.mrb[0].mxu0 %v690
  %v692 = vpop.f32.mrb[0].mxu0
  %v693 = vadd.f32 %v552, %v692
  %v694 = vpop.f32.mrb[0].mxu0
  %695 = vmatprep.mubr.f32.mxu0 0.0
  %v696 = vand.u32 %v25, 4294901760
  %697 = vmatmul.mubr.f32.gmra.mrb[0].mxu0 %v696
  %v698 = vpop.f32.mrb[0].mxu0
  %v699 = vadd.f32 %v560, %v698
  %v700 = vpop.f32.mrb[0].mxu0
  %701 = vmatprep.mubr.f32.mxu0 0.0
  %v702 = vand.u32 %v26, 4294901760
  %703 = vmatmul.mubr.f32.gmra.mrb[0].mxu0 %v702
  %v704 = vpop.f32.mrb[0].mxu0
  %v705 = vadd.f32 %v568, %v704
  %v706 = vpop.f32.mrb[0].mxu0
  %707 = vdwg.mxu0
  %708 = vmatprep.subr.mxu0 0.0
  %v709 = vand.u32 %v27, 4294901760
  %710 = vmatpush1.msra.mxu0 %v709
  %711 = vmatprep.subr.mxu0 0.0
  %v712 = vand.u32 %v28, 4294901760
  %713 = vmatpush1.msra.mxu0 %v712
  %714 = vmatprep.subr.mxu0 0.0
  %v715 = vand.u32 %v29, 4294901760
  %716 = vmatpush1.msra.mxu0 %v715
  %717 = vmatprep.subr.mxu0 0.0
  %v718 = vand.u32 %v30, 4294901760
  %719 = vmatpush1.msra.mxu0 %v718
  %720 = vmatprep.subr.mxu0 0.0
  %v721 = vand.u32 %v31, 4294901760
  %722 = vmatpush1.msra.mxu0 %v721
  %723 = vmatprep.subr.mxu0 0.0
  %v724 = vand.u32 %v32, 4294901760
  %725 = vmatpush1.msra.mxu0 %v724
  %726 = vmatprep.subr.mxu0 0.0
  %v727 = vand.u32 %v33, 4294901760
  %728 = vmatpush1.msra.mxu0 %v727
  %729 = vmatprep.subr.mxu0 0.0
  %v730 = vand.u32 %v34, 4294901760
  %731 = vmatpush1.msra.mxu0 %v730
  %732 = vmatprep.subr.mxu0 0.0
  %v733 = vand.u32 %v35, 4294901760
  %734 = vmatpush1.msra.mxu0 %v733
  %735 = vmatprep.subr.mxu0 0.0
  %v736 = vand.u32 %v36, 4294901760
  %737 = vmatpush1.msra.mxu0 %v736
  %738 = vmatprep.subr.mxu0 0.0
  %v739 = vand.u32 %v37, 4294901760
  %740 = vmatpush1.msra.mxu0 %v739
  %741 = vmatprep.subr.mxu0 0.0
  %v742 = vand.u32 %v38, 4294901760
  %743 = vmatpush1.msra.mxu0 %v742
  %744 = vmatprep.subr.mxu0 0.0
  %v745 = vand.u32 %v39, 4294901760
  %746 = vmatpush1.msra.mxu0 %v745
  %747 = vmatprep.subr.mxu0 0.0
  %v748 = vand.u32 %v40, 4294901760
  %749 = vmatpush1.msra.mxu0 %v748
  %750 = vmatprep.subr.mxu0 0.0
  %v751 = vand.u32 %v41, 4294901760
  %752 = vmatpush1.msra.mxu0 %v751
  %753 = vmatprep.subr.mxu0 0.0
  %v754 = vand.u32 %v42, 4294901760
  %755 = vmatpush1.msra.mxu0 %v754
  %756 = vmatprep.subr.mxu0 0.0
  %757 = vmatpush1.msra.mxu0 0.0
  %758 = vmatprep.subr.mxu0 0.0
  %759 = vmatpush1.msra.mxu0 0.0
  %760 = vmatprep.subr.mxu0 0.0
  %761 = vmatpush1.msra.mxu0 0.0
  %762 = vmatprep.subr.mxu0 0.0
  %763 = vmatpush1.msra.mxu0 0.0
  %764 = vmatprep.subr.mxu0 0.0
  %765 = vmatpush1.msra.mxu0 0.0
  %766 = vmatprep.subr.mxu0 0.0
  %767 = vmatpush1.msra.mxu0 0.0
  %768 = vmatprep.subr.mxu0 0.0
  %769 = vmatpush1.msra.mxu0 0.0
  %770 = vmatprep.subr.mxu0 0.0
  %771 = vmatpush1.msra.mxu0 0.0
  %772 = vmatprep.subr.mxu0 0.0
  %773 = vmatpush1.msra.mxu0 0.0
  %774 = vmatprep.subr.mxu0 0.0
  %775 = vmatpush1.msra.mxu0 0.0
  %776 = vmatprep.subr.mxu0 0.0
  %777 = vmatpush1.msra.mxu0 0.0
  %778 = vmatprep.subr.mxu0 0.0
  %779 = vmatpush1.msra.mxu0 0.0
  %780 = vmatprep.subr.mxu0 0.0
  %781 = vmatpush1.msra.mxu0 0.0
  %782 = vmatprep.subr.mxu0 0.0
  %783 = vmatpush1.msra.mxu0 0.0
  %784 = vmatprep.subr.mxu0 0.0
  %785 = vmatpush1.msra.mxu0 0.0
  %786 = vmatprep.subr.mxu0 0.0
  %787 = vmatpush1.msra.mxu0 0.0
  %788 = vmatprep.mubr.f32.mxu0 0.0
  %v789 = vand.u32 %v23, 4294901760
  %790 = vmatmul.mubr.f32.gmra.mrb[0].mxu0 %v789
  %v791 = vpop.f32.mrb[0].mxu0
  %v792 = vadd.f32 %v687, %v791
  %v793 = vpop.f32.mrb[0].mxu0
  %794 = vmatprep.mubr.f32.mxu0 0.0
  %v795 = vand.u32 %v24, 4294901760
  %796 = vmatmul.mubr.f32.gmra.mrb[0].mxu0 %v795
  %v797 = vpop.f32.mrb[0].mxu0
  %v798 = vadd.f32 %v693, %v797
  %v799 = vpop.f32.mrb[0].mxu0
  %800 = vmatprep.mubr.f32.mxu0 0.0
  %v801 = vand.u32 %v25, 4294901760
  %802 = vmatmul.mubr.f32.gmra.mrb[0].mxu0 %v801
  %v803 = vpop.f32.mrb[0].mxu0
  %v804 = vadd.f32 %v699, %v803
  %v805 = vpop.f32.mrb[0].mxu0
  %806 = vmatprep.mubr.f32.mxu0 0.0
  %v807 = vand.u32 %v26, 4294901760
  %808 = vmatmul.mubr.f32.gmra.mrb[0].mxu0 %v807
  %v809 = vpop.f32.mrb[0].mxu0
  %v810 = vadd.f32 %v705, %v809
  %v811 = vpop.f32.mrb[0].mxu0
  %812 = vdwg.mxu0
  %v813 = vadd.f32 %v19, %v792
  %v814 = vadd.f32 %v20, %v798
  %v815 = vadd.f32 %v21, %v804
  %v816 = vadd.f32 %v22, %v810
  %817 = vst [vmem:[#allocation2] sm:$0xff] %v813
  %818 = vst [vmem:[#allocation2 + $0x8] sm:$0xff] %v814
  %819 = vst [vmem:[#allocation2 + $0x10] sm:$0xff] %v815
  %820 = vst [vmem:[#allocation2 + $0x18] sm:$0xff] %v816
  // Predicated region
  $region14: #{qdrgat_forward.12} parent=0 // pred_check
    %p821 = pneg %p11
  $region15: #{qdrgat_forward.12} parent=0 // pred_check_branch
    %823 = sbr.rel (%p821) target = $region17
  $region16: #{qdrgat_forward.12} parent=0 // pred_region
    %v824 = vld [vmem:[#allocation2] sm:$0xff]
    %v825 = vld [vmem:[#allocation2 + $0x8] sm:$0xff]
    %v826 = vld [vmem:[#allocation2 + $0x10] sm:$0xff]
    %v827 = vld [vmem:[#allocation2 + $0x18] sm:$0xff]
    %828 = vst [vmem:[%s2] sm:$0xff] %v824
    %829 = vst [vmem:[%s2 + $0x8] sm:$0xff] %v825
    %830 = vst [vmem:[%s2 + $0x10] sm:$0xff] %v826
    %831 = vst [vmem:[%s2 + $0x18] sm:$0xff] %v827
  $region17: #{qdrgat_forward.12} parent=0 // pred_fallthru
    _
  // Predicated region
  $region18: #{qdrgat_forward.12} parent=0 // pred_check
    _
  $region19: #{qdrgat_forward.12} parent=0 // pred_check_branch
    %833 = sbr.rel (0) target = $region21
  $region20: #{qdrgat_forward.12} parent=0 // pred_region
    _
  $region21: #{qdrgat_forward.12} parent=0 // pred_fallthru
    _
  // Predicated region
  $region22: #{qdrgat_forward.12} parent=0 // pred_check
    _
  $region23: #{qdrgat_forward.12} parent=0 // pred_check_branch
    %835 = sbr.rel (0) target = $region25
  $region24: #{qdrgat_forward.12} parent=0 // pred_region
    _
  $region25: #{qdrgat_forward.12} parent=0 // pred_fallthru
    _

// kernel: qdrgat_forward.13
$region0: #{qdrgat_forward.13}
  #allocation0 [shape = 'u32[]', space=smem, size = 0x4, offset = 0x4, fixed_abs, tag = 'smem constant byte address 0x4 - core index']
  #allocation1 [shape = 'u32[144,128]{1,0:T(1,128)}', space=vmem, size = 0x12000, scoped, tag = 'internal scratch']
  %s0 = inlined_call_operand.vmem [shape: f32[2,16,32], index: 0, kind: input, shape index: {}]
  %s1 = inlined_call_operand.vmem [shape: f32[2,16,32], index: 1, kind: input, shape index: {}]
  %s2 = inlined_call_operand.vmem [shape: f32[2,1,32], index: 2, kind: input, shape index: {}]
  %s3 = inlined_call_operand.vmem [shape: f32[2,1,32], index: 3, kind: input, shape index: {}]
  %s4 = inlined_call_operand.vmem [shape: f32[32,4], index: 4, kind: input, shape index: {}]
  %s5 = inlined_call_operand.vmem [shape: f32[32,4], index: 5, kind: input, shape index: {}]
  %s6 = inlined_call_operand.vmem [shape: f32[2,16,16,4], index: 6, kind: input, shape index: {}]
  %s7 = inlined_call_operand.vmem [shape: f32[2,16,32], index: 7, kind: input, shape index: {}]
  %s8 = inlined_call_operand.vmem [shape: f32[32,32], index: 8, kind: input, shape index: {}]
  %s9 = inlined_call_operand.vmem [shape: f32[32,32], index: 9, kind: input, shape index: {}]
  %s10 = inlined_call_operand.hbm [shape: f32[2,16,32], index: 10, kind: output, shape index: {}]
  %s11 = sld [smem:[#allocation0]]
  $region73: #{qdrgat_forward.13} parent=0
    _
  %s13 = ssub.s32 1, %s11
  %s14 = scalar_select 0, %s13, %s11
  $region1: #{qdrgat_forward.13} parent=0
    #allocation2 [shape = 'u8[16384]{0}', space=vmem, size = 0x4000, scoped, tag = 'output window, operand 0']
    #allocation3 [shape = 's32[2]{0}', space=sflag, size = 0x8, scoped, tag = 'scoped memory for qdrgat_forward.13']
    %15 = vsyncpa [#allocation3], 0
    %s16 = scalar_lea.sflag [#allocation3], 1
    %17 = vsyncpa %s16, 0
    loop: start=0, step=1, limit=4
    $region2: #{qdrgat_forward.13} parent=1 // loop_pre_header
      _
    $region3: #{qdrgat_forward.13} parent=1 // loop_header
      %s19 = sphi 0, %s23
      %p20 = scmp.ge.s32.totalorder %s19, 4
      %s29 = sphi 0, %s31
      %s32 = sphi 0, %s29
      %s33 = sphi 0, %s32
      %s49 = sphi 0, %s33
      %s55 = sphi 0, %s57
      %s58 = sphi 0, %s55
      %s59 = sphi 0, %s58
      %s75 = sphi 0, %s59
      %s81 = sphi 0, %s83
      %s84 = sphi 0, %s81
      %s85 = sphi 0, %s84
      %s101 = sphi 0, %s85
      %s107 = sphi 0, %s109
      %s110 = sphi 0, %s107
      %s111 = sphi 0, %s110
      %s127 = sphi 0, %s111
      %s131 = sphi 0, %s131
      %s133 = sphi 0, %s131
      %s134 = sphi 0, %s133
      %s148 = sphi 0, %s134
      %s152 = sphi 0, %s152
      %s154 = sphi 0, %s152
      %s155 = sphi 0, %s154
      %s169 = sphi 0, %s155
      %s175 = sphi 0, %s177
      %s178 = sphi 0, %s175
      %s179 = sphi 0, %s178
      %s195 = sphi 0, %s179
      %s201 = sphi 0, %s203
      %s204 = sphi 0, %s201
      %s205 = sphi 0, %s204
      %s221 = sphi 0, %s205
      %s225 = sphi 0, %s225
      %s227 = sphi 0, %s225
      %s228 = sphi 0, %s227
      %s242 = sphi 0, %s228
      %s246 = sphi 0, %s246
      %s248 = sphi 0, %s246
      %s249 = sphi 0, %s248
      %s263 = sphi 0, %s249
      %s269 = sphi 0, %s271
      %s272 = sphi 0, %s269
      %s273 = sphi 0, %s272
      %s289 = sphi 0, %s273
    $region4: #{qdrgat_forward.13} parent=1 // loop_header_branch
      %22 = sbr.rel (%p20) target = $region8
    $region5: #{qdrgat_forward.13} parent=1 // loop_body
      %s24 = ssub.s32 %s19, 1
      %s25 = ssub.s32 %s19, 2
      %s26 = sadd.s32 %s19, 1
      %s27 = ssub.s32 %s19, %s26
      %p28 = scmp.eq.s32.totalorder %s27, 0
      %s30 = sadd.s32 %s29, 1
      %s31 = scalar_select %p28, %s29, %s30
      %p34 = pneg %p28
      %p35 = scmp.eq.s32.totalorder %s19, 1
      %p36 = por %p34, %p35
      %p37 = scmp.ne.s32.totalorder %s29, %s32
      %p38 = scmp.eq.s32.totalorder %s19, 0
      %p39 = por %p37, %p38
      %p40 = scmp.ne.s32.totalorder %s29, %s32
      %p41 = scmp.eq.s32.totalorder %s24, 1
      %p42 = por %p40, %p41
      %p43 = scmp.ne.s32.totalorder %s32, %s33
      %p44 = scmp.eq.s32.totalorder %s24, 0
      %p45 = por %p43, %p44
      %p46 = scmp.ne.s32.totalorder %s32, %s33
      %p47 = scmp.eq.s32.totalorder %s25, 1
      %p48 = por %p46, %p47
      %p50 = scmp.ne.s32.totalorder %s33, %s49
      %p51 = scmp.eq.s32.totalorder %s25, 0
      %p52 = por %p50, %p51
      %s53 = ssub.s32 %s19, %s26
      %p54 = scmp.eq.s32.totalorder %s53, 0
      %s56 = sadd.s32 %s55, 1
      %s57 = scalar_select %p54, %s55, %s56
      %p60 = pneg %p54
      %p61 = scmp.eq.s32.totalorder %s19, 1
      %p62 = por %p60, %p61
      %p63 = scmp.ne.s32.totalorder %s55, %s58
      %p64 = scmp.eq.s32.totalorder %s19, 0
      %p65 = por %p63, %p64
      %p66 = scmp.ne.s32.totalorder %s55, %s58
      %p67 = scmp.eq.s32.totalorder %s24, 1
      %p68 = por %p66, %p67
      %p69 = scmp.ne.s32.totalorder %s58, %s59
      %p70 = scmp.eq.s32.totalorder %s24, 0
      %p71 = por %p69, %p70
      %p72 = scmp.ne.s32.totalorder %s58, %s59
      %p73 = scmp.eq.s32.totalorder %s25, 1
      %p74 = por %p72, %p73
      %p76 = scmp.ne.s32.totalorder %s59, %s75
      %p77 = scmp.eq.s32.totalorder %s25, 0
      %p78 = por %p76, %p77
      %s79 = ssub.s32 %s19, %s26
      %p80 = scmp.eq.s32.totalorder %s79, 0
      %s82 = sadd.s32 %s81, 1
      %s83 = scalar_select %p80, %s81, %s82
      %p86 = pneg %p80
      %p87 = scmp.eq.s32.totalorder %s19, 1
      %p88 = por %p86, %p87
      %p89 = scmp.ne.s32.totalorder %s81, %s84
      %p90 = scmp.eq.s32.totalorder %s19, 0
      %p91 = por %p89, %p90
      %p92 = scmp.ne.s32.totalorder %s81, %s84
      %p93 = scmp.eq.s32.totalorder %s24, 1
      %p94 = por %p92, %p93
      %p95 = scmp.ne.s32.totalorder %s84, %s85
      %p96 = scmp.eq.s32.totalorder %s24, 0
      %p97 = por %p95, %p96
      %p98 = scmp.ne.s32.totalorder %s84, %s85
      %p99 = scmp.eq.s32.totalorder %s25, 1
      %p100 = por %p98, %p99
      %p102 = scmp.ne.s32.totalorder %s85, %s101
      %p103 = scmp.eq.s32.totalorder %s25, 0
      %p104 = por %p102, %p103
      %s105 = ssub.s32 %s19, %s26
      %p106 = scmp.eq.s32.totalorder %s105, 0
      %s108 = sadd.s32 %s107, 1
      %s109 = scalar_select %p106, %s107, %s108
      %p112 = pneg %p106
      %p113 = scmp.eq.s32.totalorder %s19, 1
      %p114 = por %p112, %p113
      %p115 = scmp.ne.s32.totalorder %s107, %s110
      %p116 = scmp.eq.s32.totalorder %s19, 0
      %p117 = por %p115, %p116
      %p118 = scmp.ne.s32.totalorder %s107, %s110
      %p119 = scmp.eq.s32.totalorder %s24, 1
      %p120 = por %p118, %p119
      %p121 = scmp.ne.s32.totalorder %s110, %s111
      %p122 = scmp.eq.s32.totalorder %s24, 0
      %p123 = por %p121, %p122
      %p124 = scmp.ne.s32.totalorder %s110, %s111
      %p125 = scmp.eq.s32.totalorder %s25, 1
      %p126 = por %p124, %p125
      %p128 = scmp.ne.s32.totalorder %s111, %s127
      %p129 = scmp.eq.s32.totalorder %s25, 0
      %p130 = por %p128, %p129
      %s132 = sadd.s32 %s131, 1
      %p135 = scmp.eq.s32.totalorder %s19, 1
      %p136 = scmp.ne.s32.totalorder %s131, %s133
      %p137 = scmp.eq.s32.totalorder %s19, 0
      %p138 = por %p136, %p137
      %p139 = scmp.ne.s32.totalorder %s131, %s133
      %p140 = scmp.eq.s32.totalorder %s24, 1
      %p141 = por %p139, %p140
      %p142 = scmp.ne.s32.totalorder %s133, %s134
      %p143 = scmp.eq.s32.totalorder %s24, 0
      %p144 = por %p142, %p143
      %p145 = scmp.ne.s32.totalorder %s133, %s134
      %p146 = scmp.eq.s32.totalorder %s25, 1
      %p147 = por %p145, %p146
      %p149 = scmp.ne.s32.totalorder %s134, %s148
      %p150 = scmp.eq.s32.totalorder %s25, 0
      %p151 = por %p149, %p150
      %s153 = sadd.s32 %s152, 1
      %p156 = scmp.eq.s32.totalorder %s19, 1
      %p157 = scmp.ne.s32.totalorder %s152, %s154
      %p158 = scmp.eq.s32.totalorder %s19, 0
      %p159 = por %p157, %p158
      %p160 = scmp.ne.s32.totalorder %s152, %s154
      %p161 = scmp.eq.s32.totalorder %s24, 1
      %p162 = por %p160, %p161
      %p163 = scmp.ne.s32.totalorder %s154, %s155
      %p164 = scmp.eq.s32.totalorder %s24, 0
      %p165 = por %p163, %p164
      %p166 = scmp.ne.s32.totalorder %s154, %s155
      %p167 = scmp.eq.s32.totalorder %s25, 1
      %p168 = por %p166, %p167
      %p170 = scmp.ne.s32.totalorder %s155, %s169
      %p171 = scmp.eq.s32.totalorder %s25, 0
      %p172 = por %p170, %p171
      %s173 = ssub.s32 %s19, %s26
      %p174 = scmp.eq.s32.totalorder %s173, 0
      %s176 = sadd.s32 %s175, 1
      %s177 = scalar_select %p174, %s175, %s176
      %p180 = pneg %p174
      %p181 = scmp.eq.s32.totalorder %s19, 1
      %p182 = por %p180, %p181
      %p183 = scmp.ne.s32.totalorder %s175, %s178
      %p184 = scmp.eq.s32.totalorder %s19, 0
      %p185 = por %p183, %p184
      %p186 = scmp.ne.s32.totalorder %s175, %s178
      %p187 = scmp.eq.s32.totalorder %s24, 1
      %p188 = por %p186, %p187
      %p189 = scmp.ne.s32.totalorder %s178, %s179
      %p190 = scmp.eq.s32.totalorder %s24, 0
      %p191 = por %p189, %p190
      %p192 = scmp.ne.s32.totalorder %s178, %s179
      %p193 = scmp.eq.s32.totalorder %s25, 1
      %p194 = por %p192, %p193
      %p196 = scmp.ne.s32.totalorder %s179, %s195
      %p197 = scmp.eq.s32.totalorder %s25, 0
      %p198 = por %p196, %p197
      %s199 = ssub.s32 %s19, %s26
      %p200 = scmp.eq.s32.totalorder %s199, 0
      %s202 = sadd.s32 %s201, 1
      %s203 = scalar_select %p200, %s201, %s202
      %p206 = pneg %p200
      %p207 = scmp.eq.s32.totalorder %s19, 1
      %p208 = por %p206, %p207
      %p209 = scmp.ne.s32.totalorder %s201, %s204
      %p210 = scmp.eq.s32.totalorder %s19, 0
      %p211 = por %p209, %p210
      %p212 = scmp.ne.s32.totalorder %s201, %s204
      %p213 = scmp.eq.s32.totalorder %s24, 1
      %p214 = por %p212, %p213
      %p215 = scmp.ne.s32.totalorder %s204, %s205
      %p216 = scmp.eq.s32.totalorder %s24, 0
      %p217 = por %p215, %p216
      %p218 = scmp.ne.s32.totalorder %s204, %s205
      %p219 = scmp.eq.s32.totalorder %s25, 1
      %p220 = por %p218, %p219
      %p222 = scmp.ne.s32.totalorder %s205, %s221
      %p223 = scmp.eq.s32.totalorder %s25, 0
      %p224 = por %p222, %p223
      %s226 = sadd.s32 %s225, 1
      %p229 = scmp.eq.s32.totalorder %s19, 1
      %p230 = scmp.ne.s32.totalorder %s225, %s227
      %p231 = scmp.eq.s32.totalorder %s19, 0
      %p232 = por %p230, %p231
      %p233 = scmp.ne.s32.totalorder %s225, %s227
      %p234 = scmp.eq.s32.totalorder %s24, 1
      %p235 = por %p233, %p234
      %p236 = scmp.ne.s32.totalorder %s227, %s228
      %p237 = scmp.eq.s32.totalorder %s24, 0
      %p238 = por %p236, %p237
      %p239 = scmp.ne.s32.totalorder %s227, %s228
      %p240 = scmp.eq.s32.totalorder %s25, 1
      %p241 = por %p239, %p240
      %p243 = scmp.ne.s32.totalorder %s228, %s242
      %p244 = scmp.eq.s32.totalorder %s25, 0
      %p245 = por %p243, %p244
      %s247 = sadd.s32 %s246, 1
      %p250 = scmp.eq.s32.totalorder %s19, 1
      %p251 = scmp.ne.s32.totalorder %s246, %s248
      %p252 = scmp.eq.s32.totalorder %s19, 0
      %p253 = por %p251, %p252
      %p254 = scmp.ne.s32.totalorder %s246, %s248
      %p255 = scmp.eq.s32.totalorder %s24, 1
      %p256 = por %p254, %p255
      %p257 = scmp.ne.s32.totalorder %s248, %s249
      %p258 = scmp.eq.s32.totalorder %s24, 0
      %p259 = por %p257, %p258
      %p260 = scmp.ne.s32.totalorder %s248, %s249
      %p261 = scmp.eq.s32.totalorder %s25, 1
      %p262 = por %p260, %p261
      %p264 = scmp.ne.s32.totalorder %s249, %s263
      %p265 = scmp.eq.s32.totalorder %s25, 0
      %p266 = por %p264, %p265
      %s267 = ssub.s32 %s19, %s26
      %p268 = scmp.eq.s32.totalorder %s267, 0
      %s270 = sadd.s32 %s269, 1
      %s271 = scalar_select %p268, %s269, %s270
      %p274 = pneg %p268
      %p275 = scmp.eq.s32.totalorder %s19, 1
      %p276 = por %p274, %p275
      %p277 = scmp.ne.s32.totalorder %s269, %s272
      %p278 = scmp.eq.s32.totalorder %s19, 0
      %p279 = por %p277, %p278
      %p280 = scmp.ne.s32.totalorder %s269, %s272
      %p281 = scmp.eq.s32.totalorder %s24, 1
      %p282 = por %p280, %p281
      %p283 = scmp.ne.s32.totalorder %s272, %s273
      %p284 = scmp.eq.s32.totalorder %s24, 0
      %p285 = por %p283, %p284
      %p286 = scmp.ne.s32.totalorder %s272, %s273
      %p287 = scmp.eq.s32.totalorder %s25, 1
      %p288 = por %p286, %p287
      %p290 = scmp.ne.s32.totalorder %s273, %s289
      %p291 = scmp.eq.s32.totalorder %s25, 0
      %p292 = por %p290, %p291
      %p293 = scmp.le.s32.totalorder 1, %s19
      %p294 = scmp.lt.s32.totalorder %s19, 3
      %p295 = pnand %p293, %p294
      %p296 = pneg %p295
      // Predicated region
      $region9: #{qdrgat_forward.13} parent=5 // pred_check
        _
      $region10: #{qdrgat_forward.13} parent=5 // pred_check_branch
        %298 = sbr.rel (%p295) target = $region12
      $region11: #{qdrgat_forward.13} parent=5 // pred_region
        %s299 = ssub.s32 %s19, 1
        // Predicated region
        $region13: #{qdrgat_forward.13} parent=11 // pred_check
          %p300 = pneg %p144
        $region14: #{qdrgat_forward.13} parent=11 // pred_check_branch
          %302 = sbr.rel (%p300) target = $region16
        $region15: #{qdrgat_forward.13} parent=11 // pred_region
          _
        $region16: #{qdrgat_forward.13} parent=11 // pred_fallthru
          _
        // Predicated region
        $region17: #{qdrgat_forward.13} parent=11 // pred_check
          %p303 = pneg %p165
        $region18: #{qdrgat_forward.13} parent=11 // pred_check_branch
          %305 = sbr.rel (%p303) target = $region20
        $region19: #{qdrgat_forward.13} parent=11 // pred_region
          _
        $region20: #{qdrgat_forward.13} parent=11 // pred_fallthru
          _
        // Predicated region
        $region21: #{qdrgat_forward.13} parent=11 // pred_check
          %p306 = pneg %p238
        $region22: #{qdrgat_forward.13} parent=11 // pred_check_branch
          %308 = sbr.rel (%p306) target = $region24
        $region23: #{qdrgat_forward.13} parent=11 // pred_region
          _
        $region24: #{qdrgat_forward.13} parent=11 // pred_fallthru
          _
        // Predicated region
        $region25: #{qdrgat_forward.13} parent=11 // pred_check
          %p309 = pneg %p259
        $region26: #{qdrgat_forward.13} parent=11 // pred_check_branch
          %311 = sbr.rel (%p309) target = $region28
        $region27: #{qdrgat_forward.13} parent=11 // pred_region
          _
        $region28: #{qdrgat_forward.13} parent=11 // pred_fallthru
          _
      $region12: #{qdrgat_forward.13} parent=5 // pred_fallthru
        _
      %p312 = scmp.lt.s32.totalorder %s19, 2
      // Predicated region
      $region29: #{qdrgat_forward.13} parent=5 // pred_check
        %p313 = pneg %p312
      $region30: #{qdrgat_forward.13} parent=5 // pred_check_branch
        %315 = sbr.rel (%p313) target = $region32
      $region31: #{qdrgat_forward.13} parent=5 // pred_region
        // Predicated region
        $region33: #{qdrgat_forward.13} parent=31 // pred_check
          %p316 = pneg %p39
        $region34: #{qdrgat_forward.13} parent=31 // pred_check_branch
          %318 = sbr.rel (%p316) target = $region36
        $region35: #{qdrgat_forward.13} parent=31 // pred_region
          %p319 = scmp.lt.s32.totalorder %s19, 1
          %s320 = scalar_select %p319, %s19, 1
          %s321 = smul.addr %s320, 2
          %s322 = smul.addr %s321, 8
          %s323 = scalar_lea.vmem %s0, %s322
        $region36: #{qdrgat_forward.13} parent=31 // pred_fallthru
          _
        // Predicated region
        $region37: #{qdrgat_forward.13} parent=31 // pred_check
          %p324 = pneg %p65
        $region38: #{qdrgat_forward.13} parent=31 // pred_check_branch
          %326 = sbr.rel (%p324) target = $region40
        $region39: #{qdrgat_forward.13} parent=31 // pred_region
          %p327 = scmp.lt.s32.totalorder %s19, 1
          %s328 = scalar_select %p327, %s19, 1
          %s329 = smul.addr %s328, 2
          %s330 = smul.addr %s329, 8
          %s331 = scalar_lea.vmem %s1, %s330
        $region40: #{qdrgat_forward.13} parent=31 // pred_fallthru
          _
        // Predicated region
        $region41: #{qdrgat_forward.13} parent=31 // pred_check
          %p332 = pneg %p91
        $region42: #{qdrgat_forward.13} parent=31 // pred_check_branch
          %334 = sbr.rel (%p332) target = $region44
        $region43: #{qdrgat_forward.13} parent=31 // pred_region
          %p335 = scmp.lt.s32.totalorder %s19, 1
          %s336 = scalar_select %p335, %s19, 1
          %s337 = scalar_lea.vmem %s2, %s336
        $region44: #{qdrgat_forward.13} parent=31 // pred_fallthru
          _
        // Predicated region
        $region45: #{qdrgat_forward.13} parent=31 // pred_check
          %p338 = pneg %p117
        $region46: #{qdrgat_forward.13} parent=31 // pred_check_branch
          %340 = sbr.rel (%p338) target = $region48
        $region47: #{qdrgat_forward.13} parent=31 // pred_region
          %p341 = scmp.lt.s32.totalorder %s19, 1
          %s342 = scalar_select %p341, %s19, 1
          %s343 = scalar_lea.vmem %s3, %s342
        $region48: #{qdrgat_forward.13} parent=31 // pred_fallthru
          _
        // Predicated region
        $region49: #{qdrgat_forward.13} parent=31 // pred_check
          %p344 = pneg %p185
        $region50: #{qdrgat_forward.13} parent=31 // pred_check_branch
          %346 = sbr.rel (%p344) target = $region52
        $region51: #{qdrgat_forward.13} parent=31 // pred_region
          %p347 = scmp.lt.s32.totalorder %s19, 1
          %s348 = scalar_select %p347, %s19, 1
          %s349 = smul.addr %s348, 32
          %s350 = smul.addr %s349, 8
          %s351 = scalar_lea.vmem %s6, %s350
        $region52: #{qdrgat_forward.13} parent=31 // pred_fallthru
          _
        // Predicated region
        $region53: #{qdrgat_forward.13} parent=31 // pred_check
          %p352 = pneg %p211
        $region54: #{qdrgat_forward.13} parent=31 // pred_check_branch
          %354 = sbr.rel (%p352) target = $region56
        $region55: #{qdrgat_forward.13} parent=31 // pred_region
          %p355 = scmp.lt.s32.totalorder %s19, 1
          %s356 = scalar_select %p355, %s19, 1
          %s357 = smul.addr %s356, 2
          %s358 = smul.addr %s357, 8
          %s359 = scalar_lea.vmem %s7, %s358
        $region56: #{qdrgat_forward.13} parent=31 // pred_fallthru
          _
      $region32: #{qdrgat_forward.13} parent=5 // pred_fallthru
        _
      %p360 = scmp.le.s32.totalorder 1, %s19
      %p361 = scmp.lt.s32.totalorder %s19, 3
      %p362 = pnand %p360, %p361
      %p363 = pneg %p362
      // Predicated region
      $region57: #{qdrgat_forward.13} parent=5 // pred_check
        _
      $region58: #{qdrgat_forward.13} parent=5 // pred_check_branch
        %365 = sbr.rel (%p362) target = $region60
      $region59: #{qdrgat_forward.13} parent=5 // pred_region
        %s366 = ssub.s32 %s19, 1
        %p367 = scmp.lt.s32.totalorder %s24, 1
        %s368 = scalar_select %p367, %s24, 1
        %s369 = smul.addr %s368, 2
        %s370 = smul.addr %s369, 8
        %s371 = scalar_lea.vmem %s0, %s370
        %p372 = pneg %p45
        %p373 = pneg %p42
        %p374 = scmp.lt.s32.totalorder %s24, 1
        %s375 = scalar_select %p374, %s24, 1
        %s376 = smul.addr %s375, 2
        %s377 = smul.addr %s376, 8
        %s378 = scalar_lea.vmem %s1, %s377
        %p379 = pneg %p71
        %p380 = pneg %p68
        %p381 = scmp.lt.s32.totalorder %s24, 1
        %s382 = scalar_select %p381, %s24, 1
        %s383 = scalar_lea.vmem %s2, %s382
        %p384 = pneg %p97
        %p385 = pneg %p94
        %p386 = scmp.lt.s32.totalorder %s24, 1
        %s387 = scalar_select %p386, %s24, 1
        %s388 = scalar_lea.vmem %s3, %s387
        %p389 = pneg %p123
        %p390 = pneg %p120
        %p391 = pneg %p144
        %p392 = pneg %p141
        %p393 = pneg %p165
        %p394 = pneg %p162
        %p395 = scmp.lt.s32.totalorder %s24, 1
        %s396 = scalar_select %p395, %s24, 1
        %s397 = smul.addr %s396, 32
        %s398 = smul.addr %s397, 8
        %s399 = scalar_lea.vmem %s6, %s398
        %p400 = pneg %p191
        %p401 = pneg %p188
        %p402 = scmp.lt.s32.totalorder %s24, 1
        %s403 = scalar_select %p402, %s24, 1
        %s404 = smul.addr %s403, 2
        %s405 = smul.addr %s404, 8
        %s406 = scalar_lea.vmem %s7, %s405
        %p407 = pneg %p217
        %p408 = pneg %p214
        %p409 = pneg %p238
        %p410 = pneg %p235
        %p411 = pneg %p259
        %p412 = pneg %p256
        %p413 = pneg %p285
        %p414 = pneg %p282
        %s415 = sand.u32 %s272, 1
        %s416 = scalar_lea.sflag [#allocation3], %s415
        %s417 = sand.u32 %s272, 1
        %s418 = smul.addr %s417, 16
        %s419 = scalar_lea.vmem [#allocation2], %s418
        %p420 = scmp.lt.s32.totalorder %s24, 1
        %s421 = scalar_select %p420, %s24, 1
        %s422 = smul.addr %s421, 2
        %s423 = smul.addr %s422, 8
        %s424 = scalar_lea.vmem %s0, %s423
        %p425 = scmp.lt.s32.totalorder %s24, 1
        %s426 = scalar_select %p425, %s24, 1
        %s427 = smul.addr %s426, 2
        %s428 = smul.addr %s427, 8
        %s429 = scalar_lea.vmem %s1, %s428
        %p430 = scmp.lt.s32.totalorder %s24, 1
        %s431 = scalar_select %p430, %s24, 1
        %s432 = scalar_lea.vmem %s2, %s431
        %p433 = scmp.lt.s32.totalorder %s24, 1
        %s434 = scalar_select %p433, %s24, 1
        %s435 = scalar_lea.vmem %s3, %s434
        %p436 = scmp.lt.s32.totalorder %s24, 1
        %s437 = scalar_select %p436, %s24, 1
        %s438 = smul.addr %s437, 32
        %s439 = smul.addr %s438, 8
        %s440 = scalar_lea.vmem %s6, %s439
        %p441 = scmp.lt.s32.totalorder %s24, 1
        %s442 = scalar_select %p441, %s24, 1
        %s443 = smul.addr %s442, 2
        %s444 = smul.addr %s443, 8
        %s445 = scalar_lea.vmem %s7, %s444
        %v446 = vld [vmem:[%s424] sm:$0xff]
        %v447 = vld [vmem:[%s424 + $0x8] sm:$0xff]
        %v448 = vld [vmem:[%s432] sm:$0x1]
        %v450 = vlaneseq
        %v451 = vshrl.u32 %v450, 7
        %v452 = vsub.s32 0, %v451
        %v453 = vrot.slane %v448, %v452
        %v455 = vmul.f32 %v446, %v453
        %v456 = vmul.f32 %v447, %v453
        %v457 = vld [vmem:[%s429] sm:$0xff]
        %v458 = vld [vmem:[%s429 + $0x8] sm:$0xff]
        %v459 = vld [vmem:[%s435] sm:$0x1]
        %v461 = vlaneseq
        %v462 = vshrl.u32 %v461, 7
        %v463 = vsub.s32 0, %v462
        %v464 = vrot.slane %v459, %v463
        %v466 = vmul.f32 %v457, %v464
        %v467 = vmul.f32 %v458, %v464
        %v468 = vld [vmem:[%s4] sm:$0xff]
        %v469 = vld [vmem:[%s4 + $0x8] sm:$0xff]
        %v470 = vld [vmem:[%s4 + $0x10] sm:$0xff]
        %v471 = vld [vmem:[%s4 + $0x18] sm:$0xff]
        %vm472 = vcmask 261120
        %v474 = vsel %vm472, %v455, 0
        %v477 = vsel %vm472, %v456, 0
        %479 = vmatprep.subr.mxu0 0.0
        %v480 = vand.u32 %v468, 4294901760
        %481 = vmatpush1.msra.mxu0 %v480
        %482 = vmatprep.subr.mxu0 0.0
        %v483 = vand.u32 %v469, 4294901760
        %484 = vmatpush1.msra.mxu0 %v483
        %485 = vmatprep.subr.mxu0 0.0
        %v486 = vand.u32 %v470, 4294901760
        %487 = vmatpush1.msra.mxu0 %v486
        %488 = vmatprep.subr.mxu0 0.0
        %v489 = vand.u32 %v471, 4294901760
        %490 = vmatpush1.msra.mxu0 %v489
        %491 = vmatprep.subr.mxu0 0.0
        %492 = vmatpush1.msra.mxu0 0.0
        %493 = vmatprep.subr.mxu0 0.0
        %494 = vmatpush1.msra.mxu0 0.0
        %495 = vmatprep.subr.mxu0 0.0
        %496 = vmatpush1.msra.mxu0 0.0
        %497 = vmatprep.subr.mxu0 0.0
        %498 = vmatpush1.msra.mxu0 0.0
        %499 = vmatprep.subr.mxu0 0.0
        %500 = vmatpush1.msra.mxu0 0.0
        %501 = vmatprep.subr.mxu0 0.0
        %502 = vmatpush1.msra.mxu0 0.0
        %503 = vmatprep.subr.mxu0 0.0
        %504 = vmatpush1.msra.mxu0 0.0
        %505 = vmatprep.subr.mxu0 0.0
        %506 = vmatpush1.msra.mxu0 0.0
        %507 = vmatprep.subr.mxu0 0.0
        %508 = vmatpush1.msra.mxu0 0.0
        %509 = vmatprep.subr.mxu0 0.0
        %510 = vmatpush1.msra.mxu0 0.0
        %511 = vmatprep.subr.mxu0 0.0
        %512 = vmatpush1.msra.mxu0 0.0
        %513 = vmatprep.subr.mxu0 0.0
        %514 = vmatpush1.msra.mxu0 0.0
        %515 = vmatprep.subr.mxu0 0.0
        %516 = vmatpush1.msra.mxu0 0.0
        %517 = vmatprep.subr.mxu0 0.0
        %518 = vmatpush1.msra.mxu0 0.0
        %519 = vmatprep.subr.mxu0 0.0
        %520 = vmatpush1.msra.mxu0 0.0
        %521 = vmatprep.subr.mxu0 0.0
        %522 = vmatpush1.msra.mxu0 0.0
        %523 = vmatprep.subr.mxu0 0.0
        %524 = vmatpush1.msra.mxu0 0.0
        %525 = vmatprep.subr.mxu0 0.0
        %526 = vmatpush1.msra.mxu0 0.0
        %527 = vmatprep.subr.mxu0 0.0
        %528 = vmatpush1.msra.mxu0 0.0
        %529 = vmatprep.subr.mxu0 0.0
        %530 = vmatpush1.msra.mxu0 0.0
        %531 = vmatprep.subr.mxu0 0.0
        %532 = vmatpush1.msra.mxu0 0.0
        %533 = vmatprep.subr.mxu0 0.0
        %534 = vmatpush1.msra.mxu0 0.0
        %535 = vmatprep.subr.mxu0 0.0
        %536 = vmatpush1.msra.mxu0 0.0
        %537 = vmatprep.subr.mxu0 0.0
        %538 = vmatpush1.msra.mxu0 0.0
        %539 = vmatprep.subr.mxu0 0.0
        %540 = vmatpush1.msra.mxu0 0.0
        %541 = vmatprep.subr.mxu0 0.0
        %542 = vmatpush1.msra.mxu0 0.0
        %543 = vmatprep.subr.mxu0 0.0
        %544 = vmatpush1.msra.mxu0 0.0
        %545 = vmatprep.subr.mxu0 0.0
        %546 = vmatpush1.msra.mxu0 0.0
        %547 = vmatprep.mubr.f32.mxu0 0.0
        %v548 = vand.u32 %v474, 4294901760
        %v549 = vsub.f32 %v474, %v548
        %v550 = vand.u32 %v549, 4294901760
        %v551 = vsub.f32 %v549, %v550
        %v552 = vand.u32 %v551, 4294901760
        %553 = vmatmul.mubr.f32.gmra.mrb[0].mxu0 %v552
        %v554 = vpop.f32.mrb[0].mxu0
        %v555 = vadd.f32 0.0, %v554
        %v556 = vpop.f32.mrb[0].mxu0
        %557 = vmatprep.mubr.f32.mxu0 0.0
        %v558 = vand.u32 %v477, 4294901760
        %v559 = vsub.f32 %v477, %v558
        %v560 = vand.u32 %v559, 4294901760
        %v561 = vsub.f32 %v559, %v560
        %v562 = vand.u32 %v561, 4294901760
        %563 = vmatmul.mubr.f32.gmra.mrb[0].mxu0 %v562
        %v564 = vpop.f32.mrb[0].mxu0
        %v565 = vadd.f32 0.0, %v564
        %v566 = vpop.f32.mrb[0].mxu0
        %567 = vdwg.mxu0
        %568 = vmatprep.subr.mxu0 0.0
        %v569 = vand.u32 %v468, 4294901760
        %v570 = vsub.f32 %v468, %v569
        %v571 = vand.u32 %v570, 4294901760
        %v572 = vsub.f32 %v570, %v571
        %v573 = vand.u32 %v572, 4294901760
        %574 = vmatpush1.msra.mxu0 %v573
        %575 = vmatprep.subr.mxu0 0.0
        %v576 = vand.u32 %v469, 4294901760
        %v577 = vsub.f32 %v469, %v576
        %v578 = vand.u32 %v577, 4294901760
        %v579 = vsub.f32 %v577, %v578
        %v580 = vand.u32 %v579, 4294901760
        %581 = vmatpush1.msra.mxu0 %v580
        %582 = vmatprep.subr.mxu0 0.0
        %v583 = vand.u32 %v470, 4294901760
        %v584 = vsub.f32 %v470, %v583
        %v585 = vand.u32 %v584, 4294901760
        %v586 = vsub.f32 %v584, %v585
        %v587 = vand.u32 %v586, 4294901760
        %588 = vmatpush1.msra.mxu0 %v587
        %589 = vmatprep.subr.mxu0 0.0
        %v590 = vand.u32 %v471, 4294901760
        %v591 = vsub.f32 %v471, %v590
        %v592 = vand.u32 %v591, 4294901760
        %v593 = vsub.f32 %v591, %v592
        %v594 = vand.u32 %v593, 4294901760
        %595 = vmatpush1.msra.mxu0 %v594
        %596 = vmatprep.subr.mxu0 0.0
        %597 = vmatpush1.msra.mxu0 0.0
        %598 = vmatprep.subr.mxu0 0.0
        %599 = vmatpush1.msra.mxu0 0.0
        %600 = vmatprep.subr.mxu0 0.0
        %601 = vmatpush1.msra.mxu0 0.0
        %602 = vmatprep.subr.mxu0 0.0
        %603 = vmatpush1.msra.mxu0 0.0
        %604 = vmatprep.subr.mxu0 0.0
        %605 = vmatpush1.msra.mxu0 0.0
        %606 = vmatprep.subr.mxu0 0.0
        %607 = vmatpush1.msra.mxu0 0.0
        %608 = vmatprep.subr.mxu0 0.0
        %609 = vmatpush1.msra.mxu0 0.0
        %610 = vmatprep.subr.mxu0 0.0
        %611 = vmatpush1.msra.mxu0 0.0
        %612 = vmatprep.subr.mxu0 0.0
        %613 = vmatpush1.msra.mxu0 0.0
        %614 = vmatprep.subr.mxu0 0.0
        %615 = vmatpush1.msra.mxu0 0.0
        %616 = vmatprep.subr.mxu0 0.0
        %617 = vmatpush1.msra.mxu0 0.0
        %618 = vmatprep.subr.mxu0 0.0
        %619 = vmatpush1.msra.mxu0 0.0
        %620 = vmatprep.subr.mxu0 0.0
        %621 = vmatpush1.msra.mxu0 0.0
        %622 = vmatprep.subr.mxu0 0.0
        %623 = vmatpush1.msra.mxu0 0.0
        %624 = vmatprep.subr.mxu0 0.0
        %625 = vmatpush1.msra.mxu0 0.0
        %626 = vmatprep.subr.mxu0 0.0
        %627 = vmatpush1.msra.mxu0 0.0
        %628 = vmatprep.subr.mxu0 0.0
        %629 = vmatpush1.msra.mxu0 0.0
        %630 = vmatprep.subr.mxu0 0.0
        %631 = vmatpush1.msra.mxu0 0.0
        %632 = vmatprep.subr.mxu0 0.0
        %633 = vmatpush1.msra.mxu0 0.0
        %634 = vmatprep.subr.mxu0 0.0
        %635 = vmatpush1.msra.mxu0 0.0
        %636 = vmatprep.subr.mxu0 0.0
        %637 = vmatpush1.msra.mxu0 0.0
        %638 = vmatprep.subr.mxu0 0.0
        %639 = vmatpush1.msra.mxu0 0.0
        %640 = vmatprep.subr.mxu0 0.0
        %641 = vmatpush1.msra.mxu0 0.0
        %642 = vmatprep.subr.mxu0 0.0
        %643 = vmatpush1.msra.mxu0 0.0
        %644 = vmatprep.subr.mxu0 0.0
        %645 = vmatpush1.msra.mxu0 0.0
        %646 = vmatprep.subr.mxu0 0.0
        %647 = vmatpush1.msra.mxu0 0.0
        %648 = vmatprep.subr.mxu0 0.0
        %649 = vmatpush1.msra.mxu0 0.0
        %650 = vmatprep.subr.mxu0 0.0
        %651 = vmatpush1.msra.mxu0 0.0
        %652 = vmatprep.mubr.f32.mxu0 0.0
        %v653 = vand.u32 %v474, 4294901760
        %654 = vmatmul.mubr.f32.gmra.mrb[0].mxu0 %v653
        %v655 = vpop.f32.mrb[0].mxu0
        %v656 = vadd.f32 %v555, %v655
        %v657 = vpop.f32.mrb[0].mxu0
        %658 = vmatprep.mubr.f32.mxu0 0.0
        %v659 = vand.u32 %v477, 4294901760
        %660 = vmatmul.mubr.f32.gmra.mrb[0].mxu0 %v659
        %v661 = vpop.f32.mrb[0].mxu0
        %v662 = vadd.f32 %v565, %v661
        %v663 = vpop.f32.mrb[0].mxu0
        %664 = vdwg.mxu0
        %665 = vmatprep.subr.mxu0 0.0
        %v666 = vand.u32 %v468, 4294901760
        %v667 = vsub.f32 %v468, %v666
        %668 = vmatpush1.msra.mxu0 %v667
        %669 = vmatprep.subr.mxu0 0.0
        %v670 = vand.u32 %v469, 4294901760
        %v671 = vsub.f32 %v469, %v670
        %672 = vmatpush1.msra.mxu0 %v671
        %673 = vmatprep.subr.mxu0 0.0
        %v674 = vand.u32 %v470, 4294901760
        %v675 = vsub.f32 %v470, %v674
        %676 = vmatpush1.msra.mxu0 %v675
        %677 = vmatprep.subr.mxu0 0.0
        %v678 = vand.u32 %v471, 4294901760
        %v679 = vsub.f32 %v471, %v678
        %680 = vmatpush1.msra.mxu0 %v679
        %681 = vmatprep.subr.mxu0 0.0
        %682 = vmatpush1.msra.mxu0 0.0
        %683 = vmatprep.subr.mxu0 0.0
        %684 = vmatpush1.msra.mxu0 0.0
        %685 = vmatprep.subr.mxu0 0.0
        %686 = vmatpush1.msra.mxu0 0.0
        %687 = vmatprep.subr.mxu0 0.0
        %688 = vmatpush1.msra.mxu0 0.0
        %689 = vmatprep.subr.mxu0 0.0
        %690 = vmatpush1.msra.mxu0 0.0
        %691 = vmatprep.subr.mxu0 0.0
        %692 = vmatpush1.msra.mxu0 0.0
        %693 = vmatprep.subr.mxu0 0.0
        %694 = vmatpush1.msra.mxu0 0.0
        %695 = vmatprep.subr.mxu0 0.0
        %696 = vmatpush1.msra.mxu0 0.0
        %697 = vmatprep.subr.mxu0 0.0
        %698 = vmatpush1.msra.mxu0 0.0
        %699 = vmatprep.subr.mxu0 0.0
        %700 = vmatpush1.msra.mxu0 0.0
        %701 = vmatprep.subr.mxu0 0.0
        %702 = vmatpush1.msra.mxu0 0.0
        %703 = vmatprep.subr.mxu0 0.0
        %704 = vmatpush1.msra.mxu0 0.0
        %705 = vmatprep.subr.mxu0 0.0
        %706 = vmatpush1.msra.mxu0 0.0
        %707 = vmatprep.subr.mxu0 0.0
        %708 = vmatpush1.msra.mxu0 0.0
        %709 = vmatprep.subr.mxu0 0.0
        %710 = vmatpush1.msra.mxu0 0.0
        %711 = vmatprep.subr.mxu0 0.0
        %712 = vmatpush1.msra.mxu0 0.0
        %713 = vmatprep.subr.mxu0 0.0
        %714 = vmatpush1.msra.mxu0 0.0
        %715 = vmatprep.subr.mxu0 0.0
        %716 = vmatpush1.msra.mxu0 0.0
        %717 = vmatprep.subr.mxu0 0.0
        %718 = vmatpush1.msra.mxu0 0.0
        %719 = vmatprep.subr.mxu0 0.0
        %720 = vmatpush1.msra.mxu0 0.0
        %721 = vmatprep.subr.mxu0 0.0
        %722 = vmatpush1.msra.mxu0 0.0
        %723 = vmatprep.subr.mxu0 0.0
        %724 = vmatpush1.msra.mxu0 0.0
        %725 = vmatprep.subr.mxu0 0.0
        %726 = vmatpush1.msra.mxu0 0.0
        %727 = vmatprep.subr.mxu0 0.0
        %728 = vmatpush1.msra.mxu0 0.0
        %729 = vmatprep.subr.mxu0 0.0
        %730 = vmatpush1.msra.mxu0 0.0
        %731 = vmatprep.subr.mxu0 0.0
        %732 = vmatpush1.msra.mxu0 0.0
        %733 = vmatprep.subr.mxu0 0.0
        %734 = vmatpush1.msra.mxu0 0.0
        %735 = vmatprep.subr.mxu0 0.0
        %736 = vmatpush1.msra.mxu0 0.0
        %737 = vmatprep.mubr.f32.mxu0 0.0
        %v738 = vand.u32 %v474, 4294901760
        %v739 = vsub.f32 %v474, %v738
        %740 = vmatmul.mubr.f32.gmra.mrb[0].mxu0 %v739
        %v741 = vpop.f32.mrb[0].mxu0
        %v742 = vadd.f32 %v656, %v741
        %v743 = vpop.f32.mrb[0].mxu0
        %744 = vmatprep.mubr.f32.mxu0 0.0
        %v745 = vand.u32 %v477, 4294901760
        %v746 = vsub.f32 %v477, %v745
        %747 = vmatmul.mubr.f32.gmra.mrb[0].mxu0 %v746
        %v748 = vpop.f32.mrb[0].mxu0
        %v749 = vadd.f32 %v662, %v748
        %v750 = vpop.f32.mrb[0].mxu0
        %751 = vdwg.mxu0
        %752 = vmatprep.subr.mxu0 0.0
        %v753 = vand.u32 %v468, 4294901760
        %754 = vmatpush1.msra.mxu0 %v753
        %755 = vmatprep.subr.mxu0 0.0
        %v756 = vand.u32 %v469, 4294901760
        %757 = vmatpush1.msra.mxu0 %v756
        %758 = vmatprep.subr.mxu0 0.0
        %v759 = vand.u32 %v470, 4294901760
        %760 = vmatpush1.msra.mxu0 %v759
        %761 = vmatprep.subr.mxu0 0.0
        %v762 = vand.u32 %v471, 4294901760
        %763 = vmatpush1.msra.mxu0 %v762
        %764 = vmatprep.subr.mxu0 0.0
        %765 = vmatpush1.msra.mxu0 0.0
        %766 = vmatprep.subr.mxu0 0.0
        %767 = vmatpush1.msra.mxu0 0.0
        %768 = vmatprep.subr.mxu0 0.0
        %769 = vmatpush1.msra.mxu0 0.0
        %770 = vmatprep.subr.mxu0 0.0
        %771 = vmatpush1.msra.mxu0 0.0
        %772 = vmatprep.subr.mxu0 0.0
        %773 = vmatpush1.msra.mxu0 0.0
        %774 = vmatprep.subr.mxu0 0.0
        %775 = vmatpush1.msra.mxu0 0.0
        %776 = vmatprep.subr.mxu0 0.0
        %777 = vmatpush1.msra.mxu0 0.0
        %778 = vmatprep.subr.mxu0 0.0
        %779 = vmatpush1.msra.mxu0 0.0
        %780 = vmatprep.subr.mxu0 0.0
        %781 = vmatpush1.msra.mxu0 0.0
        %782 = vmatprep.subr.mxu0 0.0
        %783 = vmatpush1.msra.mxu0 0.0
        %784 = vmatprep.subr.mxu0 0.0
        %785 = vmatpush1.msra.mxu0 0.0
        %786 = vmatprep.subr.mxu0 0.0
        %787 = vmatpush1.msra.mxu0 0.0
        %788 = vmatprep.subr.mxu0 0.0
        %789 = vmatpush1.msra.mxu0 0.0
        %790 = vmatprep.subr.mxu0 0.0
        %791 = vmatpush1.msra.mxu0 0.0
        %792 = vmatprep.subr.mxu0 0.0
        %793 = vmatpush1.msra.mxu0 0.0
        %794 = vmatprep.subr.mxu0 0.0
        %795 = vmatpush1.msra.mxu0 0.0
        %796 = vmatprep.subr.mxu0 0.0
        %797 = vmatpush1.msra.mxu0 0.0
        %798 = vmatprep.subr.mxu0 0.0
        %799 = vmatpush1.msra.mxu0 0.0
        %800 = vmatprep.subr.mxu0 0.0
        %801 = vmatpush1.msra.mxu0 0.0
        %802 = vmatprep.subr.mxu0 0.0
        %803 = vmatpush1.msra.mxu0 0.0
        %804 = vmatprep.subr.mxu0 0.0
        %805 = vmatpush1.msra.mxu0 0.0
        %806 = vmatprep.subr.mxu0 0.0
        %807 = vmatpush1.msra.mxu0 0.0
        %808 = vmatprep.subr.mxu0 0.0
        %809 = vmatpush1.msra.mxu0 0.0
        %810 = vmatprep.subr.mxu0 0.0
        %811 = vmatpush1.msra.mxu0 0.0
        %812 = vmatprep.subr.mxu0 0.0
        %813 = vmatpush1.msra.mxu0 0.0
        %814 = vmatprep.subr.mxu0 0.0
        %815 = vmatpush1.msra.mxu0 0.0
        %816 = vmatprep.subr.mxu0 0.0
        %817 = vmatpush1.msra.mxu0 0.0
        %818 = vmatprep.subr.mxu0 0.0
        %819 = vmatpush1.msra.mxu0 0.0
        %820 = vmatprep.mubr.f32.mxu0 0.0
        %v821 = vand.u32 %v474, 4294901760
        %v822 = vsub.f32 %v474, %v821
        %v823 = vand.u32 %v822, 4294901760
        %824 = vmatmul.mubr.f32.gmra.mrb[0].mxu0 %v823
        %v825 = vpop.f32.mrb[0].mxu0
        %v826 = vadd.f32 %v742, %v825
        %v827 = vpop.f32.mrb[0].mxu0
        %828 = vmatprep.mubr.f32.mxu0 0.0
        %v829 = vand.u32 %v477, 4294901760
        %v830 = vsub.f32 %v477, %v829
        %v831 = vand.u32 %v830, 4294901760
        %832 = vmatmul.mubr.f32.gmra.mrb[0].mxu0 %v831
        %v833 = vpop.f32.mrb[0].mxu0
        %v834 = vadd.f32 %v749, %v833
        %v835 = vpop.f32.mrb[0].mxu0
        %836 = vdwg.mxu0
        %837 = vmatprep.subr.mxu0 0.0
        %v838 = vand.u32 %v468, 4294901760
        %v839 = vsub.f32 %v468, %v838
        %v840 = vand.u32 %v839, 4294901760
        %841 = vmatpush1.msra.mxu0 %v840
        %842 = vmatprep.subr.mxu0 0.0
        %v843 = vand.u32 %v469, 4294901760
        %v844 = vsub.f32 %v469, %v843
        %v845 = vand.u32 %v844, 4294901760
        %846 = vmatpush1.msra.mxu0 %v845
        %847 = vmatprep.subr.mxu0 0.0
        %v848 = vand.u32 %v470, 4294901760
        %v849 = vsub.f32 %v470, %v848
        %v850 = vand.u32 %v849, 4294901760
        %851 = vmatpush1.msra.mxu0 %v850
        %852 = vmatprep.subr.mxu0 0.0
        %v853 = vand.u32 %v471, 4294901760
        %v854 = vsub.f32 %v471, %v853
        %v855 = vand.u32 %v854, 4294901760
        %856 = vmatpush1.msra.mxu0 %v855
        %857 = vmatprep.subr.mxu0 0.0
        %858 = vmatpush1.msra.mxu0 0.0
        %859 = vmatprep.subr.mxu0 0.0
        %860 = vmatpush1.msra.mxu0 0.0
        %861 = vmatprep.subr.mxu0 0.0
        %862 = vmatpush1.msra.mxu0 0.0
        %863 = vmatprep.subr.mxu0 0.0
        %864 = vmatpush1.msra.mxu0 0.0
        %865 = vmatprep.subr.mxu0 0.0
        %866 = vmatpush1.msra.mxu0 0.0
        %867 = vmatprep.subr.mxu0 0.0
        %868 = vmatpush1.msra.mxu0 0.0
        %869 = vmatprep.subr.mxu0 0.0
        %870 = vmatpush1.msra.mxu0 0.0
        %871 = vmatprep.subr.mxu0 0.0
        %872 = vmatpush1.msra.mxu0 0.0
        %873 = vmatprep.subr.mxu0 0.0
        %874 = vmatpush1.msra.mxu0 0.0
        %875 = vmatprep.subr.mxu0 0.0
        %876 = vmatpush1.msra.mxu0 0.0
        %877 = vmatprep.subr.mxu0 0.0
        %878 = vmatpush1.msra.mxu0 0.0
        %879 = vmatprep.subr.mxu0 0.0
        %880 = vmatpush1.msra.mxu0 0.0
        %881 = vmatprep.subr.mxu0 0.0
        %882 = vmatpush1.msra.mxu0 0.0
        %883 = vmatprep.subr.mxu0 0.0
        %884 = vmatpush1.msra.mxu0 0.0
        %885 = vmatprep.subr.mxu0 0.0
        %886 = vmatpush1.msra.mxu0 0.0
        %887 = vmatprep.subr.mxu0 0.0
        %888 = vmatpush1.msra.mxu0 0.0
        %889 = vmatprep.subr.mxu0 0.0
        %890 = vmatpush1.msra.mxu0 0.0
        %891 = vmatprep.subr.mxu0 0.0
        %892 = vmatpush1.msra.mxu0 0.0
        %893 = vmatprep.subr.mxu0 0.0
        %894 = vmatpush1.msra.mxu0 0.0
        %895 = vmatprep.subr.mxu0 0.0
        %896 = vmatpush1.msra.mxu0 0.0
        %897 = vmatprep.subr.mxu0 0.0
        %898 = vmatpush1.msra.mxu0 0.0
        %899 = vmatprep.subr.mxu0 0.0
        %900 = vmatpush1.msra.mxu0 0.0
        %901 = vmatprep.subr.mxu0 0.0
        %902 = vmatpush1.msra.mxu0 0.0
        %903 = vmatprep.subr.mxu0 0.0
        %904 = vmatpush1.msra.mxu0 0.0
        %905 = vmatprep.subr.mxu0 0.0
        %906 = vmatpush1.msra.mxu0 0.0
        %907 = vmatprep.subr.mxu0 0.0
        %908 = vmatpush1.msra.mxu0 0.0
        %909 = vmatprep.subr.mxu0 0.0
        %910 = vmatpush1.msra.mxu0 0.0
        %911 = vmatprep.subr.mxu0 0.0
        %912 = vmatpush1.msra.mxu0 0.0
        %913 = vmatprep.mubr.f32.mxu0 0.0
        %v914 = vand.u32 %v474, 4294901760
        %915 = vmatmul.mubr.f32.gmra.mrb[0].mxu0 %v914
        %v916 = vpop.f32.mrb[0].mxu0
        %v917 = vadd.f32 %v826, %v916
        %v918 = vpop.f32.mrb[0].mxu0
        %919 = vmatprep.mubr.f32.mxu0 0.0
        %v920 = vand.u32 %v477, 4294901760
        %921 = vmatmul.mubr.f32.gmra.mrb[0].mxu0 %v920
        %v922 = vpop.f32.mrb[0].mxu0
        %v923 = vadd.f32 %v834, %v922
        %v924 = vpop.f32.mrb[0].mxu0
        %925 = vdwg.mxu0
        %926 = vmatprep.subr.mxu0 0.0
        %v927 = vand.u32 %v468, 4294901760
        %928 = vmatpush1.msra.mxu0 %v927
        %929 = vmatprep.subr.mxu0 0.0
        %v930 = vand.u32 %v469, 4294901760
        %931 = vmatpush1.msra.mxu0 %v930
        %932 = vmatprep.subr.mxu0 0.0
        %v933 = vand.u32 %v470, 4294901760
        %934 = vmatpush1.msra.mxu0 %v933
        %935 = vmatprep.subr.mxu0 0.0
        %v936 = vand.u32 %v471, 4294901760
        %937 = vmatpush1.msra.mxu0 %v936
        %938 = vmatprep.subr.mxu0 0.0
        %939 = vmatpush1.msra.mxu0 0.0
        %940 = vmatprep.subr.mxu0 0.0
        %941 = vmatpush1.msra.mxu0 0.0
        %942 = vmatprep.subr.mxu0 0.0
        %943 = vmatpush1.msra.mxu0 0.0
        %944 = vmatprep.subr.mxu0 0.0
        %945 = vmatpush1.msra.mxu0 0.0
        %946 = vmatprep.subr.mxu0 0.0
        %947 = vmatpush1.msra.mxu0 0.0
        %948 = vmatprep.subr.mxu0 0.0
        %949 = vmatpush1.msra.mxu0 0.0
        %950 = vmatprep.subr.mxu0 0.0
        %951 = vmatpush1.msra.mxu0 0.0
        %952 = vmatprep.subr.mxu0 0.0
        %953 = vmatpush1.msra.mxu0 0.0
        %954 = vmatprep.subr.mxu0 0.0
        %955 = vmatpush1.msra.mxu0 0.0
        %956 = vmatprep.subr.mxu0 0.0
        %957 = vmatpush1.msra.mxu0 0.0
        %958 = vmatprep.subr.mxu0 0.0
        %959 = vmatpush1.msra.mxu0 0.0
        %960 = vmatprep.subr.mxu0 0.0
        %961 = vmatpush1.msra.mxu0 0.0
        %962 = vmatprep.subr.mxu0 0.0
        %963 = vmatpush1.msra.mxu0 0.0
        %964 = vmatprep.subr.mxu0 0.0
        %965 = vmatpush1.msra.mxu0 0.0
        %966 = vmatprep.subr.mxu0 0.0
        %967 = vmatpush1.msra.mxu0 0.0
        %968 = vmatprep.subr.mxu0 0.0
        %969 = vmatpush1.msra.mxu0 0.0
        %970 = vmatprep.subr.mxu0 0.0
        %971 = vmatpush1.msra.mxu0 0.0
        %972 = vmatprep.subr.mxu0 0.0
        %973 = vmatpush1.msra.mxu0 0.0
        %974 = vmatprep.subr.mxu0 0.0
        %975 = vmatpush1.msra.mxu0 0.0
        %976 = vmatprep.subr.mxu0 0.0
        %977 = vmatpush1.msra.mxu0 0.0
        %978 = vmatprep.subr.mxu0 0.0
        %979 = vmatpush1.msra.mxu0 0.0
        %980 = vmatprep.subr.mxu0 0.0
        %981 = vmatpush1.msra.mxu0 0.0
        %982 = vmatprep.subr.mxu0 0.0
        %983 = vmatpush1.msra.mxu0 0.0
        %984 = vmatprep.subr.mxu0 0.0
        %985 = vmatpush1.msra.mxu0 0.0
        %986 = vmatprep.subr.mxu0 0.0
        %987 = vmatpush1.msra.mxu0 0.0
        %988 = vmatprep.subr.mxu0 0.0
        %989 = vmatpush1.msra.mxu0 0.0
        %990 = vmatprep.subr.mxu0 0.0
        %991 = vmatpush1.msra.mxu0 0.0
        %992 = vmatprep.subr.mxu0 0.0
        %993 = vmatpush1.msra.mxu0 0.0
        %994 = vmatprep.mubr.f32.mxu0 0.0
        %v995 = vand.u32 %v474, 4294901760
        %996 = vmatmul.mubr.f32.gmra.mrb[0].mxu0 %v995
        %v997 = vpop.f32.mrb[0].mxu0
        %v998 = vadd.f32 %v917, %v997
        %v999 = vpop.f32.mrb[0].mxu0
        %1000 = vmatprep.mubr.f32.mxu0 0.0
        %v1001 = vand.u32 %v477, 4294901760
        %1002 = vmatmul.mubr.f32.gmra.mrb[0].mxu0 %v1001
        %v1003 = vpop.f32.mrb[0].mxu0
        %v1004 = vadd.f32 %v923, %v1003
        %v1005 = vpop.f32.mrb[0].mxu0
        %1006 = vdwg.mxu0
        %v1007 = vld [vmem:[%s5] sm:$0xff]
        %v1008 = vld [vmem:[%s5 + $0x8] sm:$0xff]
        %v1009 = vld [vmem:[%s5 + $0x10] sm:$0xff]
        %v1010 = vld [vmem:[%s5 + $0x18] sm:$0xff]
        %v1012 = vsel %vm472, %v466, 0
        %v1015 = vsel %vm472, %v467, 0
        %1017 = vmatprep.subr.mxu0 0.0
        %v1018 = vand.u32 %v1007, 4294901760
        %1019 = vmatpush1.msra.mxu0 %v1018
        %1020 = vmatprep.subr.mxu0 0.0
        %v1021 = vand.u32 %v1008, 4294901760
        %1022 = vmatpush1.msra.mxu0 %v1021
        %1023 = vmatprep.subr.mxu0 0.0
        %v1024 = vand.u32 %v1009, 4294901760
        %1025 = vmatpush1.msra.mxu0 %v1024
        %1026 = vmatprep.subr.mxu0 0.0
        %v1027 = vand.u32 %v1010, 4294901760
        %1028 = vmatpush1.msra.mxu0 %v1027
        %1029 = vmatprep.subr.mxu0 0.0
        %1030 = vmatpush1.msra.mxu0 0.0
        %1031 = vmatprep.subr.mxu0 0.0
        %1032 = vmatpush1.msra.mxu0 0.0
        %1033 = vmatprep.subr.mxu0 0.0
        %1034 = vmatpush1.msra.mxu0 0.0
        %1035 = vmatprep.subr.mxu0 0.0
        %1036 = vmatpush1.msra.mxu0 0.0
        %1037 = vmatprep.subr.mxu0 0.0
        %1038 = vmatpush1.msra.mxu0 0.0
        %1039 = vmatprep.subr.mxu0 0.0
        %1040 = vmatpush1.msra.mxu0 0.0
        %1041 = vmatprep.subr.mxu0 0.0
        %1042 = vmatpush1.msra.mxu0 0.0
        %1043 = vmatprep.subr.mxu0 0.0
        %1044 = vmatpush1.msra.mxu0 0.0
        %1045 = vmatprep.subr.mxu0 0.0
        %1046 = vmatpush1.msra.mxu0 0.0
        %1047 = vmatprep.subr.mxu0 0.0
        %1048 = vmatpush1.msra.mxu0 0.0
        %1049 = vmatprep.subr.mxu0 0.0
        %1050 = vmatpush1.msra.mxu0 0.0
        %1051 = vmatprep.subr.mxu0 0.0
        %1052 = vmatpush1.msra.mxu0 0.0
        %1053 = vmatprep.subr.mxu0 0.0
        %1054 = vmatpush1.msra.mxu0 0.0
        %1055 = vmatprep.subr.mxu0 0.0
        %1056 = vmatpush1.msra.mxu0 0.0
        %1057 = vmatprep.subr.mxu0 0.0
        %1058 = vmatpush1.msra.mxu0 0.0
        %1059 = vmatprep.subr.mxu0 0.0
        %1060 = vmatpush1.msra.mxu0 0.0
        %1061 = vmatprep.subr.mxu0 0.0
        %1062 = vmatpush1.msra.mxu0 0.0
        %1063 = vmatprep.subr.mxu0 0.0
        %1064 = vmatpush1.msra.mxu0 0.0
        %1065 = vmatprep.subr.mxu0 0.0
        %1066 = vmatpush1.msra.mxu0 0.0
        %1067 = vmatprep.subr.mxu0 0.0
        %1068 = vmatpush1.msra.mxu0 0.0
        %1069 = vmatprep.subr.mxu0 0.0
        %1070 = vmatpush1.msra.mxu0 0.0
        %1071 = vmatprep.subr.mxu0 0.0
        %1072 = vmatpush1.msra.mxu0 0.0
        %1073 = vmatprep.subr.mxu0 0.0
        %1074 = vmatpush1.msra.mxu0 0.0
        %1075 = vmatprep.subr.mxu0 0.0
        %1076 = vmatpush1.msra.mxu0 0.0
        %1077 = vmatprep.subr.mxu0 0.0
        %1078 = vmatpush1.msra.mxu0 0.0
        %1079 = vmatprep.subr.mxu0 0.0
        %1080 = vmatpush1.msra.mxu0 0.0
        %1081 = vmatprep.subr.mxu0 0.0
        %1082 = vmatpush1.msra.mxu0 0.0
        %1083 = vmatprep.subr.mxu0 0.0
        %1084 = vmatpush1.msra.mxu0 0.0
        %1085 = vmatprep.mubr.f32.mxu0 0.0
        %v1086 = vand.u32 %v1012, 4294901760
        %v1087 = vsub.f32 %v1012, %v1086
        %v1088 = vand.u32 %v1087, 4294901760
        %v1089 = vsub.f32 %v1087, %v1088
        %v1090 = vand.u32 %v1089, 4294901760
        %1091 = vmatmul.mubr.f32.gmra.mrb[0].mxu0 %v1090
        %v1092 = vpop.f32.mrb[0].mxu0
        %v1093 = vadd.f32 0.0, %v1092
        %v1094 = vpop.f32.mrb[0].mxu0
        %1095 = vmatprep.mubr.f32.mxu0 0.0
        %v1096 = vand.u32 %v1015, 4294901760
        %v1097 = vsub.f32 %v1015, %v1096
        %v1098 = vand.u32 %v1097, 4294901760
        %v1099 = vsub.f32 %v1097, %v1098
        %v1100 = vand.u32 %v1099, 4294901760
        %1101 = vmatmul.mubr.f32.gmra.mrb[0].mxu0 %v1100
        %v1102 = vpop.f32.mrb[0].mxu0
        %v1103 = vadd.f32 0.0, %v1102
        %v1104 = vpop.f32.mrb[0].mxu0
        %1105 = vdwg.mxu0
        %1106 = vmatprep.subr.mxu0 0.0
        %v1107 = vand.u32 %v1007, 4294901760
        %v1108 = vsub.f32 %v1007, %v1107
        %v1109 = vand.u32 %v1108, 4294901760
        %v1110 = vsub.f32 %v1108, %v1109
        %v1111 = vand.u32 %v1110, 4294901760
        %1112 = vmatpush1.msra.mxu0 %v1111
        %1113 = vmatprep.subr.mxu0 0.0
        %v1114 = vand.u32 %v1008, 4294901760
        %v1115 = vsub.f32 %v1008, %v1114
        %v1116 = vand.u32 %v1115, 4294901760
        %v1117 = vsub.f32 %v1115, %v1116
        %v1118 = vand.u32 %v1117, 4294901760
        %1119 = vmatpush1.msra.mxu0 %v1118
        %1120 = vmatprep.subr.mxu0 0.0
        %v1121 = vand.u32 %v1009, 4294901760
        %v1122 = vsub.f32 %v1009, %v1121
        %v1123 = vand.u32 %v1122, 4294901760
        %v1124 = vsub.f32 %v1122, %v1123
        %v1125 = vand.u32 %v1124, 4294901760
        %1126 = vmatpush1.msra.mxu0 %v1125
        %1127 = vmatprep.subr.mxu0 0.0
        %v1128 = vand.u32 %v1010, 4294901760
        %v1129 = vsub.f32 %v1010, %v1128
        %v1130 = vand.u32 %v1129, 4294901760
        %v1131 = vsub.f32 %v1129, %v1130
        %v1132 = vand.u32 %v1131, 4294901760
        %1133 = vmatpush1.msra.mxu0 %v1132
        %1134 = vmatprep.subr.mxu0 0.0
        %1135 = vmatpush1.msra.mxu0 0.0
        %1136 = vmatprep.subr.mxu0 0.0
        %1137 = vmatpush1.msra.mxu0 0.0
        %1138 = vmatprep.subr.mxu0 0.0
        %1139 = vmatpush1.msra.mxu0 0.0
        %1140 = vmatprep.subr.mxu0 0.0
        %1141 = vmatpush1.msra.mxu0 0.0
        %1142 = vmatprep.subr.mxu0 0.0
        %1143 = vmatpush1.msra.mxu0 0.0
        %1144 = vmatprep.subr.mxu0 0.0
        %1145 = vmatpush1.msra.mxu0 0.0
        %1146 = vmatprep.subr.mxu0 0.0
        %1147 = vmatpush1.msra.mxu0 0.0
        %1148 = vmatprep.subr.mxu0 0.0
        %1149 = vmatpush1.msra.mxu0 0.0
        %1150 = vmatprep.subr.mxu0 0.0
        %1151 = vmatpush1.msra.mxu0 0.0
        %1152 = vmatprep.subr.mxu0 0.0
        %1153 = vmatpush1.msra.mxu0 0.0
        %1154 = vmatprep.subr.mxu0 0.0
        %1155 = vmatpush1.msra.mxu0 0.0
        %1156 = vmatprep.subr.mxu0 0.0
        %1157 = vmatpush1.msra.mxu0 0.0
        %1158 = vmatprep.subr.mxu0 0.0
        %1159 = vmatpush1.msra.mxu0 0.0
        %1160 = vmatprep.subr.mxu0 0.0
        %1161 = vmatpush1.msra.mxu0 0.0
        %1162 = vmatprep.subr.mxu0 0.0
        %1163 = vmatpush1.msra.mxu0 0.0
        %1164 = vmatprep.subr.mxu0 0.0
        %1165 = vmatpush1.msra.mxu0 0.0
        %1166 = vmatprep.subr.mxu0 0.0
        %1167 = vmatpush1.msra.mxu0 0.0
        %1168 = vmatprep.subr.mxu0 0.0
        %1169 = vmatpush1.msra.mxu0 0.0
        %1170 = vmatprep.subr.mxu0 0.0
        %1171 = vmatpush1.msra.mxu0 0.0
        %1172 = vmatprep.subr.mxu0 0.0
        %1173 = vmatpush1.msra.mxu0 0.0
        %1174 = vmatprep.subr.mxu0 0.0
        %1175 = vmatpush1.msra.mxu0 0.0
        %1176 = vmatprep.subr.mxu0 0.0
        %1177 = vmatpush1.msra.mxu0 0.0
        %1178 = vmatprep.subr.mxu0 0.0
        %1179 = vmatpush1.msra.mxu0 0.0
        %1180 = vmatprep.subr.mxu0 0.0
        %1181 = vmatpush1.msra.mxu0 0.0
        %1182 = vmatprep.subr.mxu0 0.0
        %1183 = vmatpush1.msra.mxu0 0.0
        %1184 = vmatprep.subr.mxu0 0.0
        %1185 = vmatpush1.msra.mxu0 0.0
        %1186 = vmatprep.subr.mxu0 0.0
        %1187 = vmatpush1.msra.mxu0 0.0
        %1188 = vmatprep.subr.mxu0 0.0
        %1189 = vmatpush1.msra.mxu0 0.0
        %1190 = vmatprep.mubr.f32.mxu0 0.0
        %v1191 = vand.u32 %v1012, 4294901760
        %1192 = vmatmul.mubr.f32.gmra.mrb[0].mxu0 %v1191
        %v1193 = vpop.f32.mrb[0].mxu0
        %v1194 = vadd.f32 %v1093, %v1193
        %v1195 = vpop.f32.mrb[0].mxu0
        %1196 = vmatprep.mubr.f32.mxu0 0.0
        %v1197 = vand.u32 %v1015, 4294901760
        %1198 = vmatmul.mubr.f32.gmra.mrb[0].mxu0 %v1197
        %v1199 = vpop.f32.mrb[0].mxu0
        %v1200 = vadd.f32 %v1103, %v1199
        %v1201 = vpop.f32.mrb[0].mxu0
        %1202 = vdwg.mxu0
        %1203 = vmatprep.subr.mxu0 0.0
        %v1204 = vand.u32 %v1007, 4294901760
        %v1205 = vsub.f32 %v1007, %v1204
        %1206 = vmatpush1.msra.mxu0 %v1205
        %1207 = vmatprep.subr.mxu0 0.0
        %v1208 = vand.u32 %v1008, 4294901760
        %v1209 = vsub.f32 %v1008, %v1208
        %1210 = vmatpush1.msra.mxu0 %v1209
        %1211 = vmatprep.subr.mxu0 0.0
        %v1212 = vand.u32 %v1009, 4294901760
        %v1213 = vsub.f32 %v1009, %v1212
        %1214 = vmatpush1.msra.mxu0 %v1213
        %1215 = vmatprep.subr.mxu0 0.0
        %v1216 = vand.u32 %v1010, 4294901760
        %v1217 = vsub.f32 %v1010, %v1216
        %1218 = vmatpush1.msra.mxu0 %v1217
        %1219 = vmatprep.subr.mxu0 0.0
        %1220 = vmatpush1.msra.mxu0 0.0
        %1221 = vmatprep.subr.mxu0 0.0
        %1222 = vmatpush1.msra.mxu0 0.0
        %1223 = vmatprep.subr.mxu0 0.0
        %1224 = vmatpush1.msra.mxu0 0.0
        %1225 = vmatprep.subr.mxu0 0.0
        %1226 = vmatpush1.msra.mxu0 0.0
        %1227 = vmatprep.subr.mxu0 0.0
        %1228 = vmatpush1.msra.mxu0 0.0
        %1229 = vmatprep.subr.mxu0 0.0
        %1230 = vmatpush1.msra.mxu0 0.0
        %1231 = vmatprep.subr.mxu0 0.0
        %1232 = vmatpush1.msra.mxu0 0.0
        %1233 = vmatprep.subr.mxu0 0.0
        %1234 = vmatpush1.msra.mxu0 0.0
        %1235 = vmatprep.subr.mxu0 0.0
        %1236 = vmatpush1.msra.mxu0 0.0
        %1237 = vmatprep.subr.mxu0 0.0
        %1238 = vmatpush1.msra.mxu0 0.0
        %1239 = vmatprep.subr.mxu0 0.0
        %1240 = vmatpush1.msra.mxu0 0.0
        %1241 = vmatprep.subr.mxu0 0.0
        %1242 = vmatpush1.msra.mxu0 0.0
        %1243 = vmatprep.subr.mxu0 0.0
        %1244 = vmatpush1.msra.mxu0 0.0
        %1245 = vmatprep.subr.mxu0 0.0
        %1246 = vmatpush1.msra.mxu0 0.0
        %1247 = vmatprep.subr.mxu0 0.0
        %1248 = vmatpush1.msra.mxu0 0.0
        %1249 = vmatprep.subr.mxu0 0.0
        %1250 = vmatpush1.msra.mxu0 0.0
        %1251 = vmatprep.subr.mxu0 0.0
        %1252 = vmatpush1.msra.mxu0 0.0
        %1253 = vmatprep.subr.mxu0 0.0
        %1254 = vmatpush1.msra.mxu0 0.0
        %1255 = vmatprep.subr.mxu0 0.0
        %1256 = vmatpush1.msra.mxu0 0.0
        %1257 = vmatprep.subr.mxu0 0.0
        %1258 = vmatpush1.msra.mxu0 0.0
        %1259 = vmatprep.subr.mxu0 0.0
        %1260 = vmatpush1.msra.mxu0 0.0
        %1261 = vmatprep.subr.mxu0 0.0
        %1262 = vmatpush1.msra.mxu0 0.0
        %1263 = vmatprep.subr.mxu0 0.0
        %1264 = vmatpush1.msra.mxu0 0.0
        %1265 = vmatprep.subr.mxu0 0.0
        %1266 = vmatpush1.msra.mxu0 0.0
        %1267 = vmatprep.subr.mxu0 0.0
        %1268 = vmatpush1.msra.mxu0 0.0
        %1269 = vmatprep.subr.mxu0 0.0
        %1270 = vmatpush1.msra.mxu0 0.0
        %1271 = vmatprep.subr.mxu0 0.0
        %1272 = vmatpush1.msra.mxu0 0.0
        %1273 = vmatprep.subr.mxu0 0.0
        %1274 = vmatpush1.msra.mxu0 0.0
        %1275 = vmatprep.mubr.f32.mxu0 0.0
        %v1276 = vand.u32 %v1012, 4294901760
        %v1277 = vsub.f32 %v1012, %v1276
        %1278 = vmatmul.mubr.f32.gmra.mrb[0].mxu0 %v1277
        %v1279 = vpop.f32.mrb[0].mxu0
        %v1280 = vadd.f32 %v1194, %v1279
        %v1281 = vpop.f32.mrb[0].mxu0
        %1282 = vmatprep.mubr.f32.mxu0 0.0
        %v1283 = vand.u32 %v1015, 4294901760
        %v1284 = vsub.f32 %v1015, %v1283
        %1285 = vmatmul.mubr.f32.gmra.mrb[0].mxu0 %v1284
        %v1286 = vpop.f32.mrb[0].mxu0
        %v1287 = vadd.f32 %v1200, %v1286
        %v1288 = vpop.f32.mrb[0].mxu0
        %1289 = vdwg.mxu0
        %1290 = vmatprep.subr.mxu0 0.0
        %v1291 = vand.u32 %v1007, 4294901760
        %1292 = vmatpush1.msra.mxu0 %v1291
        %1293 = vmatprep.subr.mxu0 0.0
        %v1294 = vand.u32 %v1008, 4294901760
        %1295 = vmatpush1.msra.mxu0 %v1294
        %1296 = vmatprep.subr.mxu0 0.0
        %v1297 = vand.u32 %v1009, 4294901760
        %1298 = vmatpush1.msra.mxu0 %v1297
        %1299 = vmatprep.subr.mxu0 0.0
        %v1300 = vand.u32 %v1010, 4294901760
        %1301 = vmatpush1.msra.mxu0 %v1300
        %1302 = vmatprep.subr.mxu0 0.0
        %1303 = vmatpush1.msra.mxu0 0.0
        %1304 = vmatprep.subr.mxu0 0.0
        %1305 = vmatpush1.msra.mxu0 0.0
        %1306 = vmatprep.subr.mxu0 0.0
        %1307 = vmatpush1.msra.mxu0 0.0
        %1308 = vmatprep.subr.mxu0 0.0
        %1309 = vmatpush1.msra.mxu0 0.0
        %1310 = vmatprep.subr.mxu0 0.0
        %1311 = vmatpush1.msra.mxu0 0.0
        %1312 = vmatprep.subr.mxu0 0.0
        %1313 = vmatpush1.msra.mxu0 0.0
        %1314 = vmatprep.subr.mxu0 0.0
        %1315 = vmatpush1.msra.mxu0 0.0
        %1316 = vmatprep.subr.mxu0 0.0
        %1317 = vmatpush1.msra.mxu0 0.0
        %1318 = vmatprep.subr.mxu0 0.0
        %1319 = vmatpush1.msra.mxu0 0.0
        %1320 = vmatprep.subr.mxu0 0.0
        %1321 = vmatpush1.msra.mxu0 0.0
        %1322 = vmatprep.subr.mxu0 0.0
        %1323 = vmatpush1.msra.mxu0 0.0
        %1324 = vmatprep.subr.mxu0 0.0
        %1325 = vmatpush1.msra.mxu0 0.0
        %1326 = vmatprep.subr.mxu0 0.0
        %1327 = vmatpush1.msra.mxu0 0.0
        %1328 = vmatprep.subr.mxu0 0.0
        %1329 = vmatpush1.msra.mxu0 0.0
        %1330 = vmatprep.subr.mxu0 0.0
        %1331 = vmatpush1.msra.mxu0 0.0
        %1332 = vmatprep.subr.mxu0 0.0
        %1333 = vmatpush1.msra.mxu0 0.0
        %1334 = vmatprep.subr.mxu0 0.0
        %1335 = vmatpush1.msra.mxu0 0.0
        %1336 = vmatprep.subr.mxu0 0.0
        %1337 = vmatpush1.msra.mxu0 0.0
        %1338 = vmatprep.subr.mxu0 0.0
        %1339 = vmatpush1.msra.mxu0 0.0
        %1340 = vmatprep.subr.mxu0 0.0
        %1341 = vmatpush1.msra.mxu0 0.0
        %1342 = vmatprep.subr.mxu0 0.0
        %1343 = vmatpush1.msra.mxu0 0.0
        %1344 = vmatprep.subr.mxu0 0.0
        %1345 = vmatpush1.msra.mxu0 0.0
        %1346 = vmatprep.subr.mxu0 0.0
        %1347 = vmatpush1.msra.mxu0 0.0
        %1348 = vmatprep.subr.mxu0 0.0
        %1349 = vmatpush1.msra.mxu0 0.0
        %1350 = vmatprep.subr.mxu0 0.0
        %1351 = vmatpush1.msra.mxu0 0.0
        %1352 = vmatprep.subr.mxu0 0.0
        %1353 = vmatpush1.msra.mxu0 0.0
        %1354 = vmatprep.subr.mxu0 0.0
        %1355 = vmatpush1.msra.mxu0 0.0
        %1356 = vmatprep.subr.mxu0 0.0
        %1357 = vmatpush1.msra.mxu0 0.0
        %1358 = vmatprep.mubr.f32.mxu0 0.0
        %v1359 = vand.u32 %v1012, 4294901760
        %v1360 = vsub.f32 %v1012, %v1359
        %v1361 = vand.u32 %v1360, 4294901760
        %1362 = vmatmul.mubr.f32.gmra.mrb[0].mxu0 %v1361
        %v1363 = vpop.f32.mrb[0].mxu0
        %v1364 = vadd.f32 %v1280, %v1363
        %v1365 = vpop.f32.mrb[0].mxu0
        %1366 = vmatprep.mubr.f32.mxu0 0.0
        %v1367 = vand.u32 %v1015, 4294901760
        %v1368 = vsub.f32 %v1015, %v1367
        %v1369 = vand.u32 %v1368, 4294901760
        %1370 = vmatmul.mubr.f32.gmra.mrb[0].mxu0 %v1369
        %v1371 = vpop.f32.mrb[0].mxu0
        %v1372 = vadd.f32 %v1287, %v1371
        %v1373 = vpop.f32.mrb[0].mxu0
        %1374 = vdwg.mxu0
        %1375 = vmatprep.subr.mxu0 0.0
        %v1376 = vand.u32 %v1007, 4294901760
        %v1377 = vsub.f32 %v1007, %v1376
        %v1378 = vand.u32 %v1377, 4294901760
        %1379 = vmatpush1.msra.mxu0 %v1378
        %1380 = vmatprep.subr.mxu0 0.0
        %v1381 = vand.u32 %v1008, 4294901760
        %v1382 = vsub.f32 %v1008, %v1381
        %v1383 = vand.u32 %v1382, 4294901760
        %1384 = vmatpush1.msra.mxu0 %v1383
        %1385 = vmatprep.subr.mxu0 0.0
        %v1386 = vand.u32 %v1009, 4294901760
        %v1387 = vsub.f32 %v1009, %v1386
        %v1388 = vand.u32 %v1387, 4294901760
        %1389 = vmatpush1.msra.mxu0 %v1388
        %1390 = vmatprep.subr.mxu0 0.0
        %v1391 = vand.u32 %v1010, 4294901760
        %v1392 = vsub.f32 %v1010, %v1391
        %v1393 = vand.u32 %v1392, 4294901760
        %1394 = vmatpush1.msra.mxu0 %v1393
        %1395 = vmatprep.subr.mxu0 0.0
        %1396 = vmatpush1.msra.mxu0 0.0
        %1397 = vmatprep.subr.mxu0 0.0
        %1398 = vmatpush1.msra.mxu0 0.0
        %1399 = vmatprep.subr.mxu0 0.0
        %1400 = vmatpush1.msra.mxu0 0.0
        %1401 = vmatprep.subr.mxu0 0.0
        %1402 = vmatpush1.msra.mxu0 0.0
        %1403 = vmatprep.subr.mxu0 0.0
        %1404 = vmatpush1.msra.mxu0 0.0
        %1405 = vmatprep.subr.mxu0 0.0
        %1406 = vmatpush1.msra.mxu0 0.0
        %1407 = vmatprep.subr.mxu0 0.0
        %1408 = vmatpush1.msra.mxu0 0.0
        %1409 = vmatprep.subr.mxu0 0.0
        %1410 = vmatpush1.msra.mxu0 0.0
        %1411 = vmatprep.subr.mxu0 0.0
        %1412 = vmatpush1.msra.mxu0 0.0
        %1413 = vmatprep.subr.mxu0 0.0
        %1414 = vmatpush1.msra.mxu0 0.0
        %1415 = vmatprep.subr.mxu0 0.0
        %1416 = vmatpush1.msra.mxu0 0.0
        %1417 = vmatprep.subr.mxu0 0.0
        %1418 = vmatpush1.msra.mxu0 0.0
        %1419 = vmatprep.subr.mxu0 0.0
        %1420 = vmatpush1.msra.mxu0 0.0
        %1421 = vmatprep.subr.mxu0 0.0
        %1422 = vmatpush1.msra.mxu0 0.0
        %1423 = vmatprep.subr.mxu0 0.0
        %1424 = vmatpush1.msra.mxu0 0.0
        %1425 = vmatprep.subr.mxu0 0.0
        %1426 = vmatpush1.msra.mxu0 0.0
        %1427 = vmatprep.subr.mxu0 0.0
        %1428 = vmatpush1.msra.mxu0 0.0
        %1429 = vmatprep.subr.mxu0 0.0
        %1430 = vmatpush1.msra.mxu0 0.0
        %1431 = vmatprep.subr.mxu0 0.0
        %1432 = vmatpush1.msra.mxu0 0.0
        %1433 = vmatprep.subr.mxu0 0.0
        %1434 = vmatpush1.msra.mxu0 0.0
        %1435 = vmatprep.subr.mxu0 0.0
        %1436 = vmatpush1.msra.mxu0 0.0
        %1437 = vmatprep.subr.mxu0 0.0
        %1438 = vmatpush1.msra.mxu0 0.0
        %1439 = vmatprep.subr.mxu0 0.0
        %1440 = vmatpush1.msra.mxu0 0.0
        %1441 = vmatprep.subr.mxu0 0.0
        %1442 = vmatpush1.msra.mxu0 0.0
        %1443 = vmatprep.subr.mxu0 0.0
        %1444 = vmatpush1.msra.mxu0 0.0
        %1445 = vmatprep.subr.mxu0 0.0
        %1446 = vmatpush1.msra.mxu0 0.0
        %1447 = vmatprep.subr.mxu0 0.0
        %1448 = vmatpush1.msra.mxu0 0.0
        %1449 = vmatprep.subr.mxu0 0.0
        %1450 = vmatpush1.msra.mxu0 0.0
        %1451 = vmatprep.mubr.f32.mxu0 0.0
        %v1452 = vand.u32 %v1012, 4294901760
        %1453 = vmatmul.mubr.f32.gmra.mrb[0].mxu0 %v1452
        %v1454 = vpop.f32.mrb[0].mxu0
        %v1455 = vadd.f32 %v1364, %v1454
        %v1456 = vpop.f32.mrb[0].mxu0
        %1457 = vmatprep.mubr.f32.mxu0 0.0
        %v1458 = vand.u32 %v1015, 4294901760
        %1459 = vmatmul.mubr.f32.gmra.mrb[0].mxu0 %v1458
        %v1460 = vpop.f32.mrb[0].mxu0
        %v1461 = vadd.f32 %v1372, %v1460
        %v1462 = vpop.f32.mrb[0].mxu0
        %1463 = vdwg.mxu0
        %1464 = vmatprep.subr.mxu0 0.0
        %v1465 = vand.u32 %v1007, 4294901760
        %1466 = vmatpush1.msra.mxu0 %v1465
        %1467 = vmatprep.subr.mxu0 0.0
        %v1468 = vand.u32 %v1008, 4294901760
        %1469 = vmatpush1.msra.mxu0 %v1468
        %1470 = vmatprep.subr.mxu0 0.0
        %v1471 = vand.u32 %v1009, 4294901760
        %1472 = vmatpush1.msra.mxu0 %v1471
        %1473 = vmatprep.subr.mxu0 0.0
        %v1474 = vand.u32 %v1010, 4294901760
        %1475 = vmatpush1.msra.mxu0 %v1474
        %1476 = vmatprep.subr.mxu0 0.0
        %1477 = vmatpush1.msra.mxu0 0.0
        %1478 = vmatprep.subr.mxu0 0.0
        %1479 = vmatpush1.msra.mxu0 0.0
        %1480 = vmatprep.subr.mxu0 0.0
        %1481 = vmatpush1.msra.mxu0 0.0
        %1482 = vmatprep.subr.mxu0 0.0
        %1483 = vmatpush1.msra.mxu0 0.0
        %1484 = vmatprep.subr.mxu0 0.0
        %1485 = vmatpush1.msra.mxu0 0.0
        %1486 = vmatprep.subr.mxu0 0.0
        %1487 = vmatpush1.msra.mxu0 0.0
        %1488 = vmatprep.subr.mxu0 0.0
        %1489 = vmatpush1.msra.mxu0 0.0
        %1490 = vmatprep.subr.mxu0 0.0
        %1491 = vmatpush1.msra.mxu0 0.0
        %1492 = vmatprep.subr.mxu0 0.0
        %1493 = vmatpush1.msra.mxu0 0.0
        %1494 = vmatprep.subr.mxu0 0.0
        %1495 = vmatpush1.msra.mxu0 0.0
        %1496 = vmatprep.subr.mxu0 0.0
        %1497 = vmatpush1.msra.mxu0 0.0
        %1498 = vmatprep.subr.mxu0 0.0
        %1499 = vmatpush1.msra.mxu0 0.0
        %1500 = vmatprep.subr.mxu0 0.0
        %1501 = vmatpush1.msra.mxu0 0.0
        %1502 = vmatprep.subr.mxu0 0.0
        %1503 = vmatpush1.msra.mxu0 0.0
        %1504 = vmatprep.subr.mxu0 0.0
        %1505 = vmatpush1.msra.mxu0 0.0
        %1506 = vmatprep.subr.mxu0 0.0
        %1507 = vmatpush1.msra.mxu0 0.0
        %1508 = vmatprep.subr.mxu0 0.0
        %1509 = vmatpush1.msra.mxu0 0.0
        %1510 = vmatprep.subr.mxu0 0.0
        %1511 = vmatpush1.msra.mxu0 0.0
        %1512 = vmatprep.subr.mxu0 0.0
        %1513 = vmatpush1.msra.mxu0 0.0
        %1514 = vmatprep.subr.mxu0 0.0
        %1515 = vmatpush1.msra.mxu0 0.0
        %1516 = vmatprep.subr.mxu0 0.0
        %1517 = vmatpush1.msra.mxu0 0.0
        %1518 = vmatprep.subr.mxu0 0.0
        %1519 = vmatpush1.msra.mxu0 0.0
        %1520 = vmatprep.subr.mxu0 0.0
        %1521 = vmatpush1.msra.mxu0 0.0
        %1522 = vmatprep.subr.mxu0 0.0
        %1523 = vmatpush1.msra.mxu0 0.0
        %1524 = vmatprep.subr.mxu0 0.0
        %1525 = vmatpush1.msra.mxu0 0.0
        %1526 = vmatprep.subr.mxu0 0.0
        %1527 = vmatpush1.msra.mxu0 0.0
        %1528 = vmatprep.subr.mxu0 0.0
        %1529 = vmatpush1.msra.mxu0 0.0
        %1530 = vmatprep.subr.mxu0 0.0
        %1531 = vmatpush1.msra.mxu0 0.0
        %1532 = vmatprep.mubr.f32.mxu0 0.0
        %v1533 = vand.u32 %v1012, 4294901760
        %1534 = vmatmul.mubr.f32.gmra.mrb[0].mxu0 %v1533
        %v1535 = vpop.f32.mrb[0].mxu0
        %v1536 = vadd.f32 %v1455, %v1535
        %v1537 = vpop.f32.mrb[0].mxu0
        %1538 = vmatprep.mubr.f32.mxu0 0.0
        %v1539 = vand.u32 %v1015, 4294901760
        %1540 = vmatmul.mubr.f32.gmra.mrb[0].mxu0 %v1539
        %v1541 = vpop.f32.mrb[0].mxu0
        %v1542 = vadd.f32 %v1461, %v1541
        %v1543 = vpop.f32.mrb[0].mxu0
        %1544 = vdwg.mxu0
        %v1545 = vld [vmem:[%s440] sm:$0xff]
        %v1546 = vld [vmem:[%s440 + $0x8] sm:$0xff]
        %v1547 = vld [vmem:[%s440 + $0x10] sm:$0xff]
        %v1548 = vld [vmem:[%s440 + $0x18] sm:$0xff]
        %v1549 = vld [vmem:[%s440 + $0x20] sm:$0xff]
        %v1550 = vld [vmem:[%s440 + $0x28] sm:$0xff]
        %v1551 = vld [vmem:[%s440 + $0x30] sm:$0xff]
        %v1552 = vld [vmem:[%s440 + $0x38] sm:$0xff]
        %v1553 = vld [vmem:[%s440 + $0x40] sm:$0xff]
        %v1554 = vld [vmem:[%s440 + $0x48] sm:$0xff]
        %v1555 = vld [vmem:[%s440 + $0x50] sm:$0xff]
        %v1556 = vld [vmem:[%s440 + $0x58] sm:$0xff]
        %v1557 = vld [vmem:[%s440 + $0x60] sm:$0xff]
        %v1558 = vld [vmem:[%s440 + $0x68] sm:$0xff]
        %v1559 = vld [vmem:[%s440 + $0x70] sm:$0xff]
        %v1560 = vld [vmem:[%s440 + $0x78] sm:$0xff]
        %v1561 = vld [vmem:[%s440 + $0x80] sm:$0xff]
        %v1562 = vld [vmem:[%s440 + $0x88] sm:$0xff]
        %v1563 = vld [vmem:[%s440 + $0x90] sm:$0xff]
        %v1564 = vld [vmem:[%s440 + $0x98] sm:$0xff]
        %v1565 = vld [vmem:[%s440 + $0xa0] sm:$0xff]
        %v1566 = vld [vmem:[%s440 + $0xa8] sm:$0xff]
        %v1567 = vld [vmem:[%s440 + $0xb0] sm:$0xff]
        %v1568 = vld [vmem:[%s440 + $0xb8] sm:$0xff]
        %v1569 = vld [vmem:[%s440 + $0xc0] sm:$0xff]
        %v1570 = vld [vmem:[%s440 + $0xc8] sm:$0xff]
        %v1571 = vld [vmem:[%s440 + $0xd0] sm:$0xff]
        %v1572 = vld [vmem:[%s440 + $0xd8] sm:$0xff]
        %v1573 = vld [vmem:[%s440 + $0xe0] sm:$0xff]
        %v1574 = vld [vmem:[%s440 + $0xe8] sm:$0xff]
        %v1575 = vld [vmem:[%s440 + $0xf0] sm:$0xff]
        %v1576 = vld [vmem:[%s440 + $0xf8] sm:$0xff]
        %v1579 = vcombine.high %v998, %v998
        %v1581 = vunpack.c.l.s4 1966171168
        %v1582 = vunpack.c.0.s8 %v1581
        %v1583 = vlaneseq
        %v1584 = vshrl.u32 %v1583, 7
        %v1585 = vsub.s32 %v1582, %v1584
        %v1586 = vrot.slane %v998, %v1585
        %v1588 = vunpack.c.l.s4 1966171168
        %v1589 = vunpack.c.0.s8 %v1588
        %v1590 = vlaneseq
        %v1591 = vshrl.u32 %v1590, 7
        %v1592 = vsub.s32 %v1589, %v1591
        %v1593 = vrot.slane %v1579, %v1592
        %v1594 = vcombine.high %v1586, %v1586
        %v1595 = vcombine.high %v1593, %v1593
        %v1597 = vunpack.c.l.s4 1966171168
        %v1598 = vunpack.c.0.s8 %v1597
        %v1599 = vlaneseq
        %v1600 = vshrl.u32 %v1599, 7
        %v1601 = vsub.s32 %v1598, %v1600
        %v1602 = vrot.slane %v1586, %v1601
        %v1604 = vunpack.c.l.s4 1966171168
        %v1605 = vunpack.c.0.s8 %v1604
        %v1606 = vlaneseq
        %v1607 = vshrl.u32 %v1606, 7
        %v1608 = vsub.s32 %v1605, %v1607
        %v1609 = vrot.slane %v1593, %v1608
        %v1611 = vunpack.c.l.s4 1966171168
        %v1612 = vunpack.c.0.s8 %v1611
        %v1613 = vlaneseq
        %v1614 = vshrl.u32 %v1613, 7
        %v1615 = vsub.s32 %v1612, %v1614
        %v1616 = vrot.slane %v1594, %v1615
        %v1618 = vunpack.c.l.s4 1966171168
        %v1619 = vunpack.c.0.s8 %v1618
        %v1620 = vlaneseq
        %v1621 = vshrl.u32 %v1620, 7
        %v1622 = vsub.s32 %v1619, %v1621
        %v1623 = vrot.slane %v1595, %v1622
        %v1624 = vcombine.high %v1602, %v1602
        %v1625 = vcombine.high %v1609, %v1609
        %v1626 = vcombine.high %v1616, %v1616
        %v1627 = vcombine.high %v1623, %v1623
        %v1628 = vcombine.high %v1004, %v1004
        %v1630 = vunpack.c.l.s4 1966171168
        %v1631 = vunpack.c.0.s8 %v1630
        %v1632 = vlaneseq
        %v1633 = vshrl.u32 %v1632, 7
        %v1634 = vsub.s32 %v1631, %v1633
        %v1635 = vrot.slane %v1004, %v1634
        %v1637 = vunpack.c.l.s4 1966171168
        %v1638 = vunpack.c.0.s8 %v1637
        %v1639 = vlaneseq
        %v1640 = vshrl.u32 %v1639, 7
        %v1641 = vsub.s32 %v1638, %v1640
        %v1642 = vrot.slane %v1628, %v1641
        %v1643 = vcombine.high %v1635, %v1635
        %v1644 = vcombine.high %v1642, %v1642
        %v1646 = vunpack.c.l.s4 1966171168
        %v1647 = vunpack.c.0.s8 %v1646
        %v1648 = vlaneseq
        %v1649 = vshrl.u32 %v1648, 7
        %v1650 = vsub.s32 %v1647, %v1649
        %v1651 = vrot.slane %v1635, %v1650
        %v1653 = vunpack.c.l.s4 1966171168
        %v1654 = vunpack.c.0.s8 %v1653
        %v1655 = vlaneseq
        %v1656 = vshrl.u32 %v1655, 7
        %v1657 = vsub.s32 %v1654, %v1656
        %v1658 = vrot.slane %v1642, %v1657
        %v1660 = vunpack.c.l.s4 1966171168
        %v1661 = vunpack.c.0.s8 %v1660
        %v1662 = vlaneseq
        %v1663 = vshrl.u32 %v1662, 7
        %v1664 = vsub.s32 %v1661, %v1663
        %v1665 = vrot.slane %v1643, %v1664
        %v1667 = vunpack.c.l.s4 1966171168
        %v1668 = vunpack.c.0.s8 %v1667
        %v1669 = vlaneseq
        %v1670 = vshrl.u32 %v1669, 7
        %v1671 = vsub.s32 %v1668, %v1670
        %v1672 = vrot.slane %v1644, %v1671
        %v1673 = vcombine.high %v1651, %v1651
        %v1674 = vcombine.high %v1658, %v1658
        %v1675 = vcombine.high %v1665, %v1665
        %v1676 = vcombine.high %v1672, %v1672
        %v1677 = vlaneseq
        %v1678 = vshrl.u32 %v1677, 7
        %v1679 = vsub.s32 0, %v1678
        %v1680 = vrot.slane %v1602, %v1679
        %v1681 = vlaneseq
        %v1682 = vshrl.u32 %v1681, 7
        %v1683 = vsub.s32 0, %v1682
        %v1684 = vrot.slane %v1616, %v1683
        %v1685 = vlaneseq
        %v1686 = vshrl.u32 %v1685, 7
        %v1687 = vsub.s32 0, %v1686
        %v1688 = vrot.slane %v1624, %v1687
        %v1689 = vlaneseq
        %v1690 = vshrl.u32 %v1689, 7
        %v1691 = vsub.s32 0, %v1690
        %v1692 = vrot.slane %v1626, %v1691
        %v1693 = vlaneseq
        %v1694 = vshrl.u32 %v1693, 7
        %v1695 = vsub.s32 0, %v1694
        %v1696 = vrot.slane %v1609, %v1695
        %v1697 = vlaneseq
        %v1698 = vshrl.u32 %v1697, 7
        %v1699 = vsub.s32 0, %v1698
        %v1700 = vrot.slane %v1623, %v1699
        %v1701 = vlaneseq
        %v1702 = vshrl.u32 %v1701, 7
        %v1703 = vsub.s32 0, %v1702
        %v1704 = vrot.slane %v1625, %v1703
        %v1705 = vlaneseq
        %v1706 = vshrl.u32 %v1705, 7
        %v1707 = vsub.s32 0, %v1706
        %v1708 = vrot.slane %v1627, %v1707
        %v1709 = vlaneseq
        %v1710 = vshrl.u32 %v1709, 7
        %v1711 = vsub.s32 0, %v1710
        %v1712 = vrot.slane %v1651, %v1711
        %v1713 = vlaneseq
        %v1714 = vshrl.u32 %v1713, 7
        %v1715 = vsub.s32 0, %v1714
        %v1716 = vrot.slane %v1665, %v1715
        %v1717 = vlaneseq
        %v1718 = vshrl.u32 %v1717, 7
        %v1719 = vsub.s32 0, %v1718
        %v1720 = vrot.slane %v1673, %v1719
        %v1721 = vlaneseq
        %v1722 = vshrl.u32 %v1721, 7
        %v1723 = vsub.s32 0, %v1722
        %v1724 = vrot.slane %v1675, %v1723
        %v1725 = vlaneseq
        %v1726 = vshrl.u32 %v1725, 7
        %v1727 = vsub.s32 0, %v1726
        %v1728 = vrot.slane %v1658, %v1727
        %v1729 = vlaneseq
        %v1730 = vshrl.u32 %v1729, 7
        %v1731 = vsub.s32 0, %v1730
        %v1732 = vrot.slane %v1672, %v1731
        %v1733 = vlaneseq
        %v1734 = vshrl.u32 %v1733, 7
        %v1735 = vsub.s32 0, %v1734
        %v1736 = vrot.slane %v1674, %v1735
        %v1737 = vlaneseq
        %v1738 = vshrl.u32 %v1737, 7
        %v1739 = vsub.s32 0, %v1738
        %v1740 = vrot.slane %v1676, %v1739
        %v1757 = vadd.f32 %v1680, %v1536
        %v1758 = vadd.f32 %v1680, %v1542
        %v1759 = vadd.f32 %v1684, %v1536
        %v1760 = vadd.f32 %v1684, %v1542
        %v1761 = vadd.f32 %v1688, %v1536
        %v1762 = vadd.f32 %v1688, %v1542
        %v1763 = vadd.f32 %v1692, %v1536
        %v1764 = vadd.f32 %v1692, %v1542
        %v1765 = vadd.f32 %v1696, %v1536
        %v1766 = vadd.f32 %v1696, %v1542
        %v1767 = vadd.f32 %v1700, %v1536
        %v1768 = vadd.f32 %v1700, %v1542
        %v1769 = vadd.f32 %v1704, %v1536
        %v1770 = vadd.f32 %v1704, %v1542
        %v1771 = vadd.f32 %v1708, %v1536
        %v1772 = vadd.f32 %v1708, %v1542
        %v1773 = vadd.f32 %v1712, %v1536
        %v1774 = vadd.f32 %v1712, %v1542
        %v1775 = vadd.f32 %v1716, %v1536
        %v1776 = vadd.f32 %v1716, %v1542
        %v1777 = vadd.f32 %v1720, %v1536
        %v1778 = vadd.f32 %v1720, %v1542
        %v1779 = vadd.f32 %v1724, %v1536
        %v1780 = vadd.f32 %v1724, %v1542
        %v1781 = vadd.f32 %v1728, %v1536
        %v1782 = vadd.f32 %v1728, %v1542
        %v1783 = vadd.f32 %v1732, %v1536
        %v1784 = vadd.f32 %v1732, %v1542
        %v1785 = vadd.f32 %v1736, %v1536
        %v1786 = vadd.f32 %v1736, %v1542
        %v1787 = vadd.f32 %v1740, %v1536
        %v1788 = vadd.f32 %v1740, %v1542
        %vm1789 = vcmp.gt.f32.partialorder %v1757, 0.0
        %vm1790 = vcmp.gt.f32.partialorder %v1758, 0.0
        %vm1791 = vcmp.gt.f32.partialorder %v1759, 0.0
        %vm1792 = vcmp.gt.f32.partialorder %v1760, 0.0
        %vm1793 = vcmp.gt.f32.partialorder %v1761, 0.0
        %vm1794 = vcmp.gt.f32.partialorder %v1762, 0.0
        %vm1795 = vcmp.gt.f32.partialorder %v1763, 0.0
        %vm1796 = vcmp.gt.f32.partialorder %v1764, 0.0
        %vm1797 = vcmp.gt.f32.partialorder %v1765, 0.0
        %vm1798 = vcmp.gt.f32.partialorder %v1766, 0.0
        %vm1799 = vcmp.gt.f32.partialorder %v1767, 0.0
        %vm1800 = vcmp.gt.f32.partialorder %v1768, 0.0
        %vm1801 = vcmp.gt.f32.partialorder %v1769, 0.0
        %vm1802 = vcmp.gt.f32.partialorder %v1770, 0.0
        %vm1803 = vcmp.gt.f32.partialorder %v1771, 0.0
        %vm1804 = vcmp.gt.f32.partialorder %v1772, 0.0
        %vm1805 = vcmp.gt.f32.partialorder %v1773, 0.0
        %vm1806 = vcmp.gt.f32.partialorder %v1774, 0.0
        %vm1807 = vcmp.gt.f32.partialorder %v1775, 0.0
        %vm1808 = vcmp.gt.f32.partialorder %v1776, 0.0
        %vm1809 = vcmp.gt.f32.partialorder %v1777, 0.0
        %vm1810 = vcmp.gt.f32.partialorder %v1778, 0.0
        %vm1811 = vcmp.gt.f32.partialorder %v1779, 0.0
        %vm1812 = vcmp.gt.f32.partialorder %v1780, 0.0
        %vm1813 = vcmp.gt.f32.partialorder %v1781, 0.0
        %vm1814 = vcmp.gt.f32.partialorder %v1782, 0.0
        %vm1815 = vcmp.gt.f32.partialorder %v1783, 0.0
        %vm1816 = vcmp.gt.f32.partialorder %v1784, 0.0
        %vm1817 = vcmp.gt.f32.partialorder %v1785, 0.0
        %vm1818 = vcmp.gt.f32.partialorder %v1786, 0.0
        %vm1819 = vcmp.gt.f32.partialorder %v1787, 0.0
        %vm1820 = vcmp.gt.f32.partialorder %v1788, 0.0
        %v1821 = vmul.f32 %v1757, 0.2
        %v1822 = vmul.f32 %v1758, 0.2
        %v1823 = vmul.f32 %v1759, 0.2
        %v1824 = vmul.f32 %v1760, 0.2
        %v1825 = vmul.f32 %v1761, 0.2
        %v1826 = vmul.f32 %v1762, 0.2
        %v1827 = vmul.f32 %v1763, 0.2
        %v1828 = vmul.f32 %v1764, 0.2
        %v1829 = vmul.f32 %v1765, 0.2
        %v1830 = vmul.f32 %v1766, 0.2
        %v1831 = vmul.f32 %v1767, 0.2
        %v1832 = vmul.f32 %v1768, 0.2
        %v1833 = vmul.f32 %v1769, 0.2
        %v1834 = vmul.f32 %v1770, 0.2
        %v1835 = vmul.f32 %v1771, 0.2
        %v1836 = vmul.f32 %v1772, 0.2
        %v1837 = vmul.f32 %v1773, 0.2
        %v1838 = vmul.f32 %v1774, 0.2
        %v1839 = vmul.f32 %v1775, 0.2
        %v1840 = vmul.f32 %v1776, 0.2
        %v1841 = vmul.f32 %v1777, 0.2
        %v1842 = vmul.f32 %v1778, 0.2
        %v1843 = vmul.f32 %v1779, 0.2
        %v1844 = vmul.f32 %v1780, 0.2
        %v1845 = vmul.f32 %v1781, 0.2
        %v1846 = vmul.f32 %v1782, 0.2
        %v1847 = vmul.f32 %v1783, 0.2
        %v1848 = vmul.f32 %v1784, 0.2
        %v1849 = vmul.f32 %v1785, 0.2
        %v1850 = vmul.f32 %v1786, 0.2
        %v1851 = vmul.f32 %v1787, 0.2
        %v1852 = vmul.f32 %v1788, 0.2
        %v1853 = vsel %vm1789, %v1757, %v1821
        %v1854 = vsel %vm1790, %v1758, %v1822
        %v1855 = vsel %vm1791, %v1759, %v1823
        %v1856 = vsel %vm1792, %v1760, %v1824
        %v1857 = vsel %vm1793, %v1761, %v1825
        %v1858 = vsel %vm1794, %v1762, %v1826
        %v1859 = vsel %vm1795, %v1763, %v1827
        %v1860 = vsel %vm1796, %v1764, %v1828
        %v1861 = vsel %vm1797, %v1765, %v1829
        %v1862 = vsel %vm1798, %v1766, %v1830
        %v1863 = vsel %vm1799, %v1767, %v1831
        %v1864 = vsel %vm1800, %v1768, %v1832
        %v1865 = vsel %vm1801, %v1769, %v1833
        %v1866 = vsel %vm1802, %v1770, %v1834
        %v1867 = vsel %vm1803, %v1771, %v1835
        %v1868 = vsel %vm1804, %v1772, %v1836
        %v1869 = vsel %vm1805, %v1773, %v1837
        %v1870 = vsel %vm1806, %v1774, %v1838
        %v1871 = vsel %vm1807, %v1775, %v1839
        %v1872 = vsel %vm1808, %v1776, %v1840
        %v1873 = vsel %vm1809, %v1777, %v1841
        %v1874 = vsel %vm1810, %v1778, %v1842
        %v1875 = vsel %vm1811, %v1779, %v1843
        %v1876 = vsel %vm1812, %v1780, %v1844
        %v1877 = vsel %vm1813, %v1781, %v1845
        %v1878 = vsel %vm1814, %v1782, %v1846
        %v1879 = vsel %vm1815, %v1783, %v1847
        %v1880 = vsel %vm1816, %v1784, %v1848
        %v1881 = vsel %vm1817, %v1785, %v1849
        %v1882 = vsel %vm1818, %v1786, %v1850
        %v1883 = vsel %vm1819, %v1787, %v1851
        %v1884 = vsel %vm1820, %v1788, %v1852
        %v1885 = vmul.f32 %v1853, %v1545
        %v1886 = vmul.f32 %v1854, %v1546
        %v1887 = vmul.f32 %v1855, %v1547
        %v1888 = vmul.f32 %v1856, %v1548
        %v1889 = vmul.f32 %v1857, %v1549
        %v1890 = vmul.f32 %v1858, %v1550
        %v1891 = vmul.f32 %v1859, %v1551
        %v1892 = vmul.f32 %v1860, %v1552
        %v1893 = vmul.f32 %v1861, %v1553
        %v1894 = vmul.f32 %v1862, %v1554
        %v1895 = vmul.f32 %v1863, %v1555
        %v1896 = vmul.f32 %v1864, %v1556
        %v1897 = vmul.f32 %v1865, %v1557
        %v1898 = vmul.f32 %v1866, %v1558
        %v1899 = vmul.f32 %v1867, %v1559
        %v1900 = vmul.f32 %v1868, %v1560
        %v1901 = vmul.f32 %v1869, %v1561
        %v1902 = vmul.f32 %v1870, %v1562
        %v1903 = vmul.f32 %v1871, %v1563
        %v1904 = vmul.f32 %v1872, %v1564
        %v1905 = vmul.f32 %v1873, %v1565
        %v1906 = vmul.f32 %v1874, %v1566
        %v1907 = vmul.f32 %v1875, %v1567
        %v1908 = vmul.f32 %v1876, %v1568
        %v1909 = vmul.f32 %v1877, %v1569
        %v1910 = vmul.f32 %v1878, %v1570
        %v1911 = vmul.f32 %v1879, %v1571
        %v1912 = vmul.f32 %v1880, %v1572
        %v1913 = vmul.f32 %v1881, %v1573
        %v1914 = vmul.f32 %v1882, %v1574
        %v1915 = vmul.f32 %v1883, %v1575
        %v1916 = vmul.f32 %v1884, %v1576
        %vm1917 = vcmask 31744
        %v1918 = vsel %vm1917, %v1885, 0.0
        %1919 = vadd.xlane.f32.xlu0 %v1918
        %v1920 = vpop.xlane.xlu0 %1919
        %v1921 = vsel %vm1917, %v1886, 0.0
        %1922 = vadd.xlane.f32.xlu0 %v1921
        %v1923 = vpop.xlane.xlu0 %1922
        %v1924 = vsel %vm1917, %v1887, 0.0
        %1925 = vadd.xlane.f32.xlu0 %v1924
        %v1926 = vpop.xlane.xlu0 %1925
        %v1927 = vsel %vm1917, %v1888, 0.0
        %1928 = vadd.xlane.f32.xlu0 %v1927
        %v1929 = vpop.xlane.xlu0 %1928
        %v1930 = vsel %vm1917, %v1889, 0.0
        %1931 = vadd.xlane.f32.xlu0 %v1930
        %v1932 = vpop.xlane.xlu0 %1931
        %v1933 = vsel %vm1917, %v1890, 0.0
        %1934 = vadd.xlane.f32.xlu0 %v1933
        %v1935 = vpop.xlane.xlu0 %1934
        %v1936 = vsel %vm1917, %v1891, 0.0
        %1937 = vadd.xlane.f32.xlu0 %v1936
        %v1938 = vpop.xlane.xlu0 %1937
        %v1939 = vsel %vm1917, %v1892, 0.0
        %1940 = vadd.xlane.f32.xlu0 %v1939
        %v1941 = vpop.xlane.xlu0 %1940
        %v1942 = vsel %vm1917, %v1893, 0.0
        %1943 = vadd.xlane.f32.xlu0 %v1942
        %v1944 = vpop.xlane.xlu0 %1943
        %v1945 = vsel %vm1917, %v1894, 0.0
        %1946 = vadd.xlane.f32.xlu0 %v1945
        %v1947 = vpop.xlane.xlu0 %1946
        %v1948 = vsel %vm1917, %v1895, 0.0
        %1949 = vadd.xlane.f32.xlu0 %v1948
        %v1950 = vpop.xlane.xlu0 %1949
        %v1951 = vsel %vm1917, %v1896, 0.0
        %1952 = vadd.xlane.f32.xlu0 %v1951
        %v1953 = vpop.xlane.xlu0 %1952
        %v1954 = vsel %vm1917, %v1897, 0.0
        %1955 = vadd.xlane.f32.xlu0 %v1954
        %v1956 = vpop.xlane.xlu0 %1955
        %v1957 = vsel %vm1917, %v1898, 0.0
        %1958 = vadd.xlane.f32.xlu0 %v1957
        %v1959 = vpop.xlane.xlu0 %1958
        %v1960 = vsel %vm1917, %v1899, 0.0
        %1961 = vadd.xlane.f32.xlu0 %v1960
        %v1962 = vpop.xlane.xlu0 %1961
        %v1963 = vsel %vm1917, %v1900, 0.0
        %1964 = vadd.xlane.f32.xlu0 %v1963
        %v1965 = vpop.xlane.xlu0 %1964
        %v1966 = vsel %vm1917, %v1901, 0.0
        %1967 = vadd.xlane.f32.xlu0 %v1966
        %v1968 = vpop.xlane.xlu0 %1967
        %v1969 = vsel %vm1917, %v1902, 0.0
        %1970 = vadd.xlane.f32.xlu0 %v1969
        %v1971 = vpop.xlane.xlu0 %1970
        %v1972 = vsel %vm1917, %v1903, 0.0
        %1973 = vadd.xlane.f32.xlu0 %v1972
        %v1974 = vpop.xlane.xlu0 %1973
        %v1975 = vsel %vm1917, %v1904, 0.0
        %1976 = vadd.xlane.f32.xlu0 %v1975
        %v1977 = vpop.xlane.xlu0 %1976
        %v1978 = vsel %vm1917, %v1905, 0.0
        %1979 = vadd.xlane.f32.xlu0 %v1978
        %v1980 = vpop.xlane.xlu0 %1979
        %v1981 = vsel %vm1917, %v1906, 0.0
        %1982 = vadd.xlane.f32.xlu0 %v1981
        %v1983 = vpop.xlane.xlu0 %1982
        %v1984 = vsel %vm1917, %v1907, 0.0
        %1985 = vadd.xlane.f32.xlu0 %v1984
        %v1986 = vpop.xlane.xlu0 %1985
        %v1987 = vsel %vm1917, %v1908, 0.0
        %1988 = vadd.xlane.f32.xlu0 %v1987
        %v1989 = vpop.xlane.xlu0 %1988
        %v1990 = vsel %vm1917, %v1909, 0.0
        %1991 = vadd.xlane.f32.xlu0 %v1990
        %v1992 = vpop.xlane.xlu0 %1991
        %v1993 = vsel %vm1917, %v1910, 0.0
        %1994 = vadd.xlane.f32.xlu0 %v1993
        %v1995 = vpop.xlane.xlu0 %1994
        %v1996 = vsel %vm1917, %v1911, 0.0
        %1997 = vadd.xlane.f32.xlu0 %v1996
        %v1998 = vpop.xlane.xlu0 %1997
        %v1999 = vsel %vm1917, %v1912, 0.0
        %2000 = vadd.xlane.f32.xlu0 %v1999
        %v2001 = vpop.xlane.xlu0 %2000
        %v2002 = vsel %vm1917, %v1913, 0.0
        %2003 = vadd.xlane.f32.xlu0 %v2002
        %v2004 = vpop.xlane.xlu0 %2003
        %v2005 = vsel %vm1917, %v1914, 0.0
        %2006 = vadd.xlane.f32.xlu0 %v2005
        %v2007 = vpop.xlane.xlu0 %2006
        %v2008 = vsel %vm1917, %v1915, 0.0
        %2009 = vadd.xlane.f32.xlu0 %v2008
        %v2010 = vpop.xlane.xlu0 %2009
        %v2011 = vsel %vm1917, %v1916, 0.0
        %2012 = vadd.xlane.f32.xlu0 %v2011
        %v2013 = vpop.xlane.xlu0 %2012
        %v2014 = vsel %vm1917, %v1545, 0.0
        %2015 = vadd.xlane.f32.xlu0 %v2014
        %v2016 = vpop.xlane.xlu0 %2015
        %v2017 = vsel %vm1917, %v1546, 0.0
        %2018 = vadd.xlane.f32.xlu0 %v2017
        %v2019 = vpop.xlane.xlu0 %2018
        %v2020 = vsel %vm1917, %v1547, 0.0
        %2021 = vadd.xlane.f32.xlu0 %v2020
        %v2022 = vpop.xlane.xlu0 %2021
        %v2023 = vsel %vm1917, %v1548, 0.0
        %2024 = vadd.xlane.f32.xlu0 %v2023
        %v2025 = vpop.xlane.xlu0 %2024
        %v2026 = vsel %vm1917, %v1549, 0.0
        %2027 = vadd.xlane.f32.xlu0 %v2026
        %v2028 = vpop.xlane.xlu0 %2027
        %v2029 = vsel %vm1917, %v1550, 0.0
        %2030 = vadd.xlane.f32.xlu0 %v2029
        %v2031 = vpop.xlane.xlu0 %2030
        %v2032 = vsel %vm1917, %v1551, 0.0
        %2033 = vadd.xlane.f32.xlu0 %v2032
        %v2034 = vpop.xlane.xlu0 %2033
        %v2035 = vsel %vm1917, %v1552, 0.0
        %2036 = vadd.xlane.f32.xlu0 %v2035
        %v2037 = vpop.xlane.xlu0 %2036
        %v2038 = vsel %vm1917, %v1553, 0.0
        %2039 = vadd.xlane.f32.xlu0 %v2038
        %v2040 = vpop.xlane.xlu0 %2039
        %v2041 = vsel %vm1917, %v1554, 0.0
        %2042 = vadd.xlane.f32.xlu0 %v2041
        %v2043 = vpop.xlane.xlu0 %2042
        %v2044 = vsel %vm1917, %v1555, 0.0
        %2045 = vadd.xlane.f32.xlu0 %v2044
        %v2046 = vpop.xlane.xlu0 %2045
        %v2047 = vsel %vm1917, %v1556, 0.0
        %2048 = vadd.xlane.f32.xlu0 %v2047
        %v2049 = vpop.xlane.xlu0 %2048
        %v2050 = vsel %vm1917, %v1557, 0.0
        %2051 = vadd.xlane.f32.xlu0 %v2050
        %v2052 = vpop.xlane.xlu0 %2051
        %v2053 = vsel %vm1917, %v1558, 0.0
        %2054 = vadd.xlane.f32.xlu0 %v2053
        %v2055 = vpop.xlane.xlu0 %2054
        %v2056 = vsel %vm1917, %v1559, 0.0
        %2057 = vadd.xlane.f32.xlu0 %v2056
        %v2058 = vpop.xlane.xlu0 %2057
        %v2059 = vsel %vm1917, %v1560, 0.0
        %2060 = vadd.xlane.f32.xlu0 %v2059
        %v2061 = vpop.xlane.xlu0 %2060
        %v2062 = vsel %vm1917, %v1561, 0.0
        %2063 = vadd.xlane.f32.xlu0 %v2062
        %v2064 = vpop.xlane.xlu0 %2063
        %v2065 = vsel %vm1917, %v1562, 0.0
        %2066 = vadd.xlane.f32.xlu0 %v2065
        %v2067 = vpop.xlane.xlu0 %2066
        %v2068 = vsel %vm1917, %v1563, 0.0
        %2069 = vadd.xlane.f32.xlu0 %v2068
        %v2070 = vpop.xlane.xlu0 %2069
        %v2071 = vsel %vm1917, %v1564, 0.0
        %2072 = vadd.xlane.f32.xlu0 %v2071
        %v2073 = vpop.xlane.xlu0 %2072
        %v2074 = vsel %vm1917, %v1565, 0.0
        %2075 = vadd.xlane.f32.xlu0 %v2074
        %v2076 = vpop.xlane.xlu0 %2075
        %v2077 = vsel %vm1917, %v1566, 0.0
        %2078 = vadd.xlane.f32.xlu0 %v2077
        %v2079 = vpop.xlane.xlu0 %2078
        %v2080 = vsel %vm1917, %v1567, 0.0
        %2081 = vadd.xlane.f32.xlu0 %v2080
        %v2082 = vpop.xlane.xlu0 %2081
        %v2083 = vsel %vm1917, %v1568, 0.0
        %2084 = vadd.xlane.f32.xlu0 %v2083
        %v2085 = vpop.xlane.xlu0 %2084
        %v2086 = vsel %vm1917, %v1569, 0.0
        %2087 = vadd.xlane.f32.xlu0 %v2086
        %v2088 = vpop.xlane.xlu0 %2087
        %v2089 = vsel %vm1917, %v1570, 0.0
        %2090 = vadd.xlane.f32.xlu0 %v2089
        %v2091 = vpop.xlane.xlu0 %2090
        %v2092 = vsel %vm1917, %v1571, 0.0
        %2093 = vadd.xlane.f32.xlu0 %v2092
        %v2094 = vpop.xlane.xlu0 %2093
        %v2095 = vsel %vm1917, %v1572, 0.0
        %2096 = vadd.xlane.f32.xlu0 %v2095
        %v2097 = vpop.xlane.xlu0 %2096
        %v2098 = vsel %vm1917, %v1573, 0.0
        %2099 = vadd.xlane.f32.xlu0 %v2098
        %v2100 = vpop.xlane.xlu0 %2099
        %v2101 = vsel %vm1917, %v1574, 0.0
        %2102 = vadd.xlane.f32.xlu0 %v2101
        %v2103 = vpop.xlane.xlu0 %2102
        %v2104 = vsel %vm1917, %v1575, 0.0
        %2105 = vadd.xlane.f32.xlu0 %v2104
        %v2106 = vpop.xlane.xlu0 %2105
        %v2107 = vsel %vm1917, %v1576, 0.0
        %2108 = vadd.xlane.f32.xlu0 %v2107
        %v2109 = vpop.xlane.xlu0 %2108
        %vm2110 = vcmp.gt.f32.partialorder %v2016, 0.0
        %vm2111 = vcmp.gt.f32.partialorder %v2019, 0.0
        %vm2112 = vcmp.gt.f32.partialorder %v2022, 0.0
        %vm2113 = vcmp.gt.f32.partialorder %v2025, 0.0
        %vm2114 = vcmp.gt.f32.partialorder %v2028, 0.0
        %vm2115 = vcmp.gt.f32.partialorder %v2031, 0.0
        %vm2116 = vcmp.gt.f32.partialorder %v2034, 0.0
        %vm2117 = vcmp.gt.f32.partialorder %v2037, 0.0
        %vm2118 = vcmp.gt.f32.partialorder %v2040, 0.0
        %vm2119 = vcmp.gt.f32.partialorder %v2043, 0.0
        %vm2120 = vcmp.gt.f32.partialorder %v2046, 0.0
        %vm2121 = vcmp.gt.f32.partialorder %v2049, 0.0
        %vm2122 = vcmp.gt.f32.partialorder %v2052, 0.0
        %vm2123 = vcmp.gt.f32.partialorder %v2055, 0.0
        %vm2124 = vcmp.gt.f32.partialorder %v2058, 0.0
        %vm2125 = vcmp.gt.f32.partialorder %v2061, 0.0
        %vm2126 = vcmp.gt.f32.partialorder %v2064, 0.0
        %vm2127 = vcmp.gt.f32.partialorder %v2067, 0.0
        %vm2128 = vcmp.gt.f32.partialorder %v2070, 0.0
        %vm2129 = vcmp.gt.f32.partialorder %v2073, 0.0
        %vm2130 = vcmp.gt.f32.partialorder %v2076, 0.0
        %vm2131 = vcmp.gt.f32.partialorder %v2079, 0.0
        %vm2132 = vcmp.gt.f32.partialorder %v2082, 0.0
        %vm2133 = vcmp.gt.f32.partialorder %v2085, 0.0
        %vm2134 = vcmp.gt.f32.partialorder %v2088, 0.0
        %vm2135 = vcmp.gt.f32.partialorder %v2091, 0.0
        %vm2136 = vcmp.gt.f32.partialorder %v2094, 0.0
        %vm2137 = vcmp.gt.f32.partialorder %v2097, 0.0
        %vm2138 = vcmp.gt.f32.partialorder %v2100, 0.0
        %vm2139 = vcmp.gt.f32.partialorder %v2103, 0.0
        %vm2140 = vcmp.gt.f32.partialorder %v2106, 0.0
        %vm2141 = vcmp.gt.f32.partialorder %v2109, 0.0
        %v2142 = vsel %vm2110, %v1920, -9e+15
        %v2143 = vsel %vm2111, %v1923, -9e+15
        %v2144 = vsel %vm2112, %v1926, -9e+15
        %v2145 = vsel %vm2113, %v1929, -9e+15
        %v2146 = vsel %vm2114, %v1932, -9e+15
        %v2147 = vsel %vm2115, %v1935, -9e+15
        %v2148 = vsel %vm2116, %v1938, -9e+15
        %v2149 = vsel %vm2117, %v1941, -9e+15
        %v2150 = vsel %vm2118, %v1944, -9e+15
        %v2151 = vsel %vm2119, %v1947, -9e+15
        %v2152 = vsel %vm2120, %v1950, -9e+15
        %v2153 = vsel %vm2121, %v1953, -9e+15
        %v2154 = vsel %vm2122, %v1956, -9e+15
        %v2155 = vsel %vm2123, %v1959, -9e+15
        %v2156 = vsel %vm2124, %v1962, -9e+15
        %v2157 = vsel %vm2125, %v1965, -9e+15
        %v2158 = vsel %vm2126, %v1968, -9e+15
        %v2159 = vsel %vm2127, %v1971, -9e+15
        %v2160 = vsel %vm2128, %v1974, -9e+15
        %v2161 = vsel %vm2129, %v1977, -9e+15
        %v2162 = vsel %vm2130, %v1980, -9e+15
        %v2163 = vsel %vm2131, %v1983, -9e+15
        %v2164 = vsel %vm2132, %v1986, -9e+15
        %v2165 = vsel %vm2133, %v1989, -9e+15
        %v2166 = vsel %vm2134, %v1992, -9e+15
        %v2167 = vsel %vm2135, %v1995, -9e+15
        %v2168 = vsel %vm2136, %v1998, -9e+15
        %v2169 = vsel %vm2137, %v2001, -9e+15
        %v2170 = vsel %vm2138, %v2004, -9e+15
        %v2171 = vsel %vm2139, %v2007, -9e+15
        %v2172 = vsel %vm2140, %v2010, -9e+15
        %v2173 = vsel %vm2141, %v2013, -9e+15
        %v2206 = vlaneseq
        %v2207 = vand.u32 %v2206, 127
        %v2208 = vlaneseq
        %v2209 = vshrl.u32 %v2208, 7
        %v2210 = vsub.s32 %v2207, %v2209
        %v2211 = vrot.slane %v2142, %v2210
        %v2212 = vadd.s32 %v2207, 4294967288
        %v2213 = vlaneseq
        %v2214 = vshrl.u32 %v2213, 7
        %v2215 = vsub.s32 %v2212, %v2214
        %v2216 = vrot.slane %v2143, %v2215
        %vm2217 = vcmask 130112
        %v2218 = vsel %vm2217, %v2216, %v2211
        %v2219 = vlaneseq
        %v2220 = vshrl.u32 %v2219, 7
        %v2221 = vsub.s32 %v2207, %v2220
        %v2222 = vrot.slane %v2144, %v2221
        %v2223 = vlaneseq
        %v2224 = vshrl.u32 %v2223, 7
        %v2225 = vsub.s32 %v2212, %v2224
        %v2226 = vrot.slane %v2145, %v2225
        %v2227 = vsel %vm2217, %v2226, %v2222
        %v2228 = vlaneseq
        %v2229 = vshrl.u32 %v2228, 7
        %v2230 = vsub.s32 %v2207, %v2229
        %v2231 = vrot.slane %v2146, %v2230
        %v2232 = vlaneseq
        %v2233 = vshrl.u32 %v2232, 7
        %v2234 = vsub.s32 %v2212, %v2233
        %v2235 = vrot.slane %v2147, %v2234
        %v2236 = vsel %vm2217, %v2235, %v2231
        %v2237 = vlaneseq
        %v2238 = vshrl.u32 %v2237, 7
        %v2239 = vsub.s32 %v2207, %v2238
        %v2240 = vrot.slane %v2148, %v2239
        %v2241 = vlaneseq
        %v2242 = vshrl.u32 %v2241, 7
        %v2243 = vsub.s32 %v2212, %v2242
        %v2244 = vrot.slane %v2149, %v2243
        %v2245 = vsel %vm2217, %v2244, %v2240
        %v2246 = vlaneseq
        %v2247 = vshrl.u32 %v2246, 7
        %v2248 = vsub.s32 %v2207, %v2247
        %v2249 = vrot.slane %v2150, %v2248
        %v2250 = vlaneseq
        %v2251 = vshrl.u32 %v2250, 7
        %v2252 = vsub.s32 %v2212, %v2251
        %v2253 = vrot.slane %v2151, %v2252
        %v2254 = vsel %vm2217, %v2253, %v2249
        %v2255 = vlaneseq
        %v2256 = vshrl.u32 %v2255, 7
        %v2257 = vsub.s32 %v2207, %v2256
        %v2258 = vrot.slane %v2152, %v2257
        %v2259 = vlaneseq
        %v2260 = vshrl.u32 %v2259, 7
        %v2261 = vsub.s32 %v2212, %v2260
        %v2262 = vrot.slane %v2153, %v2261
        %v2263 = vsel %vm2217, %v2262, %v2258
        %v2264 = vlaneseq
        %v2265 = vshrl.u32 %v2264, 7
        %v2266 = vsub.s32 %v2207, %v2265
        %v2267 = vrot.slane %v2154, %v2266
        %v2268 = vlaneseq
        %v2269 = vshrl.u32 %v2268, 7
        %v2270 = vsub.s32 %v2212, %v2269
        %v2271 = vrot.slane %v2155, %v2270
        %v2272 = vsel %vm2217, %v2271, %v2267
        %v2273 = vlaneseq
        %v2274 = vshrl.u32 %v2273, 7
        %v2275 = vsub.s32 %v2207, %v2274
        %v2276 = vrot.slane %v2156, %v2275
        %v2277 = vlaneseq
        %v2278 = vshrl.u32 %v2277, 7
        %v2279 = vsub.s32 %v2212, %v2278
        %v2280 = vrot.slane %v2157, %v2279
        %v2281 = vsel %vm2217, %v2280, %v2276
        %v2282 = vlaneseq
        %v2283 = vshrl.u32 %v2282, 7
        %v2284 = vsub.s32 %v2207, %v2283
        %v2285 = vrot.slane %v2158, %v2284
        %v2286 = vlaneseq
        %v2287 = vshrl.u32 %v2286, 7
        %v2288 = vsub.s32 %v2212, %v2287
        %v2289 = vrot.slane %v2159, %v2288
        %v2290 = vsel %vm2217, %v2289, %v2285
        %v2291 = vlaneseq
        %v2292 = vshrl.u32 %v2291, 7
        %v2293 = vsub.s32 %v2207, %v2292
        %v2294 = vrot.slane %v2160, %v2293
        %v2295 = vlaneseq
        %v2296 = vshrl.u32 %v2295, 7
        %v2297 = vsub.s32 %v2212, %v2296
        %v2298 = vrot.slane %v2161, %v2297
        %v2299 = vsel %vm2217, %v2298, %v2294
        %v2300 = vlaneseq
        %v2301 = vshrl.u32 %v2300, 7
        %v2302 = vsub.s32 %v2207, %v2301
        %v2303 = vrot.slane %v2162, %v2302
        %v2304 = vlaneseq
        %v2305 = vshrl.u32 %v2304, 7
        %v2306 = vsub.s32 %v2212, %v2305
        %v2307 = vrot.slane %v2163, %v2306
        %v2308 = vsel %vm2217, %v2307, %v2303
        %v2309 = vlaneseq
        %v2310 = vshrl.u32 %v2309, 7
        %v2311 = vsub.s32 %v2207, %v2310
        %v2312 = vrot.slane %v2164, %v2311
        %v2313 = vlaneseq
        %v2314 = vshrl.u32 %v2313, 7
        %v2315 = vsub.s32 %v2212, %v2314
        %v2316 = vrot.slane %v2165, %v2315
        %v2317 = vsel %vm2217, %v2316, %v2312
        %v2318 = vlaneseq
        %v2319 = vshrl.u32 %v2318, 7
        %v2320 = vsub.s32 %v2207, %v2319
        %v2321 = vrot.slane %v2166, %v2320
        %v2322 = vlaneseq
        %v2323 = vshrl.u32 %v2322, 7
        %v2324 = vsub.s32 %v2212, %v2323
        %v2325 = vrot.slane %v2167, %v2324
        %v2326 = vsel %vm2217, %v2325, %v2321
        %v2327 = vlaneseq
        %v2328 = vshrl.u32 %v2327, 7
        %v2329 = vsub.s32 %v2207, %v2328
        %v2330 = vrot.slane %v2168, %v2329
        %v2331 = vlaneseq
        %v2332 = vshrl.u32 %v2331, 7
        %v2333 = vsub.s32 %v2212, %v2332
        %v2334 = vrot.slane %v2169, %v2333
        %v2335 = vsel %vm2217, %v2334, %v2330
        %v2336 = vlaneseq
        %v2337 = vshrl.u32 %v2336, 7
        %v2338 = vsub.s32 %v2207, %v2337
        %v2339 = vrot.slane %v2170, %v2338
        %v2340 = vlaneseq
        %v2341 = vshrl.u32 %v2340, 7
        %v2342 = vsub.s32 %v2212, %v2341
        %v2343 = vrot.slane %v2171, %v2342
        %v2344 = vsel %vm2217, %v2343, %v2339
        %v2345 = vlaneseq
        %v2346 = vshrl.u32 %v2345, 7
        %v2347 = vsub.s32 %v2207, %v2346
        %v2348 = vrot.slane %v2172, %v2347
        %v2349 = vlaneseq
        %v2350 = vshrl.u32 %v2349, 7
        %v2351 = vsub.s32 %v2212, %v2350
        %v2352 = vrot.slane %v2173, %v2351
        %v2353 = vsel %vm2217, %v2352, %v2348
        %vm2354 = vcmask 1041409
        %v2355 = vsel %vm2354, %v2227, %v2218
        %vm2356 = vcmask 1042434
        %v2357 = vsel %vm2356, %v2236, %v2355
        %vm2358 = vcmask 1043459
        %v2359 = vsel %vm2358, %v2245, %v2357
        %vm2360 = vcmask 1044484
        %v2361 = vsel %vm2360, %v2254, %v2359
        %vm2362 = vcmask 1045509
        %v2363 = vsel %vm2362, %v2263, %v2361
        %vm2364 = vcmask 1046534
        %v2365 = vsel %vm2364, %v2272, %v2363
        %vm2366 = vcmask 1047559
        %v2367 = vsel %vm2366, %v2281, %v2365
        %v2368 = vsel %vm2354, %v2299, %v2290
        %v2369 = vsel %vm2356, %v2308, %v2368
        %v2370 = vsel %vm2358, %v2317, %v2369
        %v2371 = vsel %vm2360, %v2326, %v2370
        %v2372 = vsel %vm2362, %v2335, %v2371
        %v2373 = vsel %vm2364, %v2344, %v2372
        %v2374 = vsel %vm2366, %v2353, %v2373
        %vm2377 = vcmask 130048
        %v2378 = vsel %vm2377, %v2367, -inf
        %2379 = vmax.xlane.f32.xlu0 %v2378
        %v2380 = vpop.xlane.xlu0 %2379
        %v2381 = vsel %vm2377, %v2374, -inf
        %2382 = vmax.xlane.f32.xlu0 %v2381
        %v2383 = vpop.xlane.xlu0 %2382
        %v2386 = vlaneseq
        %v2387 = vshrl.u32 %v2386, 7
        %v2388 = vsub.s32 0, %v2387
        %v2389 = vrot.slane %v2380, %v2388
        %v2390 = vlaneseq
        %v2391 = vshrl.u32 %v2390, 7
        %v2392 = vsub.s32 1, %v2391
        %v2393 = vrot.slane %v2380, %v2392
        %v2394 = vlaneseq
        %v2395 = vshrl.u32 %v2394, 7
        %v2396 = vsub.s32 2, %v2395
        %v2397 = vrot.slane %v2380, %v2396
        %v2398 = vlaneseq
        %v2399 = vshrl.u32 %v2398, 7
        %v2400 = vsub.s32 3, %v2399
        %v2401 = vrot.slane %v2380, %v2400
        %v2402 = vlaneseq
        %v2403 = vshrl.u32 %v2402, 7
        %v2404 = vsub.s32 4, %v2403
        %v2405 = vrot.slane %v2380, %v2404
        %v2406 = vlaneseq
        %v2407 = vshrl.u32 %v2406, 7
        %v2408 = vsub.s32 5, %v2407
        %v2409 = vrot.slane %v2380, %v2408
        %v2410 = vlaneseq
        %v2411 = vshrl.u32 %v2410, 7
        %v2412 = vsub.s32 6, %v2411
        %v2413 = vrot.slane %v2380, %v2412
        %v2414 = vlaneseq
        %v2415 = vshrl.u32 %v2414, 7
        %v2416 = vsub.s32 7, %v2415
        %v2417 = vrot.slane %v2380, %v2416
        %v2418 = vlaneseq
        %v2419 = vshrl.u32 %v2418, 7
        %v2420 = vsub.s32 0, %v2419
        %v2421 = vrot.slane %v2383, %v2420
        %v2422 = vlaneseq
        %v2423 = vshrl.u32 %v2422, 7
        %v2424 = vsub.s32 1, %v2423
        %v2425 = vrot.slane %v2383, %v2424
        %v2426 = vlaneseq
        %v2427 = vshrl.u32 %v2426, 7
        %v2428 = vsub.s32 2, %v2427
        %v2429 = vrot.slane %v2383, %v2428
        %v2430 = vlaneseq
        %v2431 = vshrl.u32 %v2430, 7
        %v2432 = vsub.s32 3, %v2431
        %v2433 = vrot.slane %v2383, %v2432
        %v2434 = vlaneseq
        %v2435 = vshrl.u32 %v2434, 7
        %v2436 = vsub.s32 4, %v2435
        %v2437 = vrot.slane %v2383, %v2436
        %v2438 = vlaneseq
        %v2439 = vshrl.u32 %v2438, 7
        %v2440 = vsub.s32 5, %v2439
        %v2441 = vrot.slane %v2383, %v2440
        %v2442 = vlaneseq
        %v2443 = vshrl.u32 %v2442, 7
        %v2444 = vsub.s32 6, %v2443
        %v2445 = vrot.slane %v2383, %v2444
        %v2446 = vlaneseq
        %v2447 = vshrl.u32 %v2446, 7
        %v2448 = vsub.s32 7, %v2447
        %v2449 = vrot.slane %v2383, %v2448
        %v2466 = vsub.f32 %v2142, %v2389
        %v2467 = vsub.f32 %v2143, %v2389
        %v2468 = vsub.f32 %v2144, %v2393
        %v2469 = vsub.f32 %v2145, %v2393
        %v2470 = vsub.f32 %v2146, %v2397
        %v2471 = vsub.f32 %v2147, %v2397
        %v2472 = vsub.f32 %v2148, %v2401
        %v2473 = vsub.f32 %v2149, %v2401
        %v2474 = vsub.f32 %v2150, %v2405
        %v2475 = vsub.f32 %v2151, %v2405
        %v2476 = vsub.f32 %v2152, %v2409
        %v2477 = vsub.f32 %v2153, %v2409
        %v2478 = vsub.f32 %v2154, %v2413
        %v2479 = vsub.f32 %v2155, %v2413
        %v2480 = vsub.f32 %v2156, %v2417
        %v2481 = vsub.f32 %v2157, %v2417
        %v2482 = vsub.f32 %v2158, %v2421
        %v2483 = vsub.f32 %v2159, %v2421
        %v2484 = vsub.f32 %v2160, %v2425
        %v2485 = vsub.f32 %v2161, %v2425
        %v2486 = vsub.f32 %v2162, %v2429
        %v2487 = vsub.f32 %v2163, %v2429
        %v2488 = vsub.f32 %v2164, %v2433
        %v2489 = vsub.f32 %v2165, %v2433
        %v2490 = vsub.f32 %v2166, %v2437
        %v2491 = vsub.f32 %v2167, %v2437
        %v2492 = vsub.f32 %v2168, %v2441
        %v2493 = vsub.f32 %v2169, %v2441
        %v2494 = vsub.f32 %v2170, %v2445
        %v2495 = vsub.f32 %v2171, %v2445
        %v2496 = vsub.f32 %v2172, %v2449
        %v2497 = vsub.f32 %v2173, %v2449
        %v2498 = vmul.f32 %v2466, 1.442695
        %v2499 = vpow.pop %v2498
        %v2500 = vmul.f32 %v2467, 1.442695
        %v2501 = vpow.pop %v2500
        %v2502 = vmul.f32 %v2468, 1.442695
        %v2503 = vpow.pop %v2502
        %v2504 = vmul.f32 %v2469, 1.442695
        %v2505 = vpow.pop %v2504
        %v2506 = vmul.f32 %v2470, 1.442695
        %v2507 = vpow.pop %v2506
        %v2508 = vmul.f32 %v2471, 1.442695
        %v2509 = vpow.pop %v2508
        %v2510 = vmul.f32 %v2472, 1.442695
        %v2511 = vpow.pop %v2510
        %v2512 = vmul.f32 %v2473, 1.442695
        %v2513 = vpow.pop %v2512
        %v2514 = vmul.f32 %v2474, 1.442695
        %v2515 = vpow.pop %v2514
        %v2516 = vmul.f32 %v2475, 1.442695
        %v2517 = vpow.pop %v2516
        %v2518 = vmul.f32 %v2476, 1.442695
        %v2519 = vpow.pop %v2518
        %v2520 = vmul.f32 %v2477, 1.442695
        %v2521 = vpow.pop %v2520
        %v2522 = vmul.f32 %v2478, 1.442695
        %v2523 = vpow.pop %v2522
        %v2524 = vmul.f32 %v2479, 1.442695
        %v2525 = vpow.pop %v2524
        %v2526 = vmul.f32 %v2480, 1.442695
        %v2527 = vpow.pop %v2526
        %v2528 = vmul.f32 %v2481, 1.442695
        %v2529 = vpow.pop %v2528
        %v2530 = vmul.f32 %v2482, 1.442695
        %v2531 = vpow.pop %v2530
        %v2532 = vmul.f32 %v2483, 1.442695
        %v2533 = vpow.pop %v2532
        %v2534 = vmul.f32 %v2484, 1.442695
        %v2535 = vpow.pop %v2534
        %v2536 = vmul.f32 %v2485, 1.442695
        %v2537 = vpow.pop %v2536
        %v2538 = vmul.f32 %v2486, 1.442695
        %v2539 = vpow.pop %v2538
        %v2540 = vmul.f32 %v2487, 1.442695
        %v2541 = vpow.pop %v2540
        %v2542 = vmul.f32 %v2488, 1.442695
        %v2543 = vpow.pop %v2542
        %v2544 = vmul.f32 %v2489, 1.442695
        %v2545 = vpow.pop %v2544
        %v2546 = vmul.f32 %v2490, 1.442695
        %v2547 = vpow.pop %v2546
        %v2548 = vmul.f32 %v2491, 1.442695
        %v2549 = vpow.pop %v2548
        %v2550 = vmul.f32 %v2492, 1.442695
        %v2551 = vpow.pop %v2550
        %v2552 = vmul.f32 %v2493, 1.442695
        %v2553 = vpow.pop %v2552
        %v2554 = vmul.f32 %v2494, 1.442695
        %v2555 = vpow.pop %v2554
        %v2556 = vmul.f32 %v2495, 1.442695
        %v2557 = vpow.pop %v2556
        %v2558 = vmul.f32 %v2496, 1.442695
        %v2559 = vpow.pop %v2558
        %v2560 = vmul.f32 %v2497, 1.442695
        %v2561 = vpow.pop %v2560
        %2594 = vset.pattern.permute.xlu0 0
        %2595 = vperm.xlu0 %2594, %v2499
        %v2596 = vpop.permute.xlu0 %2595
        %2597 = vset.pattern.permute.xlu0 0
        %2598 = vperm.xlu0 %2597, %v2501
        %v2599 = vpop.permute.xlu0 %2598
        %2600 = vset.pattern.permute.xlu0 0
        %2601 = vperm.xlu0 %2600, %v2503
        %v2602 = vpop.permute.xlu0 %2601
        %2603 = vset.pattern.permute.xlu0 0
        %2604 = vperm.xlu0 %2603, %v2505
        %v2605 = vpop.permute.xlu0 %2604
        %2606 = vset.pattern.permute.xlu0 0
        %2607 = vperm.xlu0 %2606, %v2507
        %v2608 = vpop.permute.xlu0 %2607
        %2609 = vset.pattern.permute.xlu0 0
        %2610 = vperm.xlu0 %2609, %v2509
        %v2611 = vpop.permute.xlu0 %2610
        %2612 = vset.pattern.permute.xlu0 0
        %2613 = vperm.xlu0 %2612, %v2511
        %v2614 = vpop.permute.xlu0 %2613
        %2615 = vset.pattern.permute.xlu0 0
        %2616 = vperm.xlu0 %2615, %v2513
        %v2617 = vpop.permute.xlu0 %2616
        %2618 = vset.pattern.permute.xlu0 0
        %2619 = vperm.xlu0 %2618, %v2515
        %v2620 = vpop.permute.xlu0 %2619
        %2621 = vset.pattern.permute.xlu0 0
        %2622 = vperm.xlu0 %2621, %v2517
        %v2623 = vpop.permute.xlu0 %2622
        %2624 = vset.pattern.permute.xlu0 0
        %2625 = vperm.xlu0 %2624, %v2519
        %v2626 = vpop.permute.xlu0 %2625
        %2627 = vset.pattern.permute.xlu0 0
        %2628 = vperm.xlu0 %2627, %v2521
        %v2629 = vpop.permute.xlu0 %2628
        %2630 = vset.pattern.permute.xlu0 0
        %2631 = vperm.xlu0 %2630, %v2523
        %v2632 = vpop.permute.xlu0 %2631
        %2633 = vset.pattern.permute.xlu0 0
        %2634 = vperm.xlu0 %2633, %v2525
        %v2635 = vpop.permute.xlu0 %2634
        %2636 = vset.pattern.permute.xlu0 0
        %2637 = vperm.xlu0 %2636, %v2527
        %v2638 = vpop.permute.xlu0 %2637
        %2639 = vset.pattern.permute.xlu0 0
        %2640 = vperm.xlu0 %2639, %v2529
        %v2641 = vpop.permute.xlu0 %2640
        %2642 = vset.pattern.permute.xlu0 0
        %2643 = vperm.xlu0 %2642, %v2531
        %v2644 = vpop.permute.xlu0 %2643
        %2645 = vset.pattern.permute.xlu0 0
        %2646 = vperm.xlu0 %2645, %v2533
        %v2647 = vpop.permute.xlu0 %2646
        %2648 = vset.pattern.permute.xlu0 0
        %2649 = vperm.xlu0 %2648, %v2535
        %v2650 = vpop.permute.xlu0 %2649
        %2651 = vset.pattern.permute.xlu0 0
        %2652 = vperm.xlu0 %2651, %v2537
        %v2653 = vpop.permute.xlu0 %2652
        %2654 = vset.pattern.permute.xlu0 0
        %2655 = vperm.xlu0 %2654, %v2539
        %v2656 = vpop.permute.xlu0 %2655
        %2657 = vset.pattern.permute.xlu0 0
        %2658 = vperm.xlu0 %2657, %v2541
        %v2659 = vpop.permute.xlu0 %2658
        %2660 = vset.pattern.permute.xlu0 0
        %2661 = vperm.xlu0 %2660, %v2543
        %v2662 = vpop.permute.xlu0 %2661
        %2663 = vset.pattern.permute.xlu0 0
        %2664 = vperm.xlu0 %2663, %v2545
        %v2665 = vpop.permute.xlu0 %2664
        %2666 = vset.pattern.permute.xlu0 0
        %2667 = vperm.xlu0 %2666, %v2547
        %v2668 = vpop.permute.xlu0 %2667
        %2669 = vset.pattern.permute.xlu0 0
        %2670 = vperm.xlu0 %2669, %v2549
        %v2671 = vpop.permute.xlu0 %2670
        %2672 = vset.pattern.permute.xlu0 0
        %2673 = vperm.xlu0 %2672, %v2551
        %v2674 = vpop.permute.xlu0 %2673
        %2675 = vset.pattern.permute.xlu0 0
        %2676 = vperm.xlu0 %2675, %v2553
        %v2677 = vpop.permute.xlu0 %2676
        %2678 = vset.pattern.permute.xlu0 0
        %2679 = vperm.xlu0 %2678, %v2555
        %v2680 = vpop.permute.xlu0 %2679
        %2681 = vset.pattern.permute.xlu0 0
        %2682 = vperm.xlu0 %2681, %v2557
        %v2683 = vpop.permute.xlu0 %2682
        %2684 = vset.pattern.permute.xlu0 0
        %2685 = vperm.xlu0 %2684, %v2559
        %v2686 = vpop.permute.xlu0 %2685
        %2687 = vset.pattern.permute.xlu0 0
        %2688 = vperm.xlu0 %2687, %v2561
        %v2689 = vpop.permute.xlu0 %2688
        %v2690 = vlaneseq
        %v2691 = vshrl.u32 %v2690, 7
        %v2692 = vsub.s32 %v2207, %v2691
        %v2693 = vrot.slane %v2596, %v2692
        %v2694 = vlaneseq
        %v2695 = vshrl.u32 %v2694, 7
        %v2696 = vsub.s32 %v2212, %v2695
        %v2697 = vrot.slane %v2599, %v2696
        %v2698 = vsel %vm2217, %v2697, %v2693
        %v2699 = vlaneseq
        %v2700 = vshrl.u32 %v2699, 7
        %v2701 = vsub.s32 %v2207, %v2700
        %v2702 = vrot.slane %v2602, %v2701
        %v2703 = vlaneseq
        %v2704 = vshrl.u32 %v2703, 7
        %v2705 = vsub.s32 %v2212, %v2704
        %v2706 = vrot.slane %v2605, %v2705
        %v2707 = vsel %vm2217, %v2706, %v2702
        %v2708 = vlaneseq
        %v2709 = vshrl.u32 %v2708, 7
        %v2710 = vsub.s32 %v2207, %v2709
        %v2711 = vrot.slane %v2608, %v2710
        %v2712 = vlaneseq
        %v2713 = vshrl.u32 %v2712, 7
        %v2714 = vsub.s32 %v2212, %v2713
        %v2715 = vrot.slane %v2611, %v2714
        %v2716 = vsel %vm2217, %v2715, %v2711
        %v2717 = vlaneseq
        %v2718 = vshrl.u32 %v2717, 7
        %v2719 = vsub.s32 %v2207, %v2718
        %v2720 = vrot.slane %v2614, %v2719
        %v2721 = vlaneseq
        %v2722 = vshrl.u32 %v2721, 7
        %v2723 = vsub.s32 %v2212, %v2722
        %v2724 = vrot.slane %v2617, %v2723
        %v2725 = vsel %vm2217, %v2724, %v2720
        %v2726 = vlaneseq
        %v2727 = vshrl.u32 %v2726, 7
        %v2728 = vsub.s32 %v2207, %v2727
        %v2729 = vrot.slane %v2620, %v2728
        %v2730 = vlaneseq
        %v2731 = vshrl.u32 %v2730, 7
        %v2732 = vsub.s32 %v2212, %v2731
        %v2733 = vrot.slane %v2623, %v2732
        %v2734 = vsel %vm2217, %v2733, %v2729
        %v2735 = vlaneseq
        %v2736 = vshrl.u32 %v2735, 7
        %v2737 = vsub.s32 %v2207, %v2736
        %v2738 = vrot.slane %v2626, %v2737
        %v2739 = vlaneseq
        %v2740 = vshrl.u32 %v2739, 7
        %v2741 = vsub.s32 %v2212, %v2740
        %v2742 = vrot.slane %v2629, %v2741
        %v2743 = vsel %vm2217, %v2742, %v2738
        %v2744 = vlaneseq
        %v2745 = vshrl.u32 %v2744, 7
        %v2746 = vsub.s32 %v2207, %v2745
        %v2747 = vrot.slane %v2632, %v2746
        %v2748 = vlaneseq
        %v2749 = vshrl.u32 %v2748, 7
        %v2750 = vsub.s32 %v2212, %v2749
        %v2751 = vrot.slane %v2635, %v2750
        %v2752 = vsel %vm2217, %v2751, %v2747
        %v2753 = vlaneseq
        %v2754 = vshrl.u32 %v2753, 7
        %v2755 = vsub.s32 %v2207, %v2754
        %v2756 = vrot.slane %v2638, %v2755
        %v2757 = vlaneseq
        %v2758 = vshrl.u32 %v2757, 7
        %v2759 = vsub.s32 %v2212, %v2758
        %v2760 = vrot.slane %v2641, %v2759
        %v2761 = vsel %vm2217, %v2760, %v2756
        %v2762 = vlaneseq
        %v2763 = vshrl.u32 %v2762, 7
        %v2764 = vsub.s32 %v2207, %v2763
        %v2765 = vrot.slane %v2644, %v2764
        %v2766 = vlaneseq
        %v2767 = vshrl.u32 %v2766, 7
        %v2768 = vsub.s32 %v2212, %v2767
        %v2769 = vrot.slane %v2647, %v2768
        %v2770 = vsel %vm2217, %v2769, %v2765
        %v2771 = vlaneseq
        %v2772 = vshrl.u32 %v2771, 7
        %v2773 = vsub.s32 %v2207, %v2772
        %v2774 = vrot.slane %v2650, %v2773
        %v2775 = vlaneseq
        %v2776 = vshrl.u32 %v2775, 7
        %v2777 = vsub.s32 %v2212, %v2776
        %v2778 = vrot.slane %v2653, %v2777
        %v2779 = vsel %vm2217, %v2778, %v2774
        %v2780 = vlaneseq
        %v2781 = vshrl.u32 %v2780, 7
        %v2782 = vsub.s32 %v2207, %v2781
        %v2783 = vrot.slane %v2656, %v2782
        %v2784 = vlaneseq
        %v2785 = vshrl.u32 %v2784, 7
        %v2786 = vsub.s32 %v2212, %v2785
        %v2787 = vrot.slane %v2659, %v2786
        %v2788 = vsel %vm2217, %v2787, %v2783
        %v2789 = vlaneseq
        %v2790 = vshrl.u32 %v2789, 7
        %v2791 = vsub.s32 %v2207, %v2790
        %v2792 = vrot.slane %v2662, %v2791
        %v2793 = vlaneseq
        %v2794 = vshrl.u32 %v2793, 7
        %v2795 = vsub.s32 %v2212, %v2794
        %v2796 = vrot.slane %v2665, %v2795
        %v2797 = vsel %vm2217, %v2796, %v2792
        %v2798 = vlaneseq
        %v2799 = vshrl.u32 %v2798, 7
        %v2800 = vsub.s32 %v2207, %v2799
        %v2801 = vrot.slane %v2668, %v2800
        %v2802 = vlaneseq
        %v2803 = vshrl.u32 %v2802, 7
        %v2804 = vsub.s32 %v2212, %v2803
        %v2805 = vrot.slane %v2671, %v2804
        %v2806 = vsel %vm2217, %v2805, %v2801
        %v2807 = vlaneseq
        %v2808 = vshrl.u32 %v2807, 7
        %v2809 = vsub.s32 %v2207, %v2808
        %v2810 = vrot.slane %v2674, %v2809
        %v2811 = vlaneseq
        %v2812 = vshrl.u32 %v2811, 7
        %v2813 = vsub.s32 %v2212, %v2812
        %v2814 = vrot.slane %v2677, %v2813
        %v2815 = vsel %vm2217, %v2814, %v2810
        %v2816 = vlaneseq
        %v2817 = vshrl.u32 %v2816, 7
        %v2818 = vsub.s32 %v2207, %v2817
        %v2819 = vrot.slane %v2680, %v2818
        %v2820 = vlaneseq
        %v2821 = vshrl.u32 %v2820, 7
        %v2822 = vsub.s32 %v2212, %v2821
        %v2823 = vrot.slane %v2683, %v2822
        %v2824 = vsel %vm2217, %v2823, %v2819
        %v2825 = vlaneseq
        %v2826 = vshrl.u32 %v2825, 7
        %v2827 = vsub.s32 %v2207, %v2826
        %v2828 = vrot.slane %v2686, %v2827
        %v2829 = vlaneseq
        %v2830 = vshrl.u32 %v2829, 7
        %v2831 = vsub.s32 %v2212, %v2830
        %v2832 = vrot.slane %v2689, %v2831
        %v2833 = vsel %vm2217, %v2832, %v2828
        %v2834 = vsel %vm2354, %v2707, %v2698
        %v2835 = vsel %vm2356, %v2716, %v2834
        %v2836 = vsel %vm2358, %v2725, %v2835
        %v2837 = vsel %vm2360, %v2734, %v2836
        %v2838 = vsel %vm2362, %v2743, %v2837
        %v2839 = vsel %vm2364, %v2752, %v2838
        %v2840 = vsel %vm2366, %v2761, %v2839
        %v2841 = vsel %vm2354, %v2779, %v2770
        %v2842 = vsel %vm2356, %v2788, %v2841
        %v2843 = vsel %vm2358, %v2797, %v2842
        %v2844 = vsel %vm2360, %v2806, %v2843
        %v2845 = vsel %vm2362, %v2815, %v2844
        %v2846 = vsel %vm2364, %v2824, %v2845
        %v2847 = vsel %vm2366, %v2833, %v2846
        %v2850 = vsel %vm2377, %v2840, 0.0
        %2851 = vadd.xlane.f32.xlu0 %v2850
        %v2852 = vpop.xlane.xlu0 %2851
        %v2853 = vsel %vm2377, %v2847, 0.0
        %2854 = vadd.xlane.f32.xlu0 %v2853
        %v2855 = vpop.xlane.xlu0 %2854
        %v2858 = vlaneseq
        %v2859 = vshrl.u32 %v2858, 7
        %v2860 = vsub.s32 0, %v2859
        %v2861 = vrot.slane %v2852, %v2860
        %v2862 = vlaneseq
        %v2863 = vshrl.u32 %v2862, 7
        %v2864 = vsub.s32 1, %v2863
        %v2865 = vrot.slane %v2852, %v2864
        %v2866 = vlaneseq
        %v2867 = vshrl.u32 %v2866, 7
        %v2868 = vsub.s32 2, %v2867
        %v2869 = vrot.slane %v2852, %v2868
        %v2870 = vlaneseq
        %v2871 = vshrl.u32 %v2870, 7
        %v2872 = vsub.s32 3, %v2871
        %v2873 = vrot.slane %v2852, %v2872
        %v2874 = vlaneseq
        %v2875 = vshrl.u32 %v2874, 7
        %v2876 = vsub.s32 4, %v2875
        %v2877 = vrot.slane %v2852, %v2876
        %v2878 = vlaneseq
        %v2879 = vshrl.u32 %v2878, 7
        %v2880 = vsub.s32 5, %v2879
        %v2881 = vrot.slane %v2852, %v2880
        %v2882 = vlaneseq
        %v2883 = vshrl.u32 %v2882, 7
        %v2884 = vsub.s32 6, %v2883
        %v2885 = vrot.slane %v2852, %v2884
        %v2886 = vlaneseq
        %v2887 = vshrl.u32 %v2886, 7
        %v2888 = vsub.s32 7, %v2887
        %v2889 = vrot.slane %v2852, %v2888
        %v2890 = vlaneseq
        %v2891 = vshrl.u32 %v2890, 7
        %v2892 = vsub.s32 0, %v2891
        %v2893 = vrot.slane %v2855, %v2892
        %v2894 = vlaneseq
        %v2895 = vshrl.u32 %v2894, 7
        %v2896 = vsub.s32 1, %v2895
        %v2897 = vrot.slane %v2855, %v2896
        %v2898 = vlaneseq
        %v2899 = vshrl.u32 %v2898, 7
        %v2900 = vsub.s32 2, %v2899
        %v2901 = vrot.slane %v2855, %v2900
        %v2902 = vlaneseq
        %v2903 = vshrl.u32 %v2902, 7
        %v2904 = vsub.s32 3, %v2903
        %v2905 = vrot.slane %v2855, %v2904
        %v2906 = vlaneseq
        %v2907 = vshrl.u32 %v2906, 7
        %v2908 = vsub.s32 4, %v2907
        %v2909 = vrot.slane %v2855, %v2908
        %v2910 = vlaneseq
        %v2911 = vshrl.u32 %v2910, 7
        %v2912 = vsub.s32 5, %v2911
        %v2913 = vrot.slane %v2855, %v2912
        %v2914 = vlaneseq
        %v2915 = vshrl.u32 %v2914, 7
        %v2916 = vsub.s32 6, %v2915
        %v2917 = vrot.slane %v2855, %v2916
        %v2918 = vlaneseq
        %v2919 = vshrl.u32 %v2918, 7
        %v2920 = vsub.s32 7, %v2919
        %v2921 = vrot.slane %v2855, %v2920
        %v2938 = vrcp.pop %v2861
        %v2939 = vmul.f32 %v2499, %v2938
        %v2940 = vmul.f32 %v2501, %v2938
        %v2941 = vrcp.pop %v2865
        %v2942 = vmul.f32 %v2503, %v2941
        %v2943 = vmul.f32 %v2505, %v2941
        %v2944 = vrcp.pop %v2869
        %v2945 = vmul.f32 %v2507, %v2944
        %v2946 = vmul.f32 %v2509, %v2944
        %v2947 = vrcp.pop %v2873
        %v2948 = vmul.f32 %v2511, %v2947
        %v2949 = vmul.f32 %v2513, %v2947
        %v2950 = vrcp.pop %v2877
        %v2951 = vmul.f32 %v2515, %v2950
        %v2952 = vmul.f32 %v2517, %v2950
        %v2953 = vrcp.pop %v2881
        %v2954 = vmul.f32 %v2519, %v2953
        %v2955 = vmul.f32 %v2521, %v2953
        %v2956 = vrcp.pop %v2885
        %v2957 = vmul.f32 %v2523, %v2956
        %v2958 = vmul.f32 %v2525, %v2956
        %v2959 = vrcp.pop %v2889
        %v2960 = vmul.f32 %v2527, %v2959
        %v2961 = vmul.f32 %v2529, %v2959
        %v2962 = vrcp.pop %v2893
        %v2963 = vmul.f32 %v2531, %v2962
        %v2964 = vmul.f32 %v2533, %v2962
        %v2965 = vrcp.pop %v2897
        %v2966 = vmul.f32 %v2535, %v2965
        %v2967 = vmul.f32 %v2537, %v2965
        %v2968 = vrcp.pop %v2901
        %v2969 = vmul.f32 %v2539, %v2968
        %v2970 = vmul.f32 %v2541, %v2968
        %v2971 = vrcp.pop %v2905
        %v2972 = vmul.f32 %v2543, %v2971
        %v2973 = vmul.f32 %v2545, %v2971
        %v2974 = vrcp.pop %v2909
        %v2975 = vmul.f32 %v2547, %v2974
        %v2976 = vmul.f32 %v2549, %v2974
        %v2977 = vrcp.pop %v2913
        %v2978 = vmul.f32 %v2551, %v2977
        %v2979 = vmul.f32 %v2553, %v2977
        %v2980 = vrcp.pop %v2917
        %v2981 = vmul.f32 %v2555, %v2980
        %v2982 = vmul.f32 %v2557, %v2980
        %v2983 = vrcp.pop %v2921
        %v2984 = vmul.f32 %v2559, %v2983
        %v2985 = vmul.f32 %v2561, %v2983
        %v2986 = vld [vmem:[%s445] sm:$0xff]
        %v2987 = vld [vmem:[%s445 + $0x8] sm:$0xff]
        %3020 = vset.pattern.permute.xlu0 0
        %3021 = vperm.xlu0 %3020, %v2939
        %v3022 = vpop.permute.xlu0 %3021
        %3023 = vset.pattern.permute.xlu0 0
        %3024 = vperm.xlu0 %3023, %v2940
        %v3025 = vpop.permute.xlu0 %3024
        %3026 = vset.pattern.permute.xlu0 0
        %3027 = vperm.xlu0 %3026, %v2942
        %v3028 = vpop.permute.xlu0 %3027
        %3029 = vset.pattern.permute.xlu0 0
        %3030 = vperm.xlu0 %3029, %v2943
        %v3031 = vpop.permute.xlu0 %3030
        %3032 = vset.pattern.permute.xlu0 0
        %3033 = vperm.xlu0 %3032, %v2945
        %v3034 = vpop.permute.xlu0 %3033
        %3035 = vset.pattern.permute.xlu0 0
        %3036 = vperm.xlu0 %3035, %v2946
        %v3037 = vpop.permute.xlu0 %3036
        %3038 = vset.pattern.permute.xlu0 0
        %3039 = vperm.xlu0 %3038, %v2948
        %v3040 = vpop.permute.xlu0 %3039
        %3041 = vset.pattern.permute.xlu0 0
        %3042 = vperm.xlu0 %3041, %v2949
        %v3043 = vpop.permute.xlu0 %3042
        %3044 = vset.pattern.permute.xlu0 0
        %3045 = vperm.xlu0 %3044, %v2951
        %v3046 = vpop.permute.xlu0 %3045
        %3047 = vset.pattern.permute.xlu0 0
        %3048 = vperm.xlu0 %3047, %v2952
        %v3049 = vpop.permute.xlu0 %3048
        %3050 = vset.pattern.permute.xlu0 0
        %3051 = vperm.xlu0 %3050, %v2954
        %v3052 = vpop.permute.xlu0 %3051
        %3053 = vset.pattern.permute.xlu0 0
        %3054 = vperm.xlu0 %3053, %v2955
        %v3055 = vpop.permute.xlu0 %3054
        %3056 = vset.pattern.permute.xlu0 0
        %3057 = vperm.xlu0 %3056, %v2957
        %v3058 = vpop.permute.xlu0 %3057
        %3059 = vset.pattern.permute.xlu0 0
        %3060 = vperm.xlu0 %3059, %v2958
        %v3061 = vpop.permute.xlu0 %3060
        %3062 = vset.pattern.permute.xlu0 0
        %3063 = vperm.xlu0 %3062, %v2960
        %v3064 = vpop.permute.xlu0 %3063
        %3065 = vset.pattern.permute.xlu0 0
        %3066 = vperm.xlu0 %3065, %v2961
        %v3067 = vpop.permute.xlu0 %3066
        %3068 = vset.pattern.permute.xlu0 0
        %3069 = vperm.xlu0 %3068, %v2963
        %v3070 = vpop.permute.xlu0 %3069
        %3071 = vset.pattern.permute.xlu0 0
        %3072 = vperm.xlu0 %3071, %v2964
        %v3073 = vpop.permute.xlu0 %3072
        %3074 = vset.pattern.permute.xlu0 0
        %3075 = vperm.xlu0 %3074, %v2966
        %v3076 = vpop.permute.xlu0 %3075
        %3077 = vset.pattern.permute.xlu0 0
        %3078 = vperm.xlu0 %3077, %v2967
        %v3079 = vpop.permute.xlu0 %3078
        %3080 = vset.pattern.permute.xlu0 0
        %3081 = vperm.xlu0 %3080, %v2969
        %v3082 = vpop.permute.xlu0 %3081
        %3083 = vset.pattern.permute.xlu0 0
        %3084 = vperm.xlu0 %3083, %v2970
        %v3085 = vpop.permute.xlu0 %3084
        %3086 = vset.pattern.permute.xlu0 0
        %3087 = vperm.xlu0 %3086, %v2972
        %v3088 = vpop.permute.xlu0 %3087
        %3089 = vset.pattern.permute.xlu0 0
        %3090 = vperm.xlu0 %3089, %v2973
        %v3091 = vpop.permute.xlu0 %3090
        %3092 = vset.pattern.permute.xlu0 0
        %3093 = vperm.xlu0 %3092, %v2975
        %v3094 = vpop.permute.xlu0 %3093
        %3095 = vset.pattern.permute.xlu0 0
        %3096 = vperm.xlu0 %3095, %v2976
        %v3097 = vpop.permute.xlu0 %3096
        %3098 = vset.pattern.permute.xlu0 0
        %3099 = vperm.xlu0 %3098, %v2978
        %v3100 = vpop.permute.xlu0 %3099
        %3101 = vset.pattern.permute.xlu0 0
        %3102 = vperm.xlu0 %3101, %v2979
        %v3103 = vpop.permute.xlu0 %3102
        %3104 = vset.pattern.permute.xlu0 0
        %3105 = vperm.xlu0 %3104, %v2981
        %v3106 = vpop.permute.xlu0 %3105
        %3107 = vset.pattern.permute.xlu0 0
        %3108 = vperm.xlu0 %3107, %v2982
        %v3109 = vpop.permute.xlu0 %3108
        %3110 = vset.pattern.permute.xlu0 0
        %3111 = vperm.xlu0 %3110, %v2984
        %v3112 = vpop.permute.xlu0 %3111
        %3113 = vset.pattern.permute.xlu0 0
        %3114 = vperm.xlu0 %3113, %v2985
        %v3115 = vpop.permute.xlu0 %3114
        %v3116 = vlaneseq
        %v3117 = vshrl.u32 %v3116, 7
        %v3118 = vsub.s32 %v2207, %v3117
        %v3119 = vrot.slane %v3022, %v3118
        %v3120 = vlaneseq
        %v3121 = vshrl.u32 %v3120, 7
        %v3122 = vsub.s32 %v2212, %v3121
        %v3123 = vrot.slane %v3025, %v3122
        %v3124 = vsel %vm2217, %v3123, %v3119
        %v3125 = vlaneseq
        %v3126 = vshrl.u32 %v3125, 7
        %v3127 = vsub.s32 %v2207, %v3126
        %v3128 = vrot.slane %v3028, %v3127
        %v3129 = vlaneseq
        %v3130 = vshrl.u32 %v3129, 7
        %v3131 = vsub.s32 %v2212, %v3130
        %v3132 = vrot.slane %v3031, %v3131
        %v3133 = vsel %vm2217, %v3132, %v3128
        %v3134 = vlaneseq
        %v3135 = vshrl.u32 %v3134, 7
        %v3136 = vsub.s32 %v2207, %v3135
        %v3137 = vrot.slane %v3034, %v3136
        %v3138 = vlaneseq
        %v3139 = vshrl.u32 %v3138, 7
        %v3140 = vsub.s32 %v2212, %v3139
        %v3141 = vrot.slane %v3037, %v3140
        %v3142 = vsel %vm2217, %v3141, %v3137
        %v3143 = vlaneseq
        %v3144 = vshrl.u32 %v3143, 7
        %v3145 = vsub.s32 %v2207, %v3144
        %v3146 = vrot.slane %v3040, %v3145
        %v3147 = vlaneseq
        %v3148 = vshrl.u32 %v3147, 7
        %v3149 = vsub.s32 %v2212, %v3148
        %v3150 = vrot.slane %v3043, %v3149
        %v3151 = vsel %vm2217, %v3150, %v3146
        %v3152 = vlaneseq
        %v3153 = vshrl.u32 %v3152, 7
        %v3154 = vsub.s32 %v2207, %v3153
        %v3155 = vrot.slane %v3046, %v3154
        %v3156 = vlaneseq
        %v3157 = vshrl.u32 %v3156, 7
        %v3158 = vsub.s32 %v2212, %v3157
        %v3159 = vrot.slane %v3049, %v3158
        %v3160 = vsel %vm2217, %v3159, %v3155
        %v3161 = vlaneseq
        %v3162 = vshrl.u32 %v3161, 7
        %v3163 = vsub.s32 %v2207, %v3162
        %v3164 = vrot.slane %v3052, %v3163
        %v3165 = vlaneseq
        %v3166 = vshrl.u32 %v3165, 7
        %v3167 = vsub.s32 %v2212, %v3166
        %v3168 = vrot.slane %v3055, %v3167
        %v3169 = vsel %vm2217, %v3168, %v3164
        %v3170 = vlaneseq
        %v3171 = vshrl.u32 %v3170, 7
        %v3172 = vsub.s32 %v2207, %v3171
        %v3173 = vrot.slane %v3058, %v3172
        %v3174 = vlaneseq
        %v3175 = vshrl.u32 %v3174, 7
        %v3176 = vsub.s32 %v2212, %v3175
        %v3177 = vrot.slane %v3061, %v3176
        %v3178 = vsel %vm2217, %v3177, %v3173
        %v3179 = vlaneseq
        %v3180 = vshrl.u32 %v3179, 7
        %v3181 = vsub.s32 %v2207, %v3180
        %v3182 = vrot.slane %v3064, %v3181
        %v3183 = vlaneseq
        %v3184 = vshrl.u32 %v3183, 7
        %v3185 = vsub.s32 %v2212, %v3184
        %v3186 = vrot.slane %v3067, %v3185
        %v3187 = vsel %vm2217, %v3186, %v3182
        %v3188 = vlaneseq
        %v3189 = vshrl.u32 %v3188, 7
        %v3190 = vsub.s32 %v2207, %v3189
        %v3191 = vrot.slane %v3070, %v3190
        %v3192 = vlaneseq
        %v3193 = vshrl.u32 %v3192, 7
        %v3194 = vsub.s32 %v2212, %v3193
        %v3195 = vrot.slane %v3073, %v3194
        %v3196 = vsel %vm2217, %v3195, %v3191
        %v3197 = vlaneseq
        %v3198 = vshrl.u32 %v3197, 7
        %v3199 = vsub.s32 %v2207, %v3198
        %v3200 = vrot.slane %v3076, %v3199
        %v3201 = vlaneseq
        %v3202 = vshrl.u32 %v3201, 7
        %v3203 = vsub.s32 %v2212, %v3202
        %v3204 = vrot.slane %v3079, %v3203
        %v3205 = vsel %vm2217, %v3204, %v3200
        %v3206 = vlaneseq
        %v3207 = vshrl.u32 %v3206, 7
        %v3208 = vsub.s32 %v2207, %v3207
        %v3209 = vrot.slane %v3082, %v3208
        %v3210 = vlaneseq
        %v3211 = vshrl.u32 %v3210, 7
        %v3212 = vsub.s32 %v2212, %v3211
        %v3213 = vrot.slane %v3085, %v3212
        %v3214 = vsel %vm2217, %v3213, %v3209
        %v3215 = vlaneseq
        %v3216 = vshrl.u32 %v3215, 7
        %v3217 = vsub.s32 %v2207, %v3216
        %v3218 = vrot.slane %v3088, %v3217
        %v3219 = vlaneseq
        %v3220 = vshrl.u32 %v3219, 7
        %v3221 = vsub.s32 %v2212, %v3220
        %v3222 = vrot.slane %v3091, %v3221
        %v3223 = vsel %vm2217, %v3222, %v3218
        %v3224 = vlaneseq
        %v3225 = vshrl.u32 %v3224, 7
        %v3226 = vsub.s32 %v2207, %v3225
        %v3227 = vrot.slane %v3094, %v3226
        %v3228 = vlaneseq
        %v3229 = vshrl.u32 %v3228, 7
        %v3230 = vsub.s32 %v2212, %v3229
        %v3231 = vrot.slane %v3097, %v3230
        %v3232 = vsel %vm2217, %v3231, %v3227
        %v3233 = vlaneseq
        %v3234 = vshrl.u32 %v3233, 7
        %v3235 = vsub.s32 %v2207, %v3234
        %v3236 = vrot.slane %v3100, %v3235
        %v3237 = vlaneseq
        %v3238 = vshrl.u32 %v3237, 7
        %v3239 = vsub.s32 %v2212, %v3238
        %v3240 = vrot.slane %v3103, %v3239
        %v3241 = vsel %vm2217, %v3240, %v3236
        %v3242 = vlaneseq
        %v3243 = vshrl.u32 %v3242, 7
        %v3244 = vsub.s32 %v2207, %v3243
        %v3245 = vrot.slane %v3106, %v3244
        %v3246 = vlaneseq
        %v3247 = vshrl.u32 %v3246, 7
        %v3248 = vsub.s32 %v2212, %v3247
        %v3249 = vrot.slane %v3109, %v3248
        %v3250 = vsel %vm2217, %v3249, %v3245
        %v3251 = vlaneseq
        %v3252 = vshrl.u32 %v3251, 7
        %v3253 = vsub.s32 %v2207, %v3252
        %v3254 = vrot.slane %v3112, %v3253
        %v3255 = vlaneseq
        %v3256 = vshrl.u32 %v3255, 7
        %v3257 = vsub.s32 %v2212, %v3256
        %v3258 = vrot.slane %v3115, %v3257
        %v3259 = vsel %vm2217, %v3258, %v3254
        %v3260 = vsel %vm2354, %v3133, %v3124
        %v3261 = vsel %vm2356, %v3142, %v3260
        %v3262 = vsel %vm2358, %v3151, %v3261
        %v3263 = vsel %vm2360, %v3160, %v3262
        %v3264 = vsel %vm2362, %v3169, %v3263
        %v3265 = vsel %vm2364, %v3178, %v3264
        %v3266 = vsel %vm2366, %v3187, %v3265
        %v3267 = vsel %vm2354, %v3205, %v3196
        %v3268 = vsel %vm2356, %v3214, %v3267
        %v3269 = vsel %vm2358, %v3223, %v3268
        %v3270 = vsel %vm2360, %v3232, %v3269
        %v3271 = vsel %vm2362, %v3241, %v3270
        %v3272 = vsel %vm2364, %v3250, %v3271
        %v3273 = vsel %vm2366, %v3259, %v3272
        %v3274 = vsel %vm2377, %v3266, 0
        %v3276 = vsel %vm2377, %v3273, 0
        %3278 = vmatprep.subr.mxu0 0.0
        %v3279 = vand.u32 %v2986, 4294901760
        %3280 = vmatpush1.msra.mxu0 %v3279
        %3281 = vmatprep.subr.mxu0 0.0
        %v3282 = vand.u32 %v2987, 4294901760
        %3283 = vmatpush1.msra.mxu0 %v3282
        %3284 = vmatprep.subr.mxu0 0.0
        %3285 = vmatpush1.msra.mxu0 0.0
        %3286 = vmatprep.subr.mxu0 0.0
        %3287 = vmatpush1.msra.mxu0 0.0
        %3288 = vmatprep.subr.mxu0 0.0
        %3289 = vmatpush1.msra.mxu0 0.0
        %3290 = vmatprep.subr.mxu0 0.0
        %3291 = vmatpush1.msra.mxu0 0.0
        %3292 = vmatprep.subr.mxu0 0.0
        %3293 = vmatpush1.msra.mxu0 0.0
        %3294 = vmatprep.subr.mxu0 0.0
        %3295 = vmatpush1.msra.mxu0 0.0
        %3296 = vmatprep.subr.mxu0 0.0
        %3297 = vmatpush1.msra.mxu0 0.0
        %3298 = vmatprep.subr.mxu0 0.0
        %3299 = vmatpush1.msra.mxu0 0.0
        %3300 = vmatprep.subr.mxu0 0.0
        %3301 = vmatpush1.msra.mxu0 0.0
        %3302 = vmatprep.subr.mxu0 0.0
        %3303 = vmatpush1.msra.mxu0 0.0
        %3304 = vmatprep.subr.mxu0 0.0
        %3305 = vmatpush1.msra.mxu0 0.0
        %3306 = vmatprep.subr.mxu0 0.0
        %3307 = vmatpush1.msra.mxu0 0.0
        %3308 = vmatprep.subr.mxu0 0.0
        %3309 = vmatpush1.msra.mxu0 0.0
        %3310 = vmatprep.subr.mxu0 0.0
        %3311 = vmatpush1.msra.mxu0 0.0
        %3312 = vmatprep.subr.mxu0 0.0
        %3313 = vmatpush1.msra.mxu0 0.0
        %3314 = vmatprep.subr.mxu0 0.0
        %3315 = vmatpush1.msra.mxu0 0.0
        %3316 = vmatprep.subr.mxu0 0.0
        %3317 = vmatpush1.msra.mxu0 0.0
        %3318 = vmatprep.subr.mxu0 0.0
        %3319 = vmatpush1.msra.mxu0 0.0
        %3320 = vmatprep.subr.mxu0 0.0
        %3321 = vmatpush1.msra.mxu0 0.0
        %3322 = vmatprep.subr.mxu0 0.0
        %3323 = vmatpush1.msra.mxu0 0.0
        %3324 = vmatprep.subr.mxu0 0.0
        %3325 = vmatpush1.msra.mxu0 0.0
        %3326 = vmatprep.subr.mxu0 0.0
        %3327 = vmatpush1.msra.mxu0 0.0
        %3328 = vmatprep.subr.mxu0 0.0
        %3329 = vmatpush1.msra.mxu0 0.0
        %3330 = vmatprep.subr.mxu0 0.0
        %3331 = vmatpush1.msra.mxu0 0.0
        %3332 = vmatprep.subr.mxu0 0.0
        %3333 = vmatpush1.msra.mxu0 0.0
        %3334 = vmatprep.subr.mxu0 0.0
        %3335 = vmatpush1.msra.mxu0 0.0
        %3336 = vmatprep.subr.mxu0 0.0
        %3337 = vmatpush1.msra.mxu0 0.0
        %3338 = vmatprep.subr.mxu0 0.0
        %3339 = vmatpush1.msra.mxu0 0.0
        %3340 = vmatprep.subr.mxu0 0.0
        %3341 = vmatpush1.msra.mxu0 0.0
        %3342 = vmatprep.subr.mxu0 0.0
        %3343 = vmatpush1.msra.mxu0 0.0
        %3344 = vmatprep.mubr.f32.mxu0 0.0
        %v3345 = vand.u32 %v3274, 4294901760
        %v3346 = vsub.f32 %v3274, %v3345
        %v3347 = vand.u32 %v3346, 4294901760
        %v3348 = vsub.f32 %v3346, %v3347
        %v3349 = vand.u32 %v3348, 4294901760
        %3350 = vmatmul.mubr.f32.gmra.mrb[0].mxu0 %v3349
        %v3351 = vpop.f32.mrb[0].mxu0
        %v3352 = vadd.f32 0.0, %v3351
        %v3353 = vpop.f32.mrb[0].mxu0
        %3354 = vmatprep.mubr.f32.mxu0 0.0
        %v3355 = vand.u32 %v3276, 4294901760
        %v3356 = vsub.f32 %v3276, %v3355
        %v3357 = vand.u32 %v3356, 4294901760
        %v3358 = vsub.f32 %v3356, %v3357
        %v3359 = vand.u32 %v3358, 4294901760
        %3360 = vmatmul.mubr.f32.gmra.mrb[0].mxu0 %v3359
        %v3361 = vpop.f32.mrb[0].mxu0
        %v3362 = vadd.f32 0.0, %v3361
        %v3363 = vpop.f32.mrb[0].mxu0
        %3364 = vdwg.mxu0
        %3365 = vmatprep.subr.mxu0 0.0
        %v3366 = vand.u32 %v2986, 4294901760
        %v3367 = vsub.f32 %v2986, %v3366
        %v3368 = vand.u32 %v3367, 4294901760
        %v3369 = vsub.f32 %v3367, %v3368
        %v3370 = vand.u32 %v3369, 4294901760
        %3371 = vmatpush1.msra.mxu0 %v3370
        %3372 = vmatprep.subr.mxu0 0.0
        %v3373 = vand.u32 %v2987, 4294901760
        %v3374 = vsub.f32 %v2987, %v3373
        %v3375 = vand.u32 %v3374, 4294901760
        %v3376 = vsub.f32 %v3374, %v3375
        %v3377 = vand.u32 %v3376, 4294901760
        %3378 = vmatpush1.msra.mxu0 %v3377
        %3379 = vmatprep.subr.mxu0 0.0
        %3380 = vmatpush1.msra.mxu0 0.0
        %3381 = vmatprep.subr.mxu0 0.0
        %3382 = vmatpush1.msra.mxu0 0.0
        %3383 = vmatprep.subr.mxu0 0.0
        %3384 = vmatpush1.msra.mxu0 0.0
        %3385 = vmatprep.subr.mxu0 0.0
        %3386 = vmatpush1.msra.mxu0 0.0
        %3387 = vmatprep.subr.mxu0 0.0
        %3388 = vmatpush1.msra.mxu0 0.0
        %3389 = vmatprep.subr.mxu0 0.0
        %3390 = vmatpush1.msra.mxu0 0.0
        %3391 = vmatprep.subr.mxu0 0.0
        %3392 = vmatpush1.msra.mxu0 0.0
        %3393 = vmatprep.subr.mxu0 0.0
        %3394 = vmatpush1.msra.mxu0 0.0
        %3395 = vmatprep.subr.mxu0 0.0
        %3396 = vmatpush1.msra.mxu0 0.0
        %3397 = vmatprep.subr.mxu0 0.0
        %3398 = vmatpush1.msra.mxu0 0.0
        %3399 = vmatprep.subr.mxu0 0.0
        %3400 = vmatpush1.msra.mxu0 0.0
        %3401 = vmatprep.subr.mxu0 0.0
        %3402 = vmatpush1.msra.mxu0 0.0
        %3403 = vmatprep.subr.mxu0 0.0
        %3404 = vmatpush1.msra.mxu0 0.0
        %3405 = vmatprep.subr.mxu0 0.0
        %3406 = vmatpush1.msra.mxu0 0.0
        %3407 = vmatprep.subr.mxu0 0.0
        %3408 = vmatpush1.msra.mxu0 0.0
        %3409 = vmatprep.subr.mxu0 0.0
        %3410 = vmatpush1.msra.mxu0 0.0
        %3411 = vmatprep.subr.mxu0 0.0
        %3412 = vmatpush1.msra.mxu0 0.0
        %3413 = vmatprep.subr.mxu0 0.0
        %3414 = vmatpush1.msra.mxu0 0.0
        %3415 = vmatprep.subr.mxu0 0.0
        %3416 = vmatpush1.msra.mxu0 0.0
        %3417 = vmatprep.subr.mxu0 0.0
        %3418 = vmatpush1.msra.mxu0 0.0
        %3419 = vmatprep.subr.mxu0 0.0
        %3420 = vmatpush1.msra.mxu0 0.0
        %3421 = vmatprep.subr.mxu0 0.0
        %3422 = vmatpush1.msra.mxu0 0.0
        %3423 = vmatprep.subr.mxu0 0.0
        %3424 = vmatpush1.msra.mxu0 0.0
        %3425 = vmatprep.subr.mxu0 0.0
        %3426 = vmatpush1.msra.mxu0 0.0
        %3427 = vmatprep.subr.mxu0 0.0
        %3428 = vmatpush1.msra.mxu0 0.0
        %3429 = vmatprep.subr.mxu0 0.0
        %3430 = vmatpush1.msra.mxu0 0.0
        %3431 = vmatprep.subr.mxu0 0.0
        %3432 = vmatpush1.msra.mxu0 0.0
        %3433 = vmatprep.subr.mxu0 0.0
        %3434 = vmatpush1.msra.mxu0 0.0
        %3435 = vmatprep.subr.mxu0 0.0
        %3436 = vmatpush1.msra.mxu0 0.0
        %3437 = vmatprep.subr.mxu0 0.0
        %3438 = vmatpush1.msra.mxu0 0.0
        %3439 = vmatprep.mubr.f32.mxu0 0.0
        %v3440 = vand.u32 %v3274, 4294901760
        %3441 = vmatmul.mubr.f32.gmra.mrb[0].mxu0 %v3440
        %v3442 = vpop.f32.mrb[0].mxu0
        %v3443 = vadd.f32 %v3352, %v3442
        %v3444 = vpop.f32.mrb[0].mxu0
        %3445 = vmatprep.mubr.f32.mxu0 0.0
        %v3446 = vand.u32 %v3276, 4294901760
        %3447 = vmatmul.mubr.f32.gmra.mrb[0].mxu0 %v3446
        %v3448 = vpop.f32.mrb[0].mxu0
        %v3449 = vadd.f32 %v3362, %v3448
        %v3450 = vpop.f32.mrb[0].mxu0
        %3451 = vdwg.mxu0
        %3452 = vmatprep.subr.mxu0 0.0
        %v3453 = vand.u32 %v2986, 4294901760
        %v3454 = vsub.f32 %v2986, %v3453
        %3455 = vmatpush1.msra.mxu0 %v3454
        %3456 = vmatprep.subr.mxu0 0.0
        %v3457 = vand.u32 %v2987, 4294901760
        %v3458 = vsub.f32 %v2987, %v3457
        %3459 = vmatpush1.msra.mxu0 %v3458
        %3460 = vmatprep.subr.mxu0 0.0
        %3461 = vmatpush1.msra.mxu0 0.0
        %3462 = vmatprep.subr.mxu0 0.0
        %3463 = vmatpush1.msra.mxu0 0.0
        %3464 = vmatprep.subr.mxu0 0.0
        %3465 = vmatpush1.msra.mxu0 0.0
        %3466 = vmatprep.subr.mxu0 0.0
        %3467 = vmatpush1.msra.mxu0 0.0
        %3468 = vmatprep.subr.mxu0 0.0
        %3469 = vmatpush1.msra.mxu0 0.0
        %3470 = vmatprep.subr.mxu0 0.0
        %3471 = vmatpush1.msra.mxu0 0.0
        %3472 = vmatprep.subr.mxu0 0.0
        %3473 = vmatpush1.msra.mxu0 0.0
        %3474 = vmatprep.subr.mxu0 0.0
        %3475 = vmatpush1.msra.mxu0 0.0
        %3476 = vmatprep.subr.mxu0 0.0
        %3477 = vmatpush1.msra.mxu0 0.0
        %3478 = vmatprep.subr.mxu0 0.0
        %3479 = vmatpush1.msra.mxu0 0.0
        %3480 = vmatprep.subr.mxu0 0.0
        %3481 = vmatpush1.msra.mxu0 0.0
        %3482 = vmatprep.subr.mxu0 0.0
        %3483 = vmatpush1.msra.mxu0 0.0
        %3484 = vmatprep.subr.mxu0 0.0
        %3485 = vmatpush1.msra.mxu0 0.0
        %3486 = vmatprep.subr.mxu0 0.0
        %3487 = vmatpush1.msra.mxu0 0.0
        %3488 = vmatprep.subr.mxu0 0.0
        %3489 = vmatpush1.msra.mxu0 0.0
        %3490 = vmatprep.subr.mxu0 0.0
        %3491 = vmatpush1.msra.mxu0 0.0
        %3492 = vmatprep.subr.mxu0 0.0
        %3493 = vmatpush1.msra.mxu0 0.0
        %3494 = vmatprep.subr.mxu0 0.0
        %3495 = vmatpush1.msra.mxu0 0.0
        %3496 = vmatprep.subr.mxu0 0.0
        %3497 = vmatpush1.msra.mxu0 0.0
        %3498 = vmatprep.subr.mxu0 0.0
        %3499 = vmatpush1.msra.mxu0 0.0
        %3500 = vmatprep.subr.mxu0 0.0
        %3501 = vmatpush1.msra.mxu0 0.0
        %3502 = vmatprep.subr.mxu0 0.0
        %3503 = vmatpush1.msra.mxu0 0.0
        %3504 = vmatprep.subr.mxu0 0.0
        %3505 = vmatpush1.msra.mxu0 0.0
        %3506 = vmatprep.subr.mxu0 0.0
        %3507 = vmatpush1.msra.mxu0 0.0
        %3508 = vmatprep.subr.mxu0 0.0
        %3509 = vmatpush1.msra.mxu0 0.0
        %3510 = vmatprep.subr.mxu0 0.0
        %3511 = vmatpush1.msra.mxu0 0.0
        %3512 = vmatprep.subr.mxu0 0.0
        %3513 = vmatpush1.msra.mxu0 0.0
        %3514 = vmatprep.subr.mxu0 0.0
        %3515 = vmatpush1.msra.mxu0 0.0
        %3516 = vmatprep.subr.mxu0 0.0
        %3517 = vmatpush1.msra.mxu0 0.0
        %3518 = vmatprep.subr.mxu0 0.0
        %3519 = vmatpush1.msra.mxu0 0.0
        %3520 = vmatprep.mubr.f32.mxu0 0.0
        %v3521 = vand.u32 %v3274, 4294901760
        %v3522 = vsub.f32 %v3274, %v3521
        %3523 = vmatmul.mubr.f32.gmra.mrb[0].mxu0 %v3522
        %v3524 = vpop.f32.mrb[0].mxu0
        %v3525 = vadd.f32 %v3443, %v3524
        %v3526 = vpop.f32.mrb[0].mxu0
        %3527 = vmatprep.mubr.f32.mxu0 0.0
        %v3528 = vand.u32 %v3276, 4294901760
        %v3529 = vsub.f32 %v3276, %v3528
        %3530 = vmatmul.mubr.f32.gmra.mrb[0].mxu0 %v3529
        %v3531 = vpop.f32.mrb[0].mxu0
        %v3532 = vadd.f32 %v3449, %v3531
        %v3533 = vpop.f32.mrb[0].mxu0
        %3534 = vdwg.mxu0
        %3535 = vmatprep.subr.mxu0 0.0
        %v3536 = vand.u32 %v2986, 4294901760
        %3537 = vmatpush1.msra.mxu0 %v3536
        %3538 = vmatprep.subr.mxu0 0.0
        %v3539 = vand.u32 %v2987, 4294901760
        %3540 = vmatpush1.msra.mxu0 %v3539
        %3541 = vmatprep.subr.mxu0 0.0
        %3542 = vmatpush1.msra.mxu0 0.0
        %3543 = vmatprep.subr.mxu0 0.0
        %3544 = vmatpush1.msra.mxu0 0.0
        %3545 = vmatprep.subr.mxu0 0.0
        %3546 = vmatpush1.msra.mxu0 0.0
        %3547 = vmatprep.subr.mxu0 0.0
        %3548 = vmatpush1.msra.mxu0 0.0
        %3549 = vmatprep.subr.mxu0 0.0
        %3550 = vmatpush1.msra.mxu0 0.0
        %3551 = vmatprep.subr.mxu0 0.0
        %3552 = vmatpush1.msra.mxu0 0.0
        %3553 = vmatprep.subr.mxu0 0.0
        %3554 = vmatpush1.msra.mxu0 0.0
        %3555 = vmatprep.subr.mxu0 0.0
        %3556 = vmatpush1.msra.mxu0 0.0
        %3557 = vmatprep.subr.mxu0 0.0
        %3558 = vmatpush1.msra.mxu0 0.0
        %3559 = vmatprep.subr.mxu0 0.0
        %3560 = vmatpush1.msra.mxu0 0.0
        %3561 = vmatprep.subr.mxu0 0.0
        %3562 = vmatpush1.msra.mxu0 0.0
        %3563 = vmatprep.subr.mxu0 0.0
        %3564 = vmatpush1.msra.mxu0 0.0
        %3565 = vmatprep.subr.mxu0 0.0
        %3566 = vmatpush1.msra.mxu0 0.0
        %3567 = vmatprep.subr.mxu0 0.0
        %3568 = vmatpush1.msra.mxu0 0.0
        %3569 = vmatprep.subr.mxu0 0.0
        %3570 = vmatpush1.msra.mxu0 0.0
        %3571 = vmatprep.subr.mxu0 0.0
        %3572 = vmatpush1.msra.mxu0 0.0
        %3573 = vmatprep.subr.mxu0 0.0
        %3574 = vmatpush1.msra.mxu0 0.0
        %3575 = vmatprep.subr.mxu0 0.0
        %3576 = vmatpush1.msra.mxu0 0.0
        %3577 = vmatprep.subr.mxu0 0.0
        %3578 = vmatpush1.msra.mxu0 0.0
        %3579 = vmatprep.subr.mxu0 0.0
        %3580 = vmatpush1.msra.mxu0 0.0
        %3581 = vmatprep.subr.mxu0 0.0
        %3582 = vmatpush1.msra.mxu0 0.0
        %3583 = vmatprep.subr.mxu0 0.0
        %3584 = vmatpush1.msra.mxu0 0.0
        %3585 = vmatprep.subr.mxu0 0.0
        %3586 = vmatpush1.msra.mxu0 0.0
        %3587 = vmatprep.subr.mxu0 0.0
        %3588 = vmatpush1.msra.mxu0 0.0
        %3589 = vmatprep.subr.mxu0 0.0
        %3590 = vmatpush1.msra.mxu0 0.0
        %3591 = vmatprep.subr.mxu0 0.0
        %3592 = vmatpush1.msra.mxu0 0.0
        %3593 = vmatprep.subr.mxu0 0.0
        %3594 = vmatpush1.msra.mxu0 0.0
        %3595 = vmatprep.subr.mxu0 0.0
        %3596 = vmatpush1.msra.mxu0 0.0
        %3597 = vmatprep.subr.mxu0 0.0
        %3598 = vmatpush1.msra.mxu0 0.0
        %3599 = vmatprep.subr.mxu0 0.0
        %3600 = vmatpush1.msra.mxu0 0.0
        %3601 = vmatprep.mubr.f32.mxu0 0.0
        %v3602 = vand.u32 %v3274, 4294901760
        %v3603 = vsub.f32 %v3274, %v3602
        %v3604 = vand.u32 %v3603, 4294901760
        %3605 = vmatmul.mubr.f32.gmra.mrb[0].mxu0 %v3604
        %v3606 = vpop.f32.mrb[0].mxu0
        %v3607 = vadd.f32 %v3525, %v3606
        %v3608 = vpop.f32.mrb[0].mxu0
        %3609 = vmatprep.mubr.f32.mxu0 0.0
        %v3610 = vand.u32 %v3276, 4294901760
        %v3611 = vsub.f32 %v3276, %v3610
        %v3612 = vand.u32 %v3611, 4294901760
        %3613 = vmatmul.mubr.f32.gmra.mrb[0].mxu0 %v3612
        %v3614 = vpop.f32.mrb[0].mxu0
        %v3615 = vadd.f32 %v3532, %v3614
        %v3616 = vpop.f32.mrb[0].mxu0
        %3617 = vdwg.mxu0
        %3618 = vmatprep.subr.mxu0 0.0
        %v3619 = vand.u32 %v2986, 4294901760
        %v3620 = vsub.f32 %v2986, %v3619
        %v3621 = vand.u32 %v3620, 4294901760
        %3622 = vmatpush1.msra.mxu0 %v3621
        %3623 = vmatprep.subr.mxu0 0.0
        %v3624 = vand.u32 %v2987, 4294901760
        %v3625 = vsub.f32 %v2987, %v3624
        %v3626 = vand.u32 %v3625, 4294901760
        %3627 = vmatpush1.msra.mxu0 %v3626
        %3628 = vmatprep.subr.mxu0 0.0
        %3629 = vmatpush1.msra.mxu0 0.0
        %3630 = vmatprep.subr.mxu0 0.0
        %3631 = vmatpush1.msra.mxu0 0.0
        %3632 = vmatprep.subr.mxu0 0.0
        %3633 = vmatpush1.msra.mxu0 0.0
        %3634 = vmatprep.subr.mxu0 0.0
        %3635 = vmatpush1.msra.mxu0 0.0
        %3636 = vmatprep.subr.mxu0 0.0
        %3637 = vmatpush1.msra.mxu0 0.0
        %3638 = vmatprep.subr.mxu0 0.0
        %3639 = vmatpush1.msra.mxu0 0.0
        %3640 = vmatprep.subr.mxu0 0.0
        %3641 = vmatpush1.msra.mxu0 0.0
        %3642 = vmatprep.subr.mxu0 0.0
        %3643 = vmatpush1.msra.mxu0 0.0
        %3644 = vmatprep.subr.mxu0 0.0
        %3645 = vmatpush1.msra.mxu0 0.0
        %3646 = vmatprep.subr.mxu0 0.0
        %3647 = vmatpush1.msra.mxu0 0.0
        %3648 = vmatprep.subr.mxu0 0.0
        %3649 = vmatpush1.msra.mxu0 0.0
        %3650 = vmatprep.subr.mxu0 0.0
        %3651 = vmatpush1.msra.mxu0 0.0
        %3652 = vmatprep.subr.mxu0 0.0
        %3653 = vmatpush1.msra.mxu0 0.0
        %3654 = vmatprep.subr.mxu0 0.0
        %3655 = vmatpush1.msra.mxu0 0.0
        %3656 = vmatprep.subr.mxu0 0.0
        %3657 = vmatpush1.msra.mxu0 0.0
        %3658 = vmatprep.subr.mxu0 0.0
        %3659 = vmatpush1.msra.mxu0 0.0
        %3660 = vmatprep.subr.mxu0 0.0
        %3661 = vmatpush1.msra.mxu0 0.0
        %3662 = vmatprep.subr.mxu0 0.0
        %3663 = vmatpush1.msra.mxu0 0.0
        %3664 = vmatprep.subr.mxu0 0.0
        %3665 = vmatpush1.msra.mxu0 0.0
        %3666 = vmatprep.subr.mxu0 0.0
        %3667 = vmatpush1.msra.mxu0 0.0
        %3668 = vmatprep.subr.mxu0 0.0
        %3669 = vmatpush1.msra.mxu0 0.0
        %3670 = vmatprep.subr.mxu0 0.0
        %3671 = vmatpush1.msra.mxu0 0.0
        %3672 = vmatprep.subr.mxu0 0.0
        %3673 = vmatpush1.msra.mxu0 0.0
        %3674 = vmatprep.subr.mxu0 0.0
        %3675 = vmatpush1.msra.mxu0 0.0
        %3676 = vmatprep.subr.mxu0 0.0
        %3677 = vmatpush1.msra.mxu0 0.0
        %3678 = vmatprep.subr.mxu0 0.0
        %3679 = vmatpush1.msra.mxu0 0.0
        %3680 = vmatprep.subr.mxu0 0.0
        %3681 = vmatpush1.msra.mxu0 0.0
        %3682 = vmatprep.subr.mxu0 0.0
        %3683 = vmatpush1.msra.mxu0 0.0
        %3684 = vmatprep.subr.mxu0 0.0
        %3685 = vmatpush1.msra.mxu0 0.0
        %3686 = vmatprep.subr.mxu0 0.0
        %3687 = vmatpush1.msra.mxu0 0.0
        %3688 = vmatprep.mubr.f32.mxu0 0.0
        %v3689 = vand.u32 %v3274, 4294901760
        %3690 = vmatmul.mubr.f32.gmra.mrb[0].mxu0 %v3689
        %v3691 = vpop.f32.mrb[0].mxu0
        %v3692 = vadd.f32 %v3607, %v3691
        %v3693 = vpop.f32.mrb[0].mxu0
        %3694 = vmatprep.mubr.f32.mxu0 0.0
        %v3695 = vand.u32 %v3276, 4294901760
        %3696 = vmatmul.mubr.f32.gmra.mrb[0].mxu0 %v3695
        %v3697 = vpop.f32.mrb[0].mxu0
        %v3698 = vadd.f32 %v3615, %v3697
        %v3699 = vpop.f32.mrb[0].mxu0
        %3700 = vdwg.mxu0
        %3701 = vmatprep.subr.mxu0 0.0
        %v3702 = vand.u32 %v2986, 4294901760
        %3703 = vmatpush1.msra.mxu0 %v3702
        %3704 = vmatprep.subr.mxu0 0.0
        %v3705 = vand.u32 %v2987, 4294901760
        %3706 = vmatpush1.msra.mxu0 %v3705
        %3707 = vmatprep.subr.mxu0 0.0
        %3708 = vmatpush1.msra.mxu0 0.0
        %3709 = vmatprep.subr.mxu0 0.0
        %3710 = vmatpush1.msra.mxu0 0.0
        %3711 = vmatprep.subr.mxu0 0.0
        %3712 = vmatpush1.msra.mxu0 0.0
        %3713 = vmatprep.subr.mxu0 0.0
        %3714 = vmatpush1.msra.mxu0 0.0
        %3715 = vmatprep.subr.mxu0 0.0
        %3716 = vmatpush1.msra.mxu0 0.0
        %3717 = vmatprep.subr.mxu0 0.0
        %3718 = vmatpush1.msra.mxu0 0.0
        %3719 = vmatprep.subr.mxu0 0.0
        %3720 = vmatpush1.msra.mxu0 0.0
        %3721 = vmatprep.subr.mxu0 0.0
        %3722 = vmatpush1.msra.mxu0 0.0
        %3723 = vmatprep.subr.mxu0 0.0
        %3724 = vmatpush1.msra.mxu0 0.0
        %3725 = vmatprep.subr.mxu0 0.0
        %3726 = vmatpush1.msra.mxu0 0.0
        %3727 = vmatprep.subr.mxu0 0.0
        %3728 = vmatpush1.msra.mxu0 0.0
        %3729 = vmatprep.subr.mxu0 0.0
        %3730 = vmatpush1.msra.mxu0 0.0
        %3731 = vmatprep.subr.mxu0 0.0
        %3732 = vmatpush1.msra.mxu0 0.0
        %3733 = vmatprep.subr.mxu0 0.0
        %3734 = vmatpush1.msra.mxu0 0.0
        %3735 = vmatprep.subr.mxu0 0.0
        %3736 = vmatpush1.msra.mxu0 0.0
        %3737 = vmatprep.subr.mxu0 0.0
        %3738 = vmatpush1.msra.mxu0 0.0
        %3739 = vmatprep.subr.mxu0 0.0
        %3740 = vmatpush1.msra.mxu0 0.0
        %3741 = vmatprep.subr.mxu0 0.0
        %3742 = vmatpush1.msra.mxu0 0.0
        %3743 = vmatprep.subr.mxu0 0.0
        %3744 = vmatpush1.msra.mxu0 0.0
        %3745 = vmatprep.subr.mxu0 0.0
        %3746 = vmatpush1.msra.mxu0 0.0
        %3747 = vmatprep.subr.mxu0 0.0
        %3748 = vmatpush1.msra.mxu0 0.0
        %3749 = vmatprep.subr.mxu0 0.0
        %3750 = vmatpush1.msra.mxu0 0.0
        %3751 = vmatprep.subr.mxu0 0.0
        %3752 = vmatpush1.msra.mxu0 0.0
        %3753 = vmatprep.subr.mxu0 0.0
        %3754 = vmatpush1.msra.mxu0 0.0
        %3755 = vmatprep.subr.mxu0 0.0
        %3756 = vmatpush1.msra.mxu0 0.0
        %3757 = vmatprep.subr.mxu0 0.0
        %3758 = vmatpush1.msra.mxu0 0.0
        %3759 = vmatprep.subr.mxu0 0.0
        %3760 = vmatpush1.msra.mxu0 0.0
        %3761 = vmatprep.subr.mxu0 0.0
        %3762 = vmatpush1.msra.mxu0 0.0
        %3763 = vmatprep.subr.mxu0 0.0
        %3764 = vmatpush1.msra.mxu0 0.0
        %3765 = vmatprep.subr.mxu0 0.0
        %3766 = vmatpush1.msra.mxu0 0.0
        %3767 = vmatprep.mubr.f32.mxu0 0.0
        %v3768 = vand.u32 %v3274, 4294901760
        %3769 = vmatmul.mubr.f32.gmra.mrb[0].mxu0 %v3768
        %v3770 = vpop.f32.mrb[0].mxu0
        %v3771 = vadd.f32 %v3692, %v3770
        %v3772 = vpop.f32.mrb[0].mxu0
        %3773 = vmatprep.mubr.f32.mxu0 0.0
        %v3774 = vand.u32 %v3276, 4294901760
        %3775 = vmatmul.mubr.f32.gmra.mrb[0].mxu0 %v3774
        %v3776 = vpop.f32.mrb[0].mxu0
        %v3777 = vadd.f32 %v3698, %v3776
        %v3778 = vpop.f32.mrb[0].mxu0
        %3779 = vdwg.mxu0
        %v3780 = vld [vmem:[%s8] sm:$0xff]
        %v3781 = vld [vmem:[%s8 + $0x8] sm:$0xff]
        %v3782 = vld [vmem:[%s8 + $0x10] sm:$0xff]
        %v3783 = vld [vmem:[%s8 + $0x18] sm:$0xff]
        %v3784 = vld [vmem:[%s9] sm:$0xff]
        %v3785 = vld [vmem:[%s9 + $0x8] sm:$0xff]
        %v3786 = vld [vmem:[%s9 + $0x10] sm:$0xff]
        %v3787 = vld [vmem:[%s9 + $0x18] sm:$0xff]
        %v3789 = vsel %vm472, %v3771, 0
        %v3792 = vsel %vm472, %v3777, 0
        %3794 = vmatprep.subr.mxu0 0.0
        %v3795 = vand.u32 %v3784, 4294901760
        %3796 = vmatpush1.msra.mxu0 %v3795
        %3797 = vmatprep.subr.mxu0 0.0
        %v3798 = vand.u32 %v3785, 4294901760
        %3799 = vmatpush1.msra.mxu0 %v3798
        %3800 = vmatprep.subr.mxu0 0.0
        %v3801 = vand.u32 %v3786, 4294901760
        %3802 = vmatpush1.msra.mxu0 %v3801
        %3803 = vmatprep.subr.mxu0 0.0
        %v3804 = vand.u32 %v3787, 4294901760
        %3805 = vmatpush1.msra.mxu0 %v3804
        %3806 = vmatprep.subr.mxu0 0.0
        %3807 = vmatpush1.msra.mxu0 0.0
        %3808 = vmatprep.subr.mxu0 0.0
        %3809 = vmatpush1.msra.mxu0 0.0
        %3810 = vmatprep.subr.mxu0 0.0
        %3811 = vmatpush1.msra.mxu0 0.0
        %3812 = vmatprep.subr.mxu0 0.0
        %3813 = vmatpush1.msra.mxu0 0.0
        %3814 = vmatprep.subr.mxu0 0.0
        %3815 = vmatpush1.msra.mxu0 0.0
        %3816 = vmatprep.subr.mxu0 0.0
        %3817 = vmatpush1.msra.mxu0 0.0
        %3818 = vmatprep.subr.mxu0 0.0
        %3819 = vmatpush1.msra.mxu0 0.0
        %3820 = vmatprep.subr.mxu0 0.0
        %3821 = vmatpush1.msra.mxu0 0.0
        %3822 = vmatprep.subr.mxu0 0.0
        %3823 = vmatpush1.msra.mxu0 0.0
        %3824 = vmatprep.subr.mxu0 0.0
        %3825 = vmatpush1.msra.mxu0 0.0
        %3826 = vmatprep.subr.mxu0 0.0
        %3827 = vmatpush1.msra.mxu0 0.0
        %3828 = vmatprep.subr.mxu0 0.0
        %3829 = vmatpush1.msra.mxu0 0.0
        %3830 = vmatprep.subr.mxu0 0.0
        %3831 = vmatpush1.msra.mxu0 0.0
        %3832 = vmatprep.subr.mxu0 0.0
        %3833 = vmatpush1.msra.mxu0 0.0
        %3834 = vmatprep.subr.mxu0 0.0
        %3835 = vmatpush1.msra.mxu0 0.0
        %3836 = vmatprep.subr.mxu0 0.0
        %3837 = vmatpush1.msra.mxu0 0.0
        %3838 = vmatprep.subr.mxu0 0.0
        %3839 = vmatpush1.msra.mxu0 0.0
        %3840 = vmatprep.subr.mxu0 0.0
        %3841 = vmatpush1.msra.mxu0 0.0
        %3842 = vmatprep.subr.mxu0 0.0
        %3843 = vmatpush1.msra.mxu0 0.0
        %3844 = vmatprep.subr.mxu0 0.0
        %3845 = vmatpush1.msra.mxu0 0.0
        %3846 = vmatprep.subr.mxu0 0.0
        %3847 = vmatpush1.msra.mxu0 0.0
        %3848 = vmatprep.subr.mxu0 0.0
        %3849 = vmatpush1.msra.mxu0 0.0
        %3850 = vmatprep.subr.mxu0 0.0
        %3851 = vmatpush1.msra.mxu0 0.0
        %3852 = vmatprep.subr.mxu0 0.0
        %3853 = vmatpush1.msra.mxu0 0.0
        %3854 = vmatprep.subr.mxu0 0.0
        %3855 = vmatpush1.msra.mxu0 0.0
        %3856 = vmatprep.subr.mxu0 0.0
        %3857 = vmatpush1.msra.mxu0 0.0
        %3858 = vmatprep.subr.mxu0 0.0
        %3859 = vmatpush1.msra.mxu0 0.0
        %3860 = vmatprep.subr.mxu0 0.0
        %3861 = vmatpush1.msra.mxu0 0.0
        %3862 = vmatprep.mubr.f32.mxu0 0.0
        %v3863 = vand.u32 %v3789, 4294901760
        %v3864 = vsub.f32 %v3789, %v3863
        %v3865 = vand.u32 %v3864, 4294901760
        %v3866 = vsub.f32 %v3864, %v3865
        %v3867 = vand.u32 %v3866, 4294901760
        %3868 = vmatmul.mubr.f32.gmra.mrb[0].mxu0 %v3867
        %v3869 = vpop.f32.mrb[0].mxu0
        %v3870 = vadd.f32 0.0, %v3869
        %v3871 = vpop.f32.mrb[0].mxu0
        %3872 = vmatprep.mubr.f32.mxu0 0.0
        %v3873 = vand.u32 %v3792, 4294901760
        %v3874 = vsub.f32 %v3792, %v3873
        %v3875 = vand.u32 %v3874, 4294901760
        %v3876 = vsub.f32 %v3874, %v3875
        %v3877 = vand.u32 %v3876, 4294901760
        %3878 = vmatmul.mubr.f32.gmra.mrb[0].mxu0 %v3877
        %v3879 = vpop.f32.mrb[0].mxu0
        %v3880 = vadd.f32 0.0, %v3879
        %v3881 = vpop.f32.mrb[0].mxu0
        %3882 = vdwg.mxu0
        %3883 = vmatprep.subr.mxu0 0.0
        %v3884 = vand.u32 %v3784, 4294901760
        %v3885 = vsub.f32 %v3784, %v3884
        %v3886 = vand.u32 %v3885, 4294901760
        %v3887 = vsub.f32 %v3885, %v3886
        %v3888 = vand.u32 %v3887, 4294901760
        %3889 = vmatpush1.msra.mxu0 %v3888
        %3890 = vmatprep.subr.mxu0 0.0
        %v3891 = vand.u32 %v3785, 4294901760
        %v3892 = vsub.f32 %v3785, %v3891
        %v3893 = vand.u32 %v3892, 4294901760
        %v3894 = vsub.f32 %v3892, %v3893
        %v3895 = vand.u32 %v3894, 4294901760
        %3896 = vmatpush1.msra.mxu0 %v3895
        %3897 = vmatprep.subr.mxu0 0.0
        %v3898 = vand.u32 %v3786, 4294901760
        %v3899 = vsub.f32 %v3786, %v3898
        %v3900 = vand.u32 %v3899, 4294901760
        %v3901 = vsub.f32 %v3899, %v3900
        %v3902 = vand.u32 %v3901, 4294901760
        %3903 = vmatpush1.msra.mxu0 %v3902
        %3904 = vmatprep.subr.mxu0 0.0
        %v3905 = vand.u32 %v3787, 4294901760
        %v3906 = vsub.f32 %v3787, %v3905
        %v3907 = vand.u32 %v3906, 4294901760
        %v3908 = vsub.f32 %v3906, %v3907
        %v3909 = vand.u32 %v3908, 4294901760
        %3910 = vmatpush1.msra.mxu0 %v3909
        %3911 = vmatprep.subr.mxu0 0.0
        %3912 = vmatpush1.msra.mxu0 0.0
        %3913 = vmatprep.subr.mxu0 0.0
        %3914 = vmatpush1.msra.mxu0 0.0
        %3915 = vmatprep.subr.mxu0 0.0
        %3916 = vmatpush1.msra.mxu0 0.0
        %3917 = vmatprep.subr.mxu0 0.0
        %3918 = vmatpush1.msra.mxu0 0.0
        %3919 = vmatprep.subr.mxu0 0.0
        %3920 = vmatpush1.msra.mxu0 0.0
        %3921 = vmatprep.subr.mxu0 0.0
        %3922 = vmatpush1.msra.mxu0 0.0
        %3923 = vmatprep.subr.mxu0 0.0
        %3924 = vmatpush1.msra.mxu0 0.0
        %3925 = vmatprep.subr.mxu0 0.0
        %3926 = vmatpush1.msra.mxu0 0.0
        %3927 = vmatprep.subr.mxu0 0.0
        %3928 = vmatpush1.msra.mxu0 0.0
        %3929 = vmatprep.subr.mxu0 0.0
        %3930 = vmatpush1.msra.mxu0 0.0
        %3931 = vmatprep.subr.mxu0 0.0
        %3932 = vmatpush1.msra.mxu0 0.0
        %3933 = vmatprep.subr.mxu0 0.0
        %3934 = vmatpush1.msra.mxu0 0.0
        %3935 = vmatprep.subr.mxu0 0.0
        %3936 = vmatpush1.msra.mxu0 0.0
        %3937 = vmatprep.subr.mxu0 0.0
        %3938 = vmatpush1.msra.mxu0 0.0
        %3939 = vmatprep.subr.mxu0 0.0
        %3940 = vmatpush1.msra.mxu0 0.0
        %3941 = vmatprep.subr.mxu0 0.0
        %3942 = vmatpush1.msra.mxu0 0.0
        %3943 = vmatprep.subr.mxu0 0.0
        %3944 = vmatpush1.msra.mxu0 0.0
        %3945 = vmatprep.subr.mxu0 0.0
        %3946 = vmatpush1.msra.mxu0 0.0
        %3947 = vmatprep.subr.mxu0 0.0
        %3948 = vmatpush1.msra.mxu0 0.0
        %3949 = vmatprep.subr.mxu0 0.0
        %3950 = vmatpush1.msra.mxu0 0.0
        %3951 = vmatprep.subr.mxu0 0.0
        %3952 = vmatpush1.msra.mxu0 0.0
        %3953 = vmatprep.subr.mxu0 0.0
        %3954 = vmatpush1.msra.mxu0 0.0
        %3955 = vmatprep.subr.mxu0 0.0
        %3956 = vmatpush1.msra.mxu0 0.0
        %3957 = vmatprep.subr.mxu0 0.0
        %3958 = vmatpush1.msra.mxu0 0.0
        %3959 = vmatprep.subr.mxu0 0.0
        %3960 = vmatpush1.msra.mxu0 0.0
        %3961 = vmatprep.subr.mxu0 0.0
        %3962 = vmatpush1.msra.mxu0 0.0
        %3963 = vmatprep.subr.mxu0 0.0
        %3964 = vmatpush1.msra.mxu0 0.0
        %3965 = vmatprep.subr.mxu0 0.0
        %3966 = vmatpush1.msra.mxu0 0.0
        %3967 = vmatprep.mubr.f32.mxu0 0.0
        %v3968 = vand.u32 %v3789, 4294901760
        %3969 = vmatmul.mubr.f32.gmra.mrb[0].mxu0 %v3968
        %v3970 = vpop.f32.mrb[0].mxu0
        %v3971 = vadd.f32 %v3870, %v3970
        %v3972 = vpop.f32.mrb[0].mxu0
        %3973 = vmatprep.mubr.f32.mxu0 0.0
        %v3974 = vand.u32 %v3792, 4294901760
        %3975 = vmatmul.mubr.f32.gmra.mrb[0].mxu0 %v3974
        %v3976 = vpop.f32.mrb[0].mxu0
        %v3977 = vadd.f32 %v3880, %v3976
        %v3978 = vpop.f32.mrb[0].mxu0
        %3979 = vdwg.mxu0
        %3980 = vmatprep.subr.mxu0 0.0
        %v3981 = vand.u32 %v3784, 4294901760
        %v3982 = vsub.f32 %v3784, %v3981
        %3983 = vmatpush1.msra.mxu0 %v3982
        %3984 = vmatprep.subr.mxu0 0.0
        %v3985 = vand.u32 %v3785, 4294901760
        %v3986 = vsub.f32 %v3785, %v3985
        %3987 = vmatpush1.msra.mxu0 %v3986
        %3988 = vmatprep.subr.mxu0 0.0
        %v3989 = vand.u32 %v3786, 4294901760
        %v3990 = vsub.f32 %v3786, %v3989
        %3991 = vmatpush1.msra.mxu0 %v3990
        %3992 = vmatprep.subr.mxu0 0.0
        %v3993 = vand.u32 %v3787, 4294901760
        %v3994 = vsub.f32 %v3787, %v3993
        %3995 = vmatpush1.msra.mxu0 %v3994
        %3996 = vmatprep.subr.mxu0 0.0
        %3997 = vmatpush1.msra.mxu0 0.0
        %3998 = vmatprep.subr.mxu0 0.0
        %3999 = vmatpush1.msra.mxu0 0.0
        %4000 = vmatprep.subr.mxu0 0.0
        %4001 = vmatpush1.msra.mxu0 0.0
        %4002 = vmatprep.subr.mxu0 0.0
        %4003 = vmatpush1.msra.mxu0 0.0
        %4004 = vmatprep.subr.mxu0 0.0
        %4005 = vmatpush1.msra.mxu0 0.0
        %4006 = vmatprep.subr.mxu0 0.0
        %4007 = vmatpush1.msra.mxu0 0.0
        %4008 = vmatprep.subr.mxu0 0.0
        %4009 = vmatpush1.msra.mxu0 0.0
        %4010 = vmatprep.subr.mxu0 0.0
        %4011 = vmatpush1.msra.mxu0 0.0
        %4012 = vmatprep.subr.mxu0 0.0
        %4013 = vmatpush1.msra.mxu0 0.0
        %4014 = vmatprep.subr.mxu0 0.0
        %4015 = vmatpush1.msra.mxu0 0.0
        %4016 = vmatprep.subr.mxu0 0.0
        %4017 = vmatpush1.msra.mxu0 0.0
        %4018 = vmatprep.subr.mxu0 0.0
        %4019 = vmatpush1.msra.mxu0 0.0
        %4020 = vmatprep.subr.mxu0 0.0
        %4021 = vmatpush1.msra.mxu0 0.0
        %4022 = vmatprep.subr.mxu0 0.0
        %4023 = vmatpush1.msra.mxu0 0.0
        %4024 = vmatprep.subr.mxu0 0.0
        %4025 = vmatpush1.msra.mxu0 0.0
        %4026 = vmatprep.subr.mxu0 0.0
        %4027 = vmatpush1.msra.mxu0 0.0
        %4028 = vmatprep.subr.mxu0 0.0
        %4029 = vmatpush1.msra.mxu0 0.0
        %4030 = vmatprep.subr.mxu0 0.0
        %4031 = vmatpush1.msra.mxu0 0.0
        %4032 = vmatprep.subr.mxu0 0.0
        %4033 = vmatpush1.msra.mxu0 0.0
        %4034 = vmatprep.subr.mxu0 0.0
        %4035 = vmatpush1.msra.mxu0 0.0
        %4036 = vmatprep.subr.mxu0 0.0
        %4037 = vmatpush1.msra.mxu0 0.0
        %4038 = vmatprep.subr.mxu0 0.0
        %4039 = vmatpush1.msra.mxu0 0.0
        %4040 = vmatprep.subr.mxu0 0.0
        %4041 = vmatpush1.msra.mxu0 0.0
        %4042 = vmatprep.subr.mxu0 0.0
        %4043 = vmatpush1.msra.mxu0 0.0
        %4044 = vmatprep.subr.mxu0 0.0
        %4045 = vmatpush1.msra.mxu0 0.0
        %4046 = vmatprep.subr.mxu0 0.0
        %4047 = vmatpush1.msra.mxu0 0.0
        %4048 = vmatprep.subr.mxu0 0.0
        %4049 = vmatpush1.msra.mxu0 0.0
        %4050 = vmatprep.subr.mxu0 0.0
        %4051 = vmatpush1.msra.mxu0 0.0
        %4052 = vmatprep.mubr.f32.mxu0 0.0
        %v4053 = vand.u32 %v3789, 4294901760
        %v4054 = vsub.f32 %v3789, %v4053
        %4055 = vmatmul.mubr.f32.gmra.mrb[0].mxu0 %v4054
        %v4056 = vpop.f32.mrb[0].mxu0
        %v4057 = vadd.f32 %v3971, %v4056
        %v4058 = vpop.f32.mrb[0].mxu0
        %4059 = vmatprep.mubr.f32.mxu0 0.0
        %v4060 = vand.u32 %v3792, 4294901760
        %v4061 = vsub.f32 %v3792, %v4060
        %4062 = vmatmul.mubr.f32.gmra.mrb[0].mxu0 %v4061
        %v4063 = vpop.f32.mrb[0].mxu0
        %v4064 = vadd.f32 %v3977, %v4063
        %v4065 = vpop.f32.mrb[0].mxu0
        %4066 = vdwg.mxu0
        %4067 = vmatprep.subr.mxu0 0.0
        %v4068 = vand.u32 %v3784, 4294901760
        %4069 = vmatpush1.msra.mxu0 %v4068
        %4070 = vmatprep.subr.mxu0 0.0
        %v4071 = vand.u32 %v3785, 4294901760
        %4072 = vmatpush1.msra.mxu0 %v4071
        %4073 = vmatprep.subr.mxu0 0.0
        %v4074 = vand.u32 %v3786, 4294901760
        %4075 = vmatpush1.msra.mxu0 %v4074
        %4076 = vmatprep.subr.mxu0 0.0
        %v4077 = vand.u32 %v3787, 4294901760
        %4078 = vmatpush1.msra.mxu0 %v4077
        %4079 = vmatprep.subr.mxu0 0.0
        %4080 = vmatpush1.msra.mxu0 0.0
        %4081 = vmatprep.subr.mxu0 0.0
        %4082 = vmatpush1.msra.mxu0 0.0
        %4083 = vmatprep.subr.mxu0 0.0
        %4084 = vmatpush1.msra.mxu0 0.0
        %4085 = vmatprep.subr.mxu0 0.0
        %4086 = vmatpush1.msra.mxu0 0.0
        %4087 = vmatprep.subr.mxu0 0.0
        %4088 = vmatpush1.msra.mxu0 0.0
        %4089 = vmatprep.subr.mxu0 0.0
        %4090 = vmatpush1.msra.mxu0 0.0
        %4091 = vmatprep.subr.mxu0 0.0
        %4092 = vmatpush1.msra.mxu0 0.0
        %4093 = vmatprep.subr.mxu0 0.0
        %4094 = vmatpush1.msra.mxu0 0.0
        %4095 = vmatprep.subr.mxu0 0.0
        %4096 = vmatpush1.msra.mxu0 0.0
        %4097 = vmatprep.subr.mxu0 0.0
        %4098 = vmatpush1.msra.mxu0 0.0
        %4099 = vmatprep.subr.mxu0 0.0
        %4100 = vmatpush1.msra.mxu0 0.0
        %4101 = vmatprep.subr.mxu0 0.0
        %4102 = vmatpush1.msra.mxu0 0.0
        %4103 = vmatprep.subr.mxu0 0.0
        %4104 = vmatpush1.msra.mxu0 0.0
        %4105 = vmatprep.subr.mxu0 0.0
        %4106 = vmatpush1.msra.mxu0 0.0
        %4107 = vmatprep.subr.mxu0 0.0
        %4108 = vmatpush1.msra.mxu0 0.0
        %4109 = vmatprep.subr.mxu0 0.0
        %4110 = vmatpush1.msra.mxu0 0.0
        %4111 = vmatprep.subr.mxu0 0.0
        %4112 = vmatpush1.msra.mxu0 0.0
        %4113 = vmatprep.subr.mxu0 0.0
        %4114 = vmatpush1.msra.mxu0 0.0
        %4115 = vmatprep.subr.mxu0 0.0
        %4116 = vmatpush1.msra.mxu0 0.0
        %4117 = vmatprep.subr.mxu0 0.0
        %4118 = vmatpush1.msra.mxu0 0.0
        %4119 = vmatprep.subr.mxu0 0.0
        %4120 = vmatpush1.msra.mxu0 0.0
        %4121 = vmatprep.subr.mxu0 0.0
        %4122 = vmatpush1.msra.mxu0 0.0
        %4123 = vmatprep.subr.mxu0 0.0
        %4124 = vmatpush1.msra.mxu0 0.0
        %4125 = vmatprep.subr.mxu0 0.0
        %4126 = vmatpush1.msra.mxu0 0.0
        %4127 = vmatprep.subr.mxu0 0.0
        %4128 = vmatpush1.msra.mxu0 0.0
        %4129 = vmatprep.subr.mxu0 0.0
        %4130 = vmatpush1.msra.mxu0 0.0
        %4131 = vmatprep.subr.mxu0 0.0
        %4132 = vmatpush1.msra.mxu0 0.0
        %4133 = vmatprep.subr.mxu0 0.0
        %4134 = vmatpush1.msra.mxu0 0.0
        %4135 = vmatprep.mubr.f32.mxu0 0.0
        %v4136 = vand.u32 %v3789, 4294901760
        %v4137 = vsub.f32 %v3789, %v4136
        %v4138 = vand.u32 %v4137, 4294901760
        %4139 = vmatmul.mubr.f32.gmra.mrb[0].mxu0 %v4138
        %v4140 = vpop.f32.mrb[0].mxu0
        %v4141 = vadd.f32 %v4057, %v4140
        %v4142 = vpop.f32.mrb[0].mxu0
        %4143 = vmatprep.mubr.f32.mxu0 0.0
        %v4144 = vand.u32 %v3792, 4294901760
        %v4145 = vsub.f32 %v3792, %v4144
        %v4146 = vand.u32 %v4145, 4294901760
        %4147 = vmatmul.mubr.f32.gmra.mrb[0].mxu0 %v4146
        %v4148 = vpop.f32.mrb[0].mxu0
        %v4149 = vadd.f32 %v4064, %v4148
        %v4150 = vpop.f32.mrb[0].mxu0
        %4151 = vdwg.mxu0
        %4152 = vmatprep.subr.mxu0 0.0
        %v4153 = vand.u32 %v3784, 4294901760
        %v4154 = vsub.f32 %v3784, %v4153
        %v4155 = vand.u32 %v4154, 4294901760
        %4156 = vmatpush1.msra.mxu0 %v4155
        %4157 = vmatprep.subr.mxu0 0.0
        %v4158 = vand.u32 %v3785, 4294901760
        %v4159 = vsub.f32 %v3785, %v4158
        %v4160 = vand.u32 %v4159, 4294901760
        %4161 = vmatpush1.msra.mxu0 %v4160
        %4162 = vmatprep.subr.mxu0 0.0
        %v4163 = vand.u32 %v3786, 4294901760
        %v4164 = vsub.f32 %v3786, %v4163
        %v4165 = vand.u32 %v4164, 4294901760
        %4166 = vmatpush1.msra.mxu0 %v4165
        %4167 = vmatprep.subr.mxu0 0.0
        %v4168 = vand.u32 %v3787, 4294901760
        %v4169 = vsub.f32 %v3787, %v4168
        %v4170 = vand.u32 %v4169, 4294901760
        %4171 = vmatpush1.msra.mxu0 %v4170
        %4172 = vmatprep.subr.mxu0 0.0
        %4173 = vmatpush1.msra.mxu0 0.0
        %4174 = vmatprep.subr.mxu0 0.0
        %4175 = vmatpush1.msra.mxu0 0.0
        %4176 = vmatprep.subr.mxu0 0.0
        %4177 = vmatpush1.msra.mxu0 0.0
        %4178 = vmatprep.subr.mxu0 0.0
        %4179 = vmatpush1.msra.mxu0 0.0
        %4180 = vmatprep.subr.mxu0 0.0
        %4181 = vmatpush1.msra.mxu0 0.0
        %4182 = vmatprep.subr.mxu0 0.0
        %4183 = vmatpush1.msra.mxu0 0.0
        %4184 = vmatprep.subr.mxu0 0.0
        %4185 = vmatpush1.msra.mxu0 0.0
        %4186 = vmatprep.subr.mxu0 0.0
        %4187 = vmatpush1.msra.mxu0 0.0
        %4188 = vmatprep.subr.mxu0 0.0
        %4189 = vmatpush1.msra.mxu0 0.0
        %4190 = vmatprep.subr.mxu0 0.0
        %4191 = vmatpush1.msra.mxu0 0.0
        %4192 = vmatprep.subr.mxu0 0.0
        %4193 = vmatpush1.msra.mxu0 0.0
        %4194 = vmatprep.subr.mxu0 0.0
        %4195 = vmatpush1.msra.mxu0 0.0
        %4196 = vmatprep.subr.mxu0 0.0
        %4197 = vmatpush1.msra.mxu0 0.0
        %4198 = vmatprep.subr.mxu0 0.0
        %4199 = vmatpush1.msra.mxu0 0.0
        %4200 = vmatprep.subr.mxu0 0.0
        %4201 = vmatpush1.msra.mxu0 0.0
        %4202 = vmatprep.subr.mxu0 0.0
        %4203 = vmatpush1.msra.mxu0 0.0
        %4204 = vmatprep.subr.mxu0 0.0
        %4205 = vmatpush1.msra.mxu0 0.0
        %4206 = vmatprep.subr.mxu0 0.0
        %4207 = vmatpush1.msra.mxu0 0.0
        %4208 = vmatprep.subr.mxu0 0.0
        %4209 = vmatpush1.msra.mxu0 0.0
        %4210 = vmatprep.subr.mxu0 0.0
        %4211 = vmatpush1.msra.mxu0 0.0
        %4212 = vmatprep.subr.mxu0 0.0
        %4213 = vmatpush1.msra.mxu0 0.0
        %4214 = vmatprep.subr.mxu0 0.0
        %4215 = vmatpush1.msra.mxu0 0.0
        %4216 = vmatprep.subr.mxu0 0.0
        %4217 = vmatpush1.msra.mxu0 0.0
        %4218 = vmatprep.subr.mxu0 0.0
        %4219 = vmatpush1.msra.mxu0 0.0
        %4220 = vmatprep.subr.mxu0 0.0
        %4221 = vmatpush1.msra.mxu0 0.0
        %4222 = vmatprep.subr.mxu0 0.0
        %4223 = vmatpush1.msra.mxu0 0.0
        %4224 = vmatprep.subr.mxu0 0.0
        %4225 = vmatpush1.msra.mxu0 0.0
        %4226 = vmatprep.subr.mxu0 0.0
        %4227 = vmatpush1.msra.mxu0 0.0
        %4228 = vmatprep.mubr.f32.mxu0 0.0
        %v4229 = vand.u32 %v3789, 4294901760
        %4230 = vmatmul.mubr.f32.gmra.mrb[0].mxu0 %v4229
        %v4231 = vpop.f32.mrb[0].mxu0
        %v4232 = vadd.f32 %v4141, %v4231
        %v4233 = vpop.f32.mrb[0].mxu0
        %4234 = vmatprep.mubr.f32.mxu0 0.0
        %v4235 = vand.u32 %v3792, 4294901760
        %4236 = vmatmul.mubr.f32.gmra.mrb[0].mxu0 %v4235
        %v4237 = vpop.f32.mrb[0].mxu0
        %v4238 = vadd.f32 %v4149, %v4237
        %v4239 = vpop.f32.mrb[0].mxu0
        %4240 = vdwg.mxu0
        %4241 = vmatprep.subr.mxu0 0.0
        %v4242 = vand.u32 %v3784, 4294901760
        %4243 = vmatpush1.msra.mxu0 %v4242
        %4244 = vmatprep.subr.mxu0 0.0
        %v4245 = vand.u32 %v3785, 4294901760
        %4246 = vmatpush1.msra.mxu0 %v4245
        %4247 = vmatprep.subr.mxu0 0.0
        %v4248 = vand.u32 %v3786, 4294901760
        %4249 = vmatpush1.msra.mxu0 %v4248
        %4250 = vmatprep.subr.mxu0 0.0
        %v4251 = vand.u32 %v3787, 4294901760
        %4252 = vmatpush1.msra.mxu0 %v4251
        %4253 = vmatprep.subr.mxu0 0.0
        %4254 = vmatpush1.msra.mxu0 0.0
        %4255 = vmatprep.subr.mxu0 0.0
        %4256 = vmatpush1.msra.mxu0 0.0
        %4257 = vmatprep.subr.mxu0 0.0
        %4258 = vmatpush1.msra.mxu0 0.0
        %4259 = vmatprep.subr.mxu0 0.0
        %4260 = vmatpush1.msra.mxu0 0.0
        %4261 = vmatprep.subr.mxu0 0.0
        %4262 = vmatpush1.msra.mxu0 0.0
        %4263 = vmatprep.subr.mxu0 0.0
        %4264 = vmatpush1.msra.mxu0 0.0
        %4265 = vmatprep.subr.mxu0 0.0
        %4266 = vmatpush1.msra.mxu0 0.0
        %4267 = vmatprep.subr.mxu0 0.0
        %4268 = vmatpush1.msra.mxu0 0.0
        %4269 = vmatprep.subr.mxu0 0.0
        %4270 = vmatpush1.msra.mxu0 0.0
        %4271 = vmatprep.subr.mxu0 0.0
        %4272 = vmatpush1.msra.mxu0 0.0
        %4273 = vmatprep.subr.mxu0 0.0
        %4274 = vmatpush1.msra.mxu0 0.0
        %4275 = vmatprep.subr.mxu0 0.0
        %4276 = vmatpush1.msra.mxu0 0.0
        %4277 = vmatprep.subr.mxu0 0.0
        %4278 = vmatpush1.msra.mxu0 0.0
        %4279 = vmatprep.subr.mxu0 0.0
        %4280 = vmatpush1.msra.mxu0 0.0
        %4281 = vmatprep.subr.mxu0 0.0
        %4282 = vmatpush1.msra.mxu0 0.0
        %4283 = vmatprep.subr.mxu0 0.0
        %4284 = vmatpush1.msra.mxu0 0.0
        %4285 = vmatprep.subr.mxu0 0.0
        %4286 = vmatpush1.msra.mxu0 0.0
        %4287 = vmatprep.subr.mxu0 0.0
        %4288 = vmatpush1.msra.mxu0 0.0
        %4289 = vmatprep.subr.mxu0 0.0
        %4290 = vmatpush1.msra.mxu0 0.0
        %4291 = vmatprep.subr.mxu0 0.0
        %4292 = vmatpush1.msra.mxu0 0.0
        %4293 = vmatprep.subr.mxu0 0.0
        %4294 = vmatpush1.msra.mxu0 0.0
        %4295 = vmatprep.subr.mxu0 0.0
        %4296 = vmatpush1.msra.mxu0 0.0
        %4297 = vmatprep.subr.mxu0 0.0
        %4298 = vmatpush1.msra.mxu0 0.0
        %4299 = vmatprep.subr.mxu0 0.0
        %4300 = vmatpush1.msra.mxu0 0.0
        %4301 = vmatprep.subr.mxu0 0.0
        %4302 = vmatpush1.msra.mxu0 0.0
        %4303 = vmatprep.subr.mxu0 0.0
        %4304 = vmatpush1.msra.mxu0 0.0
        %4305 = vmatprep.subr.mxu0 0.0
        %4306 = vmatpush1.msra.mxu0 0.0
        %4307 = vmatprep.subr.mxu0 0.0
        %4308 = vmatpush1.msra.mxu0 0.0
        %4309 = vmatprep.mubr.f32.mxu0 0.0
        %v4310 = vand.u32 %v3789, 4294901760
        %4311 = vmatmul.mubr.f32.gmra.mrb[0].mxu0 %v4310
        %v4312 = vpop.f32.mrb[0].mxu0
        %v4313 = vadd.f32 %v4232, %v4312
        %v4314 = vpop.f32.mrb[0].mxu0
        %4315 = vmatprep.mubr.f32.mxu0 0.0
        %v4316 = vand.u32 %v3792, 4294901760
        %4317 = vmatmul.mubr.f32.gmra.mrb[0].mxu0 %v4316
        %v4318 = vpop.f32.mrb[0].mxu0
        %v4319 = vadd.f32 %v4238, %v4318
        %v4320 = vpop.f32.mrb[0].mxu0
        %4321 = vdwg.mxu0
        %v4323 = vsel %vm472, %v2986, 0
        %v4326 = vsel %vm472, %v2987, 0
        %4328 = vmatprep.subr.mxu0 0.0
        %v4329 = vand.u32 %v3780, 4294901760
        %4330 = vmatpush1.msra.mxu0 %v4329
        %4331 = vmatprep.subr.mxu0 0.0
        %v4332 = vand.u32 %v3781, 4294901760
        %4333 = vmatpush1.msra.mxu0 %v4332
        %4334 = vmatprep.subr.mxu0 0.0
        %v4335 = vand.u32 %v3782, 4294901760
        %4336 = vmatpush1.msra.mxu0 %v4335
        %4337 = vmatprep.subr.mxu0 0.0
        %v4338 = vand.u32 %v3783, 4294901760
        %4339 = vmatpush1.msra.mxu0 %v4338
        %4340 = vmatprep.subr.mxu0 0.0
        %4341 = vmatpush1.msra.mxu0 0.0
        %4342 = vmatprep.subr.mxu0 0.0
        %4343 = vmatpush1.msra.mxu0 0.0
        %4344 = vmatprep.subr.mxu0 0.0
        %4345 = vmatpush1.msra.mxu0 0.0
        %4346 = vmatprep.subr.mxu0 0.0
        %4347 = vmatpush1.msra.mxu0 0.0
        %4348 = vmatprep.subr.mxu0 0.0
        %4349 = vmatpush1.msra.mxu0 0.0
        %4350 = vmatprep.subr.mxu0 0.0
        %4351 = vmatpush1.msra.mxu0 0.0
        %4352 = vmatprep.subr.mxu0 0.0
        %4353 = vmatpush1.msra.mxu0 0.0
        %4354 = vmatprep.subr.mxu0 0.0
        %4355 = vmatpush1.msra.mxu0 0.0
        %4356 = vmatprep.subr.mxu0 0.0
        %4357 = vmatpush1.msra.mxu0 0.0
        %4358 = vmatprep.subr.mxu0 0.0
        %4359 = vmatpush1.msra.mxu0 0.0
        %4360 = vmatprep.subr.mxu0 0.0
        %4361 = vmatpush1.msra.mxu0 0.0
        %4362 = vmatprep.subr.mxu0 0.0
        %4363 = vmatpush1.msra.mxu0 0.0
        %4364 = vmatprep.subr.mxu0 0.0
        %4365 = vmatpush1.msra.mxu0 0.0
        %4366 = vmatprep.subr.mxu0 0.0
        %4367 = vmatpush1.msra.mxu0 0.0
        %4368 = vmatprep.subr.mxu0 0.0
        %4369 = vmatpush1.msra.mxu0 0.0
        %4370 = vmatprep.subr.mxu0 0.0
        %4371 = vmatpush1.msra.mxu0 0.0
        %4372 = vmatprep.subr.mxu0 0.0
        %4373 = vmatpush1.msra.mxu0 0.0
        %4374 = vmatprep.subr.mxu0 0.0
        %4375 = vmatpush1.msra.mxu0 0.0
        %4376 = vmatprep.subr.mxu0 0.0
        %4377 = vmatpush1.msra.mxu0 0.0
        %4378 = vmatprep.subr.mxu0 0.0
        %4379 = vmatpush1.msra.mxu0 0.0
        %4380 = vmatprep.subr.mxu0 0.0
        %4381 = vmatpush1.msra.mxu0 0.0
        %4382 = vmatprep.subr.mxu0 0.0
        %4383 = vmatpush1.msra.mxu0 0.0
        %4384 = vmatprep.subr.mxu0 0.0
        %4385 = vmatpush1.msra.mxu0 0.0
        %4386 = vmatprep.subr.mxu0 0.0
        %4387 = vmatpush1.msra.mxu0 0.0
        %4388 = vmatprep.subr.mxu0 0.0
        %4389 = vmatpush1.msra.mxu0 0.0
        %4390 = vmatprep.subr.mxu0 0.0
        %4391 = vmatpush1.msra.mxu0 0.0
        %4392 = vmatprep.subr.mxu0 0.0
        %4393 = vmatpush1.msra.mxu0 0.0
        %4394 = vmatprep.subr.mxu0 0.0
        %4395 = vmatpush1.msra.mxu0 0.0
        %4396 = vmatprep.mubr.f32.mxu0 0.0
        %v4397 = vand.u32 %v4323, 4294901760
        %v4398 = vsub.f32 %v4323, %v4397
        %v4399 = vand.u32 %v4398, 4294901760
        %v4400 = vsub.f32 %v4398, %v4399
        %v4401 = vand.u32 %v4400, 4294901760
        %4402 = vmatmul.mubr.f32.gmra.mrb[0].mxu0 %v4401
        %v4403 = vpop.f32.mrb[0].mxu0
        %v4404 = vadd.f32 %v4313, %v4403
        %v4405 = vpop.f32.mrb[0].mxu0
        %4406 = vmatprep.mubr.f32.mxu0 0.0
        %v4407 = vand.u32 %v4326, 4294901760
        %v4408 = vsub.f32 %v4326, %v4407
        %v4409 = vand.u32 %v4408, 4294901760
        %v4410 = vsub.f32 %v4408, %v4409
        %v4411 = vand.u32 %v4410, 4294901760
        %4412 = vmatmul.mubr.f32.gmra.mrb[0].mxu0 %v4411
        %v4413 = vpop.f32.mrb[0].mxu0
        %v4414 = vadd.f32 %v4319, %v4413
        %v4415 = vpop.f32.mrb[0].mxu0
        %4416 = vdwg.mxu0
        %4417 = vmatprep.subr.mxu0 0.0
        %v4418 = vand.u32 %v3780, 4294901760
        %v4419 = vsub.f32 %v3780, %v4418
        %v4420 = vand.u32 %v4419, 4294901760
        %v4421 = vsub.f32 %v4419, %v4420
        %v4422 = vand.u32 %v4421, 4294901760
        %4423 = vmatpush1.msra.mxu0 %v4422
        %4424 = vmatprep.subr.mxu0 0.0
        %v4425 = vand.u32 %v3781, 4294901760
        %v4426 = vsub.f32 %v3781, %v4425
        %v4427 = vand.u32 %v4426, 4294901760
        %v4428 = vsub.f32 %v4426, %v4427
        %v4429 = vand.u32 %v4428, 4294901760
        %4430 = vmatpush1.msra.mxu0 %v4429
        %4431 = vmatprep.subr.mxu0 0.0
        %v4432 = vand.u32 %v3782, 4294901760
        %v4433 = vsub.f32 %v3782, %v4432
        %v4434 = vand.u32 %v4433, 4294901760
        %v4435 = vsub.f32 %v4433, %v4434
        %v4436 = vand.u32 %v4435, 4294901760
        %4437 = vmatpush1.msra.mxu0 %v4436
        %4438 = vmatprep.subr.mxu0 0.0
        %v4439 = vand.u32 %v3783, 4294901760
        %v4440 = vsub.f32 %v3783, %v4439
        %v4441 = vand.u32 %v4440, 4294901760
        %v4442 = vsub.f32 %v4440, %v4441
        %v4443 = vand.u32 %v4442, 4294901760
        %4444 = vmatpush1.msra.mxu0 %v4443
        %4445 = vmatprep.subr.mxu0 0.0
        %4446 = vmatpush1.msra.mxu0 0.0
        %4447 = vmatprep.subr.mxu0 0.0
        %4448 = vmatpush1.msra.mxu0 0.0
        %4449 = vmatprep.subr.mxu0 0.0
        %4450 = vmatpush1.msra.mxu0 0.0
        %4451 = vmatprep.subr.mxu0 0.0
        %4452 = vmatpush1.msra.mxu0 0.0
        %4453 = vmatprep.subr.mxu0 0.0
        %4454 = vmatpush1.msra.mxu0 0.0
        %4455 = vmatprep.subr.mxu0 0.0
        %4456 = vmatpush1.msra.mxu0 0.0
        %4457 = vmatprep.subr.mxu0 0.0
        %4458 = vmatpush1.msra.mxu0 0.0
        %4459 = vmatprep.subr.mxu0 0.0
        %4460 = vmatpush1.msra.mxu0 0.0
        %4461 = vmatprep.subr.mxu0 0.0
        %4462 = vmatpush1.msra.mxu0 0.0
        %4463 = vmatprep.subr.mxu0 0.0
        %4464 = vmatpush1.msra.mxu0 0.0
        %4465 = vmatprep.subr.mxu0 0.0
        %4466 = vmatpush1.msra.mxu0 0.0
        %4467 = vmatprep.subr.mxu0 0.0
        %4468 = vmatpush1.msra.mxu0 0.0
        %4469 = vmatprep.subr.mxu0 0.0
        %4470 = vmatpush1.msra.mxu0 0.0
        %4471 = vmatprep.subr.mxu0 0.0
        %4472 = vmatpush1.msra.mxu0 0.0
        %4473 = vmatprep.subr.mxu0 0.0
        %4474 = vmatpush1.msra.mxu0 0.0
        %4475 = vmatprep.subr.mxu0 0.0
        %4476 = vmatpush1.msra.mxu0 0.0
        %4477 = vmatprep.subr.mxu0 0.0
        %4478 = vmatpush1.msra.mxu0 0.0
        %4479 = vmatprep.subr.mxu0 0.0
        %4480 = vmatpush1.msra.mxu0 0.0
        %4481 = vmatprep.subr.mxu0 0.0
        %4482 = vmatpush1.msra.mxu0 0.0
        %4483 = vmatprep.subr.mxu0 0.0
        %4484 = vmatpush1.msra.mxu0 0.0
        %4485 = vmatprep.subr.mxu0 0.0
        %4486 = vmatpush1.msra.mxu0 0.0
        %4487 = vmatprep.subr.mxu0 0.0
        %4488 = vmatpush1.msra.mxu0 0.0
        %4489 = vmatprep.subr.mxu0 0.0
        %4490 = vmatpush1.msra.mxu0 0.0
        %4491 = vmatprep.subr.mxu0 0.0
        %4492 = vmatpush1.msra.mxu0 0.0
        %4493 = vmatprep.subr.mxu0 0.0
        %4494 = vmatpush1.msra.mxu0 0.0
        %4495 = vmatprep.subr.mxu0 0.0
        %4496 = vmatpush1.msra.mxu0 0.0
        %4497 = vmatprep.subr.mxu0 0.0
        %4498 = vmatpush1.msra.mxu0 0.0
        %4499 = vmatprep.subr.mxu0 0.0
        %4500 = vmatpush1.msra.mxu0 0.0
        %4501 = vmatprep.mubr.f32.mxu0 0.0
        %v4502 = vand.u32 %v4323, 4294901760
        %4503 = vmatmul.mubr.f32.gmra.mrb[0].mxu0 %v4502
        %v4504 = vpop.f32.mrb[0].mxu0
        %v4505 = vadd.f32 %v4404, %v4504
        %v4506 = vpop.f32.mrb[0].mxu0
        %4507 = vmatprep.mubr.f32.mxu0 0.0
        %v4508 = vand.u32 %v4326, 4294901760
        %4509 = vmatmul.mubr.f32.gmra.mrb[0].mxu0 %v4508
        %v4510 = vpop.f32.mrb[0].mxu0
        %v4511 = vadd.f32 %v4414, %v4510
        %v4512 = vpop.f32.mrb[0].mxu0
        %4513 = vdwg.mxu0
        %4514 = vmatprep.subr.mxu0 0.0
        %v4515 = vand.u32 %v3780, 4294901760
        %v4516 = vsub.f32 %v3780, %v4515
        %4517 = vmatpush1.msra.mxu0 %v4516
        %4518 = vmatprep.subr.mxu0 0.0
        %v4519 = vand.u32 %v3781, 4294901760
        %v4520 = vsub.f32 %v3781, %v4519
        %4521 = vmatpush1.msra.mxu0 %v4520
        %4522 = vmatprep.subr.mxu0 0.0
        %v4523 = vand.u32 %v3782, 4294901760
        %v4524 = vsub.f32 %v3782, %v4523
        %4525 = vmatpush1.msra.mxu0 %v4524
        %4526 = vmatprep.subr.mxu0 0.0
        %v4527 = vand.u32 %v3783, 4294901760
        %v4528 = vsub.f32 %v3783, %v4527
        %4529 = vmatpush1.msra.mxu0 %v4528
        %4530 = vmatprep.subr.mxu0 0.0
        %4531 = vmatpush1.msra.mxu0 0.0
        %4532 = vmatprep.subr.mxu0 0.0
        %4533 = vmatpush1.msra.mxu0 0.0
        %4534 = vmatprep.subr.mxu0 0.0
        %4535 = vmatpush1.msra.mxu0 0.0
        %4536 = vmatprep.subr.mxu0 0.0
        %4537 = vmatpush1.msra.mxu0 0.0
        %4538 = vmatprep.subr.mxu0 0.0
        %4539 = vmatpush1.msra.mxu0 0.0
        %4540 = vmatprep.subr.mxu0 0.0
        %4541 = vmatpush1.msra.mxu0 0.0
        %4542 = vmatprep.subr.mxu0 0.0
        %4543 = vmatpush1.msra.mxu0 0.0
        %4544 = vmatprep.subr.mxu0 0.0
        %4545 = vmatpush1.msra.mxu0 0.0
        %4546 = vmatprep.subr.mxu0 0.0
        %4547 = vmatpush1.msra.mxu0 0.0
        %4548 = vmatprep.subr.mxu0 0.0
        %4549 = vmatpush1.msra.mxu0 0.0
        %4550 = vmatprep.subr.mxu0 0.0
        %4551 = vmatpush1.msra.mxu0 0.0
        %4552 = vmatprep.subr.mxu0 0.0
        %4553 = vmatpush1.msra.mxu0 0.0
        %4554 = vmatprep.subr.mxu0 0.0
        %4555 = vmatpush1.msra.mxu0 0.0
        %4556 = vmatprep.subr.mxu0 0.0
        %4557 = vmatpush1.msra.mxu0 0.0
        %4558 = vmatprep.subr.mxu0 0.0
        %4559 = vmatpush1.msra.mxu0 0.0
        %4560 = vmatprep.subr.mxu0 0.0
        %4561 = vmatpush1.msra.mxu0 0.0
        %4562 = vmatprep.subr.mxu0 0.0
        %4563 = vmatpush1.msra.mxu0 0.0
        %4564 = vmatprep.subr.mxu0 0.0
        %4565 = vmatpush1.msra.mxu0 0.0
        %4566 = vmatprep.subr.mxu0 0.0
        %4567 = vmatpush1.msra.mxu0 0.0
        %4568 = vmatprep.subr.mxu0 0.0
        %4569 = vmatpush1.msra.mxu0 0.0
        %4570 = vmatprep.subr.mxu0 0.0
        %4571 = vmatpush1.msra.mxu0 0.0
        %4572 = vmatprep.subr.mxu0 0.0
        %4573 = vmatpush1.msra.mxu0 0.0
        %4574 = vmatprep.subr.mxu0 0.0
        %4575 = vmatpush1.msra.mxu0 0.0
        %4576 = vmatprep.subr.mxu0 0.0
        %4577 = vmatpush1.msra.mxu0 0.0
        %4578 = vmatprep.subr.mxu0 0.0
        %4579 = vmatpush1.msra.mxu0 0.0
        %4580 = vmatprep.subr.mxu0 0.0
        %4581 = vmatpush1.msra.mxu0 0.0
        %4582 = vmatprep.subr.mxu0 0.0
        %4583 = vmatpush1.msra.mxu0 0.0
        %4584 = vmatprep.subr.mxu0 0.0
        %4585 = vmatpush1.msra.mxu0 0.0
        %4586 = vmatprep.mubr.f32.mxu0 0.0
        %v4587 = vand.u32 %v4323, 4294901760
        %v4588 = vsub.f32 %v4323, %v4587
        %4589 = vmatmul.mubr.f32.gmra.mrb[0].mxu0 %v4588
        %v4590 = vpop.f32.mrb[0].mxu0
        %v4591 = vadd.f32 %v4505, %v4590
        %v4592 = vpop.f32.mrb[0].mxu0
        %4593 = vmatprep.mubr.f32.mxu0 0.0
        %v4594 = vand.u32 %v4326, 4294901760
        %v4595 = vsub.f32 %v4326, %v4594
        %4596 = vmatmul.mubr.f32.gmra.mrb[0].mxu0 %v4595
        %v4597 = vpop.f32.mrb[0].mxu0
        %v4598 = vadd.f32 %v4511, %v4597
        %v4599 = vpop.f32.mrb[0].mxu0
        %4600 = vdwg.mxu0
        %4601 = vmatprep.subr.mxu0 0.0
        %v4602 = vand.u32 %v3780, 4294901760
        %4603 = vmatpush1.msra.mxu0 %v4602
        %4604 = vmatprep.subr.mxu0 0.0
        %v4605 = vand.u32 %v3781, 4294901760
        %4606 = vmatpush1.msra.mxu0 %v4605
        %4607 = vmatprep.subr.mxu0 0.0
        %v4608 = vand.u32 %v3782, 4294901760
        %4609 = vmatpush1.msra.mxu0 %v4608
        %4610 = vmatprep.subr.mxu0 0.0
        %v4611 = vand.u32 %v3783, 4294901760
        %4612 = vmatpush1.msra.mxu0 %v4611
        %4613 = vmatprep.subr.mxu0 0.0
        %4614 = vmatpush1.msra.mxu0 0.0
        %4615 = vmatprep.subr.mxu0 0.0
        %4616 = vmatpush1.msra.mxu0 0.0
        %4617 = vmatprep.subr.mxu0 0.0
        %4618 = vmatpush1.msra.mxu0 0.0
        %4619 = vmatprep.subr.mxu0 0.0
        %4620 = vmatpush1.msra.mxu0 0.0
        %4621 = vmatprep.subr.mxu0 0.0
        %4622 = vmatpush1.msra.mxu0 0.0
        %4623 = vmatprep.subr.mxu0 0.0
        %4624 = vmatpush1.msra.mxu0 0.0
        %4625 = vmatprep.subr.mxu0 0.0
        %4626 = vmatpush1.msra.mxu0 0.0
        %4627 = vmatprep.subr.mxu0 0.0
        %4628 = vmatpush1.msra.mxu0 0.0
        %4629 = vmatprep.subr.mxu0 0.0
        %4630 = vmatpush1.msra.mxu0 0.0
        %4631 = vmatprep.subr.mxu0 0.0
        %4632 = vmatpush1.msra.mxu0 0.0
        %4633 = vmatprep.subr.mxu0 0.0
        %4634 = vmatpush1.msra.mxu0 0.0
        %4635 = vmatprep.subr.mxu0 0.0
        %4636 = vmatpush1.msra.mxu0 0.0
        %4637 = vmatprep.subr.mxu0 0.0
        %4638 = vmatpush1.msra.mxu0 0.0
        %4639 = vmatprep.subr.mxu0 0.0
        %4640 = vmatpush1.msra.mxu0 0.0
        %4641 = vmatprep.subr.mxu0 0.0
        %4642 = vmatpush1.msra.mxu0 0.0
        %4643 = vmatprep.subr.mxu0 0.0
        %4644 = vmatpush1.msra.mxu0 0.0
        %4645 = vmatprep.subr.mxu0 0.0
        %4646 = vmatpush1.msra.mxu0 0.0
        %4647 = vmatprep.subr.mxu0 0.0
        %4648 = vmatpush1.msra.mxu0 0.0
        %4649 = vmatprep.subr.mxu0 0.0
        %4650 = vmatpush1.msra.mxu0 0.0
        %4651 = vmatprep.subr.mxu0 0.0
        %4652 = vmatpush1.msra.mxu0 0.0
        %4653 = vmatprep.subr.mxu0 0.0
        %4654 = vmatpush1.msra.mxu0 0.0
        %4655 = vmatprep.subr.mxu0 0.0
        %4656 = vmatpush1.msra.mxu0 0.0
        %4657 = vmatprep.subr.mxu0 0.0
        %4658 = vmatpush1.msra.mxu0 0.0
        %4659 = vmatprep.subr.mxu0 0.0
        %4660 = vmatpush1.msra.mxu0 0.0
        %4661 = vmatprep.subr.mxu0 0.0
        %4662 = vmatpush1.msra.mxu0 0.0
        %4663 = vmatprep.subr.mxu0 0.0
        %4664 = vmatpush1.msra.mxu0 0.0
        %4665 = vmatprep.subr.mxu0 0.0
        %4666 = vmatpush1.msra.mxu0 0.0
        %4667 = vmatprep.subr.mxu0 0.0
        %4668 = vmatpush1.msra.mxu0 0.0
        %4669 = vmatprep.mubr.f32.mxu0 0.0
        %v4670 = vand.u32 %v4323, 4294901760
        %v4671 = vsub.f32 %v4323, %v4670
        %v4672 = vand.u32 %v4671, 4294901760
        %4673 = vmatmul.mubr.f32.gmra.mrb[0].mxu0 %v4672
        %v4674 = vpop.f32.mrb[0].mxu0
        %v4675 = vadd.f32 %v4591, %v4674
        %v4676 = vpop.f32.mrb[0].mxu0
        %4677 = vmatprep.mubr.f32.mxu0 0.0
        %v4678 = vand.u32 %v4326, 4294901760
        %v4679 = vsub.f32 %v4326, %v4678
        %v4680 = vand.u32 %v4679, 4294901760
        %4681 = vmatmul.mubr.f32.gmra.mrb[0].mxu0 %v4680
        %v4682 = vpop.f32.mrb[0].mxu0
        %v4683 = vadd.f32 %v4598, %v4682
        %v4684 = vpop.f32.mrb[0].mxu0
        %4685 = vdwg.mxu0
        %4686 = vmatprep.subr.mxu0 0.0
        %v4687 = vand.u32 %v3780, 4294901760
        %v4688 = vsub.f32 %v3780, %v4687
        %v4689 = vand.u32 %v4688, 4294901760
        %4690 = vmatpush1.msra.mxu0 %v4689
        %4691 = vmatprep.subr.mxu0 0.0
        %v4692 = vand.u32 %v3781, 4294901760
        %v4693 = vsub.f32 %v3781, %v4692
        %v4694 = vand.u32 %v4693, 4294901760
        %4695 = vmatpush1.msra.mxu0 %v4694
        %4696 = vmatprep.subr.mxu0 0.0
        %v4697 = vand.u32 %v3782, 4294901760
        %v4698 = vsub.f32 %v3782, %v4697
        %v4699 = vand.u32 %v4698, 4294901760
        %4700 = vmatpush1.msra.mxu0 %v4699
        %4701 = vmatprep.subr.mxu0 0.0
        %v4702 = vand.u32 %v3783, 4294901760
        %v4703 = vsub.f32 %v3783, %v4702
        %v4704 = vand.u32 %v4703, 4294901760
        %4705 = vmatpush1.msra.mxu0 %v4704
        %4706 = vmatprep.subr.mxu0 0.0
        %4707 = vmatpush1.msra.mxu0 0.0
        %4708 = vmatprep.subr.mxu0 0.0
        %4709 = vmatpush1.msra.mxu0 0.0
        %4710 = vmatprep.subr.mxu0 0.0
        %4711 = vmatpush1.msra.mxu0 0.0
        %4712 = vmatprep.subr.mxu0 0.0
        %4713 = vmatpush1.msra.mxu0 0.0
        %4714 = vmatprep.subr.mxu0 0.0
        %4715 = vmatpush1.msra.mxu0 0.0
        %4716 = vmatprep.subr.mxu0 0.0
        %4717 = vmatpush1.msra.mxu0 0.0
        %4718 = vmatprep.subr.mxu0 0.0
        %4719 = vmatpush1.msra.mxu0 0.0
        %4720 = vmatprep.subr.mxu0 0.0
        %4721 = vmatpush1.msra.mxu0 0.0
        %4722 = vmatprep.subr.mxu0 0.0
        %4723 = vmatpush1.msra.mxu0 0.0
        %4724 = vmatprep.subr.mxu0 0.0
        %4725 = vmatpush1.msra.mxu0 0.0
        %4726 = vmatprep.subr.mxu0 0.0
        %4727 = vmatpush1.msra.mxu0 0.0
        %4728 = vmatprep.subr.mxu0 0.0
        %4729 = vmatpush1.msra.mxu0 0.0
        %4730 = vmatprep.subr.mxu0 0.0
        %4731 = vmatpush1.msra.mxu0 0.0
        %4732 = vmatprep.subr.mxu0 0.0
        %4733 = vmatpush1.msra.mxu0 0.0
        %4734 = vmatprep.subr.mxu0 0.0
        %4735 = vmatpush1.msra.mxu0 0.0
        %4736 = vmatprep.subr.mxu0 0.0
        %4737 = vmatpush1.msra.mxu0 0.0
        %4738 = vmatprep.subr.mxu0 0.0
        %4739 = vmatpush1.msra.mxu0 0.0
        %4740 = vmatprep.subr.mxu0 0.0
        %4741 = vmatpush1.msra.mxu0 0.0
        %4742 = vmatprep.subr.mxu0 0.0
        %4743 = vmatpush1.msra.mxu0 0.0
        %4744 = vmatprep.subr.mxu0 0.0
        %4745 = vmatpush1.msra.mxu0 0.0
        %4746 = vmatprep.subr.mxu0 0.0
        %4747 = vmatpush1.msra.mxu0 0.0
        %4748 = vmatprep.subr.mxu0 0.0
        %4749 = vmatpush1.msra.mxu0 0.0
        %4750 = vmatprep.subr.mxu0 0.0
        %4751 = vmatpush1.msra.mxu0 0.0
        %4752 = vmatprep.subr.mxu0 0.0
        %4753 = vmatpush1.msra.mxu0 0.0
        %4754 = vmatprep.subr.mxu0 0.0
        %4755 = vmatpush1.msra.mxu0 0.0
        %4756 = vmatprep.subr.mxu0 0.0
        %4757 = vmatpush1.msra.mxu0 0.0
        %4758 = vmatprep.subr.mxu0 0.0
        %4759 = vmatpush1.msra.mxu0 0.0
        %4760 = vmatprep.subr.mxu0 0.0
        %4761 = vmatpush1.msra.mxu0 0.0
        %4762 = vmatprep.mubr.f32.mxu0 0.0
        %v4763 = vand.u32 %v4323, 4294901760
        %4764 = vmatmul.mubr.f32.gmra.mrb[0].mxu0 %v4763
        %v4765 = vpop.f32.mrb[0].mxu0
        %v4766 = vadd.f32 %v4675, %v4765
        %v4767 = vpop.f32.mrb[0].mxu0
        %4768 = vmatprep.mubr.f32.mxu0 0.0
        %v4769 = vand.u32 %v4326, 4294901760
        %4770 = vmatmul.mubr.f32.gmra.mrb[0].mxu0 %v4769
        %v4771 = vpop.f32.mrb[0].mxu0
        %v4772 = vadd.f32 %v4683, %v4771
        %v4773 = vpop.f32.mrb[0].mxu0
        %4774 = vdwg.mxu0
        %4775 = vmatprep.subr.mxu0 0.0
        %v4776 = vand.u32 %v3780, 4294901760
        %4777 = vmatpush1.msra.mxu0 %v4776
        %4778 = vmatprep.subr.mxu0 0.0
        %v4779 = vand.u32 %v3781, 4294901760
        %4780 = vmatpush1.msra.mxu0 %v4779
        %4781 = vmatprep.subr.mxu0 0.0
        %v4782 = vand.u32 %v3782, 4294901760
        %4783 = vmatpush1.msra.mxu0 %v4782
        %4784 = vmatprep.subr.mxu0 0.0
        %v4785 = vand.u32 %v3783, 4294901760
        %4786 = vmatpush1.msra.mxu0 %v4785
        %4787 = vmatprep.subr.mxu0 0.0
        %4788 = vmatpush1.msra.mxu0 0.0
        %4789 = vmatprep.subr.mxu0 0.0
        %4790 = vmatpush1.msra.mxu0 0.0
        %4791 = vmatprep.subr.mxu0 0.0
        %4792 = vmatpush1.msra.mxu0 0.0
        %4793 = vmatprep.subr.mxu0 0.0
        %4794 = vmatpush1.msra.mxu0 0.0
        %4795 = vmatprep.subr.mxu0 0.0
        %4796 = vmatpush1.msra.mxu0 0.0
        %4797 = vmatprep.subr.mxu0 0.0
        %4798 = vmatpush1.msra.mxu0 0.0
        %4799 = vmatprep.subr.mxu0 0.0
        %4800 = vmatpush1.msra.mxu0 0.0
        %4801 = vmatprep.subr.mxu0 0.0
        %4802 = vmatpush1.msra.mxu0 0.0
        %4803 = vmatprep.subr.mxu0 0.0
        %4804 = vmatpush1.msra.mxu0 0.0
        %4805 = vmatprep.subr.mxu0 0.0
        %4806 = vmatpush1.msra.mxu0 0.0
        %4807 = vmatprep.subr.mxu0 0.0
        %4808 = vmatpush1.msra.mxu0 0.0
        %4809 = vmatprep.subr.mxu0 0.0
        %4810 = vmatpush1.msra.mxu0 0.0
        %4811 = vmatprep.subr.mxu0 0.0
        %4812 = vmatpush1.msra.mxu0 0.0
        %4813 = vmatprep.subr.mxu0 0.0
        %4814 = vmatpush1.msra.mxu0 0.0
        %4815 = vmatprep.subr.mxu0 0.0
        %4816 = vmatpush1.msra.mxu0 0.0
        %4817 = vmatprep.subr.mxu0 0.0
        %4818 = vmatpush1.msra.mxu0 0.0
        %4819 = vmatprep.subr.mxu0 0.0
        %4820 = vmatpush1.msra.mxu0 0.0
        %4821 = vmatprep.subr.mxu0 0.0
        %4822 = vmatpush1.msra.mxu0 0.0
        %4823 = vmatprep.subr.mxu0 0.0
        %4824 = vmatpush1.msra.mxu0 0.0
        %4825 = vmatprep.subr.mxu0 0.0
        %4826 = vmatpush1.msra.mxu0 0.0
        %4827 = vmatprep.subr.mxu0 0.0
        %4828 = vmatpush1.msra.mxu0 0.0
        %4829 = vmatprep.subr.mxu0 0.0
        %4830 = vmatpush1.msra.mxu0 0.0
        %4831 = vmatprep.subr.mxu0 0.0
        %4832 = vmatpush1.msra.mxu0 0.0
        %4833 = vmatprep.subr.mxu0 0.0
        %4834 = vmatpush1.msra.mxu0 0.0
        %4835 = vmatprep.subr.mxu0 0.0
        %4836 = vmatpush1.msra.mxu0 0.0
        %4837 = vmatprep.subr.mxu0 0.0
        %4838 = vmatpush1.msra.mxu0 0.0
        %4839 = vmatprep.subr.mxu0 0.0
        %4840 = vmatpush1.msra.mxu0 0.0
        %4841 = vmatprep.subr.mxu0 0.0
        %4842 = vmatpush1.msra.mxu0 0.0
        %4843 = vmatprep.mubr.f32.mxu0 0.0
        %v4844 = vand.u32 %v4323, 4294901760
        %4845 = vmatmul.mubr.f32.gmra.mrb[0].mxu0 %v4844
        %v4846 = vpop.f32.mrb[0].mxu0
        %v4847 = vadd.f32 %v4766, %v4846
        %v4848 = vpop.f32.mrb[0].mxu0
        %4849 = vmatprep.mubr.f32.mxu0 0.0
        %v4850 = vand.u32 %v4326, 4294901760
        %4851 = vmatmul.mubr.f32.gmra.mrb[0].mxu0 %v4850
        %v4852 = vpop.f32.mrb[0].mxu0
        %v4853 = vadd.f32 %v4772, %v4852
        %v4854 = vpop.f32.mrb[0].mxu0
        %4855 = vdwg.mxu0
        %4856 = vst.msk [vmem:[%s419] sm:$0xff] %vm472, %v4847
        %4857 = vst.msk [vmem:[%s419 + $0x8] sm:$0xff] %vm472, %v4853
        %s4858 = sand.u32 %s272, 1
        %s4859 = scalar_lea.sflag [#allocation3], %s4858
        %s4860 = sand.u32 %s272, 1
        %s4861 = smul.addr %s4860, 16
        %s4862 = scalar_lea.vmem [#allocation2], %s4861
        // Predicated region
        $region61: #{qdrgat_forward.13} parent=59 // pred_check
          %p4863 = pneg %p282
        $region62: #{qdrgat_forward.13} parent=59 // pred_check_branch
          %4865 = sbr.rel (%p4863) target = $region64
        $region63: #{qdrgat_forward.13} parent=59 // pred_region
          %s4867 = ssub.s32 256, 256
          %4868 = vsyncadd %s4859, %s4867
          %s4869 = smul.addr %s24, 2
          %s4870 = smul.addr %s4869, 128
          %s4871 = scalar_lea.hbm %s10, %s4870
          %s4872 = sshll.u32 %s4862, 4
          %s4873 = int_to_ptr.vmem [resolvable:$true] %s4872
          %4878 = dma.vmem_to_hbm [thread:$0]  %s4873, 256, %s4871, %s4859, 128, 128, 8
        $region64: #{qdrgat_forward.13} parent=59 // pred_fallthru
          _
      $region60: #{qdrgat_forward.13} parent=5 // pred_fallthru
        _
      %p4879 = scmp.le.s32.totalorder 2, %s19
      // Predicated region
      $region65: #{qdrgat_forward.13} parent=5 // pred_check
        %p4880 = pneg %p4879
      $region66: #{qdrgat_forward.13} parent=5 // pred_check_branch
        %4882 = sbr.rel (%p4880) target = $region68
      $region67: #{qdrgat_forward.13} parent=5 // pred_region
        %s4883 = ssub.s32 %s19, 2
        // Predicated region
        $region69: #{qdrgat_forward.13} parent=67 // pred_check
          %p4884 = pneg %p288
        $region70: #{qdrgat_forward.13} parent=67 // pred_check_branch
          %4886 = sbr.rel (%p4884) target = $region72
        $region71: #{qdrgat_forward.13} parent=67 // pred_region
          %s4887 = sand.u32 %s273, 1
          %s4888 = scalar_lea.sflag [#allocation3], %s4887
          %s4889 = sand.u32 %s273, 1
          %s4890 = smul.addr %s4889, 16
          %s4891 = scalar_lea.vmem [#allocation2], %s4890
          %4892 = dma.done %s4888, 256
        $region72: #{qdrgat_forward.13} parent=67 // pred_fallthru
          _
      $region68: #{qdrgat_forward.13} parent=5 // pred_fallthru
        _
    $region6: #{qdrgat_forward.13} parent=1 // loop_footer
      %s23 = sadd.s32 1, %s19
    $region7: #{qdrgat_forward.13} parent=1 // loop_footer_branch
      %18 = sbr.rel target = $region3
    $region8: #{qdrgat_forward.13} parent=1 // loop_exit
      _
    %4893 = vsyncpa [#allocation3], 1
    %s4894 = scalar_lea.sflag [#allocation3], 1
    %4895 = vsyncpa %s4894, 1

</llo_original>
